<compile_context>
chip_gen: v5e
topology: v5e:2x2
jax: 0.10.0
libtpu: 0.0.40
codegen_flags: <defaults>
</compile_context>

<pallas_src>
import functools

import jax
import jax.numpy as jnp
from jax.experimental import pallas as pl
from jax.experimental.pallas import tpu as pltpu


def _pick_chunk(n, max_chunk):
    """Largest divisor of n that is <= max_chunk (>=1)."""
    for c in range(min(n, max_chunk), 0, -1):
        if n % c == 0:
            return c
    return 1


# ---------------------------------------------------------------------------
# Kernel 1: tiled dense projection  y = act(x @ W + b)
# Hoists LSTM input projections / SS query projection onto the MXU as large
# row-blocked GEMMs with resident weights and a "parallel" row grid.
# ---------------------------------------------------------------------------
def _proj_kernel(x_ref, w_ref, b_ref, o_ref, *, activation):
    y = (jnp.dot(x_ref[...], w_ref[...], preferred_element_type=jnp.float32)
         + b_ref[...])
    if activation == "tanh":
        y = jnp.tanh(y)
    o_ref[...] = y


def dense(x, w, b, activation="none", block_rows=512):
    n, d_in = x.shape
    d_out = w.shape[1]
    tm = n if n <= block_rows else block_rows
    return pl.pallas_call(
        functools.partial(_proj_kernel, activation=activation),
        out_shape=jax.ShapeDtypeStruct((n, d_out), jnp.float32),
        grid_spec=pltpu.PrefetchScalarGridSpec(
            num_scalar_prefetch=0,
            grid=(pl.cdiv(n, tm),),
            in_specs=[
                pl.BlockSpec((tm, d_in), lambda i: (i, 0)),      # row block
                pl.BlockSpec((d_in, d_out), lambda i: (0, 0)),   # W resident
                pl.BlockSpec((1, d_out), lambda i: (0, 0)),      # bias resident
            ],
            out_specs=pl.BlockSpec((tm, d_out), lambda i: (i, 0)),
        ),
        compiler_params=pltpu.CompilerParams(
            dimension_semantics=("parallel",)),
    )(x, w, b)


# ---------------------------------------------------------------------------
# Kernel 2: fused LSTM recurrence (used by encoder AND decoder).
# Input-gate terms gx[t] = x[t] @ W_ih + b are precomputed; each step only
# does h @ W_hh + gx[t] plus the gate nonlinearities.  The time axis is
# chunked: grid=(n/CH,) with an unrolled fori_loop over CH timesteps inside
# the kernel.  h/c are carried in VMEM scratch across grid steps; W_hh stays
# resident.  PyTorch gate order (i, f, g, o) with b_ih+b_hh pre-summed.
# ---------------------------------------------------------------------------
def _lstm_scan_kernel(gx_ref, whh_ref, h0_ref, c0_ref, hseq_ref, cfin_ref,
                      h_sc, c_sc, *, chunk):
    i = pl.program_id(0)

    @pl.when(i == 0)
    def _():
        h_sc[...] = h0_ref[...]
        c_sc[...] = c0_ref[...]

    whh = whh_ref[...]
    H = whh.shape[0]

    def cell(step, carry):
        h, c = carry
        gates = gx_ref[step] + jnp.dot(h, whh,
                                       preferred_element_type=jnp.float32)
        # Lane-aligned slices when H % 128 == 0 (see test config).
        ig = jax.nn.sigmoid(gates[:, 0 * H:1 * H])
        fg = jax.nn.sigmoid(gates[:, 1 * H:2 * H])
        gg = jnp.tanh(gates[:, 2 * H:3 * H])
        og = jax.nn.sigmoid(gates[:, 3 * H:4 * H])
        c_new = fg * c + ig * gg
        h_new = og * jnp.tanh(c_new)
        hseq_ref[step] = h_new
        return (h_new, c_new)

    h_fin, c_fin = jax.lax.fori_loop(0, chunk, cell, (h_sc[...], c_sc[...]),
                                     unroll=True)
    h_sc[...] = h_fin
    c_sc[...] = c_fin

    @pl.when(i == pl.num_programs(0) - 1)
    def _():
        cfin_ref[...] = c_fin          # only the final step stores the cell


def lstm_scan(gx, w_hh, h0, c0, max_chunk=32):
    n, B, G = gx.shape
    H = G // 4
    chunk = _pick_chunk(n, max_chunk)
    return pl.pallas_call(
        functools.partial(_lstm_scan_kernel, chunk=chunk),
        out_shape=(jax.ShapeDtypeStruct((n, B, H), jnp.float32),
                   jax.ShapeDtypeStruct((B, H), jnp.float32)),
        grid_spec=pltpu.PrefetchScalarGridSpec(
            num_scalar_prefetch=0,
            grid=(n // chunk,),
            in_specs=[
                pl.BlockSpec((chunk, B, G), lambda i: (i, 0, 0)),   # gx chunk
                pl.BlockSpec((H, G), lambda i: (0, 0)),             # W_hh resident
                pl.BlockSpec((B, H), lambda i: (0, 0)),             # h0
                pl.BlockSpec((B, H), lambda i: (0, 0)),             # c0
            ],
            out_specs=[
                pl.BlockSpec((chunk, B, H), lambda i: (i, 0, 0)),   # h sequence
                pl.BlockSpec((B, H), lambda i: (0, 0)),             # final cell
            ],
            scratch_shapes=[pltpu.VMEM((B, H), jnp.float32),
                            pltpu.VMEM((B, H), jnp.float32)],
        ),
        compiler_params=pltpu.CompilerParams(
            dimension_semantics=("arbitrary",)),
    )(gx, w_hh, h0, c0)


# ---------------------------------------------------------------------------
# Kernel 3: batched Luong attention over ALL decoder timesteps at once
# (hoisted out of the serial recurrence; the attention output never feeds
# back into the LSTM in this decoder configuration).  Gridded over the batch
# ("parallel" -> megacore-shardable on v7x); contexts block and W_c stay in
# VMEM for the whole block of timesteps.  Everything is batch-major so the
# einsums lower to clean batched MXU matmuls with no in-kernel transposes.
# ---------------------------------------------------------------------------
def _attention_kernel(h_ref, ctx_ref, wc_ctx_ref, wc_h_ref, out_ref, gamma_ref):
    h = h_ref[...]                 # (bb, T, H)
    ctx = ctx_ref[...]             # (bb, S, H)
    scores = jnp.einsum('bth,bsh->bts', h, ctx,
                        preferred_element_type=jnp.float32)      # (bb, T, S)
    m = jnp.max(scores, axis=-1, keepdims=True)
    e = jnp.exp(scores - m)
    gamma = e / jnp.sum(e, axis=-1, keepdims=True)               # exact softmax
    weighted = jnp.einsum('bts,bsh->bth', gamma, ctx,
                          preferred_element_type=jnp.float32)    # (bb, T, H)
    # tanh(W_c [ctx; h]) without the concat: two dots into one accumulator.
    att = jnp.tanh(
        jnp.einsum('bth,hk->btk', weighted, wc_ctx_ref[...],
                   preferred_element_type=jnp.float32)
        + jnp.einsum('bth,hk->btk', h, wc_h_ref[...],
                     preferred_element_type=jnp.float32))
    out_ref[...] = att
    gamma_ref[...] = gamma


def luong_attention(hseq_tm, contexts_b, wc_ctx, wc_h, max_batch_block=8):
    T, B, H = hseq_tm.shape
    S = contexts_b.shape[1]
    hseq_b = jnp.transpose(hseq_tm, (1, 0, 2))                   # (B, T, H)
    bb = _pick_chunk(B, max_batch_block)
    att_b, gamma_b = pl.pallas_call(
        _attention_kernel,
        out_shape=(jax.ShapeDtypeStruct((B, T, H), jnp.float32),
                   jax.ShapeDtypeStruct((B, T, S), jnp.float32)),
        grid_spec=pltpu.PrefetchScalarGridSpec(
            num_scalar_prefetch=0,
            grid=(B // bb,),
            in_specs=[
                pl.BlockSpec((bb, T, H), lambda i: (i, 0, 0)),   # decoder h
                pl.BlockSpec((bb, S, H), lambda i: (i, 0, 0)),   # contexts
                pl.BlockSpec((H, H), lambda i: (0, 0)),          # Wc_ctx
                pl.BlockSpec((H, H), lambda i: (0, 0)),          # Wc_h
            ],
            out_specs=[
                pl.BlockSpec((bb, T, H), lambda i: (i, 0, 0)),   # att hidden
                pl.BlockSpec((bb, T, S), lambda i: (i, 0, 0)),   # gamma
            ],
        ),
        compiler_params=pltpu.CompilerParams(
            dimension_semantics=("parallel",)),
    )(hseq_b, contexts_b, wc_ctx, wc_h)
    return jnp.transpose(att_b, (1, 0, 2)), jnp.transpose(gamma_b, (1, 0, 2))


# ---------------------------------------------------------------------------
# Kernel 4a: SS source-side term (shared across all speaker queries),
# tiled over rows with resident weights:
#   a[b,s,:] = tanh(src[b,s,:] @ W_enc + b_enc) @ W_mask
# ---------------------------------------------------------------------------
def _ss_src_kernel(src_ref, wenc_ref, benc_ref, wmask_ref, a_ref):
    mix = jnp.tanh(
        jnp.dot(src_ref[...], wenc_ref[...], preferred_element_type=jnp.float32)
        + benc_ref[...])
    a_ref[...] = jnp.dot(mix, wmask_ref[...],
                         preferred_element_type=jnp.float32)


def ss_src_term(src2, params, block_rows=512):
    n, F = src2.shape
    H = params['ss_w_enc'].shape[1]
    tm = n if n <= block_rows else block_rows
    return pl.pallas_call(
        _ss_src_kernel,
        out_shape=jax.ShapeDtypeStruct((n, F), jnp.float32),
        grid_spec=pltpu.PrefetchScalarGridSpec(
            num_scalar_prefetch=0,
            grid=(pl.cdiv(n, tm),),
            in_specs=[
                pl.BlockSpec((tm, F), lambda i: (i, 0)),
                pl.BlockSpec((F, H), lambda i: (0, 0)),
                pl.BlockSpec((1, H), lambda i: (0, 0)),
                pl.BlockSpec((H, F), lambda i: (0, 0)),
            ],
            out_specs=pl.BlockSpec((tm, F), lambda i: (i, 0)),
        ),
        compiler_params=pltpu.CompilerParams(
            dimension_semantics=("parallel",)),
    )(src2, params['ss_w_enc'], params['ss_b_enc'], params['ss_w_mask'])


# ---------------------------------------------------------------------------
# Kernel 4b: per-speaker-query mask, grid=(Q,) parallel.  The query @ V_mask
# GEMM is hoisted into one big `dense` call outside; this kernel only does
#   predicted_maps[b,q,s,f] = sigmoid(a[b,s,f] + bq[q,b,f])
# and writes lane-dense (B,1,S,F) tiles directly into the (B,Q,S,F) output
# (== ss_model(...).transpose(0,1) of the reference).
# ---------------------------------------------------------------------------
def _ss_mask_kernel(bq_ref, a_ref, out_ref):
    out_ref[...] = jax.nn.sigmoid(a_ref[...] + bq_ref[...][:, None, :])


def ss_mask_apply(a_bsf, bq_qbf):
    B, S, F = a_bsf.shape
    Q = bq_qbf.shape[0]
    return pl.pallas_call(
        _ss_mask_kernel,
        out_shape=jax.ShapeDtypeStruct((B, Q, S, F), jnp.float32),
        grid_spec=pltpu.PrefetchScalarGridSpec(
            num_scalar_prefetch=0,
            grid=(Q,),
            in_specs=[
                pl.BlockSpec((None, B, F), lambda q: (q, 0, 0)),     # bq[q]
                pl.BlockSpec((B, S, F), lambda q: (0, 0, 0)),        # shared a
            ],
            out_specs=pl.BlockSpec((B, None, S, F), lambda q: (0, q, 0, 0)),
        ),
        compiler_params=pltpu.CompilerParams(
            dimension_semantics=("parallel",)),   # q tiles independent (2 TCs on v7x)
    )(bq_qbf, a_bsf)


# ---------------------------------------------------------------------------
# Full forward (mirrors seq2seq.forward for the non-global_emb / non-TasNet
# configuration).
# ---------------------------------------------------------------------------
def seq2seq_forward(params, src, src_len, tgt):
    B, S, F = src.shape
    T = tgt.shape[0]
    H = params['enc_w_hh'].shape[0]

    # torch.sort(src_len, descending=True): the reference only consumes the
    # sorted lengths; with full-length sequences this is a no-op for the math.
    # TODO(synk): pack_padded_sequence length masking (src_len < S) not modeled.
    del src_len

    src_tm = jnp.transpose(src, (1, 0, 2))          # src.transpose(0,1) -> (S,B,F)

    # ---------------- encoder: hoisted projection + fused LSTM scan ----------
    gx_enc = dense(src_tm.reshape(S * B, F), params['enc_w_ih'],
                   params['enc_b']).reshape(S, B, 4 * H)
    zeros_bh = jnp.zeros((B, H), jnp.float32)
    contexts_tm, c_enc = lstm_scan(gx_enc, params['enc_w_hh'],
                                   zeros_bh, zeros_bh)            # (S,B,H),(B,H)
    h_enc = contexts_tm[-1]
    contexts_b = jnp.transpose(contexts_tm, (1, 0, 2))            # (B,S,H)

    # ---------------- decoder LSTM (teacher forcing); attention hoisted ------
    emb = jnp.take(params['dec_embedding'], tgt, axis=0)          # (T,B,H)
    gx_dec = dense(emb.reshape(T * B, H), params['dec_w_ih'],
                   params['dec_b']).reshape(T, B, 4 * H)
    hseq, _ = lstm_scan(gx_dec, params['dec_w_hh'], h_enc, c_enc) # (T,B,H)

    # ---------------- batched Luong attention over all T ---------------------
    wc_ctx = params['att_wc'][:H]
    wc_h = params['att_wc'][H:]
    outputs, gamma = luong_attention(hseq, contexts_b, wc_ctx, wc_h)
    # outputs: (T,B,H), gamma: (T,B,S)

    # ---------------- SS model: ss_model(src, outputs[:-1], tgt[1:-1]) -------
    Q = T - 1
    query = outputs[:-1]                                          # (Q,B,H)
    bq = dense(query.reshape(Q * B, H), params['ss_v_mask'],
               jnp.zeros((1, F), jnp.float32)).reshape(Q, B, F)   # one big GEMM
    a = ss_src_term(src.reshape(B * S, F), params).reshape(B, S, F)
    predicted_maps = ss_mask_apply(a, bq)                         # (B,Q,S,F)

    return outputs, tgt[1:], predicted_maps, gamma


# ---------------------------------------------------------------------------
# Deterministic synthetic parameters (shapes implied by the module config).
# Note: single bias per LSTM == PyTorch's (b_ih + b_hh) pre-summed.
# ---------------------------------------------------------------------------
def init_params(key, F, H, V):
    ks = jax.random.split(key, 9)

    def w(k, shape, scale=0.1):
        return scale * jax.random.normal(k, shape, jnp.float32)

    return dict(
        enc_w_ih=w(ks[0], (F, 4 * H)),
        enc_w_hh=w(ks[1], (H, 4 * H)),
        enc_b=jnp.zeros((1, 4 * H), jnp.float32),
        dec_embedding=w(ks[2], (V, H)),
        dec_w_ih=w(ks[3], (H, 4 * H)),
        dec_w_hh=w(ks[4], (H, 4 * H)),
        dec_b=jnp.zeros((1, 4 * H), jnp.float32),
        att_wc=w(ks[5], (2 * H, H)),
        ss_w_enc=w(ks[6], (F, H)),
        ss_b_enc=jnp.zeros((1, H), jnp.float32),
        ss_w_mask=w(ks[7], (H, F)),
        ss_v_mask=w(ks[8], (H, F)),
    )


if __name__ == "__main__":
    # H = F = 128 keeps gate slices lane-aligned and hidden/frequency outputs
    # lane-dense; B = 8 fills the sublane dimension.  Still small.
    B, S, F, H, T, V = 8, 16, 128, 128, 4, 10
    key = jax.random.PRNGKey(0)
    k_par, k_src, k_tgt = jax.random.split(key, 3)

    params = init_params(k_par, F, H, V)
    src = jax.random.normal(k_src, (B, S, F), jnp.float32)
    src_len = jnp.full((B,), S, jnp.int32)
    tgt = jax.random.randint(k_tgt, (T, B), 0, V, dtype=jnp.int32)

    fwd = jax.jit(seq2seq_forward)
    outputs, tgt_shift, predicted_maps, gamma = fwd(params, src, src_len, tgt)
    jax.block_until_ready((outputs, tgt_shift, predicted_maps, gamma))

    assert outputs.shape == (T, B, H)
    assert tgt_shift.shape == (T - 1, B)
    assert predicted_maps.shape == (B, T - 1, S, F)
    assert gamma.shape == (T, B, S)
    assert bool(jnp.all(jnp.isfinite(outputs)))
    assert bool(jnp.allclose(jnp.sum(gamma, axis=-1), 1.0, atol=1e-4))
    assert bool(jnp.all(predicted_maps >= 0) and jnp.all(predicted_maps <= 1))
    print("KERNEL_OK")
</pallas_src>

<mosaic_0001>
module attributes {stable_mosaic.version = 11 : i64} {
  func.func @_proj_kernel(%arg0: i32, %arg1: memref<128x128xf32, #tpu.memory_space<vmem>>, %arg2: memref<128x512xf32, #tpu.memory_space<vmem>>, %arg3: memref<1x512xf32, #tpu.memory_space<vmem>>, %arg4: memref<128x512xf32, #tpu.memory_space<vmem>>) attributes {dimension_semantics = [#tpu.dimension_semantics<parallel>], iteration_bounds = array<i64: 1>, scalar_prefetch = 0 : i64, scratch_operands = 0 : i64, tpu.core_type = #tpu.core_type<tc>, window_params = [{transform_indices = @transform_0, window_bounds = array<i64: 128, 128>}, {pipeline_mode = #tpu.pipeline_mode<synchronous>, transform_indices = @transform_1, window_bounds = array<i64: 128, 512>}, {pipeline_mode = #tpu.pipeline_mode<synchronous>, transform_indices = @transform_2, window_bounds = array<i64: 1, 512>}, {transform_indices = @transform_3, window_bounds = array<i64: 128, 512>}]} {
    %c0 = arith.constant 0 : index
    %c0_0 = arith.constant 0 : index
    %0 = vector.load %arg1[%c0, %c0_0] : memref<128x128xf32, #tpu.memory_space<vmem>>, vector<128x128xf32>
    %c0_1 = arith.constant 0 : index
    %c0_2 = arith.constant 0 : index
    %1 = vector.load %arg2[%c0_1, %c0_2] : memref<128x512xf32, #tpu.memory_space<vmem>>, vector<128x512xf32>
    %cst = arith.constant dense<0.000000e+00> : vector<128x512xf32>
    %2 = tpu.matmul %0, %1, %cst {dimension_numbers = #tpu.dot_dimension_numbers<[1], [0], [0], [1], [0, 0, 1, 1], [], []>} : vector<128x128xf32>, vector<128x512xf32>, vector<128x512xf32> -> vector<128x512xf32>
    %c0_3 = arith.constant 0 : index
    %c0_4 = arith.constant 0 : index
    %3 = vector.load %arg3[%c0_3, %c0_4] : memref<1x512xf32, #tpu.memory_space<vmem>>, vector<1x512xf32>
    %4 = vector.broadcast %3 : vector<1x512xf32> to vector<128x512xf32>
    %5 = arith.addf %2, %4 : vector<128x512xf32>
    %c0_5 = arith.constant 0 : index
    %c0_6 = arith.constant 0 : index
    %6 = vector.load %arg4[%c0_5, %c0_6] : memref<128x512xf32, #tpu.memory_space<vmem>>, vector<128x512xf32>
    tpu.vector_store %arg4[%c0_5, %c0_6], %5 {strides = array<i32>} : memref<128x512xf32, #tpu.memory_space<vmem>>, vector<128x512xf32>,
    return
  }
  func.func @transform_0(%arg0: i32) -> (i32, i32) {
    %c0_i32 = arith.constant 0 : i32
    %c0_i32_0 = arith.constant 0 : i32
    return %arg0, %c0_i32 : i32, i32
  }
  func.func @transform_1(%arg0: i32) -> (i32, i32) {
    %c0_i32 = arith.constant 0 : i32
    %c0_i32_0 = arith.constant 0 : i32
    %c0_i32_1 = arith.constant 0 : i32
    return %c0_i32, %c0_i32_0 : i32, i32
  }
  func.func @transform_2(%arg0: i32) -> (i32, i32) {
    %c0_i32 = arith.constant 0 : i32
    %c0_i32_0 = arith.constant 0 : i32
    %c0_i32_1 = arith.constant 0 : i32
    return %c0_i32, %c0_i32_0 : i32, i32
  }
  func.func @transform_3(%arg0: i32) -> (i32, i32) {
    %c0_i32 = arith.constant 0 : i32
    %c0_i32_0 = arith.constant 0 : i32
    return %arg0, %c0_i32 : i32, i32
  }
}

module attributes {stable_mosaic.version = 11 : i64} {
  func.func @_lstm_scan_kernel(%arg0: i32, %arg1: memref<16x8x512xf32, #tpu.memory_space<vmem>>, %arg2: memref<128x512xf32, #tpu.memory_space<vmem>>, %arg3: memref<8x128xf32, #tpu.memory_space<vmem>>, %arg4: memref<8x128xf32, #tpu.memory_space<vmem>>, %arg5: memref<16x8x128xf32, #tpu.memory_space<vmem>>, %arg6: memref<8x128xf32, #tpu.memory_space<vmem>>, %arg7: memref<8x128xf32, #tpu.memory_space<vmem>>, %arg8: memref<8x128xf32, #tpu.memory_space<vmem>>) attributes {dimension_semantics = [#tpu.dimension_semantics<arbitrary>], iteration_bounds = array<i64: 1>, scalar_prefetch = 0 : i64, scratch_operands = 2 : i64, tpu.core_type = #tpu.core_type<tc>, window_params = [{transform_indices = @transform_0, window_bounds = array<i64: 16, 8, 512>}, {pipeline_mode = #tpu.pipeline_mode<synchronous>, transform_indices = @transform_1, window_bounds = array<i64: 128, 512>}, {pipeline_mode = #tpu.pipeline_mode<synchronous>, transform_indices = @transform_2, window_bounds = array<i64: 8, 128>}, {pipeline_mode = #tpu.pipeline_mode<synchronous>, transform_indices = @transform_3, window_bounds = array<i64: 8, 128>}, {transform_indices = @transform_4, window_bounds = array<i64: 16, 8, 128>}, {pipeline_mode = #tpu.pipeline_mode<synchronous>, transform_indices = @transform_5, window_bounds = array<i64: 8, 128>}]} {
    %c0_i32 = arith.constant 0 : i32
    %0 = arith.cmpi eq, %arg0, %c0_i32 : i32
    %1 = arith.extui %0 : i1 to i32
    %c0_i32_0 = arith.constant 0 : i32
    %2 = arith.cmpi ne, %1, %c0_i32_0 : i32
    scf.if %2 {
      %c0_140 = arith.constant 0 : index
      %c0_141 = arith.constant 0 : index
      %555 = vector.load %arg3[%c0_140, %c0_141] : memref<8x128xf32, #tpu.memory_space<vmem>>, vector<8x128xf32>
      %c0_142 = arith.constant 0 : index
      %c0_143 = arith.constant 0 : index
      %556 = vector.load %arg7[%c0_142, %c0_143] : memref<8x128xf32, #tpu.memory_space<vmem>>, vector<8x128xf32>
      tpu.vector_store %arg7[%c0_142, %c0_143], %555 {strides = array<i32>} : memref<8x128xf32, #tpu.memory_space<vmem>>, vector<8x128xf32>,
      %c0_144 = arith.constant 0 : index
      %c0_145 = arith.constant 0 : index
      %557 = vector.load %arg4[%c0_144, %c0_145] : memref<8x128xf32, #tpu.memory_space<vmem>>, vector<8x128xf32>
      %c0_146 = arith.constant 0 : index
      %c0_147 = arith.constant 0 : index
      %558 = vector.load %arg8[%c0_146, %c0_147] : memref<8x128xf32, #tpu.memory_space<vmem>>, vector<8x128xf32>
      tpu.vector_store %arg8[%c0_146, %c0_147], %557 {strides = array<i32>} : memref<8x128xf32, #tpu.memory_space<vmem>>, vector<8x128xf32>,
    } else {
    }
    %c0 = arith.constant 0 : index
    %c0_1 = arith.constant 0 : index
    %3 = vector.load %arg2[%c0, %c0_1] : memref<128x512xf32, #tpu.memory_space<vmem>>, vector<128x512xf32>
    %c0_2 = arith.constant 0 : index
    %c0_3 = arith.constant 0 : index
    %4 = vector.load %arg7[%c0_2, %c0_3] : memref<8x128xf32, #tpu.memory_space<vmem>>, vector<8x128xf32>
    %c0_4 = arith.constant 0 : index
    %c0_5 = arith.constant 0 : index
    %5 = vector.load %arg8[%c0_4, %c0_5] : memref<8x128xf32, #tpu.memory_space<vmem>>, vector<8x128xf32>
    %c0_i32_6 = arith.constant 0 : i32
    %6 = arith.index_cast %c0_i32_6 : i32 to index
    %c0_7 = arith.constant 0 : index
    %c0_8 = arith.constant 0 : index
    %7 = vector.load %arg1[%6, %c0_7, %c0_8] : memref<16x8x512xf32, #tpu.memory_space<vmem>>, vector<1x8x512xf32>
    %8 = vector.shape_cast %7 : vector<1x8x512xf32> to vector<8x512xf32>
    %cst = arith.constant dense<0.000000e+00> : vector<8x512xf32>
    %9 = tpu.matmul %4, %3, %cst {dimension_numbers = #tpu.dot_dimension_numbers<[1], [0], [0], [1], [0, 0, 1, 1], [], []>} : vector<8x128xf32>, vector<128x512xf32>, vector<8x512xf32> -> vector<8x512xf32>
    %10 = arith.addf %8, %9 : vector<8x512xf32>
    %11 = vector.extract_strided_slice %10 {offsets = [0, 0], sizes = [8, 128], strides = [1, 1]} : vector<8x512xf32> to vector<8x128xf32>
    %12 = arith.negf %11 : vector<8x128xf32>
    %13 = math.exp %12 : vector<8x128xf32>
    %cst_9 = arith.constant 1.000000e+00 : f32
    %14 = vector.broadcast %cst_9 : f32 to vector<8x128xf32>
    %15 = arith.addf %14, %13 : vector<8x128xf32>
    %16 = arith.divf %14, %15 : vector<8x128xf32>
    %17 = vector.extract_strided_slice %10 {offsets = [0, 128], sizes = [8, 128], strides = [1, 1]} : vector<8x512xf32> to vector<8x128xf32>
    %18 = arith.negf %17 : vector<8x128xf32>
    %19 = math.exp %18 : vector<8x128xf32>
    %cst_10 = arith.constant 1.000000e+00 : f32
    %20 = vector.broadcast %cst_10 : f32 to vector<8x128xf32>
    %21 = arith.addf %20, %19 : vector<8x128xf32>
    %22 = arith.divf %20, %21 : vector<8x128xf32>
    %23 = vector.extract_strided_slice %10 {offsets = [0, 256], sizes = [8, 128], strides = [1, 1]} : vector<8x512xf32> to vector<8x128xf32>
    %24 = math.tanh %23 : vector<8x128xf32>
    %25 = vector.extract_strided_slice %10 {offsets = [0, 384], sizes = [8, 128], strides = [1, 1]} : vector<8x512xf32> to vector<8x128xf32>
    %26 = arith.negf %25 : vector<8x128xf32>
    %27 = math.exp %26 : vector<8x128xf32>
    %cst_11 = arith.constant 1.000000e+00 : f32
    %28 = vector.broadcast %cst_11 : f32 to vector<8x128xf32>
    %29 = arith.addf %28, %27 : vector<8x128xf32>
    %30 = arith.divf %28, %29 : vector<8x128xf32>
    %31 = arith.mulf %22, %5 : vector<8x128xf32>
    %32 = arith.mulf %16, %24 : vector<8x128xf32>
    %33 = arith.addf %31, %32 : vector<8x128xf32>
    %34 = math.tanh %33 : vector<8x128xf32>
    %35 = arith.mulf %30, %34 : vector<8x128xf32>
    %36 = arith.index_cast %c0_i32_6 : i32 to index
    %c0_12 = arith.constant 0 : index
    %c0_13 = arith.constant 0 : index
    %37 = vector.load %arg5[%36, %c0_12, %c0_13] : memref<16x8x128xf32, #tpu.memory_space<vmem>>, vector<1x8x128xf32>
    %38 = vector.shape_cast %37 : vector<1x8x128xf32> to vector<8x128xf32>
    %39 = vector.shape_cast %35 : vector<8x128xf32> to vector<1x8x128xf32>
    tpu.vector_store %arg5[%36, %c0_12, %c0_13], %39 {strides = array<i32>} : memref<16x8x128xf32, #tpu.memory_space<vmem>>, vector<1x8x128xf32>,
    %c1_i32 = arith.constant 1 : i32
    %40 = arith.index_cast %c1_i32 : i32 to index
    %c0_14 = arith.constant 0 : index
    %c0_15 = arith.constant 0 : index
    %41 = vector.load %arg1[%40, %c0_14, %c0_15] : memref<16x8x512xf32, #tpu.memory_space<vmem>>, vector<1x8x512xf32>
    %42 = vector.shape_cast %41 : vector<1x8x512xf32> to vector<8x512xf32>
    %cst_16 = arith.constant dense<0.000000e+00> : vector<8x512xf32>
    %43 = tpu.matmul %35, %3, %cst_16 {dimension_numbers = #tpu.dot_dimension_numbers<[1], [0], [0], [1], [0, 0, 1, 1], [], []>} : vector<8x128xf32>, vector<128x512xf32>, vector<8x512xf32> -> vector<8x512xf32>
    %44 = arith.addf %42, %43 : vector<8x512xf32>
    %45 = vector.extract_strided_slice %44 {offsets = [0, 0], sizes = [8, 128], strides = [1, 1]} : vector<8x512xf32> to vector<8x128xf32>
    %46 = arith.negf %45 : vector<8x128xf32>
    %47 = math.exp %46 : vector<8x128xf32>
    %cst_17 = arith.constant 1.000000e+00 : f32
    %48 = vector.broadcast %cst_17 : f32 to vector<8x128xf32>
    %49 = arith.addf %48, %47 : vector<8x128xf32>
    %50 = arith.divf %48, %49 : vector<8x128xf32>
    %51 = vector.extract_strided_slice %44 {offsets = [0, 128], sizes = [8, 128], strides = [1, 1]} : vector<8x512xf32> to vector<8x128xf32>
    %52 = arith.negf %51 : vector<8x128xf32>
    %53 = math.exp %52 : vector<8x128xf32>
    %cst_18 = arith.constant 1.000000e+00 : f32
    %54 = vector.broadcast %cst_18 : f32 to vector<8x128xf32>
    %55 = arith.addf %54, %53 : vector<8x128xf32>
    %56 = arith.divf %54, %55 : vector<8x128xf32>
    %57 = vector.extract_strided_slice %44 {offsets = [0, 256], sizes = [8, 128], strides = [1, 1]} : vector<8x512xf32> to vector<8x128xf32>
    %58 = math.tanh %57 : vector<8x128xf32>
    %59 = vector.extract_strided_slice %44 {offsets = [0, 384], sizes = [8, 128], strides = [1, 1]} : vector<8x512xf32> to vector<8x128xf32>
    %60 = arith.negf %59 : vector<8x128xf32>
    %61 = math.exp %60 : vector<8x128xf32>
    %cst_19 = arith.constant 1.000000e+00 : f32
    %62 = vector.broadcast %cst_19 : f32 to vector<8x128xf32>
    %63 = arith.addf %62, %61 : vector<8x128xf32>
    %64 = arith.divf %62, %63 : vector<8x128xf32>
    %65 = arith.mulf %56, %33 : vector<8x128xf32>
    %66 = arith.mulf %50, %58 : vector<8x128xf32>
    %67 = arith.addf %65, %66 : vector<8x128xf32>
    %68 = math.tanh %67 : vector<8x128xf32>
    %69 = arith.mulf %64, %68 : vector<8x128xf32>
    %70 = arith.index_cast %c1_i32 : i32 to index
    %c0_20 = arith.constant 0 : index
    %c0_21 = arith.constant 0 : index
    %71 = vector.load %arg5[%70, %c0_20, %c0_21] : memref<16x8x128xf32, #tpu.memory_space<vmem>>, vector<1x8x128xf32>
    %72 = vector.shape_cast %71 : vector<1x8x128xf32> to vector<8x128xf32>
    %73 = vector.shape_cast %69 : vector<8x128xf32> to vector<1x8x128xf32>
    tpu.vector_store %arg5[%70, %c0_20, %c0_21], %73 {strides = array<i32>} : memref<16x8x128xf32, #tpu.memory_space<vmem>>, vector<1x8x128xf32>,
    %c2_i32 = arith.constant 2 : i32
    %74 = arith.index_cast %c2_i32 : i32 to index
    %c0_22 = arith.constant 0 : index
    %c0_23 = arith.constant 0 : index
    %75 = vector.load %arg1[%74, %c0_22, %c0_23] : memref<16x8x512xf32, #tpu.memory_space<vmem>>, vector<1x8x512xf32>
    %76 = vector.shape_cast %75 : vector<1x8x512xf32> to vector<8x512xf32>
    %cst_24 = arith.constant dense<0.000000e+00> : vector<8x512xf32>
    %77 = tpu.matmul %69, %3, %cst_24 {dimension_numbers = #tpu.dot_dimension_numbers<[1], [0], [0], [1], [0, 0, 1, 1], [], []>} : vector<8x128xf32>, vector<128x512xf32>, vector<8x512xf32> -> vector<8x512xf32>
    %78 = arith.addf %76, %77 : vector<8x512xf32>
    %79 = vector.extract_strided_slice %78 {offsets = [0, 0], sizes = [8, 128], strides = [1, 1]} : vector<8x512xf32> to vector<8x128xf32>
    %80 = arith.negf %79 : vector<8x128xf32>
    %81 = math.exp %80 : vector<8x128xf32>
    %cst_25 = arith.constant 1.000000e+00 : f32
    %82 = vector.broadcast %cst_25 : f32 to vector<8x128xf32>
    %83 = arith.addf %82, %81 : vector<8x128xf32>
    %84 = arith.divf %82, %83 : vector<8x128xf32>
    %85 = vector.extract_strided_slice %78 {offsets = [0, 128], sizes = [8, 128], strides = [1, 1]} : vector<8x512xf32> to vector<8x128xf32>
    %86 = arith.negf %85 : vector<8x128xf32>
    %87 = math.exp %86 : vector<8x128xf32>
    %cst_26 = arith.constant 1.000000e+00 : f32
    %88 = vector.broadcast %cst_26 : f32 to vector<8x128xf32>
    %89 = arith.addf %88, %87 : vector<8x128xf32>
    %90 = arith.divf %88, %89 : vector<8x128xf32>
    %91 = vector.extract_strided_slice %78 {offsets = [0, 256], sizes = [8, 128], strides = [1, 1]} : vector<8x512xf32> to vector<8x128xf32>
    %92 = math.tanh %91 : vector<8x128xf32>
    %93 = vector.extract_strided_slice %78 {offsets = [0, 384], sizes = [8, 128], strides = [1, 1]} : vector<8x512xf32> to vector<8x128xf32>
    %94 = arith.negf %93 : vector<8x128xf32>
    %95 = math.exp %94 : vector<8x128xf32>
    %cst_27 = arith.constant 1.000000e+00 : f32
    %96 = vector.broadcast %cst_27 : f32 to vector<8x128xf32>
    %97 = arith.addf %96, %95 : vector<8x128xf32>
    %98 = arith.divf %96, %97 : vector<8x128xf32>
    %99 = arith.mulf %90, %67 : vector<8x128xf32>
    %100 = arith.mulf %84, %92 : vector<8x128xf32>
    %101 = arith.addf %99, %100 : vector<8x128xf32>
    %102 = math.tanh %101 : vector<8x128xf32>
    %103 = arith.mulf %98, %102 : vector<8x128xf32>
    %104 = arith.index_cast %c2_i32 : i32 to index
    %c0_28 = arith.constant 0 : index
    %c0_29 = arith.constant 0 : index
    %105 = vector.load %arg5[%104, %c0_28, %c0_29] : memref<16x8x128xf32, #tpu.memory_space<vmem>>, vector<1x8x128xf32>
    %106 = vector.shape_cast %105 : vector<1x8x128xf32> to vector<8x128xf32>
    %107 = vector.shape_cast %103 : vector<8x128xf32> to vector<1x8x128xf32>
    tpu.vector_store %arg5[%104, %c0_28, %c0_29], %107 {strides = array<i32>} : memref<16x8x128xf32, #tpu.memory_space<vmem>>, vector<1x8x128xf32>,
    %c3_i32 = arith.constant 3 : i32
    %108 = arith.index_cast %c3_i32 : i32 to index
    %c0_30 = arith.constant 0 : index
    %c0_31 = arith.constant 0 : index
    %109 = vector.load %arg1[%108, %c0_30, %c0_31] : memref<16x8x512xf32, #tpu.memory_space<vmem>>, vector<1x8x512xf32>
    %110 = vector.shape_cast %109 : vector<1x8x512xf32> to vector<8x512xf32>
    %cst_32 = arith.constant dense<0.000000e+00> : vector<8x512xf32>
    %111 = tpu.matmul %103, %3, %cst_32 {dimension_numbers = #tpu.dot_dimension_numbers<[1], [0], [0], [1], [0, 0, 1, 1], [], []>} : vector<8x128xf32>, vector<128x512xf32>, vector<8x512xf32> -> vector<8x512xf32>
    %112 = arith.addf %110, %111 : vector<8x512xf32>
    %113 = vector.extract_strided_slice %112 {offsets = [0, 0], sizes = [8, 128], strides = [1, 1]} : vector<8x512xf32> to vector<8x128xf32>
    %114 = arith.negf %113 : vector<8x128xf32>
    %115 = math.exp %114 : vector<8x128xf32>
    %cst_33 = arith.constant 1.000000e+00 : f32
    %116 = vector.broadcast %cst_33 : f32 to vector<8x128xf32>
    %117 = arith.addf %116, %115 : vector<8x128xf32>
    %118 = arith.divf %116, %117 : vector<8x128xf32>
    %119 = vector.extract_strided_slice %112 {offsets = [0, 128], sizes = [8, 128], strides = [1, 1]} : vector<8x512xf32> to vector<8x128xf32>
    %120 = arith.negf %119 : vector<8x128xf32>
    %121 = math.exp %120 : vector<8x128xf32>
    %cst_34 = arith.constant 1.000000e+00 : f32
    %122 = vector.broadcast %cst_34 : f32 to vector<8x128xf32>
    %123 = arith.addf %122, %121 : vector<8x128xf32>
    %124 = arith.divf %122, %123 : vector<8x128xf32>
    %125 = vector.extract_strided_slice %112 {offsets = [0, 256], sizes = [8, 128], strides = [1, 1]} : vector<8x512xf32> to vector<8x128xf32>
    %126 = math.tanh %125 : vector<8x128xf32>
    %127 = vector.extract_strided_slice %112 {offsets = [0, 384], sizes = [8, 128], strides = [1, 1]} : vector<8x512xf32> to vector<8x128xf32>
    %128 = arith.negf %127 : vector<8x128xf32>
    %129 = math.exp %128 : vector<8x128xf32>
    %cst_35 = arith.constant 1.000000e+00 : f32
    %130 = vector.broadcast %cst_35 : f32 to vector<8x128xf32>
    %131 = arith.addf %130, %129 : vector<8x128xf32>
    %132 = arith.divf %130, %131 : vector<8x128xf32>
    %133 = arith.mulf %124, %101 : vector<8x128xf32>
    %134 = arith.mulf %118, %126 : vector<8x128xf32>
    %135 = arith.addf %133, %134 : vector<8x128xf32>
    %136 = math.tanh %135 : vector<8x128xf32>
    %137 = arith.mulf %132, %136 : vector<8x128xf32>
    %138 = arith.index_cast %c3_i32 : i32 to index
    %c0_36 = arith.constant 0 : index
    %c0_37 = arith.constant 0 : index
    %139 = vector.load %arg5[%138, %c0_36, %c0_37] : memref<16x8x128xf32, #tpu.memory_space<vmem>>, vector<1x8x128xf32>
    %140 = vector.shape_cast %139 : vector<1x8x128xf32> to vector<8x128xf32>
    %141 = vector.shape_cast %137 : vector<8x128xf32> to vector<1x8x128xf32>
    tpu.vector_store %arg5[%138, %c0_36, %c0_37], %141 {strides = array<i32>} : memref<16x8x128xf32, #tpu.memory_space<vmem>>, vector<1x8x128xf32>,
    %c4_i32 = arith.constant 4 : i32
    %142 = arith.index_cast %c4_i32 : i32 to index
    %c0_38 = arith.constant 0 : index
    %c0_39 = arith.constant 0 : index
    %143 = vector.load %arg1[%142, %c0_38, %c0_39] : memref<16x8x512xf32, #tpu.memory_space<vmem>>, vector<1x8x512xf32>
    %144 = vector.shape_cast %143 : vector<1x8x512xf32> to vector<8x512xf32>
    %cst_40 = arith.constant dense<0.000000e+00> : vector<8x512xf32>
    %145 = tpu.matmul %137, %3, %cst_40 {dimension_numbers = #tpu.dot_dimension_numbers<[1], [0], [0], [1], [0, 0, 1, 1], [], []>} : vector<8x128xf32>, vector<128x512xf32>, vector<8x512xf32> -> vector<8x512xf32>
    %146 = arith.addf %144, %145 : vector<8x512xf32>
    %147 = vector.extract_strided_slice %146 {offsets = [0, 0], sizes = [8, 128], strides = [1, 1]} : vector<8x512xf32> to vector<8x128xf32>
    %148 = arith.negf %147 : vector<8x128xf32>
    %149 = math.exp %148 : vector<8x128xf32>
    %cst_41 = arith.constant 1.000000e+00 : f32
    %150 = vector.broadcast %cst_41 : f32 to vector<8x128xf32>
    %151 = arith.addf %150, %149 : vector<8x128xf32>
    %152 = arith.divf %150, %151 : vector<8x128xf32>
    %153 = vector.extract_strided_slice %146 {offsets = [0, 128], sizes = [8, 128], strides = [1, 1]} : vector<8x512xf32> to vector<8x128xf32>
    %154 = arith.negf %153 : vector<8x128xf32>
    %155 = math.exp %154 : vector<8x128xf32>
    %cst_42 = arith.constant 1.000000e+00 : f32
    %156 = vector.broadcast %cst_42 : f32 to vector<8x128xf32>
    %157 = arith.addf %156, %155 : vector<8x128xf32>
    %158 = arith.divf %156, %157 : vector<8x128xf32>
    %159 = vector.extract_strided_slice %146 {offsets = [0, 256], sizes = [8, 128], strides = [1, 1]} : vector<8x512xf32> to vector<8x128xf32>
    %160 = math.tanh %159 : vector<8x128xf32>
    %161 = vector.extract_strided_slice %146 {offsets = [0, 384], sizes = [8, 128], strides = [1, 1]} : vector<8x512xf32> to vector<8x128xf32>
    %162 = arith.negf %161 : vector<8x128xf32>
    %163 = math.exp %162 : vector<8x128xf32>
    %cst_43 = arith.constant 1.000000e+00 : f32
    %164 = vector.broadcast %cst_43 : f32 to vector<8x128xf32>
    %165 = arith.addf %164, %163 : vector<8x128xf32>
    %166 = arith.divf %164, %165 : vector<8x128xf32>
    %167 = arith.mulf %158, %135 : vector<8x128xf32>
    %168 = arith.mulf %152, %160 : vector<8x128xf32>
    %169 = arith.addf %167, %168 : vector<8x128xf32>
    %170 = math.tanh %169 : vector<8x128xf32>
    %171 = arith.mulf %166, %170 : vector<8x128xf32>
    %172 = arith.index_cast %c4_i32 : i32 to index
    %c0_44 = arith.constant 0 : index
    %c0_45 = arith.constant 0 : index
    %173 = vector.load %arg5[%172, %c0_44, %c0_45] : memref<16x8x128xf32, #tpu.memory_space<vmem>>, vector<1x8x128xf32>
    %174 = vector.shape_cast %173 : vector<1x8x128xf32> to vector<8x128xf32>
    %175 = vector.shape_cast %171 : vector<8x128xf32> to vector<1x8x128xf32>
    tpu.vector_store %arg5[%172, %c0_44, %c0_45], %175 {strides = array<i32>} : memref<16x8x128xf32, #tpu.memory_space<vmem>>, vector<1x8x128xf32>,
    %c5_i32 = arith.constant 5 : i32
    %176 = arith.index_cast %c5_i32 : i32 to index
    %c0_46 = arith.constant 0 : index
    %c0_47 = arith.constant 0 : index
    %177 = vector.load %arg1[%176, %c0_46, %c0_47] : memref<16x8x512xf32, #tpu.memory_space<vmem>>, vector<1x8x512xf32>
    %178 = vector.shape_cast %177 : vector<1x8x512xf32> to vector<8x512xf32>
    %cst_48 = arith.constant dense<0.000000e+00> : vector<8x512xf32>
    %179 = tpu.matmul %171, %3, %cst_48 {dimension_numbers = #tpu.dot_dimension_numbers<[1], [0], [0], [1], [0, 0, 1, 1], [], []>} : vector<8x128xf32>, vector<128x512xf32>, vector<8x512xf32> -> vector<8x512xf32>
    %180 = arith.addf %178, %179 : vector<8x512xf32>
    %181 = vector.extract_strided_slice %180 {offsets = [0, 0], sizes = [8, 128], strides = [1, 1]} : vector<8x512xf32> to vector<8x128xf32>
    %182 = arith.negf %181 : vector<8x128xf32>
    %183 = math.exp %182 : vector<8x128xf32>
    %cst_49 = arith.constant 1.000000e+00 : f32
    %184 = vector.broadcast %cst_49 : f32 to vector<8x128xf32>
    %185 = arith.addf %184, %183 : vector<8x128xf32>
    %186 = arith.divf %184, %185 : vector<8x128xf32>
    %187 = vector.extract_strided_slice %180 {offsets = [0, 128], sizes = [8, 128], strides = [1, 1]} : vector<8x512xf32> to vector<8x128xf32>
    %188 = arith.negf %187 : vector<8x128xf32>
    %189 = math.exp %188 : vector<8x128xf32>
    %cst_50 = arith.constant 1.000000e+00 : f32
    %190 = vector.broadcast %cst_50 : f32 to vector<8x128xf32>
    %191 = arith.addf %190, %189 : vector<8x128xf32>
    %192 = arith.divf %190, %191 : vector<8x128xf32>
    %193 = vector.extract_strided_slice %180 {offsets = [0, 256], sizes = [8, 128], strides = [1, 1]} : vector<8x512xf32> to vector<8x128xf32>
    %194 = math.tanh %193 : vector<8x128xf32>
    %195 = vector.extract_strided_slice %180 {offsets = [0, 384], sizes = [8, 128], strides = [1, 1]} : vector<8x512xf32> to vector<8x128xf32>
    %196 = arith.negf %195 : vector<8x128xf32>
    %197 = math.exp %196 : vector<8x128xf32>
    %cst_51 = arith.constant 1.000000e+00 : f32
    %198 = vector.broadcast %cst_51 : f32 to vector<8x128xf32>
    %199 = arith.addf %198, %197 : vector<8x128xf32>
    %200 = arith.divf %198, %199 : vector<8x128xf32>
    %201 = arith.mulf %192, %169 : vector<8x128xf32>
    %202 = arith.mulf %186, %194 : vector<8x128xf32>
    %203 = arith.addf %201, %202 : vector<8x128xf32>
    %204 = math.tanh %203 : vector<8x128xf32>
    %205 = arith.mulf %200, %204 : vector<8x128xf32>
    %206 = arith.index_cast %c5_i32 : i32 to index
    %c0_52 = arith.constant 0 : index
    %c0_53 = arith.constant 0 : index
    %207 = vector.load %arg5[%206, %c0_52, %c0_53] : memref<16x8x128xf32, #tpu.memory_space<vmem>>, vector<1x8x128xf32>
    %208 = vector.shape_cast %207 : vector<1x8x128xf32> to vector<8x128xf32>
    %209 = vector.shape_cast %205 : vector<8x128xf32> to vector<1x8x128xf32>
    tpu.vector_store %arg5[%206, %c0_52, %c0_53], %209 {strides = array<i32>} : memref<16x8x128xf32, #tpu.memory_space<vmem>>, vector<1x8x128xf32>,
    %c6_i32 = arith.constant 6 : i32
    %210 = arith.index_cast %c6_i32 : i32 to index
    %c0_54 = arith.constant 0 : index
    %c0_55 = arith.constant 0 : index
    %211 = vector.load %arg1[%210, %c0_54, %c0_55] : memref<16x8x512xf32, #tpu.memory_space<vmem>>, vector<1x8x512xf32>
    %212 = vector.shape_cast %211 : vector<1x8x512xf32> to vector<8x512xf32>
    %cst_56 = arith.constant dense<0.000000e+00> : vector<8x512xf32>
    %213 = tpu.matmul %205, %3, %cst_56 {dimension_numbers = #tpu.dot_dimension_numbers<[1], [0], [0], [1], [0, 0, 1, 1], [], []>} : vector<8x128xf32>, vector<128x512xf32>, vector<8x512xf32> -> vector<8x512xf32>
    %214 = arith.addf %212, %213 : vector<8x512xf32>
    %215 = vector.extract_strided_slice %214 {offsets = [0, 0], sizes = [8, 128], strides = [1, 1]} : vector<8x512xf32> to vector<8x128xf32>
    %216 = arith.negf %215 : vector<8x128xf32>
    %217 = math.exp %216 : vector<8x128xf32>
    %cst_57 = arith.constant 1.000000e+00 : f32
    %218 = vector.broadcast %cst_57 : f32 to vector<8x128xf32>
    %219 = arith.addf %218, %217 : vector<8x128xf32>
    %220 = arith.divf %218, %219 : vector<8x128xf32>
    %221 = vector.extract_strided_slice %214 {offsets = [0, 128], sizes = [8, 128], strides = [1, 1]} : vector<8x512xf32> to vector<8x128xf32>
    %222 = arith.negf %221 : vector<8x128xf32>
    %223 = math.exp %222 : vector<8x128xf32>
    %cst_58 = arith.constant 1.000000e+00 : f32
    %224 = vector.broadcast %cst_58 : f32 to vector<8x128xf32>
    %225 = arith.addf %224, %223 : vector<8x128xf32>
    %226 = arith.divf %224, %225 : vector<8x128xf32>
    %227 = vector.extract_strided_slice %214 {offsets = [0, 256], sizes = [8, 128], strides = [1, 1]} : vector<8x512xf32> to vector<8x128xf32>
    %228 = math.tanh %227 : vector<8x128xf32>
    %229 = vector.extract_strided_slice %214 {offsets = [0, 384], sizes = [8, 128], strides = [1, 1]} : vector<8x512xf32> to vector<8x128xf32>
    %230 = arith.negf %229 : vector<8x128xf32>
    %231 = math.exp %230 : vector<8x128xf32>
    %cst_59 = arith.constant 1.000000e+00 : f32
    %232 = vector.broadcast %cst_59 : f32 to vector<8x128xf32>
    %233 = arith.addf %232, %231 : vector<8x128xf32>
    %234 = arith.divf %232, %233 : vector<8x128xf32>
    %235 = arith.mulf %226, %203 : vector<8x128xf32>
    %236 = arith.mulf %220, %228 : vector<8x128xf32>
    %237 = arith.addf %235, %236 : vector<8x128xf32>
    %238 = math.tanh %237 : vector<8x128xf32>
    %239 = arith.mulf %234, %238 : vector<8x128xf32>
    %240 = arith.index_cast %c6_i32 : i32 to index
    %c0_60 = arith.constant 0 : index
    %c0_61 = arith.constant 0 : index
    %241 = vector.load %arg5[%240, %c0_60, %c0_61] : memref<16x8x128xf32, #tpu.memory_space<vmem>>, vector<1x8x128xf32>
    %242 = vector.shape_cast %241 : vector<1x8x128xf32> to vector<8x128xf32>
    %243 = vector.shape_cast %239 : vector<8x128xf32> to vector<1x8x128xf32>
    tpu.vector_store %arg5[%240, %c0_60, %c0_61], %243 {strides = array<i32>} : memref<16x8x128xf32, #tpu.memory_space<vmem>>, vector<1x8x128xf32>,
    %c7_i32 = arith.constant 7 : i32
    %244 = arith.index_cast %c7_i32 : i32 to index
    %c0_62 = arith.constant 0 : index
    %c0_63 = arith.constant 0 : index
    %245 = vector.load %arg1[%244, %c0_62, %c0_63] : memref<16x8x512xf32, #tpu.memory_space<vmem>>, vector<1x8x512xf32>
    %246 = vector.shape_cast %245 : vector<1x8x512xf32> to vector<8x512xf32>
    %cst_64 = arith.constant dense<0.000000e+00> : vector<8x512xf32>
    %247 = tpu.matmul %239, %3, %cst_64 {dimension_numbers = #tpu.dot_dimension_numbers<[1], [0], [0], [1], [0, 0, 1, 1], [], []>} : vector<8x128xf32>, vector<128x512xf32>, vector<8x512xf32> -> vector<8x512xf32>
    %248 = arith.addf %246, %247 : vector<8x512xf32>
    %249 = vector.extract_strided_slice %248 {offsets = [0, 0], sizes = [8, 128], strides = [1, 1]} : vector<8x512xf32> to vector<8x128xf32>
    %250 = arith.negf %249 : vector<8x128xf32>
    %251 = math.exp %250 : vector<8x128xf32>
    %cst_65 = arith.constant 1.000000e+00 : f32
    %252 = vector.broadcast %cst_65 : f32 to vector<8x128xf32>
    %253 = arith.addf %252, %251 : vector<8x128xf32>
    %254 = arith.divf %252, %253 : vector<8x128xf32>
    %255 = vector.extract_strided_slice %248 {offsets = [0, 128], sizes = [8, 128], strides = [1, 1]} : vector<8x512xf32> to vector<8x128xf32>
    %256 = arith.negf %255 : vector<8x128xf32>
    %257 = math.exp %256 : vector<8x128xf32>
    %cst_66 = arith.constant 1.000000e+00 : f32
    %258 = vector.broadcast %cst_66 : f32 to vector<8x128xf32>
    %259 = arith.addf %258, %257 : vector<8x128xf32>
    %260 = arith.divf %258, %259 : vector<8x128xf32>
    %261 = vector.extract_strided_slice %248 {offsets = [0, 256], sizes = [8, 128], strides = [1, 1]} : vector<8x512xf32> to vector<8x128xf32>
    %262 = math.tanh %261 : vector<8x128xf32>
    %263 = vector.extract_strided_slice %248 {offsets = [0, 384], sizes = [8, 128], strides = [1, 1]} : vector<8x512xf32> to vector<8x128xf32>
    %264 = arith.negf %263 : vector<8x128xf32>
    %265 = math.exp %264 : vector<8x128xf32>
    %cst_67 = arith.constant 1.000000e+00 : f32
    %266 = vector.broadcast %cst_67 : f32 to vector<8x128xf32>
    %267 = arith.addf %266, %265 : vector<8x128xf32>
    %268 = arith.divf %266, %267 : vector<8x128xf32>
    %269 = arith.mulf %260, %237 : vector<8x128xf32>
    %270 = arith.mulf %254, %262 : vector<8x128xf32>
    %271 = arith.addf %269, %270 : vector<8x128xf32>
    %272 = math.tanh %271 : vector<8x128xf32>
    %273 = arith.mulf %268, %272 : vector<8x128xf32>
    %274 = arith.index_cast %c7_i32 : i32 to index
    %c0_68 = arith.constant 0 : index
    %c0_69 = arith.constant 0 : index
    %275 = vector.load %arg5[%274, %c0_68, %c0_69] : memref<16x8x128xf32, #tpu.memory_space<vmem>>, vector<1x8x128xf32>
    %276 = vector.shape_cast %275 : vector<1x8x128xf32> to vector<8x128xf32>
    %277 = vector.shape_cast %273 : vector<8x128xf32> to vector<1x8x128xf32>
    tpu.vector_store %arg5[%274, %c0_68, %c0_69], %277 {strides = array<i32>} : memref<16x8x128xf32, #tpu.memory_space<vmem>>, vector<1x8x128xf32>,
    %c8_i32 = arith.constant 8 : i32
    %278 = arith.index_cast %c8_i32 : i32 to index
    %c0_70 = arith.constant 0 : index
    %c0_71 = arith.constant 0 : index
    %279 = vector.load %arg1[%278, %c0_70, %c0_71] : memref<16x8x512xf32, #tpu.memory_space<vmem>>, vector<1x8x512xf32>
    %280 = vector.shape_cast %279 : vector<1x8x512xf32> to vector<8x512xf32>
    %cst_72 = arith.constant dense<0.000000e+00> : vector<8x512xf32>
    %281 = tpu.matmul %273, %3, %cst_72 {dimension_numbers = #tpu.dot_dimension_numbers<[1], [0], [0], [1], [0, 0, 1, 1], [], []>} : vector<8x128xf32>, vector<128x512xf32>, vector<8x512xf32> -> vector<8x512xf32>
    %282 = arith.addf %280, %281 : vector<8x512xf32>
    %283 = vector.extract_strided_slice %282 {offsets = [0, 0], sizes = [8, 128], strides = [1, 1]} : vector<8x512xf32> to vector<8x128xf32>
    %284 = arith.negf %283 : vector<8x128xf32>
    %285 = math.exp %284 : vector<8x128xf32>
    %cst_73 = arith.constant 1.000000e+00 : f32
    %286 = vector.broadcast %cst_73 : f32 to vector<8x128xf32>
    %287 = arith.addf %286, %285 : vector<8x128xf32>
    %288 = arith.divf %286, %287 : vector<8x128xf32>
    %289 = vector.extract_strided_slice %282 {offsets = [0, 128], sizes = [8, 128], strides = [1, 1]} : vector<8x512xf32> to vector<8x128xf32>
    %290 = arith.negf %289 : vector<8x128xf32>
    %291 = math.exp %290 : vector<8x128xf32>
    %cst_74 = arith.constant 1.000000e+00 : f32
    %292 = vector.broadcast %cst_74 : f32 to vector<8x128xf32>
    %293 = arith.addf %292, %291 : vector<8x128xf32>
    %294 = arith.divf %292, %293 : vector<8x128xf32>
    %295 = vector.extract_strided_slice %282 {offsets = [0, 256], sizes = [8, 128], strides = [1, 1]} : vector<8x512xf32> to vector<8x128xf32>
    %296 = math.tanh %295 : vector<8x128xf32>
    %297 = vector.extract_strided_slice %282 {offsets = [0, 384], sizes = [8, 128], strides = [1, 1]} : vector<8x512xf32> to vector<8x128xf32>
    %298 = arith.negf %297 : vector<8x128xf32>
    %299 = math.exp %298 : vector<8x128xf32>
    %cst_75 = arith.constant 1.000000e+00 : f32
    %300 = vector.broadcast %cst_75 : f32 to vector<8x128xf32>
    %301 = arith.addf %300, %299 : vector<8x128xf32>
    %302 = arith.divf %300, %301 : vector<8x128xf32>
    %303 = arith.mulf %294, %271 : vector<8x128xf32>
    %304 = arith.mulf %288, %296 : vector<8x128xf32>
    %305 = arith.addf %303, %304 : vector<8x128xf32>
    %306 = math.tanh %305 : vector<8x128xf32>
    %307 = arith.mulf %302, %306 : vector<8x128xf32>
    %308 = arith.index_cast %c8_i32 : i32 to index
    %c0_76 = arith.constant 0 : index
    %c0_77 = arith.constant 0 : index
    %309 = vector.load %arg5[%308, %c0_76, %c0_77] : memref<16x8x128xf32, #tpu.memory_space<vmem>>, vector<1x8x128xf32>
    %310 = vector.shape_cast %309 : vector<1x8x128xf32> to vector<8x128xf32>
    %311 = vector.shape_cast %307 : vector<8x128xf32> to vector<1x8x128xf32>
    tpu.vector_store %arg5[%308, %c0_76, %c0_77], %311 {strides = array<i32>} : memref<16x8x128xf32, #tpu.memory_space<vmem>>, vector<1x8x128xf32>,
    %c9_i32 = arith.constant 9 : i32
    %312 = arith.index_cast %c9_i32 : i32 to index
    %c0_78 = arith.constant 0 : index
    %c0_79 = arith.constant 0 : index
    %313 = vector.load %arg1[%312, %c0_78, %c0_79] : memref<16x8x512xf32, #tpu.memory_space<vmem>>, vector<1x8x512xf32>
    %314 = vector.shape_cast %313 : vector<1x8x512xf32> to vector<8x512xf32>
    %cst_80 = arith.constant dense<0.000000e+00> : vector<8x512xf32>
    %315 = tpu.matmul %307, %3, %cst_80 {dimension_numbers = #tpu.dot_dimension_numbers<[1], [0], [0], [1], [0, 0, 1, 1], [], []>} : vector<8x128xf32>, vector<128x512xf32>, vector<8x512xf32> -> vector<8x512xf32>
    %316 = arith.addf %314, %315 : vector<8x512xf32>
    %317 = vector.extract_strided_slice %316 {offsets = [0, 0], sizes = [8, 128], strides = [1, 1]} : vector<8x512xf32> to vector<8x128xf32>
    %318 = arith.negf %317 : vector<8x128xf32>
    %319 = math.exp %318 : vector<8x128xf32>
    %cst_81 = arith.constant 1.000000e+00 : f32
    %320 = vector.broadcast %cst_81 : f32 to vector<8x128xf32>
    %321 = arith.addf %320, %319 : vector<8x128xf32>
    %322 = arith.divf %320, %321 : vector<8x128xf32>
    %323 = vector.extract_strided_slice %316 {offsets = [0, 128], sizes = [8, 128], strides = [1, 1]} : vector<8x512xf32> to vector<8x128xf32>
    %324 = arith.negf %323 : vector<8x128xf32>
    %325 = math.exp %324 : vector<8x128xf32>
    %cst_82 = arith.constant 1.000000e+00 : f32
    %326 = vector.broadcast %cst_82 : f32 to vector<8x128xf32>
    %327 = arith.addf %326, %325 : vector<8x128xf32>
    %328 = arith.divf %326, %327 : vector<8x128xf32>
    %329 = vector.extract_strided_slice %316 {offsets = [0, 256], sizes = [8, 128], strides = [1, 1]} : vector<8x512xf32> to vector<8x128xf32>
    %330 = math.tanh %329 : vector<8x128xf32>
    %331 = vector.extract_strided_slice %316 {offsets = [0, 384], sizes = [8, 128], strides = [1, 1]} : vector<8x512xf32> to vector<8x128xf32>
    %332 = arith.negf %331 : vector<8x128xf32>
    %333 = math.exp %332 : vector<8x128xf32>
    %cst_83 = arith.constant 1.000000e+00 : f32
    %334 = vector.broadcast %cst_83 : f32 to vector<8x128xf32>
    %335 = arith.addf %334, %333 : vector<8x128xf32>
    %336 = arith.divf %334, %335 : vector<8x128xf32>
    %337 = arith.mulf %328, %305 : vector<8x128xf32>
    %338 = arith.mulf %322, %330 : vector<8x128xf32>
    %339 = arith.addf %337, %338 : vector<8x128xf32>
    %340 = math.tanh %339 : vector<8x128xf32>
    %341 = arith.mulf %336, %340 : vector<8x128xf32>
    %342 = arith.index_cast %c9_i32 : i32 to index
    %c0_84 = arith.constant 0 : index
    %c0_85 = arith.constant 0 : index
    %343 = vector.load %arg5[%342, %c0_84, %c0_85] : memref<16x8x128xf32, #tpu.memory_space<vmem>>, vector<1x8x128xf32>
    %344 = vector.shape_cast %343 : vector<1x8x128xf32> to vector<8x128xf32>
    %345 = vector.shape_cast %341 : vector<8x128xf32> to vector<1x8x128xf32>
    tpu.vector_store %arg5[%342, %c0_84, %c0_85], %345 {strides = array<i32>} : memref<16x8x128xf32, #tpu.memory_space<vmem>>, vector<1x8x128xf32>,
    %c10_i32 = arith.constant 10 : i32
    %346 = arith.index_cast %c10_i32 : i32 to index
    %c0_86 = arith.constant 0 : index
    %c0_87 = arith.constant 0 : index
    %347 = vector.load %arg1[%346, %c0_86, %c0_87] : memref<16x8x512xf32, #tpu.memory_space<vmem>>, vector<1x8x512xf32>
    %348 = vector.shape_cast %347 : vector<1x8x512xf32> to vector<8x512xf32>
    %cst_88 = arith.constant dense<0.000000e+00> : vector<8x512xf32>
    %349 = tpu.matmul %341, %3, %cst_88 {dimension_numbers = #tpu.dot_dimension_numbers<[1], [0], [0], [1], [0, 0, 1, 1], [], []>} : vector<8x128xf32>, vector<128x512xf32>, vector<8x512xf32> -> vector<8x512xf32>
    %350 = arith.addf %348, %349 : vector<8x512xf32>
    %351 = vector.extract_strided_slice %350 {offsets = [0, 0], sizes = [8, 128], strides = [1, 1]} : vector<8x512xf32> to vector<8x128xf32>
    %352 = arith.negf %351 : vector<8x128xf32>
    %353 = math.exp %352 : vector<8x128xf32>
    %cst_89 = arith.constant 1.000000e+00 : f32
    %354 = vector.broadcast %cst_89 : f32 to vector<8x128xf32>
    %355 = arith.addf %354, %353 : vector<8x128xf32>
    %356 = arith.divf %354, %355 : vector<8x128xf32>
    %357 = vector.extract_strided_slice %350 {offsets = [0, 128], sizes = [8, 128], strides = [1, 1]} : vector<8x512xf32> to vector<8x128xf32>
    %358 = arith.negf %357 : vector<8x128xf32>
    %359 = math.exp %358 : vector<8x128xf32>
    %cst_90 = arith.constant 1.000000e+00 : f32
    %360 = vector.broadcast %cst_90 : f32 to vector<8x128xf32>
    %361 = arith.addf %360, %359 : vector<8x128xf32>
    %362 = arith.divf %360, %361 : vector<8x128xf32>
    %363 = vector.extract_strided_slice %350 {offsets = [0, 256], sizes = [8, 128], strides = [1, 1]} : vector<8x512xf32> to vector<8x128xf32>
    %364 = math.tanh %363 : vector<8x128xf32>
    %365 = vector.extract_strided_slice %350 {offsets = [0, 384], sizes = [8, 128], strides = [1, 1]} : vector<8x512xf32> to vector<8x128xf32>
    %366 = arith.negf %365 : vector<8x128xf32>
    %367 = math.exp %366 : vector<8x128xf32>
    %cst_91 = arith.constant 1.000000e+00 : f32
    %368 = vector.broadcast %cst_91 : f32 to vector<8x128xf32>
    %369 = arith.addf %368, %367 : vector<8x128xf32>
    %370 = arith.divf %368, %369 : vector<8x128xf32>
    %371 = arith.mulf %362, %339 : vector<8x128xf32>
    %372 = arith.mulf %356, %364 : vector<8x128xf32>
    %373 = arith.addf %371, %372 : vector<8x128xf32>
    %374 = math.tanh %373 : vector<8x128xf32>
    %375 = arith.mulf %370, %374 : vector<8x128xf32>
    %376 = arith.index_cast %c10_i32 : i32 to index
    %c0_92 = arith.constant 0 : index
    %c0_93 = arith.constant 0 : index
    %377 = vector.load %arg5[%376, %c0_92, %c0_93] : memref<16x8x128xf32, #tpu.memory_space<vmem>>, vector<1x8x128xf32>
    %378 = vector.shape_cast %377 : vector<1x8x128xf32> to vector<8x128xf32>
    %379 = vector.shape_cast %375 : vector<8x128xf32> to vector<1x8x128xf32>
    tpu.vector_store %arg5[%376, %c0_92, %c0_93], %379 {strides = array<i32>} : memref<16x8x128xf32, #tpu.memory_space<vmem>>, vector<1x8x128xf32>,
    %c11_i32 = arith.constant 11 : i32
    %380 = arith.index_cast %c11_i32 : i32 to index
    %c0_94 = arith.constant 0 : index
    %c0_95 = arith.constant 0 : index
    %381 = vector.load %arg1[%380, %c0_94, %c0_95] : memref<16x8x512xf32, #tpu.memory_space<vmem>>, vector<1x8x512xf32>
    %382 = vector.shape_cast %381 : vector<1x8x512xf32> to vector<8x512xf32>
    %cst_96 = arith.constant dense<0.000000e+00> : vector<8x512xf32>
    %383 = tpu.matmul %375, %3, %cst_96 {dimension_numbers = #tpu.dot_dimension_numbers<[1], [0], [0], [1], [0, 0, 1, 1], [], []>} : vector<8x128xf32>, vector<128x512xf32>, vector<8x512xf32> -> vector<8x512xf32>
    %384 = arith.addf %382, %383 : vector<8x512xf32>
    %385 = vector.extract_strided_slice %384 {offsets = [0, 0], sizes = [8, 128], strides = [1, 1]} : vector<8x512xf32> to vector<8x128xf32>
    %386 = arith.negf %385 : vector<8x128xf32>
    %387 = math.exp %386 : vector<8x128xf32>
    %cst_97 = arith.constant 1.000000e+00 : f32
    %388 = vector.broadcast %cst_97 : f32 to vector<8x128xf32>
    %389 = arith.addf %388, %387 : vector<8x128xf32>
    %390 = arith.divf %388, %389 : vector<8x128xf32>
    %391 = vector.extract_strided_slice %384 {offsets = [0, 128], sizes = [8, 128], strides = [1, 1]} : vector<8x512xf32> to vector<8x128xf32>
    %392 = arith.negf %391 : vector<8x128xf32>
    %393 = math.exp %392 : vector<8x128xf32>
    %cst_98 = arith.constant 1.000000e+00 : f32
    %394 = vector.broadcast %cst_98 : f32 to vector<8x128xf32>
    %395 = arith.addf %394, %393 : vector<8x128xf32>
    %396 = arith.divf %394, %395 : vector<8x128xf32>
    %397 = vector.extract_strided_slice %384 {offsets = [0, 256], sizes = [8, 128], strides = [1, 1]} : vector<8x512xf32> to vector<8x128xf32>
    %398 = math.tanh %397 : vector<8x128xf32>
    %399 = vector.extract_strided_slice %384 {offsets = [0, 384], sizes = [8, 128], strides = [1, 1]} : vector<8x512xf32> to vector<8x128xf32>
    %400 = arith.negf %399 : vector<8x128xf32>
    %401 = math.exp %400 : vector<8x128xf32>
    %cst_99 = arith.constant 1.000000e+00 : f32
    %402 = vector.broadcast %cst_99 : f32 to vector<8x128xf32>
    %403 = arith.addf %402, %401 : vector<8x128xf32>
    %404 = arith.divf %402, %403 : vector<8x128xf32>
    %405 = arith.mulf %396, %373 : vector<8x128xf32>
    %406 = arith.mulf %390, %398 : vector<8x128xf32>
    %407 = arith.addf %405, %406 : vector<8x128xf32>
    %408 = math.tanh %407 : vector<8x128xf32>
    %409 = arith.mulf %404, %408 : vector<8x128xf32>
    %410 = arith.index_cast %c11_i32 : i32 to index
    %c0_100 = arith.constant 0 : index
    %c0_101 = arith.constant 0 : index
    %411 = vector.load %arg5[%410, %c0_100, %c0_101] : memref<16x8x128xf32, #tpu.memory_space<vmem>>, vector<1x8x128xf32>
    %412 = vector.shape_cast %411 : vector<1x8x128xf32> to vector<8x128xf32>
    %413 = vector.shape_cast %409 : vector<8x128xf32> to vector<1x8x128xf32>
    tpu.vector_store %arg5[%410, %c0_100, %c0_101], %413 {strides = array<i32>} : memref<16x8x128xf32, #tpu.memory_space<vmem>>, vector<1x8x128xf32>,
    %c12_i32 = arith.constant 12 : i32
    %414 = arith.index_cast %c12_i32 : i32 to index
    %c0_102 = arith.constant 0 : index
    %c0_103 = arith.constant 0 : index
    %415 = vector.load %arg1[%414, %c0_102, %c0_103] : memref<16x8x512xf32, #tpu.memory_space<vmem>>, vector<1x8x512xf32>
    %416 = vector.shape_cast %415 : vector<1x8x512xf32> to vector<8x512xf32>
    %cst_104 = arith.constant dense<0.000000e+00> : vector<8x512xf32>
    %417 = tpu.matmul %409, %3, %cst_104 {dimension_numbers = #tpu.dot_dimension_numbers<[1], [0], [0], [1], [0, 0, 1, 1], [], []>} : vector<8x128xf32>, vector<128x512xf32>, vector<8x512xf32> -> vector<8x512xf32>
    %418 = arith.addf %416, %417 : vector<8x512xf32>
    %419 = vector.extract_strided_slice %418 {offsets = [0, 0], sizes = [8, 128], strides = [1, 1]} : vector<8x512xf32> to vector<8x128xf32>
    %420 = arith.negf %419 : vector<8x128xf32>
    %421 = math.exp %420 : vector<8x128xf32>
    %cst_105 = arith.constant 1.000000e+00 : f32
    %422 = vector.broadcast %cst_105 : f32 to vector<8x128xf32>
    %423 = arith.addf %422, %421 : vector<8x128xf32>
    %424 = arith.divf %422, %423 : vector<8x128xf32>
    %425 = vector.extract_strided_slice %418 {offsets = [0, 128], sizes = [8, 128], strides = [1, 1]} : vector<8x512xf32> to vector<8x128xf32>
    %426 = arith.negf %425 : vector<8x128xf32>
    %427 = math.exp %426 : vector<8x128xf32>
    %cst_106 = arith.constant 1.000000e+00 : f32
    %428 = vector.broadcast %cst_106 : f32 to vector<8x128xf32>
    %429 = arith.addf %428, %427 : vector<8x128xf32>
    %430 = arith.divf %428, %429 : vector<8x128xf32>
    %431 = vector.extract_strided_slice %418 {offsets = [0, 256], sizes = [8, 128], strides = [1, 1]} : vector<8x512xf32> to vector<8x128xf32>
    %432 = math.tanh %431 : vector<8x128xf32>
    %433 = vector.extract_strided_slice %418 {offsets = [0, 384], sizes = [8, 128], strides = [1, 1]} : vector<8x512xf32> to vector<8x128xf32>
    %434 = arith.negf %433 : vector<8x128xf32>
    %435 = math.exp %434 : vector<8x128xf32>
    %cst_107 = arith.constant 1.000000e+00 : f32
    %436 = vector.broadcast %cst_107 : f32 to vector<8x128xf32>
    %437 = arith.addf %436, %435 : vector<8x128xf32>
    %438 = arith.divf %436, %437 : vector<8x128xf32>
    %439 = arith.mulf %430, %407 : vector<8x128xf32>
    %440 = arith.mulf %424, %432 : vector<8x128xf32>
    %441 = arith.addf %439, %440 : vector<8x128xf32>
    %442 = math.tanh %441 : vector<8x128xf32>
    %443 = arith.mulf %438, %442 : vector<8x128xf32>
    %444 = arith.index_cast %c12_i32 : i32 to index
    %c0_108 = arith.constant 0 : index
    %c0_109 = arith.constant 0 : index
    %445 = vector.load %arg5[%444, %c0_108, %c0_109] : memref<16x8x128xf32, #tpu.memory_space<vmem>>, vector<1x8x128xf32>
    %446 = vector.shape_cast %445 : vector<1x8x128xf32> to vector<8x128xf32>
    %447 = vector.shape_cast %443 : vector<8x128xf32> to vector<1x8x128xf32>
    tpu.vector_store %arg5[%444, %c0_108, %c0_109], %447 {strides = array<i32>} : memref<16x8x128xf32, #tpu.memory_space<vmem>>, vector<1x8x128xf32>,
    %c13_i32 = arith.constant 13 : i32
    %448 = arith.index_cast %c13_i32 : i32 to index
    %c0_110 = arith.constant 0 : index
    %c0_111 = arith.constant 0 : index
    %449 = vector.load %arg1[%448, %c0_110, %c0_111] : memref<16x8x512xf32, #tpu.memory_space<vmem>>, vector<1x8x512xf32>
    %450 = vector.shape_cast %449 : vector<1x8x512xf32> to vector<8x512xf32>
    %cst_112 = arith.constant dense<0.000000e+00> : vector<8x512xf32>
    %451 = tpu.matmul %443, %3, %cst_112 {dimension_numbers = #tpu.dot_dimension_numbers<[1], [0], [0], [1], [0, 0, 1, 1], [], []>} : vector<8x128xf32>, vector<128x512xf32>, vector<8x512xf32> -> vector<8x512xf32>
    %452 = arith.addf %450, %451 : vector<8x512xf32>
    %453 = vector.extract_strided_slice %452 {offsets = [0, 0], sizes = [8, 128], strides = [1, 1]} : vector<8x512xf32> to vector<8x128xf32>
    %454 = arith.negf %453 : vector<8x128xf32>
    %455 = math.exp %454 : vector<8x128xf32>
    %cst_113 = arith.constant 1.000000e+00 : f32
    %456 = vector.broadcast %cst_113 : f32 to vector<8x128xf32>
    %457 = arith.addf %456, %455 : vector<8x128xf32>
    %458 = arith.divf %456, %457 : vector<8x128xf32>
    %459 = vector.extract_strided_slice %452 {offsets = [0, 128], sizes = [8, 128], strides = [1, 1]} : vector<8x512xf32> to vector<8x128xf32>
    %460 = arith.negf %459 : vector<8x128xf32>
    %461 = math.exp %460 : vector<8x128xf32>
    %cst_114 = arith.constant 1.000000e+00 : f32
    %462 = vector.broadcast %cst_114 : f32 to vector<8x128xf32>
    %463 = arith.addf %462, %461 : vector<8x128xf32>
    %464 = arith.divf %462, %463 : vector<8x128xf32>
    %465 = vector.extract_strided_slice %452 {offsets = [0, 256], sizes = [8, 128], strides = [1, 1]} : vector<8x512xf32> to vector<8x128xf32>
    %466 = math.tanh %465 : vector<8x128xf32>
    %467 = vector.extract_strided_slice %452 {offsets = [0, 384], sizes = [8, 128], strides = [1, 1]} : vector<8x512xf32> to vector<8x128xf32>
    %468 = arith.negf %467 : vector<8x128xf32>
    %469 = math.exp %468 : vector<8x128xf32>
    %cst_115 = arith.constant 1.000000e+00 : f32
    %470 = vector.broadcast %cst_115 : f32 to vector<8x128xf32>
    %471 = arith.addf %470, %469 : vector<8x128xf32>
    %472 = arith.divf %470, %471 : vector<8x128xf32>
    %473 = arith.mulf %464, %441 : vector<8x128xf32>
    %474 = arith.mulf %458, %466 : vector<8x128xf32>
    %475 = arith.addf %473, %474 : vector<8x128xf32>
    %476 = math.tanh %475 : vector<8x128xf32>
    %477 = arith.mulf %472, %476 : vector<8x128xf32>
    %478 = arith.index_cast %c13_i32 : i32 to index
    %c0_116 = arith.constant 0 : index
    %c0_117 = arith.constant 0 : index
    %479 = vector.load %arg5[%478, %c0_116, %c0_117] : memref<16x8x128xf32, #tpu.memory_space<vmem>>, vector<1x8x128xf32>
    %480 = vector.shape_cast %479 : vector<1x8x128xf32> to vector<8x128xf32>
    %481 = vector.shape_cast %477 : vector<8x128xf32> to vector<1x8x128xf32>
    tpu.vector_store %arg5[%478, %c0_116, %c0_117], %481 {strides = array<i32>} : memref<16x8x128xf32, #tpu.memory_space<vmem>>, vector<1x8x128xf32>,
    %c14_i32 = arith.constant 14 : i32
    %482 = arith.index_cast %c14_i32 : i32 to index
    %c0_118 = arith.constant 0 : index
    %c0_119 = arith.constant 0 : index
    %483 = vector.load %arg1[%482, %c0_118, %c0_119] : memref<16x8x512xf32, #tpu.memory_space<vmem>>, vector<1x8x512xf32>
    %484 = vector.shape_cast %483 : vector<1x8x512xf32> to vector<8x512xf32>
    %cst_120 = arith.constant dense<0.000000e+00> : vector<8x512xf32>
    %485 = tpu.matmul %477, %3, %cst_120 {dimension_numbers = #tpu.dot_dimension_numbers<[1], [0], [0], [1], [0, 0, 1, 1], [], []>} : vector<8x128xf32>, vector<128x512xf32>, vector<8x512xf32> -> vector<8x512xf32>
    %486 = arith.addf %484, %485 : vector<8x512xf32>
    %487 = vector.extract_strided_slice %486 {offsets = [0, 0], sizes = [8, 128], strides = [1, 1]} : vector<8x512xf32> to vector<8x128xf32>
    %488 = arith.negf %487 : vector<8x128xf32>
    %489 = math.exp %488 : vector<8x128xf32>
    %cst_121 = arith.constant 1.000000e+00 : f32
    %490 = vector.broadcast %cst_121 : f32 to vector<8x128xf32>
    %491 = arith.addf %490, %489 : vector<8x128xf32>
    %492 = arith.divf %490, %491 : vector<8x128xf32>
    %493 = vector.extract_strided_slice %486 {offsets = [0, 128], sizes = [8, 128], strides = [1, 1]} : vector<8x512xf32> to vector<8x128xf32>
    %494 = arith.negf %493 : vector<8x128xf32>
    %495 = math.exp %494 : vector<8x128xf32>
    %cst_122 = arith.constant 1.000000e+00 : f32
    %496 = vector.broadcast %cst_122 : f32 to vector<8x128xf32>
    %497 = arith.addf %496, %495 : vector<8x128xf32>
    %498 = arith.divf %496, %497 : vector<8x128xf32>
    %499 = vector.extract_strided_slice %486 {offsets = [0, 256], sizes = [8, 128], strides = [1, 1]} : vector<8x512xf32> to vector<8x128xf32>
    %500 = math.tanh %499 : vector<8x128xf32>
    %501 = vector.extract_strided_slice %486 {offsets = [0, 384], sizes = [8, 128], strides = [1, 1]} : vector<8x512xf32> to vector<8x128xf32>
    %502 = arith.negf %501 : vector<8x128xf32>
    %503 = math.exp %502 : vector<8x128xf32>
    %cst_123 = arith.constant 1.000000e+00 : f32
    %504 = vector.broadcast %cst_123 : f32 to vector<8x128xf32>
    %505 = arith.addf %504, %503 : vector<8x128xf32>
    %506 = arith.divf %504, %505 : vector<8x128xf32>
    %507 = arith.mulf %498, %475 : vector<8x128xf32>
    %508 = arith.mulf %492, %500 : vector<8x128xf32>
    %509 = arith.addf %507, %508 : vector<8x128xf32>
    %510 = math.tanh %509 : vector<8x128xf32>
    %511 = arith.mulf %506, %510 : vector<8x128xf32>
    %512 = arith.index_cast %c14_i32 : i32 to index
    %c0_124 = arith.constant 0 : index
    %c0_125 = arith.constant 0 : index
    %513 = vector.load %arg5[%512, %c0_124, %c0_125] : memref<16x8x128xf32, #tpu.memory_space<vmem>>, vector<1x8x128xf32>
    %514 = vector.shape_cast %513 : vector<1x8x128xf32> to vector<8x128xf32>
    %515 = vector.shape_cast %511 : vector<8x128xf32> to vector<1x8x128xf32>
    tpu.vector_store %arg5[%512, %c0_124, %c0_125], %515 {strides = array<i32>} : memref<16x8x128xf32, #tpu.memory_space<vmem>>, vector<1x8x128xf32>,
    %c15_i32 = arith.constant 15 : i32
    %516 = arith.index_cast %c15_i32 : i32 to index
    %c0_126 = arith.constant 0 : index
    %c0_127 = arith.constant 0 : index
    %517 = vector.load %arg1[%516, %c0_126, %c0_127] : memref<16x8x512xf32, #tpu.memory_space<vmem>>, vector<1x8x512xf32>
    %518 = vector.shape_cast %517 : vector<1x8x512xf32> to vector<8x512xf32>
    %cst_128 = arith.constant dense<0.000000e+00> : vector<8x512xf32>
    %519 = tpu.matmul %511, %3, %cst_128 {dimension_numbers = #tpu.dot_dimension_numbers<[1], [0], [0], [1], [0, 0, 1, 1], [], []>} : vector<8x128xf32>, vector<128x512xf32>, vector<8x512xf32> -> vector<8x512xf32>
    %520 = arith.addf %518, %519 : vector<8x512xf32>
    %521 = vector.extract_strided_slice %520 {offsets = [0, 0], sizes = [8, 128], strides = [1, 1]} : vector<8x512xf32> to vector<8x128xf32>
    %522 = arith.negf %521 : vector<8x128xf32>
    %523 = math.exp %522 : vector<8x128xf32>
    %cst_129 = arith.constant 1.000000e+00 : f32
    %524 = vector.broadcast %cst_129 : f32 to vector<8x128xf32>
    %525 = arith.addf %524, %523 : vector<8x128xf32>
    %526 = arith.divf %524, %525 : vector<8x128xf32>
    %527 = vector.extract_strided_slice %520 {offsets = [0, 128], sizes = [8, 128], strides = [1, 1]} : vector<8x512xf32> to vector<8x128xf32>
    %528 = arith.negf %527 : vector<8x128xf32>
    %529 = math.exp %528 : vector<8x128xf32>
    %cst_130 = arith.constant 1.000000e+00 : f32
    %530 = vector.broadcast %cst_130 : f32 to vector<8x128xf32>
    %531 = arith.addf %530, %529 : vector<8x128xf32>
    %532 = arith.divf %530, %531 : vector<8x128xf32>
    %533 = vector.extract_strided_slice %520 {offsets = [0, 256], sizes = [8, 128], strides = [1, 1]} : vector<8x512xf32> to vector<8x128xf32>
    %534 = math.tanh %533 : vector<8x128xf32>
    %535 = vector.extract_strided_slice %520 {offsets = [0, 384], sizes = [8, 128], strides = [1, 1]} : vector<8x512xf32> to vector<8x128xf32>
    %536 = arith.negf %535 : vector<8x128xf32>
    %537 = math.exp %536 : vector<8x128xf32>
    %cst_131 = arith.constant 1.000000e+00 : f32
    %538 = vector.broadcast %cst_131 : f32 to vector<8x128xf32>
    %539 = arith.addf %538, %537 : vector<8x128xf32>
    %540 = arith.divf %538, %539 : vector<8x128xf32>
    %541 = arith.mulf %532, %509 : vector<8x128xf32>
    %542 = arith.mulf %526, %534 : vector<8x128xf32>
    %543 = arith.addf %541, %542 : vector<8x128xf32>
    %544 = math.tanh %543 : vector<8x128xf32>
    %545 = arith.mulf %540, %544 : vector<8x128xf32>
    %546 = arith.index_cast %c15_i32 : i32 to index
    %c0_132 = arith.constant 0 : index
    %c0_133 = arith.constant 0 : index
    %547 = vector.load %arg5[%546, %c0_132, %c0_133] : memref<16x8x128xf32, #tpu.memory_space<vmem>>, vector<1x8x128xf32>
    %548 = vector.shape_cast %547 : vector<1x8x128xf32> to vector<8x128xf32>
    %549 = vector.shape_cast %545 : vector<8x128xf32> to vector<1x8x128xf32>
    tpu.vector_store %arg5[%546, %c0_132, %c0_133], %549 {strides = array<i32>} : memref<16x8x128xf32, #tpu.memory_space<vmem>>, vector<1x8x128xf32>,
    %c16_i32 = arith.constant 16 : i32
    %c0_134 = arith.constant 0 : index
    %c0_135 = arith.constant 0 : index
    %550 = vector.load %arg7[%c0_134, %c0_135] : memref<8x128xf32, #tpu.memory_space<vmem>>, vector<8x128xf32>
    tpu.vector_store %arg7[%c0_134, %c0_135], %545 {strides = array<i32>} : memref<8x128xf32, #tpu.memory_space<vmem>>, vector<8x128xf32>,
    %c0_136 = arith.constant 0 : index
    %c0_137 = arith.constant 0 : index
    %551 = vector.load %arg8[%c0_136, %c0_137] : memref<8x128xf32, #tpu.memory_space<vmem>>, vector<8x128xf32>
    tpu.vector_store %arg8[%c0_136, %c0_137], %543 {strides = array<i32>} : memref<8x128xf32, #tpu.memory_space<vmem>>, vector<8x128xf32>,
    %c0_i32_138 = arith.constant 0 : i32
    %552 = arith.cmpi eq, %arg0, %c0_i32_138 : i32
    %553 = arith.extui %552 : i1 to i32
    %c0_i32_139 = arith.constant 0 : i32
    %554 = arith.cmpi ne, %553, %c0_i32_139 : i32
    scf.if %554 {
      %c0_140 = arith.constant 0 : index
      %c0_141 = arith.constant 0 : index
      %555 = vector.load %arg6[%c0_140, %c0_141] : memref<8x128xf32, #tpu.memory_space<vmem>>, vector<8x128xf32>
      tpu.vector_store %arg6[%c0_140, %c0_141], %543 {strides = array<i32>} : memref<8x128xf32, #tpu.memory_space<vmem>>, vector<8x128xf32>,
    } else {
    }
    return
  }
  func.func @transform_0(%arg0: i32) -> (i32, i32, i32) {
    %c0_i32 = arith.constant 0 : i32
    %c0_i32_0 = arith.constant 0 : i32
    %c0_i32_1 = arith.constant 0 : i32
    return %arg0, %c0_i32, %c0_i32_0 : i32, i32, i32
  }
  func.func @transform_1(%arg0: i32) -> (i32, i32) {
    %c0_i32 = arith.constant 0 : i32
    %c0_i32_0 = arith.constant 0 : i32
    %c0_i32_1 = arith.constant 0 : i32
    return %c0_i32, %c0_i32_0 : i32, i32
  }
  func.func @transform_2(%arg0: i32) -> (i32, i32) {
    %c0_i32 = arith.constant 0 : i32
    %c0_i32_0 = arith.constant 0 : i32
    %c0_i32_1 = arith.constant 0 : i32
    return %c0_i32, %c0_i32_0 : i32, i32
  }
  func.func @transform_3(%arg0: i32) -> (i32, i32) {
    %c0_i32 = arith.constant 0 : i32
    %c0_i32_0 = arith.constant 0 : i32
    %c0_i32_1 = arith.constant 0 : i32
    return %c0_i32, %c0_i32_0 : i32, i32
  }
  func.func @transform_4(%arg0: i32) -> (i32, i32, i32) {
    %c0_i32 = arith.constant 0 : i32
    %c0_i32_0 = arith.constant 0 : i32
    %c0_i32_1 = arith.constant 0 : i32
    return %arg0, %c0_i32, %c0_i32_0 : i32, i32, i32
  }
  func.func @transform_5(%arg0: i32) -> (i32, i32) {
    %c0_i32 = arith.constant 0 : i32
    %c0_i32_0 = arith.constant 0 : i32
    %c0_i32_1 = arith.constant 0 : i32
    return %c0_i32, %c0_i32_0 : i32, i32
  }
}

module attributes {stable_mosaic.version = 11 : i64} {
  func.func @_proj_kernel(%arg0: i32, %arg1: memref<32x128xf32, #tpu.memory_space<vmem>>, %arg2: memref<128x512xf32, #tpu.memory_space<vmem>>, %arg3: memref<1x512xf32, #tpu.memory_space<vmem>>, %arg4: memref<32x512xf32, #tpu.memory_space<vmem>>) attributes {dimension_semantics = [#tpu.dimension_semantics<parallel>], iteration_bounds = array<i64: 1>, scalar_prefetch = 0 : i64, scratch_operands = 0 : i64, tpu.core_type = #tpu.core_type<tc>, window_params = [{transform_indices = @transform_0, window_bounds = array<i64: 32, 128>}, {pipeline_mode = #tpu.pipeline_mode<synchronous>, transform_indices = @transform_1, window_bounds = array<i64: 128, 512>}, {pipeline_mode = #tpu.pipeline_mode<synchronous>, transform_indices = @transform_2, window_bounds = array<i64: 1, 512>}, {transform_indices = @transform_3, window_bounds = array<i64: 32, 512>}]} {
    %c0 = arith.constant 0 : index
    %c0_0 = arith.constant 0 : index
    %0 = vector.load %arg1[%c0, %c0_0] : memref<32x128xf32, #tpu.memory_space<vmem>>, vector<32x128xf32>
    %c0_1 = arith.constant 0 : index
    %c0_2 = arith.constant 0 : index
    %1 = vector.load %arg2[%c0_1, %c0_2] : memref<128x512xf32, #tpu.memory_space<vmem>>, vector<128x512xf32>
    %cst = arith.constant dense<0.000000e+00> : vector<32x512xf32>
    %2 = tpu.matmul %0, %1, %cst {dimension_numbers = #tpu.dot_dimension_numbers<[1], [0], [0], [1], [0, 0, 1, 1], [], []>} : vector<32x128xf32>, vector<128x512xf32>, vector<32x512xf32> -> vector<32x512xf32>
    %c0_3 = arith.constant 0 : index
    %c0_4 = arith.constant 0 : index
    %3 = vector.load %arg3[%c0_3, %c0_4] : memref<1x512xf32, #tpu.memory_space<vmem>>, vector<1x512xf32>
    %4 = vector.broadcast %3 : vector<1x512xf32> to vector<32x512xf32>
    %5 = arith.addf %2, %4 : vector<32x512xf32>
    %c0_5 = arith.constant 0 : index
    %c0_6 = arith.constant 0 : index
    %6 = vector.load %arg4[%c0_5, %c0_6] : memref<32x512xf32, #tpu.memory_space<vmem>>, vector<32x512xf32>
    tpu.vector_store %arg4[%c0_5, %c0_6], %5 {strides = array<i32>} : memref<32x512xf32, #tpu.memory_space<vmem>>, vector<32x512xf32>,
    return
  }
  func.func @transform_0(%arg0: i32) -> (i32, i32) {
    %c0_i32 = arith.constant 0 : i32
    %c0_i32_0 = arith.constant 0 : i32
    return %arg0, %c0_i32 : i32, i32
  }
  func.func @transform_1(%arg0: i32) -> (i32, i32) {
    %c0_i32 = arith.constant 0 : i32
    %c0_i32_0 = arith.constant 0 : i32
    %c0_i32_1 = arith.constant 0 : i32
    return %c0_i32, %c0_i32_0 : i32, i32
  }
  func.func @transform_2(%arg0: i32) -> (i32, i32) {
    %c0_i32 = arith.constant 0 : i32
    %c0_i32_0 = arith.constant 0 : i32
    %c0_i32_1 = arith.constant 0 : i32
    return %c0_i32, %c0_i32_0 : i32, i32
  }
  func.func @transform_3(%arg0: i32) -> (i32, i32) {
    %c0_i32 = arith.constant 0 : i32
    %c0_i32_0 = arith.constant 0 : i32
    return %arg0, %c0_i32 : i32, i32
  }
}

module attributes {stable_mosaic.version = 11 : i64} {
  func.func @_lstm_scan_kernel(%arg0: i32, %arg1: memref<4x8x512xf32, #tpu.memory_space<vmem>>, %arg2: memref<128x512xf32, #tpu.memory_space<vmem>>, %arg3: memref<8x128xf32, #tpu.memory_space<vmem>>, %arg4: memref<8x128xf32, #tpu.memory_space<vmem>>, %arg5: memref<4x8x128xf32, #tpu.memory_space<vmem>>, %arg6: memref<8x128xf32, #tpu.memory_space<vmem>>, %arg7: memref<8x128xf32, #tpu.memory_space<vmem>>, %arg8: memref<8x128xf32, #tpu.memory_space<vmem>>) attributes {dimension_semantics = [#tpu.dimension_semantics<arbitrary>], iteration_bounds = array<i64: 1>, scalar_prefetch = 0 : i64, scratch_operands = 2 : i64, tpu.core_type = #tpu.core_type<tc>, window_params = [{transform_indices = @transform_0, window_bounds = array<i64: 4, 8, 512>}, {pipeline_mode = #tpu.pipeline_mode<synchronous>, transform_indices = @transform_1, window_bounds = array<i64: 128, 512>}, {pipeline_mode = #tpu.pipeline_mode<synchronous>, transform_indices = @transform_2, window_bounds = array<i64: 8, 128>}, {pipeline_mode = #tpu.pipeline_mode<synchronous>, transform_indices = @transform_3, window_bounds = array<i64: 8, 128>}, {transform_indices = @transform_4, window_bounds = array<i64: 4, 8, 128>}, {pipeline_mode = #tpu.pipeline_mode<synchronous>, transform_indices = @transform_5, window_bounds = array<i64: 8, 128>}]} {
    %c0_i32 = arith.constant 0 : i32
    %0 = arith.cmpi eq, %arg0, %c0_i32 : i32
    %1 = arith.extui %0 : i1 to i32
    %c0_i32_0 = arith.constant 0 : i32
    %2 = arith.cmpi ne, %1, %c0_i32_0 : i32
    scf.if %2 {
      %c0_44 = arith.constant 0 : index
      %c0_45 = arith.constant 0 : index
      %147 = vector.load %arg3[%c0_44, %c0_45] : memref<8x128xf32, #tpu.memory_space<vmem>>, vector<8x128xf32>
      %c0_46 = arith.constant 0 : index
      %c0_47 = arith.constant 0 : index
      %148 = vector.load %arg7[%c0_46, %c0_47] : memref<8x128xf32, #tpu.memory_space<vmem>>, vector<8x128xf32>
      tpu.vector_store %arg7[%c0_46, %c0_47], %147 {strides = array<i32>} : memref<8x128xf32, #tpu.memory_space<vmem>>, vector<8x128xf32>,
      %c0_48 = arith.constant 0 : index
      %c0_49 = arith.constant 0 : index
      %149 = vector.load %arg4[%c0_48, %c0_49] : memref<8x128xf32, #tpu.memory_space<vmem>>, vector<8x128xf32>
      %c0_50 = arith.constant 0 : index
      %c0_51 = arith.constant 0 : index
      %150 = vector.load %arg8[%c0_50, %c0_51] : memref<8x128xf32, #tpu.memory_space<vmem>>, vector<8x128xf32>
      tpu.vector_store %arg8[%c0_50, %c0_51], %149 {strides = array<i32>} : memref<8x128xf32, #tpu.memory_space<vmem>>, vector<8x128xf32>,
    } else {
    }
    %c0 = arith.constant 0 : index
    %c0_1 = arith.constant 0 : index
    %3 = vector.load %arg2[%c0, %c0_1] : memref<128x512xf32, #tpu.memory_space<vmem>>, vector<128x512xf32>
    %c0_2 = arith.constant 0 : index
    %c0_3 = arith.constant 0 : index
    %4 = vector.load %arg7[%c0_2, %c0_3] : memref<8x128xf32, #tpu.memory_space<vmem>>, vector<8x128xf32>
    %c0_4 = arith.constant 0 : index
    %c0_5 = arith.constant 0 : index
    %5 = vector.load %arg8[%c0_4, %c0_5] : memref<8x128xf32, #tpu.memory_space<vmem>>, vector<8x128xf32>
    %c0_i32_6 = arith.constant 0 : i32
    %6 = arith.index_cast %c0_i32_6 : i32 to index
    %c0_7 = arith.constant 0 : index
    %c0_8 = arith.constant 0 : index
    %7 = vector.load %arg1[%6, %c0_7, %c0_8] : memref<4x8x512xf32, #tpu.memory_space<vmem>>, vector<1x8x512xf32>
    %8 = vector.shape_cast %7 : vector<1x8x512xf32> to vector<8x512xf32>
    %cst = arith.constant dense<0.000000e+00> : vector<8x512xf32>
    %9 = tpu.matmul %4, %3, %cst {dimension_numbers = #tpu.dot_dimension_numbers<[1], [0], [0], [1], [0, 0, 1, 1], [], []>} : vector<8x128xf32>, vector<128x512xf32>, vector<8x512xf32> -> vector<8x512xf32>
    %10 = arith.addf %8, %9 : vector<8x512xf32>
    %11 = vector.extract_strided_slice %10 {offsets = [0, 0], sizes = [8, 128], strides = [1, 1]} : vector<8x512xf32> to vector<8x128xf32>
    %12 = arith.negf %11 : vector<8x128xf32>
    %13 = math.exp %12 : vector<8x128xf32>
    %cst_9 = arith.constant 1.000000e+00 : f32
    %14 = vector.broadcast %cst_9 : f32 to vector<8x128xf32>
    %15 = arith.addf %14, %13 : vector<8x128xf32>
    %16 = arith.divf %14, %15 : vector<8x128xf32>
    %17 = vector.extract_strided_slice %10 {offsets = [0, 128], sizes = [8, 128], strides = [1, 1]} : vector<8x512xf32> to vector<8x128xf32>
    %18 = arith.negf %17 : vector<8x128xf32>
    %19 = math.exp %18 : vector<8x128xf32>
    %cst_10 = arith.constant 1.000000e+00 : f32
    %20 = vector.broadcast %cst_10 : f32 to vector<8x128xf32>
    %21 = arith.addf %20, %19 : vector<8x128xf32>
    %22 = arith.divf %20, %21 : vector<8x128xf32>
    %23 = vector.extract_strided_slice %10 {offsets = [0, 256], sizes = [8, 128], strides = [1, 1]} : vector<8x512xf32> to vector<8x128xf32>
    %24 = math.tanh %23 : vector<8x128xf32>
    %25 = vector.extract_strided_slice %10 {offsets = [0, 384], sizes = [8, 128], strides = [1, 1]} : vector<8x512xf32> to vector<8x128xf32>
    %26 = arith.negf %25 : vector<8x128xf32>
    %27 = math.exp %26 : vector<8x128xf32>
    %cst_11 = arith.constant 1.000000e+00 : f32
    %28 = vector.broadcast %cst_11 : f32 to vector<8x128xf32>
    %29 = arith.addf %28, %27 : vector<8x128xf32>
    %30 = arith.divf %28, %29 : vector<8x128xf32>
    %31 = arith.mulf %22, %5 : vector<8x128xf32>
    %32 = arith.mulf %16, %24 : vector<8x128xf32>
    %33 = arith.addf %31, %32 : vector<8x128xf32>
    %34 = math.tanh %33 : vector<8x128xf32>
    %35 = arith.mulf %30, %34 : vector<8x128xf32>
    %36 = arith.index_cast %c0_i32_6 : i32 to index
    %c0_12 = arith.constant 0 : index
    %c0_13 = arith.constant 0 : index
    %37 = vector.load %arg5[%36, %c0_12, %c0_13] : memref<4x8x128xf32, #tpu.memory_space<vmem>>, vector<1x8x128xf32>
    %38 = vector.shape_cast %37 : vector<1x8x128xf32> to vector<8x128xf32>
    %39 = vector.shape_cast %35 : vector<8x128xf32> to vector<1x8x128xf32>
    tpu.vector_store %arg5[%36, %c0_12, %c0_13], %39 {strides = array<i32>} : memref<4x8x128xf32, #tpu.memory_space<vmem>>, vector<1x8x128xf32>,
    %c1_i32 = arith.constant 1 : i32
    %40 = arith.index_cast %c1_i32 : i32 to index
    %c0_14 = arith.constant 0 : index
    %c0_15 = arith.constant 0 : index
    %41 = vector.load %arg1[%40, %c0_14, %c0_15] : memref<4x8x512xf32, #tpu.memory_space<vmem>>, vector<1x8x512xf32>
    %42 = vector.shape_cast %41 : vector<1x8x512xf32> to vector<8x512xf32>
    %cst_16 = arith.constant dense<0.000000e+00> : vector<8x512xf32>
    %43 = tpu.matmul %35, %3, %cst_16 {dimension_numbers = #tpu.dot_dimension_numbers<[1], [0], [0], [1], [0, 0, 1, 1], [], []>} : vector<8x128xf32>, vector<128x512xf32>, vector<8x512xf32> -> vector<8x512xf32>
    %44 = arith.addf %42, %43 : vector<8x512xf32>
    %45 = vector.extract_strided_slice %44 {offsets = [0, 0], sizes = [8, 128], strides = [1, 1]} : vector<8x512xf32> to vector<8x128xf32>
    %46 = arith.negf %45 : vector<8x128xf32>
    %47 = math.exp %46 : vector<8x128xf32>
    %cst_17 = arith.constant 1.000000e+00 : f32
    %48 = vector.broadcast %cst_17 : f32 to vector<8x128xf32>
    %49 = arith.addf %48, %47 : vector<8x128xf32>
    %50 = arith.divf %48, %49 : vector<8x128xf32>
    %51 = vector.extract_strided_slice %44 {offsets = [0, 128], sizes = [8, 128], strides = [1, 1]} : vector<8x512xf32> to vector<8x128xf32>
    %52 = arith.negf %51 : vector<8x128xf32>
    %53 = math.exp %52 : vector<8x128xf32>
    %cst_18 = arith.constant 1.000000e+00 : f32
    %54 = vector.broadcast %cst_18 : f32 to vector<8x128xf32>
    %55 = arith.addf %54, %53 : vector<8x128xf32>
    %56 = arith.divf %54, %55 : vector<8x128xf32>
    %57 = vector.extract_strided_slice %44 {offsets = [0, 256], sizes = [8, 128], strides = [1, 1]} : vector<8x512xf32> to vector<8x128xf32>
    %58 = math.tanh %57 : vector<8x128xf32>
    %59 = vector.extract_strided_slice %44 {offsets = [0, 384], sizes = [8, 128], strides = [1, 1]} : vector<8x512xf32> to vector<8x128xf32>
    %60 = arith.negf %59 : vector<8x128xf32>
    %61 = math.exp %60 : vector<8x128xf32>
    %cst_19 = arith.constant 1.000000e+00 : f32
    %62 = vector.broadcast %cst_19 : f32 to vector<8x128xf32>
    %63 = arith.addf %62, %61 : vector<8x128xf32>
    %64 = arith.divf %62, %63 : vector<8x128xf32>
    %65 = arith.mulf %56, %33 : vector<8x128xf32>
    %66 = arith.mulf %50, %58 : vector<8x128xf32>
    %67 = arith.addf %65, %66 : vector<8x128xf32>
    %68 = math.tanh %67 : vector<8x128xf32>
    %69 = arith.mulf %64, %68 : vector<8x128xf32>
    %70 = arith.index_cast %c1_i32 : i32 to index
    %c0_20 = arith.constant 0 : index
    %c0_21 = arith.constant 0 : index
    %71 = vector.load %arg5[%70, %c0_20, %c0_21] : memref<4x8x128xf32, #tpu.memory_space<vmem>>, vector<1x8x128xf32>
    %72 = vector.shape_cast %71 : vector<1x8x128xf32> to vector<8x128xf32>
    %73 = vector.shape_cast %69 : vector<8x128xf32> to vector<1x8x128xf32>
    tpu.vector_store %arg5[%70, %c0_20, %c0_21], %73 {strides = array<i32>} : memref<4x8x128xf32, #tpu.memory_space<vmem>>, vector<1x8x128xf32>,
    %c2_i32 = arith.constant 2 : i32
    %74 = arith.index_cast %c2_i32 : i32 to index
    %c0_22 = arith.constant 0 : index
    %c0_23 = arith.constant 0 : index
    %75 = vector.load %arg1[%74, %c0_22, %c0_23] : memref<4x8x512xf32, #tpu.memory_space<vmem>>, vector<1x8x512xf32>
    %76 = vector.shape_cast %75 : vector<1x8x512xf32> to vector<8x512xf32>
    %cst_24 = arith.constant dense<0.000000e+00> : vector<8x512xf32>
    %77 = tpu.matmul %69, %3, %cst_24 {dimension_numbers = #tpu.dot_dimension_numbers<[1], [0], [0], [1], [0, 0, 1, 1], [], []>} : vector<8x128xf32>, vector<128x512xf32>, vector<8x512xf32> -> vector<8x512xf32>
    %78 = arith.addf %76, %77 : vector<8x512xf32>
    %79 = vector.extract_strided_slice %78 {offsets = [0, 0], sizes = [8, 128], strides = [1, 1]} : vector<8x512xf32> to vector<8x128xf32>
    %80 = arith.negf %79 : vector<8x128xf32>
    %81 = math.exp %80 : vector<8x128xf32>
    %cst_25 = arith.constant 1.000000e+00 : f32
    %82 = vector.broadcast %cst_25 : f32 to vector<8x128xf32>
    %83 = arith.addf %82, %81 : vector<8x128xf32>
    %84 = arith.divf %82, %83 : vector<8x128xf32>
    %85 = vector.extract_strided_slice %78 {offsets = [0, 128], sizes = [8, 128], strides = [1, 1]} : vector<8x512xf32> to vector<8x128xf32>
    %86 = arith.negf %85 : vector<8x128xf32>
    %87 = math.exp %86 : vector<8x128xf32>
    %cst_26 = arith.constant 1.000000e+00 : f32
    %88 = vector.broadcast %cst_26 : f32 to vector<8x128xf32>
    %89 = arith.addf %88, %87 : vector<8x128xf32>
    %90 = arith.divf %88, %89 : vector<8x128xf32>
    %91 = vector.extract_strided_slice %78 {offsets = [0, 256], sizes = [8, 128], strides = [1, 1]} : vector<8x512xf32> to vector<8x128xf32>
    %92 = math.tanh %91 : vector<8x128xf32>
    %93 = vector.extract_strided_slice %78 {offsets = [0, 384], sizes = [8, 128], strides = [1, 1]} : vector<8x512xf32> to vector<8x128xf32>
    %94 = arith.negf %93 : vector<8x128xf32>
    %95 = math.exp %94 : vector<8x128xf32>
    %cst_27 = arith.constant 1.000000e+00 : f32
    %96 = vector.broadcast %cst_27 : f32 to vector<8x128xf32>
    %97 = arith.addf %96, %95 : vector<8x128xf32>
    %98 = arith.divf %96, %97 : vector<8x128xf32>
    %99 = arith.mulf %90, %67 : vector<8x128xf32>
    %100 = arith.mulf %84, %92 : vector<8x128xf32>
    %101 = arith.addf %99, %100 : vector<8x128xf32>
    %102 = math.tanh %101 : vector<8x128xf32>
    %103 = arith.mulf %98, %102 : vector<8x128xf32>
    %104 = arith.index_cast %c2_i32 : i32 to index
    %c0_28 = arith.constant 0 : index
    %c0_29 = arith.constant 0 : index
    %105 = vector.load %arg5[%104, %c0_28, %c0_29] : memref<4x8x128xf32, #tpu.memory_space<vmem>>, vector<1x8x128xf32>
    %106 = vector.shape_cast %105 : vector<1x8x128xf32> to vector<8x128xf32>
    %107 = vector.shape_cast %103 : vector<8x128xf32> to vector<1x8x128xf32>
    tpu.vector_store %arg5[%104, %c0_28, %c0_29], %107 {strides = array<i32>} : memref<4x8x128xf32, #tpu.memory_space<vmem>>, vector<1x8x128xf32>,
    %c3_i32 = arith.constant 3 : i32
    %108 = arith.index_cast %c3_i32 : i32 to index
    %c0_30 = arith.constant 0 : index
    %c0_31 = arith.constant 0 : index
    %109 = vector.load %arg1[%108, %c0_30, %c0_31] : memref<4x8x512xf32, #tpu.memory_space<vmem>>, vector<1x8x512xf32>
    %110 = vector.shape_cast %109 : vector<1x8x512xf32> to vector<8x512xf32>
    %cst_32 = arith.constant dense<0.000000e+00> : vector<8x512xf32>
    %111 = tpu.matmul %103, %3, %cst_32 {dimension_numbers = #tpu.dot_dimension_numbers<[1], [0], [0], [1], [0, 0, 1, 1], [], []>} : vector<8x128xf32>, vector<128x512xf32>, vector<8x512xf32> -> vector<8x512xf32>
    %112 = arith.addf %110, %111 : vector<8x512xf32>
    %113 = vector.extract_strided_slice %112 {offsets = [0, 0], sizes = [8, 128], strides = [1, 1]} : vector<8x512xf32> to vector<8x128xf32>
    %114 = arith.negf %113 : vector<8x128xf32>
    %115 = math.exp %114 : vector<8x128xf32>
    %cst_33 = arith.constant 1.000000e+00 : f32
    %116 = vector.broadcast %cst_33 : f32 to vector<8x128xf32>
    %117 = arith.addf %116, %115 : vector<8x128xf32>
    %118 = arith.divf %116, %117 : vector<8x128xf32>
    %119 = vector.extract_strided_slice %112 {offsets = [0, 128], sizes = [8, 128], strides = [1, 1]} : vector<8x512xf32> to vector<8x128xf32>
    %120 = arith.negf %119 : vector<8x128xf32>
    %121 = math.exp %120 : vector<8x128xf32>
    %cst_34 = arith.constant 1.000000e+00 : f32
    %122 = vector.broadcast %cst_34 : f32 to vector<8x128xf32>
    %123 = arith.addf %122, %121 : vector<8x128xf32>
    %124 = arith.divf %122, %123 : vector<8x128xf32>
    %125 = vector.extract_strided_slice %112 {offsets = [0, 256], sizes = [8, 128], strides = [1, 1]} : vector<8x512xf32> to vector<8x128xf32>
    %126 = math.tanh %125 : vector<8x128xf32>
    %127 = vector.extract_strided_slice %112 {offsets = [0, 384], sizes = [8, 128], strides = [1, 1]} : vector<8x512xf32> to vector<8x128xf32>
    %128 = arith.negf %127 : vector<8x128xf32>
    %129 = math.exp %128 : vector<8x128xf32>
    %cst_35 = arith.constant 1.000000e+00 : f32
    %130 = vector.broadcast %cst_35 : f32 to vector<8x128xf32>
    %131 = arith.addf %130, %129 : vector<8x128xf32>
    %132 = arith.divf %130, %131 : vector<8x128xf32>
    %133 = arith.mulf %124, %101 : vector<8x128xf32>
    %134 = arith.mulf %118, %126 : vector<8x128xf32>
    %135 = arith.addf %133, %134 : vector<8x128xf32>
    %136 = math.tanh %135 : vector<8x128xf32>
    %137 = arith.mulf %132, %136 : vector<8x128xf32>
    %138 = arith.index_cast %c3_i32 : i32 to index
    %c0_36 = arith.constant 0 : index
    %c0_37 = arith.constant 0 : index
    %139 = vector.load %arg5[%138, %c0_36, %c0_37] : memref<4x8x128xf32, #tpu.memory_space<vmem>>, vector<1x8x128xf32>
    %140 = vector.shape_cast %139 : vector<1x8x128xf32> to vector<8x128xf32>
    %141 = vector.shape_cast %137 : vector<8x128xf32> to vector<1x8x128xf32>
    tpu.vector_store %arg5[%138, %c0_36, %c0_37], %141 {strides = array<i32>} : memref<4x8x128xf32, #tpu.memory_space<vmem>>, vector<1x8x128xf32>,
    %c4_i32 = arith.constant 4 : i32
    %c0_38 = arith.constant 0 : index
    %c0_39 = arith.constant 0 : index
    %142 = vector.load %arg7[%c0_38, %c0_39] : memref<8x128xf32, #tpu.memory_space<vmem>>, vector<8x128xf32>
    tpu.vector_store %arg7[%c0_38, %c0_39], %137 {strides = array<i32>} : memref<8x128xf32, #tpu.memory_space<vmem>>, vector<8x128xf32>,
    %c0_40 = arith.constant 0 : index
    %c0_41 = arith.constant 0 : index
    %143 = vector.load %arg8[%c0_40, %c0_41] : memref<8x128xf32, #tpu.memory_space<vmem>>, vector<8x128xf32>
    tpu.vector_store %arg8[%c0_40, %c0_41], %135 {strides = array<i32>} : memref<8x128xf32, #tpu.memory_space<vmem>>, vector<8x128xf32>,
    %c0_i32_42 = arith.constant 0 : i32
    %144 = arith.cmpi eq, %arg0, %c0_i32_42 : i32
    %145 = arith.extui %144 : i1 to i32
    %c0_i32_43 = arith.constant 0 : i32
    %146 = arith.cmpi ne, %145, %c0_i32_43 : i32
    scf.if %146 {
      %c0_44 = arith.constant 0 : index
      %c0_45 = arith.constant 0 : index
      %147 = vector.load %arg6[%c0_44, %c0_45] : memref<8x128xf32, #tpu.memory_space<vmem>>, vector<8x128xf32>
      tpu.vector_store %arg6[%c0_44, %c0_45], %135 {strides = array<i32>} : memref<8x128xf32, #tpu.memory_space<vmem>>, vector<8x128xf32>,
    } else {
    }
    return
  }
  func.func @transform_0(%arg0: i32) -> (i32, i32, i32) {
    %c0_i32 = arith.constant 0 : i32
    %c0_i32_0 = arith.constant 0 : i32
    %c0_i32_1 = arith.constant 0 : i32
    return %arg0, %c0_i32, %c0_i32_0 : i32, i32, i32
  }
  func.func @transform_1(%arg0: i32) -> (i32, i32) {
    %c0_i32 = arith.constant 0 : i32
    %c0_i32_0 = arith.constant 0 : i32
    %c0_i32_1 = arith.constant 0 : i32
    return %c0_i32, %c0_i32_0 : i32, i32
  }
  func.func @transform_2(%arg0: i32) -> (i32, i32) {
    %c0_i32 = arith.constant 0 : i32
    %c0_i32_0 = arith.constant 0 : i32
    %c0_i32_1 = arith.constant 0 : i32
    return %c0_i32, %c0_i32_0 : i32, i32
  }
  func.func @transform_3(%arg0: i32) -> (i32, i32) {
    %c0_i32 = arith.constant 0 : i32
    %c0_i32_0 = arith.constant 0 : i32
    %c0_i32_1 = arith.constant 0 : i32
    return %c0_i32, %c0_i32_0 : i32, i32
  }
  func.func @transform_4(%arg0: i32) -> (i32, i32, i32) {
    %c0_i32 = arith.constant 0 : i32
    %c0_i32_0 = arith.constant 0 : i32
    %c0_i32_1 = arith.constant 0 : i32
    return %arg0, %c0_i32, %c0_i32_0 : i32, i32, i32
  }
  func.func @transform_5(%arg0: i32) -> (i32, i32) {
    %c0_i32 = arith.constant 0 : i32
    %c0_i32_0 = arith.constant 0 : i32
    %c0_i32_1 = arith.constant 0 : i32
    return %c0_i32, %c0_i32_0 : i32, i32
  }
}

module attributes {stable_mosaic.version = 11 : i64} {
  func.func @_attention_kernel(%arg0: i32, %arg1: memref<8x4x128xf32, #tpu.memory_space<vmem>>, %arg2: memref<8x16x128xf32, #tpu.memory_space<vmem>>, %arg3: memref<128x128xf32, #tpu.memory_space<vmem>>, %arg4: memref<128x128xf32, #tpu.memory_space<vmem>>, %arg5: memref<8x4x128xf32, #tpu.memory_space<vmem>>, %arg6: memref<8x4x16xf32, #tpu.memory_space<vmem>>) attributes {dimension_semantics = [#tpu.dimension_semantics<parallel>], iteration_bounds = array<i64: 1>, scalar_prefetch = 0 : i64, scratch_operands = 0 : i64, tpu.core_type = #tpu.core_type<tc>, window_params = [{transform_indices = @transform_0, window_bounds = array<i64: 8, 4, 128>}, {transform_indices = @transform_1, window_bounds = array<i64: 8, 16, 128>}, {pipeline_mode = #tpu.pipeline_mode<synchronous>, transform_indices = @transform_2, window_bounds = array<i64: 128, 128>}, {pipeline_mode = #tpu.pipeline_mode<synchronous>, transform_indices = @transform_3, window_bounds = array<i64: 128, 128>}, {transform_indices = @transform_4, window_bounds = array<i64: 8, 4, 128>}, {transform_indices = @transform_5, window_bounds = array<i64: 8, 4, 16>}]} {
    %c0 = arith.constant 0 : index
    %c0_0 = arith.constant 0 : index
    %c0_1 = arith.constant 0 : index
    %0 = vector.load %arg1[%c0, %c0_0, %c0_1] : memref<8x4x128xf32, #tpu.memory_space<vmem>>, vector<8x4x128xf32>
    %c0_2 = arith.constant 0 : index
    %c0_3 = arith.constant 0 : index
    %c0_4 = arith.constant 0 : index
    %1 = vector.load %arg2[%c0_2, %c0_3, %c0_4] : memref<8x16x128xf32, #tpu.memory_space<vmem>>, vector<8x16x128xf32>
    "tpu.trace_start"() <{level = 10 : i32, message = "bth,bsh->bts"}> : () -> ()
    %cst = arith.constant dense<0.000000e+00> : vector<8x4x16xf32>
    %2 = tpu.matmul %0, %1, %cst {dimension_numbers = #tpu.dot_dimension_numbers<[2], [2], [1], [1], [0, 0, 0, 1, 1, 1], [0], [0]>} : vector<8x4x128xf32>, vector<8x16x128xf32>, vector<8x4x16xf32> -> vector<8x4x16xf32>
    "tpu.trace_stop"() : () -> ()
    %cst_5 = arith.constant dense<0xFF800000> : vector<8x4xf32>
    %3 = vector.multi_reduction <maximumf>, %2, %cst_5 [2] : vector<8x4x16xf32> to vector<8x4xf32>
    %4 = vector.shape_cast %3 : vector<8x4xf32> to vector<8x4x1xf32>
    %5 = vector.broadcast %4 : vector<8x4x1xf32> to vector<8x4x16xf32>
    %6 = arith.subf %2, %5 : vector<8x4x16xf32>
    %7 = math.exp %6 : vector<8x4x16xf32>
    %cst_6 = arith.constant dense<0.000000e+00> : vector<8x4xf32>
    %8 = vector.multi_reduction <add>, %7, %cst_6 [2] : vector<8x4x16xf32> to vector<8x4xf32>
    %9 = vector.shape_cast %8 : vector<8x4xf32> to vector<8x4x1xf32>
    %10 = vector.broadcast %9 : vector<8x4x1xf32> to vector<8x4x16xf32>
    %11 = arith.divf %7, %10 : vector<8x4x16xf32>
    "tpu.trace_start"() <{level = 10 : i32, message = "bts,bsh->bth"}> : () -> ()
    %cst_7 = arith.constant dense<0.000000e+00> : vector<8x4x128xf32>
    %12 = tpu.matmul %11, %1, %cst_7 {dimension_numbers = #tpu.dot_dimension_numbers<[2], [1], [1], [2], [0, 0, 0, 1, 1, 2], [0], [0]>} : vector<8x4x16xf32>, vector<8x16x128xf32>, vector<8x4x128xf32> -> vector<8x4x128xf32>
    "tpu.trace_stop"() : () -> ()
    %c0_8 = arith.constant 0 : index
    %c0_9 = arith.constant 0 : index
    %13 = vector.load %arg3[%c0_8, %c0_9] : memref<128x128xf32, #tpu.memory_space<vmem>>, vector<128x128xf32>
    "tpu.trace_start"() <{level = 10 : i32, message = "bth,hk->btk"}> : () -> ()
    %cst_10 = arith.constant dense<0.000000e+00> : vector<8x4x128xf32>
    %14 = tpu.matmul %12, %13, %cst_10 {dimension_numbers = #tpu.dot_dimension_numbers<[2], [0], [0, 1], [1], [0, 0, 0, 1, 1, 1], [], []>} : vector<8x4x128xf32>, vector<128x128xf32>, vector<8x4x128xf32> -> vector<8x4x128xf32>
    "tpu.trace_stop"() : () -> ()
    %c0_11 = arith.constant 0 : index
    %c0_12 = arith.constant 0 : index
    %15 = vector.load %arg4[%c0_11, %c0_12] : memref<128x128xf32, #tpu.memory_space<vmem>>, vector<128x128xf32>
    "tpu.trace_start"() <{level = 10 : i32, message = "bth,hk->btk"}> : () -> ()
    %cst_13 = arith.constant dense<0.000000e+00> : vector<8x4x128xf32>
    %16 = tpu.matmul %0, %15, %cst_13 {dimension_numbers = #tpu.dot_dimension_numbers<[2], [0], [0, 1], [1], [0, 0, 0, 1, 1, 1], [], []>} : vector<8x4x128xf32>, vector<128x128xf32>, vector<8x4x128xf32> -> vector<8x4x128xf32>
    "tpu.trace_stop"() : () -> ()
    %17 = arith.addf %14, %16 : vector<8x4x128xf32>
    %18 = math.tanh %17 : vector<8x4x128xf32>
    %c0_14 = arith.constant 0 : index
    %c0_15 = arith.constant 0 : index
    %c0_16 = arith.constant 0 : index
    %19 = vector.load %arg5[%c0_14, %c0_15, %c0_16] : memref<8x4x128xf32, #tpu.memory_space<vmem>>, vector<8x4x128xf32>
    tpu.vector_store %arg5[%c0_14, %c0_15, %c0_16], %18 {strides = array<i32>} : memref<8x4x128xf32, #tpu.memory_space<vmem>>, vector<8x4x128xf32>,
    %c0_17 = arith.constant 0 : index
    %c0_18 = arith.constant 0 : index
    %c0_19 = arith.constant 0 : index
    %20 = vector.load %arg6[%c0_17, %c0_18, %c0_19] : memref<8x4x16xf32, #tpu.memory_space<vmem>>, vector<8x4x16xf32>
    tpu.vector_store %arg6[%c0_17, %c0_18, %c0_19], %11 {strides = array<i32>} : memref<8x4x16xf32, #tpu.memory_space<vmem>>, vector<8x4x16xf32>,
    return
  }
  func.func @transform_0(%arg0: i32) -> (i32, i32, i32) {
    %c0_i32 = arith.constant 0 : i32
    %c0_i32_0 = arith.constant 0 : i32
    %c0_i32_1 = arith.constant 0 : i32
    return %arg0, %c0_i32, %c0_i32_0 : i32, i32, i32
  }
  func.func @transform_1(%arg0: i32) -> (i32, i32, i32) {
    %c0_i32 = arith.constant 0 : i32
    %c0_i32_0 = arith.constant 0 : i32
    %c0_i32_1 = arith.constant 0 : i32
    return %arg0, %c0_i32, %c0_i32_0 : i32, i32, i32
  }
  func.func @transform_2(%arg0: i32) -> (i32, i32) {
    %c0_i32 = arith.constant 0 : i32
    %c0_i32_0 = arith.constant 0 : i32
    %c0_i32_1 = arith.constant 0 : i32
    return %c0_i32, %c0_i32_0 : i32, i32
  }
  func.func @transform_3(%arg0: i32) -> (i32, i32) {
    %c0_i32 = arith.constant 0 : i32
    %c0_i32_0 = arith.constant 0 : i32
    %c0_i32_1 = arith.constant 0 : i32
    return %c0_i32, %c0_i32_0 : i32, i32
  }
  func.func @transform_4(%arg0: i32) -> (i32, i32, i32) {
    %c0_i32 = arith.constant 0 : i32
    %c0_i32_0 = arith.constant 0 : i32
    %c0_i32_1 = arith.constant 0 : i32
    return %arg0, %c0_i32, %c0_i32_0 : i32, i32, i32
  }
  func.func @transform_5(%arg0: i32) -> (i32, i32, i32) {
    %c0_i32 = arith.constant 0 : i32
    %c0_i32_0 = arith.constant 0 : i32
    %c0_i32_1 = arith.constant 0 : i32
    return %arg0, %c0_i32, %c0_i32_0 : i32, i32, i32
  }
}

module attributes {stable_mosaic.version = 11 : i64} {
  func.func @_proj_kernel(%arg0: i32, %arg1: memref<24x128xf32, #tpu.memory_space<vmem>>, %arg2: memref<128x128xf32, #tpu.memory_space<vmem>>, %arg3: memref<1x128xf32, #tpu.memory_space<vmem>>, %arg4: memref<24x128xf32, #tpu.memory_space<vmem>>) attributes {dimension_semantics = [#tpu.dimension_semantics<parallel>], iteration_bounds = array<i64: 1>, scalar_prefetch = 0 : i64, scratch_operands = 0 : i64, tpu.core_type = #tpu.core_type<tc>, window_params = [{transform_indices = @transform_0, window_bounds = array<i64: 24, 128>}, {pipeline_mode = #tpu.pipeline_mode<synchronous>, transform_indices = @transform_1, window_bounds = array<i64: 128, 128>}, {pipeline_mode = #tpu.pipeline_mode<synchronous>, transform_indices = @transform_2, window_bounds = array<i64: 1, 128>}, {transform_indices = @transform_3, window_bounds = array<i64: 24, 128>}]} {
    %c0 = arith.constant 0 : index
    %c0_0 = arith.constant 0 : index
    %0 = vector.load %arg1[%c0, %c0_0] : memref<24x128xf32, #tpu.memory_space<vmem>>, vector<24x128xf32>
    %c0_1 = arith.constant 0 : index
    %c0_2 = arith.constant 0 : index
    %1 = vector.load %arg2[%c0_1, %c0_2] : memref<128x128xf32, #tpu.memory_space<vmem>>, vector<128x128xf32>
    %cst = arith.constant dense<0.000000e+00> : vector<24x128xf32>
    %2 = tpu.matmul %0, %1, %cst {dimension_numbers = #tpu.dot_dimension_numbers<[1], [0], [0], [1], [0, 0, 1, 1], [], []>} : vector<24x128xf32>, vector<128x128xf32>, vector<24x128xf32> -> vector<24x128xf32>
    %c0_3 = arith.constant 0 : index
    %c0_4 = arith.constant 0 : index
    %3 = vector.load %arg3[%c0_3, %c0_4] : memref<1x128xf32, #tpu.memory_space<vmem>>, vector<1x128xf32>
    %4 = vector.broadcast %3 : vector<1x128xf32> to vector<24x128xf32>
    %5 = arith.addf %2, %4 : vector<24x128xf32>
    %c0_5 = arith.constant 0 : index
    %c0_6 = arith.constant 0 : index
    %6 = vector.load %arg4[%c0_5, %c0_6] : memref<24x128xf32, #tpu.memory_space<vmem>>, vector<24x128xf32>
    tpu.vector_store %arg4[%c0_5, %c0_6], %5 {strides = array<i32>} : memref<24x128xf32, #tpu.memory_space<vmem>>, vector<24x128xf32>,
    return
  }
  func.func @transform_0(%arg0: i32) -> (i32, i32) {
    %c0_i32 = arith.constant 0 : i32
    %c0_i32_0 = arith.constant 0 : i32
    return %arg0, %c0_i32 : i32, i32
  }
  func.func @transform_1(%arg0: i32) -> (i32, i32) {
    %c0_i32 = arith.constant 0 : i32
    %c0_i32_0 = arith.constant 0 : i32
    %c0_i32_1 = arith.constant 0 : i32
    return %c0_i32, %c0_i32_0 : i32, i32
  }
  func.func @transform_2(%arg0: i32) -> (i32, i32) {
    %c0_i32 = arith.constant 0 : i32
    %c0_i32_0 = arith.constant 0 : i32
    %c0_i32_1 = arith.constant 0 : i32
    return %c0_i32, %c0_i32_0 : i32, i32
  }
  func.func @transform_3(%arg0: i32) -> (i32, i32) {
    %c0_i32 = arith.constant 0 : i32
    %c0_i32_0 = arith.constant 0 : i32
    return %arg0, %c0_i32 : i32, i32
  }
}

module attributes {stable_mosaic.version = 11 : i64} {
  func.func @_ss_src_kernel(%arg0: i32, %arg1: memref<128x128xf32, #tpu.memory_space<vmem>>, %arg2: memref<128x128xf32, #tpu.memory_space<vmem>>, %arg3: memref<1x128xf32, #tpu.memory_space<vmem>>, %arg4: memref<128x128xf32, #tpu.memory_space<vmem>>, %arg5: memref<128x128xf32, #tpu.memory_space<vmem>>) attributes {dimension_semantics = [#tpu.dimension_semantics<parallel>], iteration_bounds = array<i64: 1>, scalar_prefetch = 0 : i64, scratch_operands = 0 : i64, tpu.core_type = #tpu.core_type<tc>, window_params = [{transform_indices = @transform_0, window_bounds = array<i64: 128, 128>}, {pipeline_mode = #tpu.pipeline_mode<synchronous>, transform_indices = @transform_1, window_bounds = array<i64: 128, 128>}, {pipeline_mode = #tpu.pipeline_mode<synchronous>, transform_indices = @transform_2, window_bounds = array<i64: 1, 128>}, {pipeline_mode = #tpu.pipeline_mode<synchronous>, transform_indices = @transform_3, window_bounds = array<i64: 128, 128>}, {transform_indices = @transform_4, window_bounds = array<i64: 128, 128>}]} {
    %c0 = arith.constant 0 : index
    %c0_0 = arith.constant 0 : index
    %0 = vector.load %arg1[%c0, %c0_0] : memref<128x128xf32, #tpu.memory_space<vmem>>, vector<128x128xf32>
    %c0_1 = arith.constant 0 : index
    %c0_2 = arith.constant 0 : index
    %1 = vector.load %arg2[%c0_1, %c0_2] : memref<128x128xf32, #tpu.memory_space<vmem>>, vector<128x128xf32>
    %cst = arith.constant dense<0.000000e+00> : vector<128x128xf32>
    %2 = tpu.matmul %0, %1, %cst {dimension_numbers = #tpu.dot_dimension_numbers<[1], [0], [0], [1], [0, 0, 1, 1], [], []>} : vector<128x128xf32>, vector<128x128xf32>, vector<128x128xf32> -> vector<128x128xf32>
    %c0_3 = arith.constant 0 : index
    %c0_4 = arith.constant 0 : index
    %3 = vector.load %arg3[%c0_3, %c0_4] : memref<1x128xf32, #tpu.memory_space<vmem>>, vector<1x128xf32>
    %4 = vector.broadcast %3 : vector<1x128xf32> to vector<128x128xf32>
    %5 = arith.addf %2, %4 : vector<128x128xf32>
    %6 = math.tanh %5 : vector<128x128xf32>
    %c0_5 = arith.constant 0 : index
    %c0_6 = arith.constant 0 : index
    %7 = vector.load %arg4[%c0_5, %c0_6] : memref<128x128xf32, #tpu.memory_space<vmem>>, vector<128x128xf32>
    %cst_7 = arith.constant dense<0.000000e+00> : vector<128x128xf32>
    %8 = tpu.matmul %6, %7, %cst_7 {dimension_numbers = #tpu.dot_dimension_numbers<[1], [0], [0], [1], [0, 0, 1, 1], [], []>} : vector<128x128xf32>, vector<128x128xf32>, vector<128x128xf32> -> vector<128x128xf32>
    %c0_8 = arith.constant 0 : index
    %c0_9 = arith.constant 0 : index
    %9 = vector.load %arg5[%c0_8, %c0_9] : memref<128x128xf32, #tpu.memory_space<vmem>>, vector<128x128xf32>
    tpu.vector_store %arg5[%c0_8, %c0_9], %8 {strides = array<i32>} : memref<128x128xf32, #tpu.memory_space<vmem>>, vector<128x128xf32>,
    return
  }
  func.func @transform_0(%arg0: i32) -> (i32, i32) {
    %c0_i32 = arith.constant 0 : i32
    %c0_i32_0 = arith.constant 0 : i32
    return %arg0, %c0_i32 : i32, i32
  }
  func.func @transform_1(%arg0: i32) -> (i32, i32) {
    %c0_i32 = arith.constant 0 : i32
    %c0_i32_0 = arith.constant 0 : i32
    %c0_i32_1 = arith.constant 0 : i32
    return %c0_i32, %c0_i32_0 : i32, i32
  }
  func.func @transform_2(%arg0: i32) -> (i32, i32) {
    %c0_i32 = arith.constant 0 : i32
    %c0_i32_0 = arith.constant 0 : i32
    %c0_i32_1 = arith.constant 0 : i32
    return %c0_i32, %c0_i32_0 : i32, i32
  }
  func.func @transform_3(%arg0: i32) -> (i32, i32) {
    %c0_i32 = arith.constant 0 : i32
    %c0_i32_0 = arith.constant 0 : i32
    %c0_i32_1 = arith.constant 0 : i32
    return %c0_i32, %c0_i32_0 : i32, i32
  }
  func.func @transform_4(%arg0: i32) -> (i32, i32) {
    %c0_i32 = arith.constant 0 : i32
    %c0_i32_0 = arith.constant 0 : i32
    return %arg0, %c0_i32 : i32, i32
  }
}

module attributes {stable_mosaic.version = 11 : i64} {
  func.func @_ss_mask_kernel(%arg0: i32, %arg1: memref<1x8x128xf32, #tpu.memory_space<vmem>>, %arg2: memref<8x16x128xf32, #tpu.memory_space<vmem>>, %arg3: memref<8x1x16x128xf32, #tpu.memory_space<vmem>>) attributes {dimension_semantics = [#tpu.dimension_semantics<parallel>], iteration_bounds = array<i64: 3>, scalar_prefetch = 0 : i64, scratch_operands = 0 : i64, tpu.core_type = #tpu.core_type<tc>, window_params = [{transform_indices = @transform_0, window_bounds = array<i64: 1, 8, 128>}, {pipeline_mode = #tpu.pipeline_mode<synchronous>, transform_indices = @transform_1, window_bounds = array<i64: 8, 16, 128>}, {transform_indices = @transform_2, window_bounds = array<i64: 8, 1, 16, 128>}]} {
    %c0 = arith.constant 0 : index
    %c0_0 = arith.constant 0 : index
    %c0_1 = arith.constant 0 : index
    %0 = vector.load %arg2[%c0, %c0_0, %c0_1] : memref<8x16x128xf32, #tpu.memory_space<vmem>>, vector<8x16x128xf32>
    %c0_2 = arith.constant 0 : index
    %c0_3 = arith.constant 0 : index
    %c0_4 = arith.constant 0 : index
    %1 = vector.load %arg1[%c0_2, %c0_3, %c0_4] : memref<1x8x128xf32, #tpu.memory_space<vmem>>, vector<1x8x128xf32>
    %2 = vector.shape_cast %1 : vector<1x8x128xf32> to vector<8x128xf32>
    %3 = vector.shape_cast %2 : vector<8x128xf32> to vector<8x1x128xf32>
    %4 = vector.broadcast %3 : vector<8x1x128xf32> to vector<8x16x128xf32>
    %5 = arith.addf %0, %4 : vector<8x16x128xf32>
    %6 = arith.negf %5 : vector<8x16x128xf32>
    %7 = math.exp %6 : vector<8x16x128xf32>
    %cst = arith.constant 1.000000e+00 : f32
    %8 = vector.broadcast %cst : f32 to vector<8x16x128xf32>
    %9 = arith.addf %8, %7 : vector<8x16x128xf32>
    %10 = arith.divf %8, %9 : vector<8x16x128xf32>
    %c0_5 = arith.constant 0 : index
    %c0_6 = arith.constant 0 : index
    %c0_7 = arith.constant 0 : index
    %c0_8 = arith.constant 0 : index
    %11 = vector.load %arg3[%c0_5, %c0_6, %c0_7, %c0_8] : memref<8x1x16x128xf32, #tpu.memory_space<vmem>>, vector<8x1x16x128xf32>
    %12 = vector.shape_cast %11 : vector<8x1x16x128xf32> to vector<8x16x128xf32>
    %13 = vector.shape_cast %10 : vector<8x16x128xf32> to vector<8x1x16x128xf32>
    tpu.vector_store %arg3[%c0_5, %c0_6, %c0_7, %c0_8], %13 {strides = array<i32>} : memref<8x1x16x128xf32, #tpu.memory_space<vmem>>, vector<8x1x16x128xf32>,
    return
  }
  func.func @transform_0(%arg0: i32) -> (i32, i32, i32) {
    %c0_i32 = arith.constant 0 : i32
    %c0_i32_0 = arith.constant 0 : i32
    %c0_i32_1 = arith.constant 0 : i32
    return %arg0, %c0_i32, %c0_i32_0 : i32, i32, i32
  }
  func.func @transform_1(%arg0: i32) -> (i32, i32, i32) {
    %c0_i32 = arith.constant 0 : i32
    %c0_i32_0 = arith.constant 0 : i32
    %c0_i32_1 = arith.constant 0 : i32
    %c0_i32_2 = arith.constant 0 : i32
    return %c0_i32, %c0_i32_0, %c0_i32_1 : i32, i32, i32
  }
  func.func @transform_2(%arg0: i32) -> (i32, i32, i32, i32) {
    %c0_i32 = arith.constant 0 : i32
    %c0_i32_0 = arith.constant 0 : i32
    %c0_i32_1 = arith.constant 0 : i32
    %c0_i32_2 = arith.constant 0 : i32
    return %c0_i32, %arg0, %c0_i32_0, %c0_i32_1 : i32, i32, i32, i32
  }
}

</mosaic_0001>

<llo_original>
// kernel: seq2seq_forward.8
$region0: #{seq2seq_forward.8}
  #allocation0 [shape = 'u32[]', space=smem, size = 0x4, offset = 0x4, fixed_abs, tag = 'smem constant byte address 0x4 - core index']
  #allocation1 [shape = 'u32[72,128]{1,0:T(1,128)}', space=vmem, size = 0x9000, scoped, tag = 'internal scratch']
  %s0 = inlined_call_operand.vmem [shape: f32[128,128], index: 0, kind: input, shape index: {}]
  %s1 = inlined_call_operand.hbm [shape: f32[128,512], index: 1, kind: input, shape index: {}]
  %s2 = inlined_call_operand.vmem [shape: f32[1,512], index: 2, kind: input, shape index: {}]
  %s3 = inlined_call_operand.vmem [shape: f32[128,512], index: 3, kind: output, shape index: {}]
  %s4 = sld [smem:[#allocation0]]
  $region26: #{seq2seq_forward.8} parent=0
    _
  %s6 = ssub.s32 1, %s4
  %s7 = scalar_select 0, %s6, %s4
  $region1: #{seq2seq_forward.8} parent=0
    #allocation2 [shape = 'u8[262144]{0}', space=vmem, size = 0x40000, scoped, tag = 'input window, operand 1, single buffered']
    #allocation3 [shape = 's32[1]{0}', space=sflag, size = 0x4, scoped, tag = 'scoped memory for seq2seq_forward.8']
    %8 = vsyncpa [#allocation3], 0
    // Predicated region
    $region2: #{seq2seq_forward.8} parent=1 // pred_check
      _
    $region3: #{seq2seq_forward.8} parent=1 // pred_check_branch
      %10 = sbr.rel (0) target = $region5
    $region4: #{seq2seq_forward.8} parent=1 // pred_region
      _
    $region5: #{seq2seq_forward.8} parent=1 // pred_fallthru
      _
    // Predicated region
    $region6: #{seq2seq_forward.8} parent=1 // pred_check
      _
    $region7: #{seq2seq_forward.8} parent=1 // pred_check_branch
      %12 = sbr.rel (0) target = $region9
    $region8: #{seq2seq_forward.8} parent=1 // pred_region
      %14 = vsyncadd [#allocation3], 0
      %s15 = sshll.u32 %s1, 4
      %s16 = int_to_ptr.hbm [resolvable:$true] %s15
      %s17 = sshll.u32 [#allocation2], 4
      %s18 = int_to_ptr.vmem [resolvable:$true] %s17
      %23 = dma.hbm_to_vmem [thread:$0]  %s16, 8192, %s18, [#allocation3], 512, 512, 32
    $region9: #{seq2seq_forward.8} parent=1 // pred_fallthru
      _
    // Predicated region
    $region10: #{seq2seq_forward.8} parent=1 // pred_check
      _
    $region11: #{seq2seq_forward.8} parent=1 // pred_check_branch
      %25 = sbr.rel (0) target = $region13
    $region12: #{seq2seq_forward.8} parent=1 // pred_region
      _
    $region13: #{seq2seq_forward.8} parent=1 // pred_fallthru
      _
    // Predicated region
    $region14: #{seq2seq_forward.8} parent=1 // pred_check
      _
    $region15: #{seq2seq_forward.8} parent=1 // pred_check_branch
      %27 = sbr.rel (0) target = $region17
    $region16: #{seq2seq_forward.8} parent=1 // pred_region
      %29 = dma.done [#allocation3], 8192
    $region17: #{seq2seq_forward.8} parent=1 // pred_fallthru
      _
    %v30 = vld [vmem:[%s0] sm:$0xff]
    %v31 = vld [vmem:[%s0 + $0x8] sm:$0xff]
    %v32 = vld [vmem:[%s0 + $0x10] sm:$0xff]
    %v33 = vld [vmem:[%s0 + $0x18] sm:$0xff]
    %v34 = vld [vmem:[%s0 + $0x20] sm:$0xff]
    %v35 = vld [vmem:[%s0 + $0x28] sm:$0xff]
    %v36 = vld [vmem:[%s0 + $0x30] sm:$0xff]
    %v37 = vld [vmem:[%s0 + $0x38] sm:$0xff]
    %v38 = vld [vmem:[%s0 + $0x40] sm:$0xff]
    %v39 = vld [vmem:[%s0 + $0x48] sm:$0xff]
    %v40 = vld [vmem:[%s0 + $0x50] sm:$0xff]
    %v41 = vld [vmem:[%s0 + $0x58] sm:$0xff]
    %v42 = vld [vmem:[%s0 + $0x60] sm:$0xff]
    %v43 = vld [vmem:[%s0 + $0x68] sm:$0xff]
    %v44 = vld [vmem:[%s0 + $0x70] sm:$0xff]
    %v45 = vld [vmem:[%s0 + $0x78] sm:$0xff]
    %v46 = vld [vmem:[#allocation2] sm:$0xff]
    %v47 = vld [vmem:[#allocation2 + $0x8] sm:$0xff]
    %v48 = vld [vmem:[#allocation2 + $0x10] sm:$0xff]
    %v49 = vld [vmem:[#allocation2 + $0x18] sm:$0xff]
    %v50 = vld [vmem:[#allocation2 + $0x20] sm:$0xff]
    %v51 = vld [vmem:[#allocation2 + $0x28] sm:$0xff]
    %v52 = vld [vmem:[#allocation2 + $0x30] sm:$0xff]
    %v53 = vld [vmem:[#allocation2 + $0x38] sm:$0xff]
    %v54 = vld [vmem:[#allocation2 + $0x40] sm:$0xff]
    %v55 = vld [vmem:[#allocation2 + $0x48] sm:$0xff]
    %v56 = vld [vmem:[#allocation2 + $0x50] sm:$0xff]
    %v57 = vld [vmem:[#allocation2 + $0x58] sm:$0xff]
    %v58 = vld [vmem:[#allocation2 + $0x60] sm:$0xff]
    %v59 = vld [vmem:[#allocation2 + $0x68] sm:$0xff]
    %v60 = vld [vmem:[#allocation2 + $0x70] sm:$0xff]
    %v61 = vld [vmem:[#allocation2 + $0x78] sm:$0xff]
    %v62 = vld [vmem:[#allocation2 + $0x80] sm:$0xff]
    %v63 = vld [vmem:[#allocation2 + $0x88] sm:$0xff]
    %v64 = vld [vmem:[#allocation2 + $0x90] sm:$0xff]
    %v65 = vld [vmem:[#allocation2 + $0x98] sm:$0xff]
    %v66 = vld [vmem:[#allocation2 + $0xa0] sm:$0xff]
    %v67 = vld [vmem:[#allocation2 + $0xa8] sm:$0xff]
    %v68 = vld [vmem:[#allocation2 + $0xb0] sm:$0xff]
    %v69 = vld [vmem:[#allocation2 + $0xb8] sm:$0xff]
    %v70 = vld [vmem:[#allocation2 + $0xc0] sm:$0xff]
    %v71 = vld [vmem:[#allocation2 + $0xc8] sm:$0xff]
    %v72 = vld [vmem:[#allocation2 + $0xd0] sm:$0xff]
    %v73 = vld [vmem:[#allocation2 + $0xd8] sm:$0xff]
    %v74 = vld [vmem:[#allocation2 + $0xe0] sm:$0xff]
    %v75 = vld [vmem:[#allocation2 + $0xe8] sm:$0xff]
    %v76 = vld [vmem:[#allocation2 + $0xf0] sm:$0xff]
    %v77 = vld [vmem:[#allocation2 + $0xf8] sm:$0xff]
    %v78 = vld [vmem:[#allocation2 + $0x100] sm:$0xff]
    %v79 = vld [vmem:[#allocation2 + $0x108] sm:$0xff]
    %v80 = vld [vmem:[#allocation2 + $0x110] sm:$0xff]
    %v81 = vld [vmem:[#allocation2 + $0x118] sm:$0xff]
    %v82 = vld [vmem:[#allocation2 + $0x120] sm:$0xff]
    %v83 = vld [vmem:[#allocation2 + $0x128] sm:$0xff]
    %v84 = vld [vmem:[#allocation2 + $0x130] sm:$0xff]
    %v85 = vld [vmem:[#allocation2 + $0x138] sm:$0xff]
    %v86 = vld [vmem:[#allocation2 + $0x140] sm:$0xff]
    %v87 = vld [vmem:[#allocation2 + $0x148] sm:$0xff]
    %v88 = vld [vmem:[#allocation2 + $0x150] sm:$0xff]
    %v89 = vld [vmem:[#allocation2 + $0x158] sm:$0xff]
    %v90 = vld [vmem:[#allocation2 + $0x160] sm:$0xff]
    %v91 = vld [vmem:[#allocation2 + $0x168] sm:$0xff]
    %v92 = vld [vmem:[#allocation2 + $0x170] sm:$0xff]
    %v93 = vld [vmem:[#allocation2 + $0x178] sm:$0xff]
    %v94 = vld [vmem:[#allocation2 + $0x180] sm:$0xff]
    %v95 = vld [vmem:[#allocation2 + $0x188] sm:$0xff]
    %v96 = vld [vmem:[#allocation2 + $0x190] sm:$0xff]
    %v97 = vld [vmem:[#allocation2 + $0x198] sm:$0xff]
    %v98 = vld [vmem:[#allocation2 + $0x1a0] sm:$0xff]
    %v99 = vld [vmem:[#allocation2 + $0x1a8] sm:$0xff]
    %v100 = vld [vmem:[#allocation2 + $0x1b0] sm:$0xff]
    %v101 = vld [vmem:[#allocation2 + $0x1b8] sm:$0xff]
    %v102 = vld [vmem:[#allocation2 + $0x1c0] sm:$0xff]
    %v103 = vld [vmem:[#allocation2 + $0x1c8] sm:$0xff]
    %v104 = vld [vmem:[#allocation2 + $0x1d0] sm:$0xff]
    %v105 = vld [vmem:[#allocation2 + $0x1d8] sm:$0xff]
    %v106 = vld [vmem:[#allocation2 + $0x1e0] sm:$0xff]
    %v107 = vld [vmem:[#allocation2 + $0x1e8] sm:$0xff]
    %v108 = vld [vmem:[#allocation2 + $0x1f0] sm:$0xff]
    %v109 = vld [vmem:[#allocation2 + $0x1f8] sm:$0xff]
    %v110 = vld [vmem:[%s2] sm:$0xf]
    %v112 = vperm.slane %v110, 0
    %v113 = vperm.slane %v110, 1
    %v114 = vperm.slane %v110, 2
    %v115 = vperm.slane %v110, 3
    %120 = vmatpush.msra.mxu0 %v106
    %121 = vmatpush.msra.mxu0 %v102
    %122 = vmatpush.msra.mxu0 %v98
    %123 = vmatpush.msra.mxu0 %v94
    %124 = vmatpush.msra.mxu0 %v90
    %125 = vmatpush.msra.mxu0 %v86
    %126 = vmatpush.msra.mxu0 %v82
    %127 = vmatpush.msra.mxu0 %v78
    %128 = vmatpush.msra.mxu0 %v74
    %129 = vmatpush.msra.mxu0 %v70
    %130 = vmatpush.msra.mxu0 %v66
    %131 = vmatpush.msra.mxu0 %v62
    %132 = vmatpush.msra.mxu0 %v58
    %133 = vmatpush.msra.mxu0 %v54
    %134 = vmatpush.msra.mxu0 %v50
    %135 = vmatpush.msra.mxu0 %v46
    %136 = vmatmul.f32.gmra.mxu0 %v30
    %v137 = vpop.f32.mrf.mxu0
    %v138 = vadd.f32 %v112, %v137
    %139 = vmatmul.f32.gmra.mxu0 %v31
    %v140 = vpop.f32.mrf.mxu0
    %v141 = vadd.f32 %v112, %v140
    %142 = vmatmul.f32.gmra.mxu0 %v32
    %v143 = vpop.f32.mrf.mxu0
    %v144 = vadd.f32 %v112, %v143
    %145 = vmatmul.f32.gmra.mxu0 %v33
    %v146 = vpop.f32.mrf.mxu0
    %v147 = vadd.f32 %v112, %v146
    %148 = vmatmul.f32.gmra.mxu0 %v34
    %v149 = vpop.f32.mrf.mxu0
    %v150 = vadd.f32 %v112, %v149
    %151 = vmatmul.f32.gmra.mxu0 %v35
    %v152 = vpop.f32.mrf.mxu0
    %v153 = vadd.f32 %v112, %v152
    %154 = vmatmul.f32.gmra.mxu0 %v36
    %v155 = vpop.f32.mrf.mxu0
    %v156 = vadd.f32 %v112, %v155
    %157 = vmatmul.f32.gmra.mxu0 %v37
    %v158 = vpop.f32.mrf.mxu0
    %v159 = vadd.f32 %v112, %v158
    %160 = vmatmul.f32.gmra.mxu0 %v38
    %v161 = vpop.f32.mrf.mxu0
    %v162 = vadd.f32 %v112, %v161
    %163 = vmatmul.f32.gmra.mxu0 %v39
    %v164 = vpop.f32.mrf.mxu0
    %v165 = vadd.f32 %v112, %v164
    %166 = vmatmul.f32.gmra.mxu0 %v40
    %v167 = vpop.f32.mrf.mxu0
    %v168 = vadd.f32 %v112, %v167
    %169 = vmatmul.f32.gmra.mxu0 %v41
    %v170 = vpop.f32.mrf.mxu0
    %v171 = vadd.f32 %v112, %v170
    %172 = vmatmul.f32.gmra.mxu0 %v42
    %v173 = vpop.f32.mrf.mxu0
    %v174 = vadd.f32 %v112, %v173
    %175 = vmatmul.f32.gmra.mxu0 %v43
    %v176 = vpop.f32.mrf.mxu0
    %v177 = vadd.f32 %v112, %v176
    %178 = vmatmul.f32.gmra.mxu0 %v44
    %v179 = vpop.f32.mrf.mxu0
    %v180 = vadd.f32 %v112, %v179
    %181 = vmatmul.f32.gmra.mxu0 %v45
    %v182 = vpop.f32.mrf.mxu0
    %v183 = vadd.f32 %v112, %v182
    %184 = vdwg.mxu0
    %185 = vmatpush.msra.mxu0 %v107
    %186 = vmatpush.msra.mxu0 %v103
    %187 = vmatpush.msra.mxu0 %v99
    %188 = vmatpush.msra.mxu0 %v95
    %189 = vmatpush.msra.mxu0 %v91
    %190 = vmatpush.msra.mxu0 %v87
    %191 = vmatpush.msra.mxu0 %v83
    %192 = vmatpush.msra.mxu0 %v79
    %193 = vmatpush.msra.mxu0 %v75
    %194 = vmatpush.msra.mxu0 %v71
    %195 = vmatpush.msra.mxu0 %v67
    %196 = vmatpush.msra.mxu0 %v63
    %197 = vmatpush.msra.mxu0 %v59
    %198 = vmatpush.msra.mxu0 %v55
    %199 = vmatpush.msra.mxu0 %v51
    %200 = vmatpush.msra.mxu0 %v47
    %201 = vmatmul.f32.gmra.mxu0 %v30
    %v202 = vpop.f32.mrf.mxu0
    %v203 = vadd.f32 %v113, %v202
    %204 = vmatmul.f32.gmra.mxu0 %v31
    %v205 = vpop.f32.mrf.mxu0
    %v206 = vadd.f32 %v113, %v205
    %207 = vmatmul.f32.gmra.mxu0 %v32
    %v208 = vpop.f32.mrf.mxu0
    %v209 = vadd.f32 %v113, %v208
    %210 = vmatmul.f32.gmra.mxu0 %v33
    %v211 = vpop.f32.mrf.mxu0
    %v212 = vadd.f32 %v113, %v211
    %213 = vmatmul.f32.gmra.mxu0 %v34
    %v214 = vpop.f32.mrf.mxu0
    %v215 = vadd.f32 %v113, %v214
    %216 = vmatmul.f32.gmra.mxu0 %v35
    %v217 = vpop.f32.mrf.mxu0
    %v218 = vadd.f32 %v113, %v217
    %219 = vmatmul.f32.gmra.mxu0 %v36
    %v220 = vpop.f32.mrf.mxu0
    %v221 = vadd.f32 %v113, %v220
    %222 = vmatmul.f32.gmra.mxu0 %v37
    %v223 = vpop.f32.mrf.mxu0
    %v224 = vadd.f32 %v113, %v223
    %225 = vmatmul.f32.gmra.mxu0 %v38
    %v226 = vpop.f32.mrf.mxu0
    %v227 = vadd.f32 %v113, %v226
    %228 = vmatmul.f32.gmra.mxu0 %v39
    %v229 = vpop.f32.mrf.mxu0
    %v230 = vadd.f32 %v113, %v229
    %231 = vmatmul.f32.gmra.mxu0 %v40
    %v232 = vpop.f32.mrf.mxu0
    %v233 = vadd.f32 %v113, %v232
    %234 = vmatmul.f32.gmra.mxu0 %v41
    %v235 = vpop.f32.mrf.mxu0
    %v236 = vadd.f32 %v113, %v235
    %237 = vmatmul.f32.gmra.mxu0 %v42
    %v238 = vpop.f32.mrf.mxu0
    %v239 = vadd.f32 %v113, %v238
    %240 = vmatmul.f32.gmra.mxu0 %v43
    %v241 = vpop.f32.mrf.mxu0
    %v242 = vadd.f32 %v113, %v241
    %243 = vmatmul.f32.gmra.mxu0 %v44
    %v244 = vpop.f32.mrf.mxu0
    %v245 = vadd.f32 %v113, %v244
    %246 = vmatmul.f32.gmra.mxu0 %v45
    %v247 = vpop.f32.mrf.mxu0
    %v248 = vadd.f32 %v113, %v247
    %249 = vdwg.mxu0
    %250 = vmatpush.msra.mxu0 %v108
    %251 = vmatpush.msra.mxu0 %v104
    %252 = vmatpush.msra.mxu0 %v100
    %253 = vmatpush.msra.mxu0 %v96
    %254 = vmatpush.msra.mxu0 %v92
    %255 = vmatpush.msra.mxu0 %v88
    %256 = vmatpush.msra.mxu0 %v84
    %257 = vmatpush.msra.mxu0 %v80
    %258 = vmatpush.msra.mxu0 %v76
    %259 = vmatpush.msra.mxu0 %v72
    %260 = vmatpush.msra.mxu0 %v68
    %261 = vmatpush.msra.mxu0 %v64
    %262 = vmatpush.msra.mxu0 %v60
    %263 = vmatpush.msra.mxu0 %v56
    %264 = vmatpush.msra.mxu0 %v52
    %265 = vmatpush.msra.mxu0 %v48
    %266 = vmatmul.f32.gmra.mxu0 %v30
    %v267 = vpop.f32.mrf.mxu0
    %v268 = vadd.f32 %v114, %v267
    %269 = vmatmul.f32.gmra.mxu0 %v31
    %v270 = vpop.f32.mrf.mxu0
    %v271 = vadd.f32 %v114, %v270
    %272 = vmatmul.f32.gmra.mxu0 %v32
    %v273 = vpop.f32.mrf.mxu0
    %v274 = vadd.f32 %v114, %v273
    %275 = vmatmul.f32.gmra.mxu0 %v33
    %v276 = vpop.f32.mrf.mxu0
    %v277 = vadd.f32 %v114, %v276
    %278 = vmatmul.f32.gmra.mxu0 %v34
    %v279 = vpop.f32.mrf.mxu0
    %v280 = vadd.f32 %v114, %v279
    %281 = vmatmul.f32.gmra.mxu0 %v35
    %v282 = vpop.f32.mrf.mxu0
    %v283 = vadd.f32 %v114, %v282
    %284 = vmatmul.f32.gmra.mxu0 %v36
    %v285 = vpop.f32.mrf.mxu0
    %v286 = vadd.f32 %v114, %v285
    %287 = vmatmul.f32.gmra.mxu0 %v37
    %v288 = vpop.f32.mrf.mxu0
    %v289 = vadd.f32 %v114, %v288
    %290 = vmatmul.f32.gmra.mxu0 %v38
    %v291 = vpop.f32.mrf.mxu0
    %v292 = vadd.f32 %v114, %v291
    %293 = vmatmul.f32.gmra.mxu0 %v39
    %v294 = vpop.f32.mrf.mxu0
    %v295 = vadd.f32 %v114, %v294
    %296 = vmatmul.f32.gmra.mxu0 %v40
    %v297 = vpop.f32.mrf.mxu0
    %v298 = vadd.f32 %v114, %v297
    %299 = vmatmul.f32.gmra.mxu0 %v41
    %v300 = vpop.f32.mrf.mxu0
    %v301 = vadd.f32 %v114, %v300
    %302 = vmatmul.f32.gmra.mxu0 %v42
    %v303 = vpop.f32.mrf.mxu0
    %v304 = vadd.f32 %v114, %v303
    %305 = vmatmul.f32.gmra.mxu0 %v43
    %v306 = vpop.f32.mrf.mxu0
    %v307 = vadd.f32 %v114, %v306
    %308 = vmatmul.f32.gmra.mxu0 %v44
    %v309 = vpop.f32.mrf.mxu0
    %v310 = vadd.f32 %v114, %v309
    %311 = vmatmul.f32.gmra.mxu0 %v45
    %v312 = vpop.f32.mrf.mxu0
    %v313 = vadd.f32 %v114, %v312
    %314 = vdwg.mxu0
    %315 = vmatpush.msra.mxu0 %v109
    %316 = vmatpush.msra.mxu0 %v105
    %317 = vmatpush.msra.mxu0 %v101
    %318 = vmatpush.msra.mxu0 %v97
    %319 = vmatpush.msra.mxu0 %v93
    %320 = vmatpush.msra.mxu0 %v89
    %321 = vmatpush.msra.mxu0 %v85
    %322 = vmatpush.msra.mxu0 %v81
    %323 = vmatpush.msra.mxu0 %v77
    %324 = vmatpush.msra.mxu0 %v73
    %325 = vmatpush.msra.mxu0 %v69
    %326 = vmatpush.msra.mxu0 %v65
    %327 = vmatpush.msra.mxu0 %v61
    %328 = vmatpush.msra.mxu0 %v57
    %329 = vmatpush.msra.mxu0 %v53
    %330 = vmatpush.msra.mxu0 %v49
    %331 = vmatmul.f32.gmra.mxu0 %v30
    %v332 = vpop.f32.mrf.mxu0
    %v333 = vadd.f32 %v115, %v332
    %334 = vmatmul.f32.gmra.mxu0 %v31
    %v335 = vpop.f32.mrf.mxu0
    %v336 = vadd.f32 %v115, %v335
    %337 = vmatmul.f32.gmra.mxu0 %v32
    %v338 = vpop.f32.mrf.mxu0
    %v339 = vadd.f32 %v115, %v338
    %340 = vmatmul.f32.gmra.mxu0 %v33
    %v341 = vpop.f32.mrf.mxu0
    %v342 = vadd.f32 %v115, %v341
    %343 = vmatmul.f32.gmra.mxu0 %v34
    %v344 = vpop.f32.mrf.mxu0
    %v345 = vadd.f32 %v115, %v344
    %346 = vmatmul.f32.gmra.mxu0 %v35
    %v347 = vpop.f32.mrf.mxu0
    %v348 = vadd.f32 %v115, %v347
    %349 = vmatmul.f32.gmra.mxu0 %v36
    %v350 = vpop.f32.mrf.mxu0
    %v351 = vadd.f32 %v115, %v350
    %352 = vmatmul.f32.gmra.mxu0 %v37
    %v353 = vpop.f32.mrf.mxu0
    %v354 = vadd.f32 %v115, %v353
    %355 = vmatmul.f32.gmra.mxu0 %v38
    %v356 = vpop.f32.mrf.mxu0
    %v357 = vadd.f32 %v115, %v356
    %358 = vmatmul.f32.gmra.mxu0 %v39
    %v359 = vpop.f32.mrf.mxu0
    %v360 = vadd.f32 %v115, %v359
    %361 = vmatmul.f32.gmra.mxu0 %v40
    %v362 = vpop.f32.mrf.mxu0
    %v363 = vadd.f32 %v115, %v362
    %364 = vmatmul.f32.gmra.mxu0 %v41
    %v365 = vpop.f32.mrf.mxu0
    %v366 = vadd.f32 %v115, %v365
    %367 = vmatmul.f32.gmra.mxu0 %v42
    %v368 = vpop.f32.mrf.mxu0
    %v369 = vadd.f32 %v115, %v368
    %370 = vmatmul.f32.gmra.mxu0 %v43
    %v371 = vpop.f32.mrf.mxu0
    %v372 = vadd.f32 %v115, %v371
    %373 = vmatmul.f32.gmra.mxu0 %v44
    %v374 = vpop.f32.mrf.mxu0
    %v375 = vadd.f32 %v115, %v374
    %376 = vmatmul.f32.gmra.mxu0 %v45
    %v377 = vpop.f32.mrf.mxu0
    %v378 = vadd.f32 %v115, %v377
    %379 = vdwg.mxu0
    %380 = vst [vmem:[%s3] sm:$0xff] %v138
    %381 = vst [vmem:[%s3 + $0x8] sm:$0xff] %v203
    %382 = vst [vmem:[%s3 + $0x10] sm:$0xff] %v268
    %383 = vst [vmem:[%s3 + $0x18] sm:$0xff] %v333
    %384 = vst [vmem:[%s3 + $0x20] sm:$0xff] %v141
    %385 = vst [vmem:[%s3 + $0x28] sm:$0xff] %v206
    %386 = vst [vmem:[%s3 + $0x30] sm:$0xff] %v271
    %387 = vst [vmem:[%s3 + $0x38] sm:$0xff] %v336
    %388 = vst [vmem:[%s3 + $0x40] sm:$0xff] %v144
    %389 = vst [vmem:[%s3 + $0x48] sm:$0xff] %v209
    %390 = vst [vmem:[%s3 + $0x50] sm:$0xff] %v274
    %391 = vst [vmem:[%s3 + $0x58] sm:$0xff] %v339
    %392 = vst [vmem:[%s3 + $0x60] sm:$0xff] %v147
    %393 = vst [vmem:[%s3 + $0x68] sm:$0xff] %v212
    %394 = vst [vmem:[%s3 + $0x70] sm:$0xff] %v277
    %395 = vst [vmem:[%s3 + $0x78] sm:$0xff] %v342
    %396 = vst [vmem:[%s3 + $0x80] sm:$0xff] %v150
    %397 = vst [vmem:[%s3 + $0x88] sm:$0xff] %v215
    %398 = vst [vmem:[%s3 + $0x90] sm:$0xff] %v280
    %399 = vst [vmem:[%s3 + $0x98] sm:$0xff] %v345
    %400 = vst [vmem:[%s3 + $0xa0] sm:$0xff] %v153
    %401 = vst [vmem:[%s3 + $0xa8] sm:$0xff] %v218
    %402 = vst [vmem:[%s3 + $0xb0] sm:$0xff] %v283
    %403 = vst [vmem:[%s3 + $0xb8] sm:$0xff] %v348
    %404 = vst [vmem:[%s3 + $0xc0] sm:$0xff] %v156
    %405 = vst [vmem:[%s3 + $0xc8] sm:$0xff] %v221
    %406 = vst [vmem:[%s3 + $0xd0] sm:$0xff] %v286
    %407 = vst [vmem:[%s3 + $0xd8] sm:$0xff] %v351
    %408 = vst [vmem:[%s3 + $0xe0] sm:$0xff] %v159
    %409 = vst [vmem:[%s3 + $0xe8] sm:$0xff] %v224
    %410 = vst [vmem:[%s3 + $0xf0] sm:$0xff] %v289
    %411 = vst [vmem:[%s3 + $0xf8] sm:$0xff] %v354
    %412 = vst [vmem:[%s3 + $0x100] sm:$0xff] %v162
    %413 = vst [vmem:[%s3 + $0x108] sm:$0xff] %v227
    %414 = vst [vmem:[%s3 + $0x110] sm:$0xff] %v292
    %415 = vst [vmem:[%s3 + $0x118] sm:$0xff] %v357
    %416 = vst [vmem:[%s3 + $0x120] sm:$0xff] %v165
    %417 = vst [vmem:[%s3 + $0x128] sm:$0xff] %v230
    %418 = vst [vmem:[%s3 + $0x130] sm:$0xff] %v295
    %419 = vst [vmem:[%s3 + $0x138] sm:$0xff] %v360
    %420 = vst [vmem:[%s3 + $0x140] sm:$0xff] %v168
    %421 = vst [vmem:[%s3 + $0x148] sm:$0xff] %v233
    %422 = vst [vmem:[%s3 + $0x150] sm:$0xff] %v298
    %423 = vst [vmem:[%s3 + $0x158] sm:$0xff] %v363
    %424 = vst [vmem:[%s3 + $0x160] sm:$0xff] %v171
    %425 = vst [vmem:[%s3 + $0x168] sm:$0xff] %v236
    %426 = vst [vmem:[%s3 + $0x170] sm:$0xff] %v301
    %427 = vst [vmem:[%s3 + $0x178] sm:$0xff] %v366
    %428 = vst [vmem:[%s3 + $0x180] sm:$0xff] %v174
    %429 = vst [vmem:[%s3 + $0x188] sm:$0xff] %v239
    %430 = vst [vmem:[%s3 + $0x190] sm:$0xff] %v304
    %431 = vst [vmem:[%s3 + $0x198] sm:$0xff] %v369
    %432 = vst [vmem:[%s3 + $0x1a0] sm:$0xff] %v177
    %433 = vst [vmem:[%s3 + $0x1a8] sm:$0xff] %v242
    %434 = vst [vmem:[%s3 + $0x1b0] sm:$0xff] %v307
    %435 = vst [vmem:[%s3 + $0x1b8] sm:$0xff] %v372
    %436 = vst [vmem:[%s3 + $0x1c0] sm:$0xff] %v180
    %437 = vst [vmem:[%s3 + $0x1c8] sm:$0xff] %v245
    %438 = vst [vmem:[%s3 + $0x1d0] sm:$0xff] %v310
    %439 = vst [vmem:[%s3 + $0x1d8] sm:$0xff] %v375
    %440 = vst [vmem:[%s3 + $0x1e0] sm:$0xff] %v183
    %441 = vst [vmem:[%s3 + $0x1e8] sm:$0xff] %v248
    %442 = vst [vmem:[%s3 + $0x1f0] sm:$0xff] %v313
    %443 = vst [vmem:[%s3 + $0x1f8] sm:$0xff] %v378
    // Predicated region
    $region18: #{seq2seq_forward.8} parent=1 // pred_check
      _
    $region19: #{seq2seq_forward.8} parent=1 // pred_check_branch
      %445 = sbr.rel (0) target = $region21
    $region20: #{seq2seq_forward.8} parent=1 // pred_region
      _
    $region21: #{seq2seq_forward.8} parent=1 // pred_fallthru
      _
    // Predicated region
    $region22: #{seq2seq_forward.8} parent=1 // pred_check
      _
    $region23: #{seq2seq_forward.8} parent=1 // pred_check_branch
      %447 = sbr.rel (0) target = $region25
    $region24: #{seq2seq_forward.8} parent=1 // pred_region
      _
    $region25: #{seq2seq_forward.8} parent=1 // pred_fallthru
      _
    %448 = vsyncpa [#allocation3], 1

// kernel: seq2seq_forward.10
$region0: #{seq2seq_forward.10}
  #allocation0 [shape = 'u32[]', space=smem, size = 0x4, offset = 0x4, fixed_abs, tag = 'smem constant byte address 0x4 - core index']
  #allocation1 [shape = 'u32[72,128]{1,0:T(1,128)}', space=vmem, size = 0x9000, scoped, tag = 'internal scratch']
  %s0 = inlined_call_operand.vmem [shape: f32[32,128], index: 0, kind: input, shape index: {}]
  %s1 = inlined_call_operand.hbm [shape: f32[128,512], index: 1, kind: input, shape index: {}]
  %s2 = inlined_call_operand.vmem [shape: f32[1,512], index: 2, kind: input, shape index: {}]
  %s3 = inlined_call_operand.vmem [shape: f32[32,512], index: 3, kind: output, shape index: {}]
  %s4 = sld [smem:[#allocation0]]
  $region26: #{seq2seq_forward.10} parent=0
    _
  %s6 = ssub.s32 1, %s4
  %s7 = scalar_select 0, %s6, %s4
  $region1: #{seq2seq_forward.10} parent=0
    #allocation2 [shape = 'u8[262144]{0}', space=vmem, size = 0x40000, scoped, tag = 'input window, operand 1, single buffered']
    #allocation3 [shape = 's32[1]{0}', space=sflag, size = 0x4, scoped, tag = 'scoped memory for seq2seq_forward.10']
    %8 = vsyncpa [#allocation3], 0
    // Predicated region
    $region2: #{seq2seq_forward.10} parent=1 // pred_check
      _
    $region3: #{seq2seq_forward.10} parent=1 // pred_check_branch
      %10 = sbr.rel (0) target = $region5
    $region4: #{seq2seq_forward.10} parent=1 // pred_region
      _
    $region5: #{seq2seq_forward.10} parent=1 // pred_fallthru
      _
    // Predicated region
    $region6: #{seq2seq_forward.10} parent=1 // pred_check
      _
    $region7: #{seq2seq_forward.10} parent=1 // pred_check_branch
      %12 = sbr.rel (0) target = $region9
    $region8: #{seq2seq_forward.10} parent=1 // pred_region
      %14 = vsyncadd [#allocation3], 0
      %s15 = sshll.u32 %s1, 4
      %s16 = int_to_ptr.hbm [resolvable:$true] %s15
      %s17 = sshll.u32 [#allocation2], 4
      %s18 = int_to_ptr.vmem [resolvable:$true] %s17
      %23 = dma.hbm_to_vmem [thread:$0]  %s16, 8192, %s18, [#allocation3], 512, 512, 32
    $region9: #{seq2seq_forward.10} parent=1 // pred_fallthru
      _
    // Predicated region
    $region10: #{seq2seq_forward.10} parent=1 // pred_check
      _
    $region11: #{seq2seq_forward.10} parent=1 // pred_check_branch
      %25 = sbr.rel (0) target = $region13
    $region12: #{seq2seq_forward.10} parent=1 // pred_region
      _
    $region13: #{seq2seq_forward.10} parent=1 // pred_fallthru
      _
    // Predicated region
    $region14: #{seq2seq_forward.10} parent=1 // pred_check
      _
    $region15: #{seq2seq_forward.10} parent=1 // pred_check_branch
      %27 = sbr.rel (0) target = $region17
    $region16: #{seq2seq_forward.10} parent=1 // pred_region
      %29 = dma.done [#allocation3], 8192
    $region17: #{seq2seq_forward.10} parent=1 // pred_fallthru
      _
    %v30 = vld [vmem:[%s0] sm:$0xff]
    %v31 = vld [vmem:[%s0 + $0x8] sm:$0xff]
    %v32 = vld [vmem:[%s0 + $0x10] sm:$0xff]
    %v33 = vld [vmem:[%s0 + $0x18] sm:$0xff]
    %v34 = vld [vmem:[#allocation2] sm:$0xff]
    %v35 = vld [vmem:[#allocation2 + $0x8] sm:$0xff]
    %v36 = vld [vmem:[#allocation2 + $0x10] sm:$0xff]
    %v37 = vld [vmem:[#allocation2 + $0x18] sm:$0xff]
    %v38 = vld [vmem:[#allocation2 + $0x20] sm:$0xff]
    %v39 = vld [vmem:[#allocation2 + $0x28] sm:$0xff]
    %v40 = vld [vmem:[#allocation2 + $0x30] sm:$0xff]
    %v41 = vld [vmem:[#allocation2 + $0x38] sm:$0xff]
    %v42 = vld [vmem:[#allocation2 + $0x40] sm:$0xff]
    %v43 = vld [vmem:[#allocation2 + $0x48] sm:$0xff]
    %v44 = vld [vmem:[#allocation2 + $0x50] sm:$0xff]
    %v45 = vld [vmem:[#allocation2 + $0x58] sm:$0xff]
    %v46 = vld [vmem:[#allocation2 + $0x60] sm:$0xff]
    %v47 = vld [vmem:[#allocation2 + $0x68] sm:$0xff]
    %v48 = vld [vmem:[#allocation2 + $0x70] sm:$0xff]
    %v49 = vld [vmem:[#allocation2 + $0x78] sm:$0xff]
    %v50 = vld [vmem:[#allocation2 + $0x80] sm:$0xff]
    %v51 = vld [vmem:[#allocation2 + $0x88] sm:$0xff]
    %v52 = vld [vmem:[#allocation2 + $0x90] sm:$0xff]
    %v53 = vld [vmem:[#allocation2 + $0x98] sm:$0xff]
    %v54 = vld [vmem:[#allocation2 + $0xa0] sm:$0xff]
    %v55 = vld [vmem:[#allocation2 + $0xa8] sm:$0xff]
    %v56 = vld [vmem:[#allocation2 + $0xb0] sm:$0xff]
    %v57 = vld [vmem:[#allocation2 + $0xb8] sm:$0xff]
    %v58 = vld [vmem:[#allocation2 + $0xc0] sm:$0xff]
    %v59 = vld [vmem:[#allocation2 + $0xc8] sm:$0xff]
    %v60 = vld [vmem:[#allocation2 + $0xd0] sm:$0xff]
    %v61 = vld [vmem:[#allocation2 + $0xd8] sm:$0xff]
    %v62 = vld [vmem:[#allocation2 + $0xe0] sm:$0xff]
    %v63 = vld [vmem:[#allocation2 + $0xe8] sm:$0xff]
    %v64 = vld [vmem:[#allocation2 + $0xf0] sm:$0xff]
    %v65 = vld [vmem:[#allocation2 + $0xf8] sm:$0xff]
    %v66 = vld [vmem:[#allocation2 + $0x100] sm:$0xff]
    %v67 = vld [vmem:[#allocation2 + $0x108] sm:$0xff]
    %v68 = vld [vmem:[#allocation2 + $0x110] sm:$0xff]
    %v69 = vld [vmem:[#allocation2 + $0x118] sm:$0xff]
    %v70 = vld [vmem:[#allocation2 + $0x120] sm:$0xff]
    %v71 = vld [vmem:[#allocation2 + $0x128] sm:$0xff]
    %v72 = vld [vmem:[#allocation2 + $0x130] sm:$0xff]
    %v73 = vld [vmem:[#allocation2 + $0x138] sm:$0xff]
    %v74 = vld [vmem:[#allocation2 + $0x140] sm:$0xff]
    %v75 = vld [vmem:[#allocation2 + $0x148] sm:$0xff]
    %v76 = vld [vmem:[#allocation2 + $0x150] sm:$0xff]
    %v77 = vld [vmem:[#allocation2 + $0x158] sm:$0xff]
    %v78 = vld [vmem:[#allocation2 + $0x160] sm:$0xff]
    %v79 = vld [vmem:[#allocation2 + $0x168] sm:$0xff]
    %v80 = vld [vmem:[#allocation2 + $0x170] sm:$0xff]
    %v81 = vld [vmem:[#allocation2 + $0x178] sm:$0xff]
    %v82 = vld [vmem:[#allocation2 + $0x180] sm:$0xff]
    %v83 = vld [vmem:[#allocation2 + $0x188] sm:$0xff]
    %v84 = vld [vmem:[#allocation2 + $0x190] sm:$0xff]
    %v85 = vld [vmem:[#allocation2 + $0x198] sm:$0xff]
    %v86 = vld [vmem:[#allocation2 + $0x1a0] sm:$0xff]
    %v87 = vld [vmem:[#allocation2 + $0x1a8] sm:$0xff]
    %v88 = vld [vmem:[#allocation2 + $0x1b0] sm:$0xff]
    %v89 = vld [vmem:[#allocation2 + $0x1b8] sm:$0xff]
    %v90 = vld [vmem:[#allocation2 + $0x1c0] sm:$0xff]
    %v91 = vld [vmem:[#allocation2 + $0x1c8] sm:$0xff]
    %v92 = vld [vmem:[#allocation2 + $0x1d0] sm:$0xff]
    %v93 = vld [vmem:[#allocation2 + $0x1d8] sm:$0xff]
    %v94 = vld [vmem:[#allocation2 + $0x1e0] sm:$0xff]
    %v95 = vld [vmem:[#allocation2 + $0x1e8] sm:$0xff]
    %v96 = vld [vmem:[#allocation2 + $0x1f0] sm:$0xff]
    %v97 = vld [vmem:[#allocation2 + $0x1f8] sm:$0xff]
    %v98 = vld [vmem:[%s2] sm:$0xf]
    %v100 = vperm.slane %v98, 0
    %v101 = vperm.slane %v98, 1
    %v102 = vperm.slane %v98, 2
    %v103 = vperm.slane %v98, 3
    %108 = vmatpush.msra.mxu0 %v94
    %109 = vmatpush.msra.mxu0 %v90
    %110 = vmatpush.msra.mxu0 %v86
    %111 = vmatpush.msra.mxu0 %v82
    %112 = vmatpush.msra.mxu0 %v78
    %113 = vmatpush.msra.mxu0 %v74
    %114 = vmatpush.msra.mxu0 %v70
    %115 = vmatpush.msra.mxu0 %v66
    %116 = vmatpush.msra.mxu0 %v62
    %117 = vmatpush.msra.mxu0 %v58
    %118 = vmatpush.msra.mxu0 %v54
    %119 = vmatpush.msra.mxu0 %v50
    %120 = vmatpush.msra.mxu0 %v46
    %121 = vmatpush.msra.mxu0 %v42
    %122 = vmatpush.msra.mxu0 %v38
    %123 = vmatpush.msra.mxu0 %v34
    %124 = vmatmul.f32.gmra.mxu0 %v30
    %v125 = vpop.f32.mrf.mxu0
    %v126 = vadd.f32 %v100, %v125
    %127 = vmatmul.f32.gmra.mxu0 %v31
    %v128 = vpop.f32.mrf.mxu0
    %v129 = vadd.f32 %v100, %v128
    %130 = vmatmul.f32.gmra.mxu0 %v32
    %v131 = vpop.f32.mrf.mxu0
    %v132 = vadd.f32 %v100, %v131
    %133 = vmatmul.f32.gmra.mxu0 %v33
    %v134 = vpop.f32.mrf.mxu0
    %v135 = vadd.f32 %v100, %v134
    %136 = vdwg.mxu0
    %137 = vmatpush.msra.mxu0 %v95
    %138 = vmatpush.msra.mxu0 %v91
    %139 = vmatpush.msra.mxu0 %v87
    %140 = vmatpush.msra.mxu0 %v83
    %141 = vmatpush.msra.mxu0 %v79
    %142 = vmatpush.msra.mxu0 %v75
    %143 = vmatpush.msra.mxu0 %v71
    %144 = vmatpush.msra.mxu0 %v67
    %145 = vmatpush.msra.mxu0 %v63
    %146 = vmatpush.msra.mxu0 %v59
    %147 = vmatpush.msra.mxu0 %v55
    %148 = vmatpush.msra.mxu0 %v51
    %149 = vmatpush.msra.mxu0 %v47
    %150 = vmatpush.msra.mxu0 %v43
    %151 = vmatpush.msra.mxu0 %v39
    %152 = vmatpush.msra.mxu0 %v35
    %153 = vmatmul.f32.gmra.mxu0 %v30
    %v154 = vpop.f32.mrf.mxu0
    %v155 = vadd.f32 %v101, %v154
    %156 = vmatmul.f32.gmra.mxu0 %v31
    %v157 = vpop.f32.mrf.mxu0
    %v158 = vadd.f32 %v101, %v157
    %159 = vmatmul.f32.gmra.mxu0 %v32
    %v160 = vpop.f32.mrf.mxu0
    %v161 = vadd.f32 %v101, %v160
    %162 = vmatmul.f32.gmra.mxu0 %v33
    %v163 = vpop.f32.mrf.mxu0
    %v164 = vadd.f32 %v101, %v163
    %165 = vdwg.mxu0
    %166 = vmatpush.msra.mxu0 %v96
    %167 = vmatpush.msra.mxu0 %v92
    %168 = vmatpush.msra.mxu0 %v88
    %169 = vmatpush.msra.mxu0 %v84
    %170 = vmatpush.msra.mxu0 %v80
    %171 = vmatpush.msra.mxu0 %v76
    %172 = vmatpush.msra.mxu0 %v72
    %173 = vmatpush.msra.mxu0 %v68
    %174 = vmatpush.msra.mxu0 %v64
    %175 = vmatpush.msra.mxu0 %v60
    %176 = vmatpush.msra.mxu0 %v56
    %177 = vmatpush.msra.mxu0 %v52
    %178 = vmatpush.msra.mxu0 %v48
    %179 = vmatpush.msra.mxu0 %v44
    %180 = vmatpush.msra.mxu0 %v40
    %181 = vmatpush.msra.mxu0 %v36
    %182 = vmatmul.f32.gmra.mxu0 %v30
    %v183 = vpop.f32.mrf.mxu0
    %v184 = vadd.f32 %v102, %v183
    %185 = vmatmul.f32.gmra.mxu0 %v31
    %v186 = vpop.f32.mrf.mxu0
    %v187 = vadd.f32 %v102, %v186
    %188 = vmatmul.f32.gmra.mxu0 %v32
    %v189 = vpop.f32.mrf.mxu0
    %v190 = vadd.f32 %v102, %v189
    %191 = vmatmul.f32.gmra.mxu0 %v33
    %v192 = vpop.f32.mrf.mxu0
    %v193 = vadd.f32 %v102, %v192
    %194 = vdwg.mxu0
    %195 = vmatpush.msra.mxu0 %v97
    %196 = vmatpush.msra.mxu0 %v93
    %197 = vmatpush.msra.mxu0 %v89
    %198 = vmatpush.msra.mxu0 %v85
    %199 = vmatpush.msra.mxu0 %v81
    %200 = vmatpush.msra.mxu0 %v77
    %201 = vmatpush.msra.mxu0 %v73
    %202 = vmatpush.msra.mxu0 %v69
    %203 = vmatpush.msra.mxu0 %v65
    %204 = vmatpush.msra.mxu0 %v61
    %205 = vmatpush.msra.mxu0 %v57
    %206 = vmatpush.msra.mxu0 %v53
    %207 = vmatpush.msra.mxu0 %v49
    %208 = vmatpush.msra.mxu0 %v45
    %209 = vmatpush.msra.mxu0 %v41
    %210 = vmatpush.msra.mxu0 %v37
    %211 = vmatmul.f32.gmra.mxu0 %v30
    %v212 = vpop.f32.mrf.mxu0
    %v213 = vadd.f32 %v103, %v212
    %214 = vmatmul.f32.gmra.mxu0 %v31
    %v215 = vpop.f32.mrf.mxu0
    %v216 = vadd.f32 %v103, %v215
    %217 = vmatmul.f32.gmra.mxu0 %v32
    %v218 = vpop.f32.mrf.mxu0
    %v219 = vadd.f32 %v103, %v218
    %220 = vmatmul.f32.gmra.mxu0 %v33
    %v221 = vpop.f32.mrf.mxu0
    %v222 = vadd.f32 %v103, %v221
    %223 = vdwg.mxu0
    %224 = vst [vmem:[%s3] sm:$0xff] %v126
    %225 = vst [vmem:[%s3 + $0x8] sm:$0xff] %v155
    %226 = vst [vmem:[%s3 + $0x10] sm:$0xff] %v184
    %227 = vst [vmem:[%s3 + $0x18] sm:$0xff] %v213
    %228 = vst [vmem:[%s3 + $0x20] sm:$0xff] %v129
    %229 = vst [vmem:[%s3 + $0x28] sm:$0xff] %v158
    %230 = vst [vmem:[%s3 + $0x30] sm:$0xff] %v187
    %231 = vst [vmem:[%s3 + $0x38] sm:$0xff] %v216
    %232 = vst [vmem:[%s3 + $0x40] sm:$0xff] %v132
    %233 = vst [vmem:[%s3 + $0x48] sm:$0xff] %v161
    %234 = vst [vmem:[%s3 + $0x50] sm:$0xff] %v190
    %235 = vst [vmem:[%s3 + $0x58] sm:$0xff] %v219
    %236 = vst [vmem:[%s3 + $0x60] sm:$0xff] %v135
    %237 = vst [vmem:[%s3 + $0x68] sm:$0xff] %v164
    %238 = vst [vmem:[%s3 + $0x70] sm:$0xff] %v193
    %239 = vst [vmem:[%s3 + $0x78] sm:$0xff] %v222
    // Predicated region
    $region18: #{seq2seq_forward.10} parent=1 // pred_check
      _
    $region19: #{seq2seq_forward.10} parent=1 // pred_check_branch
      %241 = sbr.rel (0) target = $region21
    $region20: #{seq2seq_forward.10} parent=1 // pred_region
      _
    $region21: #{seq2seq_forward.10} parent=1 // pred_fallthru
      _
    // Predicated region
    $region22: #{seq2seq_forward.10} parent=1 // pred_check
      _
    $region23: #{seq2seq_forward.10} parent=1 // pred_check_branch
      %243 = sbr.rel (0) target = $region25
    $region24: #{seq2seq_forward.10} parent=1 // pred_region
      _
    $region25: #{seq2seq_forward.10} parent=1 // pred_fallthru
      _
    %244 = vsyncpa [#allocation3], 1

// kernel: seq2seq_forward.11
$region0: #{seq2seq_forward.11}
  #allocation0 [shape = 'u32[]', space=smem, size = 0x4, offset = 0x4, fixed_abs, tag = 'smem constant byte address 0x4 - core index']
  #allocation1 [shape = 'u32[72,128]{1,0:T(1,128)}', space=vmem, size = 0x9000, scoped, tag = 'internal scratch']
  #allocation2 [shape = 'f32[8,128]{1,0:T(8,128)}', space=vmem, size = 0x1000, scoped, tag = 'scratch operand']
  #allocation3 [shape = 'f32[8,128]{1,0:T(8,128)}', space=vmem, size = 0x1000, scoped, tag = 'scratch operand']
  %s0 = inlined_call_operand.vmem [shape: f32[4,8,512], index: 0, kind: input, shape index: {}]
  %s1 = inlined_call_operand.hbm [shape: f32[128,512], index: 1, kind: input, shape index: {}]
  %s2 = inlined_call_operand.vmem [shape: f32[8,128], index: 2, kind: input, shape index: {}]
  %s3 = inlined_call_operand.vmem [shape: f32[8,128], index: 3, kind: input, shape index: {}]
  %s4 = inlined_call_operand.vmem [shape: f32[4,8,128], index: 4, kind: output, shape index: {0}]
  %s5 = inlined_call_operand.hbm [shape: f32[8,128], index: 5, kind: output, shape index: {1}]
  %6 = xla_tuple %s4, %s5
  %s7 = sld [smem:[#allocation0]]
  $region46: #{seq2seq_forward.11} parent=0
    _
  %s9 = ssub.s32 1, %s7
  %s10 = scalar_select 0, %s9, %s7
  $region1: #{seq2seq_forward.11} parent=0
    #allocation4 [shape = 'u8[262144]{0}', space=vmem, size = 0x40000, scoped, tag = 'input window, operand 1, single buffered']
    #allocation5 [shape = 's32[1]{0}', space=sflag, size = 0x4, scoped, tag = 'scoped memory for seq2seq_forward.11']
    #allocation6 [shape = 's32[1]{0}', space=sflag, size = 0x4, scoped, tag = 'scoped memory for seq2seq_forward.11']
    #allocation7 [shape = 'u8[4096]{0}', space=vmem, size = 0x1000, scoped, tag = 'output window, operand 1, single buffered']
    %11 = vsyncpa [#allocation5], 0
    %12 = vsyncpa [#allocation6], 0
    // Predicated region
    $region2: #{seq2seq_forward.11} parent=1 // pred_check
      _
    $region3: #{seq2seq_forward.11} parent=1 // pred_check_branch
      %14 = sbr.rel (0) target = $region5
    $region4: #{seq2seq_forward.11} parent=1 // pred_region
      _
    $region5: #{seq2seq_forward.11} parent=1 // pred_fallthru
      _
    // Predicated region
    $region6: #{seq2seq_forward.11} parent=1 // pred_check
      _
    $region7: #{seq2seq_forward.11} parent=1 // pred_check_branch
      %16 = sbr.rel (0) target = $region9
    $region8: #{seq2seq_forward.11} parent=1 // pred_region
      %18 = vsyncadd [#allocation5], 0
      %s19 = sshll.u32 %s1, 4
      %s20 = int_to_ptr.hbm [resolvable:$true] %s19
      %s21 = sshll.u32 [#allocation4], 4
      %s22 = int_to_ptr.vmem [resolvable:$true] %s21
      %27 = dma.hbm_to_vmem [thread:$0]  %s20, 8192, %s22, [#allocation5], 512, 512, 32
    $region9: #{seq2seq_forward.11} parent=1 // pred_fallthru
      _
    // Predicated region
    $region10: #{seq2seq_forward.11} parent=1 // pred_check
      _
    $region11: #{seq2seq_forward.11} parent=1 // pred_check_branch
      %29 = sbr.rel (0) target = $region13
    $region12: #{seq2seq_forward.11} parent=1 // pred_region
      _
    $region13: #{seq2seq_forward.11} parent=1 // pred_fallthru
      _
    // Predicated region
    $region14: #{seq2seq_forward.11} parent=1 // pred_check
      _
    $region15: #{seq2seq_forward.11} parent=1 // pred_check_branch
      %31 = sbr.rel (0) target = $region17
    $region16: #{seq2seq_forward.11} parent=1 // pred_region
      _
    $region17: #{seq2seq_forward.11} parent=1 // pred_fallthru
      _
    // Predicated region
    $region18: #{seq2seq_forward.11} parent=1 // pred_check
      _
    $region19: #{seq2seq_forward.11} parent=1 // pred_check_branch
      %33 = sbr.rel (0) target = $region21
    $region20: #{seq2seq_forward.11} parent=1 // pred_region
      %35 = dma.done [#allocation5], 8192
    $region21: #{seq2seq_forward.11} parent=1 // pred_fallthru
      _
    %p36 = scmp.eq.s32.totalorder 0, 0
    // Predicated region
    $region22: #{seq2seq_forward.11} parent=1 // pred_check
      %p37 = pneg %p36
    $region23: #{seq2seq_forward.11} parent=1 // pred_check_branch
      %39 = sbr.rel (%p37) target = $region25
    $region24: #{seq2seq_forward.11} parent=1 // pred_region
      %v40 = vld [vmem:[%s2] sm:$0xff]
      %41 = vst [vmem:[#allocation2] sm:$0xff] %v40
      %v42 = vld [vmem:[%s3] sm:$0xff]
      %43 = vst [vmem:[#allocation3] sm:$0xff] %v42
    $region25: #{seq2seq_forward.11} parent=1 // pred_fallthru
      _
    %v44 = vld [vmem:[#allocation4] sm:$0xff]
    %v45 = vld [vmem:[#allocation4 + $0x8] sm:$0xff]
    %v46 = vld [vmem:[#allocation4 + $0x10] sm:$0xff]
    %v47 = vld [vmem:[#allocation4 + $0x18] sm:$0xff]
    %v48 = vld [vmem:[#allocation4 + $0x20] sm:$0xff]
    %v49 = vld [vmem:[#allocation4 + $0x28] sm:$0xff]
    %v50 = vld [vmem:[#allocation4 + $0x30] sm:$0xff]
    %v51 = vld [vmem:[#allocation4 + $0x38] sm:$0xff]
    %v52 = vld [vmem:[#allocation4 + $0x40] sm:$0xff]
    %v53 = vld [vmem:[#allocation4 + $0x48] sm:$0xff]
    %v54 = vld [vmem:[#allocation4 + $0x50] sm:$0xff]
    %v55 = vld [vmem:[#allocation4 + $0x58] sm:$0xff]
    %v56 = vld [vmem:[#allocation4 + $0x60] sm:$0xff]
    %v57 = vld [vmem:[#allocation4 + $0x68] sm:$0xff]
    %v58 = vld [vmem:[#allocation4 + $0x70] sm:$0xff]
    %v59 = vld [vmem:[#allocation4 + $0x78] sm:$0xff]
    %v60 = vld [vmem:[#allocation4 + $0x80] sm:$0xff]
    %v61 = vld [vmem:[#allocation4 + $0x88] sm:$0xff]
    %v62 = vld [vmem:[#allocation4 + $0x90] sm:$0xff]
    %v63 = vld [vmem:[#allocation4 + $0x98] sm:$0xff]
    %v64 = vld [vmem:[#allocation4 + $0xa0] sm:$0xff]
    %v65 = vld [vmem:[#allocation4 + $0xa8] sm:$0xff]
    %v66 = vld [vmem:[#allocation4 + $0xb0] sm:$0xff]
    %v67 = vld [vmem:[#allocation4 + $0xb8] sm:$0xff]
    %v68 = vld [vmem:[#allocation4 + $0xc0] sm:$0xff]
    %v69 = vld [vmem:[#allocation4 + $0xc8] sm:$0xff]
    %v70 = vld [vmem:[#allocation4 + $0xd0] sm:$0xff]
    %v71 = vld [vmem:[#allocation4 + $0xd8] sm:$0xff]
    %v72 = vld [vmem:[#allocation4 + $0xe0] sm:$0xff]
    %v73 = vld [vmem:[#allocation4 + $0xe8] sm:$0xff]
    %v74 = vld [vmem:[#allocation4 + $0xf0] sm:$0xff]
    %v75 = vld [vmem:[#allocation4 + $0xf8] sm:$0xff]
    %v76 = vld [vmem:[#allocation4 + $0x100] sm:$0xff]
    %v77 = vld [vmem:[#allocation4 + $0x108] sm:$0xff]
    %v78 = vld [vmem:[#allocation4 + $0x110] sm:$0xff]
    %v79 = vld [vmem:[#allocation4 + $0x118] sm:$0xff]
    %v80 = vld [vmem:[#allocation4 + $0x120] sm:$0xff]
    %v81 = vld [vmem:[#allocation4 + $0x128] sm:$0xff]
    %v82 = vld [vmem:[#allocation4 + $0x130] sm:$0xff]
    %v83 = vld [vmem:[#allocation4 + $0x138] sm:$0xff]
    %v84 = vld [vmem:[#allocation4 + $0x140] sm:$0xff]
    %v85 = vld [vmem:[#allocation4 + $0x148] sm:$0xff]
    %v86 = vld [vmem:[#allocation4 + $0x150] sm:$0xff]
    %v87 = vld [vmem:[#allocation4 + $0x158] sm:$0xff]
    %v88 = vld [vmem:[#allocation4 + $0x160] sm:$0xff]
    %v89 = vld [vmem:[#allocation4 + $0x168] sm:$0xff]
    %v90 = vld [vmem:[#allocation4 + $0x170] sm:$0xff]
    %v91 = vld [vmem:[#allocation4 + $0x178] sm:$0xff]
    %v92 = vld [vmem:[#allocation4 + $0x180] sm:$0xff]
    %v93 = vld [vmem:[#allocation4 + $0x188] sm:$0xff]
    %v94 = vld [vmem:[#allocation4 + $0x190] sm:$0xff]
    %v95 = vld [vmem:[#allocation4 + $0x198] sm:$0xff]
    %v96 = vld [vmem:[#allocation4 + $0x1a0] sm:$0xff]
    %v97 = vld [vmem:[#allocation4 + $0x1a8] sm:$0xff]
    %v98 = vld [vmem:[#allocation4 + $0x1b0] sm:$0xff]
    %v99 = vld [vmem:[#allocation4 + $0x1b8] sm:$0xff]
    %v100 = vld [vmem:[#allocation4 + $0x1c0] sm:$0xff]
    %v101 = vld [vmem:[#allocation4 + $0x1c8] sm:$0xff]
    %v102 = vld [vmem:[#allocation4 + $0x1d0] sm:$0xff]
    %v103 = vld [vmem:[#allocation4 + $0x1d8] sm:$0xff]
    %v104 = vld [vmem:[#allocation4 + $0x1e0] sm:$0xff]
    %v105 = vld [vmem:[#allocation4 + $0x1e8] sm:$0xff]
    %v106 = vld [vmem:[#allocation4 + $0x1f0] sm:$0xff]
    %v107 = vld [vmem:[#allocation4 + $0x1f8] sm:$0xff]
    %v108 = vld [vmem:[#allocation2] sm:$0xff]
    %v109 = vld [vmem:[#allocation3] sm:$0xff]
    %v110 = vld [vmem:[%s0] sm:$0xff]
    %v111 = vld [vmem:[%s0 + $0x8] sm:$0xff]
    %v112 = vld [vmem:[%s0 + $0x10] sm:$0xff]
    %v113 = vld [vmem:[%s0 + $0x18] sm:$0xff]
    %114 = vmatpush.msra.mxu0 %v104
    %115 = vmatpush.msra.mxu0 %v100
    %116 = vmatpush.msra.mxu0 %v96
    %117 = vmatpush.msra.mxu0 %v92
    %118 = vmatpush.msra.mxu0 %v88
    %119 = vmatpush.msra.mxu0 %v84
    %120 = vmatpush.msra.mxu0 %v80
    %121 = vmatpush.msra.mxu0 %v76
    %122 = vmatpush.msra.mxu0 %v72
    %123 = vmatpush.msra.mxu0 %v68
    %124 = vmatpush.msra.mxu0 %v64
    %125 = vmatpush.msra.mxu0 %v60
    %126 = vmatpush.msra.mxu0 %v56
    %127 = vmatpush.msra.mxu0 %v52
    %128 = vmatpush.msra.mxu0 %v48
    %129 = vmatpush.msra.mxu0 %v44
    %130 = vmatmul.f32.gmra.mxu0 %v108
    %v131 = vpop.f32.mrf.mxu0
    %v132 = vadd.f32 0.0, %v131
    %133 = vdwg.mxu0
    %134 = vmatpush.msra.mxu0 %v105
    %135 = vmatpush.msra.mxu0 %v101
    %136 = vmatpush.msra.mxu0 %v97
    %137 = vmatpush.msra.mxu0 %v93
    %138 = vmatpush.msra.mxu0 %v89
    %139 = vmatpush.msra.mxu0 %v85
    %140 = vmatpush.msra.mxu0 %v81
    %141 = vmatpush.msra.mxu0 %v77
    %142 = vmatpush.msra.mxu0 %v73
    %143 = vmatpush.msra.mxu0 %v69
    %144 = vmatpush.msra.mxu0 %v65
    %145 = vmatpush.msra.mxu0 %v61
    %146 = vmatpush.msra.mxu0 %v57
    %147 = vmatpush.msra.mxu0 %v53
    %148 = vmatpush.msra.mxu0 %v49
    %149 = vmatpush.msra.mxu0 %v45
    %150 = vmatmul.f32.gmra.mxu0 %v108
    %v151 = vpop.f32.mrf.mxu0
    %v152 = vadd.f32 0.0, %v151
    %153 = vdwg.mxu0
    %154 = vmatpush.msra.mxu0 %v106
    %155 = vmatpush.msra.mxu0 %v102
    %156 = vmatpush.msra.mxu0 %v98
    %157 = vmatpush.msra.mxu0 %v94
    %158 = vmatpush.msra.mxu0 %v90
    %159 = vmatpush.msra.mxu0 %v86
    %160 = vmatpush.msra.mxu0 %v82
    %161 = vmatpush.msra.mxu0 %v78
    %162 = vmatpush.msra.mxu0 %v74
    %163 = vmatpush.msra.mxu0 %v70
    %164 = vmatpush.msra.mxu0 %v66
    %165 = vmatpush.msra.mxu0 %v62
    %166 = vmatpush.msra.mxu0 %v58
    %167 = vmatpush.msra.mxu0 %v54
    %168 = vmatpush.msra.mxu0 %v50
    %169 = vmatpush.msra.mxu0 %v46
    %170 = vmatmul.f32.gmra.mxu0 %v108
    %v171 = vpop.f32.mrf.mxu0
    %v172 = vadd.f32 0.0, %v171
    %173 = vdwg.mxu0
    %174 = vmatpush.msra.mxu0 %v107
    %175 = vmatpush.msra.mxu0 %v103
    %176 = vmatpush.msra.mxu0 %v99
    %177 = vmatpush.msra.mxu0 %v95
    %178 = vmatpush.msra.mxu0 %v91
    %179 = vmatpush.msra.mxu0 %v87
    %180 = vmatpush.msra.mxu0 %v83
    %181 = vmatpush.msra.mxu0 %v79
    %182 = vmatpush.msra.mxu0 %v75
    %183 = vmatpush.msra.mxu0 %v71
    %184 = vmatpush.msra.mxu0 %v67
    %185 = vmatpush.msra.mxu0 %v63
    %186 = vmatpush.msra.mxu0 %v59
    %187 = vmatpush.msra.mxu0 %v55
    %188 = vmatpush.msra.mxu0 %v51
    %189 = vmatpush.msra.mxu0 %v47
    %190 = vmatmul.f32.gmra.mxu0 %v108
    %v191 = vpop.f32.mrf.mxu0
    %v192 = vadd.f32 0.0, %v191
    %193 = vdwg.mxu0
    %v194 = vadd.f32 %v110, %v132
    %v195 = vadd.f32 %v111, %v152
    %v196 = vadd.f32 %v112, %v172
    %v197 = vadd.f32 %v113, %v192
    %v198 = vxor.u32 %v194, 2147483648
    %v199 = vmul.f32 %v198, 1.442695
    %v200 = vpow.pop %v199
    %v201 = vadd.f32 %v200, 1.0
    %v202 = vrcp.pop %v201
    %v203 = vmul.f32 %v201, %v202
    %v204 = vsub.f32 1.0, %v203
    %v205 = vmul.f32 %v202, %v204
    %v206 = vadd.f32 %v202, %v205
    %vm207 = vweird.f32 %v201
    %vm208 = vweird.f32 %v202
    %vm209 = vmor %vm207, %vm208
    %v210 = vsel %vm209, %v202, %v206
    %v211 = vand.u32 2147483647, %v201
    %vm212 = vcmp.eq.f32.partialorder %v211, 8.507059e+37
    %v213 = vand.u32 %v201, 2147483648
    %v214 = vor.u32 1.1754944e-38, %v213
    %v215 = vsel %vm212, %v214, %v210
    %v216 = vmul.f32 1.0, %v215
    %v217 = vxor.u32 %v195, 2147483648
    %v218 = vmul.f32 %v217, 1.442695
    %v219 = vpow.pop %v218
    %v220 = vadd.f32 %v219, 1.0
    %v221 = vrcp.pop %v220
    %v222 = vmul.f32 %v220, %v221
    %v223 = vsub.f32 1.0, %v222
    %v224 = vmul.f32 %v221, %v223
    %v225 = vadd.f32 %v221, %v224
    %vm226 = vweird.f32 %v220
    %vm227 = vweird.f32 %v221
    %vm228 = vmor %vm226, %vm227
    %v229 = vsel %vm228, %v221, %v225
    %v230 = vand.u32 2147483647, %v220
    %vm231 = vcmp.eq.f32.partialorder %v230, 8.507059e+37
    %v232 = vand.u32 %v220, 2147483648
    %v233 = vor.u32 1.1754944e-38, %v232
    %v234 = vsel %vm231, %v233, %v229
    %v235 = vmul.f32 1.0, %v234
    %v236 = vtanh.pop %v196
    %v237 = vxor.u32 %v197, 2147483648
    %v238 = vmul.f32 %v237, 1.442695
    %v239 = vpow.pop %v238
    %v240 = vadd.f32 %v239, 1.0
    %v241 = vrcp.pop %v240
    %v242 = vmul.f32 %v240, %v241
    %v243 = vsub.f32 1.0, %v242
    %v244 = vmul.f32 %v241, %v243
    %v245 = vadd.f32 %v241, %v244
    %vm246 = vweird.f32 %v240
    %vm247 = vweird.f32 %v241
    %vm248 = vmor %vm246, %vm247
    %v249 = vsel %vm248, %v241, %v245
    %v250 = vand.u32 2147483647, %v240
    %vm251 = vcmp.eq.f32.partialorder %v250, 8.507059e+37
    %v252 = vand.u32 %v240, 2147483648
    %v253 = vor.u32 1.1754944e-38, %v252
    %v254 = vsel %vm251, %v253, %v249
    %v255 = vmul.f32 1.0, %v254
    %v256 = vmul.f32 %v235, %v109
    %v257 = vmul.f32 %v216, %v236
    %v258 = vadd.f32 %v256, %v257
    %v259 = vtanh.pop %v258
    %v260 = vmul.f32 %v255, %v259
    %261 = vst [vmem:[%s4] sm:$0xff] %v260
    %s262 = scalar_lea.vmem %s0, 32
    %v263 = vld [vmem:[%s262] sm:$0xff]
    %v264 = vld [vmem:[%s262 + $0x8] sm:$0xff]
    %v265 = vld [vmem:[%s262 + $0x10] sm:$0xff]
    %v266 = vld [vmem:[%s262 + $0x18] sm:$0xff]
    %267 = vmatpush.msra.mxu0 %v104
    %268 = vmatpush.msra.mxu0 %v100
    %269 = vmatpush.msra.mxu0 %v96
    %270 = vmatpush.msra.mxu0 %v92
    %271 = vmatpush.msra.mxu0 %v88
    %272 = vmatpush.msra.mxu0 %v84
    %273 = vmatpush.msra.mxu0 %v80
    %274 = vmatpush.msra.mxu0 %v76
    %275 = vmatpush.msra.mxu0 %v72
    %276 = vmatpush.msra.mxu0 %v68
    %277 = vmatpush.msra.mxu0 %v64
    %278 = vmatpush.msra.mxu0 %v60
    %279 = vmatpush.msra.mxu0 %v56
    %280 = vmatpush.msra.mxu0 %v52
    %281 = vmatpush.msra.mxu0 %v48
    %282 = vmatpush.msra.mxu0 %v44
    %283 = vmatmul.f32.gmra.mxu0 %v260
    %v284 = vpop.f32.mrf.mxu0
    %v285 = vadd.f32 0.0, %v284
    %286 = vdwg.mxu0
    %287 = vmatpush.msra.mxu0 %v105
    %288 = vmatpush.msra.mxu0 %v101
    %289 = vmatpush.msra.mxu0 %v97
    %290 = vmatpush.msra.mxu0 %v93
    %291 = vmatpush.msra.mxu0 %v89
    %292 = vmatpush.msra.mxu0 %v85
    %293 = vmatpush.msra.mxu0 %v81
    %294 = vmatpush.msra.mxu0 %v77
    %295 = vmatpush.msra.mxu0 %v73
    %296 = vmatpush.msra.mxu0 %v69
    %297 = vmatpush.msra.mxu0 %v65
    %298 = vmatpush.msra.mxu0 %v61
    %299 = vmatpush.msra.mxu0 %v57
    %300 = vmatpush.msra.mxu0 %v53
    %301 = vmatpush.msra.mxu0 %v49
    %302 = vmatpush.msra.mxu0 %v45
    %303 = vmatmul.f32.gmra.mxu0 %v260
    %v304 = vpop.f32.mrf.mxu0
    %v305 = vadd.f32 0.0, %v304
    %306 = vdwg.mxu0
    %307 = vmatpush.msra.mxu0 %v106
    %308 = vmatpush.msra.mxu0 %v102
    %309 = vmatpush.msra.mxu0 %v98
    %310 = vmatpush.msra.mxu0 %v94
    %311 = vmatpush.msra.mxu0 %v90
    %312 = vmatpush.msra.mxu0 %v86
    %313 = vmatpush.msra.mxu0 %v82
    %314 = vmatpush.msra.mxu0 %v78
    %315 = vmatpush.msra.mxu0 %v74
    %316 = vmatpush.msra.mxu0 %v70
    %317 = vmatpush.msra.mxu0 %v66
    %318 = vmatpush.msra.mxu0 %v62
    %319 = vmatpush.msra.mxu0 %v58
    %320 = vmatpush.msra.mxu0 %v54
    %321 = vmatpush.msra.mxu0 %v50
    %322 = vmatpush.msra.mxu0 %v46
    %323 = vmatmul.f32.gmra.mxu0 %v260
    %v324 = vpop.f32.mrf.mxu0
    %v325 = vadd.f32 0.0, %v324
    %326 = vdwg.mxu0
    %327 = vmatpush.msra.mxu0 %v107
    %328 = vmatpush.msra.mxu0 %v103
    %329 = vmatpush.msra.mxu0 %v99
    %330 = vmatpush.msra.mxu0 %v95
    %331 = vmatpush.msra.mxu0 %v91
    %332 = vmatpush.msra.mxu0 %v87
    %333 = vmatpush.msra.mxu0 %v83
    %334 = vmatpush.msra.mxu0 %v79
    %335 = vmatpush.msra.mxu0 %v75
    %336 = vmatpush.msra.mxu0 %v71
    %337 = vmatpush.msra.mxu0 %v67
    %338 = vmatpush.msra.mxu0 %v63
    %339 = vmatpush.msra.mxu0 %v59
    %340 = vmatpush.msra.mxu0 %v55
    %341 = vmatpush.msra.mxu0 %v51
    %342 = vmatpush.msra.mxu0 %v47
    %343 = vmatmul.f32.gmra.mxu0 %v260
    %v344 = vpop.f32.mrf.mxu0
    %v345 = vadd.f32 0.0, %v344
    %346 = vdwg.mxu0
    %v347 = vadd.f32 %v263, %v285
    %v348 = vadd.f32 %v264, %v305
    %v349 = vadd.f32 %v265, %v325
    %v350 = vadd.f32 %v266, %v345
    %v351 = vxor.u32 %v347, 2147483648
    %v352 = vmul.f32 %v351, 1.442695
    %v353 = vpow.pop %v352
    %v354 = vadd.f32 %v353, 1.0
    %v355 = vrcp.pop %v354
    %v356 = vmul.f32 %v354, %v355
    %v357 = vsub.f32 1.0, %v356
    %v358 = vmul.f32 %v355, %v357
    %v359 = vadd.f32 %v355, %v358
    %vm360 = vweird.f32 %v354
    %vm361 = vweird.f32 %v355
    %vm362 = vmor %vm360, %vm361
    %v363 = vsel %vm362, %v355, %v359
    %v364 = vand.u32 2147483647, %v354
    %vm365 = vcmp.eq.f32.partialorder %v364, 8.507059e+37
    %v366 = vand.u32 %v354, 2147483648
    %v367 = vor.u32 1.1754944e-38, %v366
    %v368 = vsel %vm365, %v367, %v363
    %v369 = vmul.f32 1.0, %v368
    %v370 = vxor.u32 %v348, 2147483648
    %v371 = vmul.f32 %v370, 1.442695
    %v372 = vpow.pop %v371
    %v373 = vadd.f32 %v372, 1.0
    %v374 = vrcp.pop %v373
    %v375 = vmul.f32 %v373, %v374
    %v376 = vsub.f32 1.0, %v375
    %v377 = vmul.f32 %v374, %v376
    %v378 = vadd.f32 %v374, %v377
    %vm379 = vweird.f32 %v373
    %vm380 = vweird.f32 %v374
    %vm381 = vmor %vm379, %vm380
    %v382 = vsel %vm381, %v374, %v378
    %v383 = vand.u32 2147483647, %v373
    %vm384 = vcmp.eq.f32.partialorder %v383, 8.507059e+37
    %v385 = vand.u32 %v373, 2147483648
    %v386 = vor.u32 1.1754944e-38, %v385
    %v387 = vsel %vm384, %v386, %v382
    %v388 = vmul.f32 1.0, %v387
    %v389 = vtanh.pop %v349
    %v390 = vxor.u32 %v350, 2147483648
    %v391 = vmul.f32 %v390, 1.442695
    %v392 = vpow.pop %v391
    %v393 = vadd.f32 %v392, 1.0
    %v394 = vrcp.pop %v393
    %v395 = vmul.f32 %v393, %v394
    %v396 = vsub.f32 1.0, %v395
    %v397 = vmul.f32 %v394, %v396
    %v398 = vadd.f32 %v394, %v397
    %vm399 = vweird.f32 %v393
    %vm400 = vweird.f32 %v394
    %vm401 = vmor %vm399, %vm400
    %v402 = vsel %vm401, %v394, %v398
    %v403 = vand.u32 2147483647, %v393
    %vm404 = vcmp.eq.f32.partialorder %v403, 8.507059e+37
    %v405 = vand.u32 %v393, 2147483648
    %v406 = vor.u32 1.1754944e-38, %v405
    %v407 = vsel %vm404, %v406, %v402
    %v408 = vmul.f32 1.0, %v407
    %v409 = vmul.f32 %v388, %v258
    %v410 = vmul.f32 %v369, %v389
    %v411 = vadd.f32 %v409, %v410
    %v412 = vtanh.pop %v411
    %v413 = vmul.f32 %v408, %v412
    %s414 = scalar_lea.vmem %s4, 8
    %415 = vst [vmem:[%s414] sm:$0xff] %v413
    %s416 = scalar_lea.vmem %s0, 64
    %v417 = vld [vmem:[%s416] sm:$0xff]
    %v418 = vld [vmem:[%s416 + $0x8] sm:$0xff]
    %v419 = vld [vmem:[%s416 + $0x10] sm:$0xff]
    %v420 = vld [vmem:[%s416 + $0x18] sm:$0xff]
    %421 = vmatpush.msra.mxu0 %v104
    %422 = vmatpush.msra.mxu0 %v100
    %423 = vmatpush.msra.mxu0 %v96
    %424 = vmatpush.msra.mxu0 %v92
    %425 = vmatpush.msra.mxu0 %v88
    %426 = vmatpush.msra.mxu0 %v84
    %427 = vmatpush.msra.mxu0 %v80
    %428 = vmatpush.msra.mxu0 %v76
    %429 = vmatpush.msra.mxu0 %v72
    %430 = vmatpush.msra.mxu0 %v68
    %431 = vmatpush.msra.mxu0 %v64
    %432 = vmatpush.msra.mxu0 %v60
    %433 = vmatpush.msra.mxu0 %v56
    %434 = vmatpush.msra.mxu0 %v52
    %435 = vmatpush.msra.mxu0 %v48
    %436 = vmatpush.msra.mxu0 %v44
    %437 = vmatmul.f32.gmra.mxu0 %v413
    %v438 = vpop.f32.mrf.mxu0
    %v439 = vadd.f32 0.0, %v438
    %440 = vdwg.mxu0
    %441 = vmatpush.msra.mxu0 %v105
    %442 = vmatpush.msra.mxu0 %v101
    %443 = vmatpush.msra.mxu0 %v97
    %444 = vmatpush.msra.mxu0 %v93
    %445 = vmatpush.msra.mxu0 %v89
    %446 = vmatpush.msra.mxu0 %v85
    %447 = vmatpush.msra.mxu0 %v81
    %448 = vmatpush.msra.mxu0 %v77
    %449 = vmatpush.msra.mxu0 %v73
    %450 = vmatpush.msra.mxu0 %v69
    %451 = vmatpush.msra.mxu0 %v65
    %452 = vmatpush.msra.mxu0 %v61
    %453 = vmatpush.msra.mxu0 %v57
    %454 = vmatpush.msra.mxu0 %v53
    %455 = vmatpush.msra.mxu0 %v49
    %456 = vmatpush.msra.mxu0 %v45
    %457 = vmatmul.f32.gmra.mxu0 %v413
    %v458 = vpop.f32.mrf.mxu0
    %v459 = vadd.f32 0.0, %v458
    %460 = vdwg.mxu0
    %461 = vmatpush.msra.mxu0 %v106
    %462 = vmatpush.msra.mxu0 %v102
    %463 = vmatpush.msra.mxu0 %v98
    %464 = vmatpush.msra.mxu0 %v94
    %465 = vmatpush.msra.mxu0 %v90
    %466 = vmatpush.msra.mxu0 %v86
    %467 = vmatpush.msra.mxu0 %v82
    %468 = vmatpush.msra.mxu0 %v78
    %469 = vmatpush.msra.mxu0 %v74
    %470 = vmatpush.msra.mxu0 %v70
    %471 = vmatpush.msra.mxu0 %v66
    %472 = vmatpush.msra.mxu0 %v62
    %473 = vmatpush.msra.mxu0 %v58
    %474 = vmatpush.msra.mxu0 %v54
    %475 = vmatpush.msra.mxu0 %v50
    %476 = vmatpush.msra.mxu0 %v46
    %477 = vmatmul.f32.gmra.mxu0 %v413
    %v478 = vpop.f32.mrf.mxu0
    %v479 = vadd.f32 0.0, %v478
    %480 = vdwg.mxu0
    %481 = vmatpush.msra.mxu0 %v107
    %482 = vmatpush.msra.mxu0 %v103
    %483 = vmatpush.msra.mxu0 %v99
    %484 = vmatpush.msra.mxu0 %v95
    %485 = vmatpush.msra.mxu0 %v91
    %486 = vmatpush.msra.mxu0 %v87
    %487 = vmatpush.msra.mxu0 %v83
    %488 = vmatpush.msra.mxu0 %v79
    %489 = vmatpush.msra.mxu0 %v75
    %490 = vmatpush.msra.mxu0 %v71
    %491 = vmatpush.msra.mxu0 %v67
    %492 = vmatpush.msra.mxu0 %v63
    %493 = vmatpush.msra.mxu0 %v59
    %494 = vmatpush.msra.mxu0 %v55
    %495 = vmatpush.msra.mxu0 %v51
    %496 = vmatpush.msra.mxu0 %v47
    %497 = vmatmul.f32.gmra.mxu0 %v413
    %v498 = vpop.f32.mrf.mxu0
    %v499 = vadd.f32 0.0, %v498
    %500 = vdwg.mxu0
    %v501 = vadd.f32 %v417, %v439
    %v502 = vadd.f32 %v418, %v459
    %v503 = vadd.f32 %v419, %v479
    %v504 = vadd.f32 %v420, %v499
    %v505 = vxor.u32 %v501, 2147483648
    %v506 = vmul.f32 %v505, 1.442695
    %v507 = vpow.pop %v506
    %v508 = vadd.f32 %v507, 1.0
    %v509 = vrcp.pop %v508
    %v510 = vmul.f32 %v508, %v509
    %v511 = vsub.f32 1.0, %v510
    %v512 = vmul.f32 %v509, %v511
    %v513 = vadd.f32 %v509, %v512
    %vm514 = vweird.f32 %v508
    %vm515 = vweird.f32 %v509
    %vm516 = vmor %vm514, %vm515
    %v517 = vsel %vm516, %v509, %v513
    %v518 = vand.u32 2147483647, %v508
    %vm519 = vcmp.eq.f32.partialorder %v518, 8.507059e+37
    %v520 = vand.u32 %v508, 2147483648
    %v521 = vor.u32 1.1754944e-38, %v520
    %v522 = vsel %vm519, %v521, %v517
    %v523 = vmul.f32 1.0, %v522
    %v524 = vxor.u32 %v502, 2147483648
    %v525 = vmul.f32 %v524, 1.442695
    %v526 = vpow.pop %v525
    %v527 = vadd.f32 %v526, 1.0
    %v528 = vrcp.pop %v527
    %v529 = vmul.f32 %v527, %v528
    %v530 = vsub.f32 1.0, %v529
    %v531 = vmul.f32 %v528, %v530
    %v532 = vadd.f32 %v528, %v531
    %vm533 = vweird.f32 %v527
    %vm534 = vweird.f32 %v528
    %vm535 = vmor %vm533, %vm534
    %v536 = vsel %vm535, %v528, %v532
    %v537 = vand.u32 2147483647, %v527
    %vm538 = vcmp.eq.f32.partialorder %v537, 8.507059e+37
    %v539 = vand.u32 %v527, 2147483648
    %v540 = vor.u32 1.1754944e-38, %v539
    %v541 = vsel %vm538, %v540, %v536
    %v542 = vmul.f32 1.0, %v541
    %v543 = vtanh.pop %v503
    %v544 = vxor.u32 %v504, 2147483648
    %v545 = vmul.f32 %v544, 1.442695
    %v546 = vpow.pop %v545
    %v547 = vadd.f32 %v546, 1.0
    %v548 = vrcp.pop %v547
    %v549 = vmul.f32 %v547, %v548
    %v550 = vsub.f32 1.0, %v549
    %v551 = vmul.f32 %v548, %v550
    %v552 = vadd.f32 %v548, %v551
    %vm553 = vweird.f32 %v547
    %vm554 = vweird.f32 %v548
    %vm555 = vmor %vm553, %vm554
    %v556 = vsel %vm555, %v548, %v552
    %v557 = vand.u32 2147483647, %v547
    %vm558 = vcmp.eq.f32.partialorder %v557, 8.507059e+37
    %v559 = vand.u32 %v547, 2147483648
    %v560 = vor.u32 1.1754944e-38, %v559
    %v561 = vsel %vm558, %v560, %v556
    %v562 = vmul.f32 1.0, %v561
    %v563 = vmul.f32 %v542, %v411
    %v564 = vmul.f32 %v523, %v543
    %v565 = vadd.f32 %v563, %v564
    %v566 = vtanh.pop %v565
    %v567 = vmul.f32 %v562, %v566
    %s568 = scalar_lea.vmem %s4, 16
    %569 = vst [vmem:[%s568] sm:$0xff] %v567
    %s570 = scalar_lea.vmem %s0, 96
    %v571 = vld [vmem:[%s570] sm:$0xff]
    %v572 = vld [vmem:[%s570 + $0x8] sm:$0xff]
    %v573 = vld [vmem:[%s570 + $0x10] sm:$0xff]
    %v574 = vld [vmem:[%s570 + $0x18] sm:$0xff]
    %575 = vmatpush.msra.mxu0 %v104
    %576 = vmatpush.msra.mxu0 %v100
    %577 = vmatpush.msra.mxu0 %v96
    %578 = vmatpush.msra.mxu0 %v92
    %579 = vmatpush.msra.mxu0 %v88
    %580 = vmatpush.msra.mxu0 %v84
    %581 = vmatpush.msra.mxu0 %v80
    %582 = vmatpush.msra.mxu0 %v76
    %583 = vmatpush.msra.mxu0 %v72
    %584 = vmatpush.msra.mxu0 %v68
    %585 = vmatpush.msra.mxu0 %v64
    %586 = vmatpush.msra.mxu0 %v60
    %587 = vmatpush.msra.mxu0 %v56
    %588 = vmatpush.msra.mxu0 %v52
    %589 = vmatpush.msra.mxu0 %v48
    %590 = vmatpush.msra.mxu0 %v44
    %591 = vmatmul.f32.gmra.mxu0 %v567
    %v592 = vpop.f32.mrf.mxu0
    %v593 = vadd.f32 0.0, %v592
    %594 = vdwg.mxu0
    %595 = vmatpush.msra.mxu0 %v105
    %596 = vmatpush.msra.mxu0 %v101
    %597 = vmatpush.msra.mxu0 %v97
    %598 = vmatpush.msra.mxu0 %v93
    %599 = vmatpush.msra.mxu0 %v89
    %600 = vmatpush.msra.mxu0 %v85
    %601 = vmatpush.msra.mxu0 %v81
    %602 = vmatpush.msra.mxu0 %v77
    %603 = vmatpush.msra.mxu0 %v73
    %604 = vmatpush.msra.mxu0 %v69
    %605 = vmatpush.msra.mxu0 %v65
    %606 = vmatpush.msra.mxu0 %v61
    %607 = vmatpush.msra.mxu0 %v57
    %608 = vmatpush.msra.mxu0 %v53
    %609 = vmatpush.msra.mxu0 %v49
    %610 = vmatpush.msra.mxu0 %v45
    %611 = vmatmul.f32.gmra.mxu0 %v567
    %v612 = vpop.f32.mrf.mxu0
    %v613 = vadd.f32 0.0, %v612
    %614 = vdwg.mxu0
    %615 = vmatpush.msra.mxu0 %v106
    %616 = vmatpush.msra.mxu0 %v102
    %617 = vmatpush.msra.mxu0 %v98
    %618 = vmatpush.msra.mxu0 %v94
    %619 = vmatpush.msra.mxu0 %v90
    %620 = vmatpush.msra.mxu0 %v86
    %621 = vmatpush.msra.mxu0 %v82
    %622 = vmatpush.msra.mxu0 %v78
    %623 = vmatpush.msra.mxu0 %v74
    %624 = vmatpush.msra.mxu0 %v70
    %625 = vmatpush.msra.mxu0 %v66
    %626 = vmatpush.msra.mxu0 %v62
    %627 = vmatpush.msra.mxu0 %v58
    %628 = vmatpush.msra.mxu0 %v54
    %629 = vmatpush.msra.mxu0 %v50
    %630 = vmatpush.msra.mxu0 %v46
    %631 = vmatmul.f32.gmra.mxu0 %v567
    %v632 = vpop.f32.mrf.mxu0
    %v633 = vadd.f32 0.0, %v632
    %634 = vdwg.mxu0
    %635 = vmatpush.msra.mxu0 %v107
    %636 = vmatpush.msra.mxu0 %v103
    %637 = vmatpush.msra.mxu0 %v99
    %638 = vmatpush.msra.mxu0 %v95
    %639 = vmatpush.msra.mxu0 %v91
    %640 = vmatpush.msra.mxu0 %v87
    %641 = vmatpush.msra.mxu0 %v83
    %642 = vmatpush.msra.mxu0 %v79
    %643 = vmatpush.msra.mxu0 %v75
    %644 = vmatpush.msra.mxu0 %v71
    %645 = vmatpush.msra.mxu0 %v67
    %646 = vmatpush.msra.mxu0 %v63
    %647 = vmatpush.msra.mxu0 %v59
    %648 = vmatpush.msra.mxu0 %v55
    %649 = vmatpush.msra.mxu0 %v51
    %650 = vmatpush.msra.mxu0 %v47
    %651 = vmatmul.f32.gmra.mxu0 %v567
    %v652 = vpop.f32.mrf.mxu0
    %v653 = vadd.f32 0.0, %v652
    %654 = vdwg.mxu0
    %v655 = vadd.f32 %v571, %v593
    %v656 = vadd.f32 %v572, %v613
    %v657 = vadd.f32 %v573, %v633
    %v658 = vadd.f32 %v574, %v653
    %v659 = vxor.u32 %v655, 2147483648
    %v660 = vmul.f32 %v659, 1.442695
    %v661 = vpow.pop %v660
    %v662 = vadd.f32 %v661, 1.0
    %v663 = vrcp.pop %v662
    %v664 = vmul.f32 %v662, %v663
    %v665 = vsub.f32 1.0, %v664
    %v666 = vmul.f32 %v663, %v665
    %v667 = vadd.f32 %v663, %v666
    %vm668 = vweird.f32 %v662
    %vm669 = vweird.f32 %v663
    %vm670 = vmor %vm668, %vm669
    %v671 = vsel %vm670, %v663, %v667
    %v672 = vand.u32 2147483647, %v662
    %vm673 = vcmp.eq.f32.partialorder %v672, 8.507059e+37
    %v674 = vand.u32 %v662, 2147483648
    %v675 = vor.u32 1.1754944e-38, %v674
    %v676 = vsel %vm673, %v675, %v671
    %v677 = vmul.f32 1.0, %v676
    %v678 = vxor.u32 %v656, 2147483648
    %v679 = vmul.f32 %v678, 1.442695
    %v680 = vpow.pop %v679
    %v681 = vadd.f32 %v680, 1.0
    %v682 = vrcp.pop %v681
    %v683 = vmul.f32 %v681, %v682
    %v684 = vsub.f32 1.0, %v683
    %v685 = vmul.f32 %v682, %v684
    %v686 = vadd.f32 %v682, %v685
    %vm687 = vweird.f32 %v681
    %vm688 = vweird.f32 %v682
    %vm689 = vmor %vm687, %vm688
    %v690 = vsel %vm689, %v682, %v686
    %v691 = vand.u32 2147483647, %v681
    %vm692 = vcmp.eq.f32.partialorder %v691, 8.507059e+37
    %v693 = vand.u32 %v681, 2147483648
    %v694 = vor.u32 1.1754944e-38, %v693
    %v695 = vsel %vm692, %v694, %v690
    %v696 = vmul.f32 1.0, %v695
    %v697 = vtanh.pop %v657
    %v698 = vxor.u32 %v658, 2147483648
    %v699 = vmul.f32 %v698, 1.442695
    %v700 = vpow.pop %v699
    %v701 = vadd.f32 %v700, 1.0
    %v702 = vrcp.pop %v701
    %v703 = vmul.f32 %v701, %v702
    %v704 = vsub.f32 1.0, %v703
    %v705 = vmul.f32 %v702, %v704
    %v706 = vadd.f32 %v702, %v705
    %vm707 = vweird.f32 %v701
    %vm708 = vweird.f32 %v702
    %vm709 = vmor %vm707, %vm708
    %v710 = vsel %vm709, %v702, %v706
    %v711 = vand.u32 2147483647, %v701
    %vm712 = vcmp.eq.f32.partialorder %v711, 8.507059e+37
    %v713 = vand.u32 %v701, 2147483648
    %v714 = vor.u32 1.1754944e-38, %v713
    %v715 = vsel %vm712, %v714, %v710
    %v716 = vmul.f32 1.0, %v715
    %v717 = vmul.f32 %v696, %v565
    %v718 = vmul.f32 %v677, %v697
    %v719 = vadd.f32 %v717, %v718
    %v720 = vtanh.pop %v719
    %v721 = vmul.f32 %v716, %v720
    %s722 = scalar_lea.vmem %s4, 24
    %723 = vst [vmem:[%s722] sm:$0xff] %v721
    %724 = vst [vmem:[#allocation2] sm:$0xff] %v721
    %725 = vst [vmem:[#allocation3] sm:$0xff] %v719
    // Predicated region
    $region26: #{seq2seq_forward.11} parent=1 // pred_check
      %p726 = pneg %p36
    $region27: #{seq2seq_forward.11} parent=1 // pred_check_branch
      %728 = sbr.rel (%p726) target = $region29
    $region28: #{seq2seq_forward.11} parent=1 // pred_region
      %729 = vst [vmem:[#allocation7] sm:$0xff] %v719
    $region29: #{seq2seq_forward.11} parent=1 // pred_fallthru
      _
    // Predicated region
    $region30: #{seq2seq_forward.11} parent=1 // pred_check
      _
    $region31: #{seq2seq_forward.11} parent=1 // pred_check_branch
      %731 = sbr.rel (0) target = $region33
    $region32: #{seq2seq_forward.11} parent=1 // pred_region
      _
    $region33: #{seq2seq_forward.11} parent=1 // pred_fallthru
      _
    // Predicated region
    $region34: #{seq2seq_forward.11} parent=1 // pred_check
      _
    $region35: #{seq2seq_forward.11} parent=1 // pred_check_branch
      %733 = sbr.rel (0) target = $region37
    $region36: #{seq2seq_forward.11} parent=1 // pred_region
      %735 = vsyncadd [#allocation6], 0
      %s737 = sshll.u32 [#allocation7], 4
      %s738 = int_to_ptr.vmem [resolvable:$true] %s737
      %s739 = sshll.u32 %s5, 4
      %s740 = int_to_ptr.hbm [resolvable:$true] %s739
      %742 = dma.vmem_to_hbm [thread:$0]  %s738, 128, %s740, [#allocation6]
    $region37: #{seq2seq_forward.11} parent=1 // pred_fallthru
      _
    // Predicated region
    $region38: #{seq2seq_forward.11} parent=1 // pred_check
      _
    $region39: #{seq2seq_forward.11} parent=1 // pred_check_branch
      %744 = sbr.rel (0) target = $region41
    $region40: #{seq2seq_forward.11} parent=1 // pred_region
      _
    $region41: #{seq2seq_forward.11} parent=1 // pred_fallthru
      _
    // Predicated region
    $region42: #{seq2seq_forward.11} parent=1 // pred_check
      _
    $region43: #{seq2seq_forward.11} parent=1 // pred_check_branch
      %746 = sbr.rel (0) target = $region45
    $region44: #{seq2seq_forward.11} parent=1 // pred_region
      %748 = dma.done [#allocation6], 128
    $region45: #{seq2seq_forward.11} parent=1 // pred_fallthru
      _
    %749 = vsyncpa [#allocation5], 1
    %750 = vsyncpa [#allocation6], 1

// kernel: seq2seq_forward.9
$region0: #{seq2seq_forward.9}
  #allocation0 [shape = 'u32[]', space=smem, size = 0x4, offset = 0x4, fixed_abs, tag = 'smem constant byte address 0x4 - core index']
  #allocation1 [shape = 'u32[72,128]{1,0:T(1,128)}', space=vmem, size = 0x9000, scoped, tag = 'internal scratch']
  #allocation2 [shape = 'f32[8,128]{1,0:T(8,128)}', space=vmem, size = 0x1000, scoped, tag = 'scratch operand']
  #allocation3 [shape = 'f32[8,128]{1,0:T(8,128)}', space=vmem, size = 0x1000, scoped, tag = 'scratch operand']
  %s0 = inlined_call_operand.vmem [shape: f32[16,8,512], index: 0, kind: input, shape index: {}]
  %s1 = inlined_call_operand.hbm [shape: f32[128,512], index: 1, kind: input, shape index: {}]
  %s2 = inlined_call_operand.vmem [shape: f32[8,128], index: 2, kind: input, shape index: {}, may-alias: {2,3}]
  %s3 = inlined_call_operand.vmem [shape: f32[8,128], index: 3, kind: input, shape index: {}, may-alias: {2,3}]
  %s4 = inlined_call_operand.vmem [shape: f32[16,8,128], index: 4, kind: output, shape index: {0}]
  %s5 = inlined_call_operand.vmem [shape: f32[8,128], index: 5, kind: output, shape index: {1}]
  %6 = xla_tuple %s4, %s5
  %s7 = sld [smem:[#allocation0]]
  $region46: #{seq2seq_forward.9} parent=0
    _
  %s9 = ssub.s32 1, %s7
  %s10 = scalar_select 0, %s9, %s7
  $region1: #{seq2seq_forward.9} parent=0
    #allocation4 [shape = 'u8[262144]{0}', space=vmem, size = 0x40000, scoped, tag = 'input window, operand 1, single buffered']
    #allocation5 [shape = 's32[1]{0}', space=sflag, size = 0x4, scoped, tag = 'scoped memory for seq2seq_forward.9']
    %11 = vsyncpa [#allocation5], 0
    // Predicated region
    $region2: #{seq2seq_forward.9} parent=1 // pred_check
      _
    $region3: #{seq2seq_forward.9} parent=1 // pred_check_branch
      %13 = sbr.rel (0) target = $region5
    $region4: #{seq2seq_forward.9} parent=1 // pred_region
      _
    $region5: #{seq2seq_forward.9} parent=1 // pred_fallthru
      _
    // Predicated region
    $region6: #{seq2seq_forward.9} parent=1 // pred_check
      _
    $region7: #{seq2seq_forward.9} parent=1 // pred_check_branch
      %15 = sbr.rel (0) target = $region9
    $region8: #{seq2seq_forward.9} parent=1 // pred_region
      %17 = vsyncadd [#allocation5], 0
      %s18 = sshll.u32 %s1, 4
      %s19 = int_to_ptr.hbm [resolvable:$true] %s18
      %s20 = sshll.u32 [#allocation4], 4
      %s21 = int_to_ptr.vmem [resolvable:$true] %s20
      %26 = dma.hbm_to_vmem [thread:$0]  %s19, 8192, %s21, [#allocation5], 512, 512, 32
    $region9: #{seq2seq_forward.9} parent=1 // pred_fallthru
      _
    // Predicated region
    $region10: #{seq2seq_forward.9} parent=1 // pred_check
      _
    $region11: #{seq2seq_forward.9} parent=1 // pred_check_branch
      %28 = sbr.rel (0) target = $region13
    $region12: #{seq2seq_forward.9} parent=1 // pred_region
      _
    $region13: #{seq2seq_forward.9} parent=1 // pred_fallthru
      _
    // Predicated region
    $region14: #{seq2seq_forward.9} parent=1 // pred_check
      _
    $region15: #{seq2seq_forward.9} parent=1 // pred_check_branch
      %30 = sbr.rel (0) target = $region17
    $region16: #{seq2seq_forward.9} parent=1 // pred_region
      _
    $region17: #{seq2seq_forward.9} parent=1 // pred_fallthru
      _
    // Predicated region
    $region18: #{seq2seq_forward.9} parent=1 // pred_check
      _
    $region19: #{seq2seq_forward.9} parent=1 // pred_check_branch
      %32 = sbr.rel (0) target = $region21
    $region20: #{seq2seq_forward.9} parent=1 // pred_region
      %34 = dma.done [#allocation5], 8192
    $region21: #{seq2seq_forward.9} parent=1 // pred_fallthru
      _
    %p35 = scmp.eq.s32.totalorder 0, 0
    // Predicated region
    $region22: #{seq2seq_forward.9} parent=1 // pred_check
      %p36 = pneg %p35
    $region23: #{seq2seq_forward.9} parent=1 // pred_check_branch
      %38 = sbr.rel (%p36) target = $region25
    $region24: #{seq2seq_forward.9} parent=1 // pred_region
      %v39 = vld [vmem:[%s2] sm:$0xff]
      %40 = vst [vmem:[#allocation2] sm:$0xff] %v39
      %v41 = vld [vmem:[%s3] sm:$0xff]
      %42 = vst [vmem:[#allocation3] sm:$0xff] %v41
    $region25: #{seq2seq_forward.9} parent=1 // pred_fallthru
      _
    %v43 = vld [vmem:[#allocation4] sm:$0xff]
    %v44 = vld [vmem:[#allocation4 + $0x8] sm:$0xff]
    %v45 = vld [vmem:[#allocation4 + $0x10] sm:$0xff]
    %v46 = vld [vmem:[#allocation4 + $0x18] sm:$0xff]
    %v47 = vld [vmem:[#allocation4 + $0x20] sm:$0xff]
    %v48 = vld [vmem:[#allocation4 + $0x28] sm:$0xff]
    %v49 = vld [vmem:[#allocation4 + $0x30] sm:$0xff]
    %v50 = vld [vmem:[#allocation4 + $0x38] sm:$0xff]
    %v51 = vld [vmem:[#allocation4 + $0x40] sm:$0xff]
    %v52 = vld [vmem:[#allocation4 + $0x48] sm:$0xff]
    %v53 = vld [vmem:[#allocation4 + $0x50] sm:$0xff]
    %v54 = vld [vmem:[#allocation4 + $0x58] sm:$0xff]
    %v55 = vld [vmem:[#allocation4 + $0x60] sm:$0xff]
    %v56 = vld [vmem:[#allocation4 + $0x68] sm:$0xff]
    %v57 = vld [vmem:[#allocation4 + $0x70] sm:$0xff]
    %v58 = vld [vmem:[#allocation4 + $0x78] sm:$0xff]
    %v59 = vld [vmem:[#allocation4 + $0x80] sm:$0xff]
    %v60 = vld [vmem:[#allocation4 + $0x88] sm:$0xff]
    %v61 = vld [vmem:[#allocation4 + $0x90] sm:$0xff]
    %v62 = vld [vmem:[#allocation4 + $0x98] sm:$0xff]
    %v63 = vld [vmem:[#allocation4 + $0xa0] sm:$0xff]
    %v64 = vld [vmem:[#allocation4 + $0xa8] sm:$0xff]
    %v65 = vld [vmem:[#allocation4 + $0xb0] sm:$0xff]
    %v66 = vld [vmem:[#allocation4 + $0xb8] sm:$0xff]
    %v67 = vld [vmem:[#allocation4 + $0xc0] sm:$0xff]
    %v68 = vld [vmem:[#allocation4 + $0xc8] sm:$0xff]
    %v69 = vld [vmem:[#allocation4 + $0xd0] sm:$0xff]
    %v70 = vld [vmem:[#allocation4 + $0xd8] sm:$0xff]
    %v71 = vld [vmem:[#allocation4 + $0xe0] sm:$0xff]
    %v72 = vld [vmem:[#allocation4 + $0xe8] sm:$0xff]
    %v73 = vld [vmem:[#allocation4 + $0xf0] sm:$0xff]
    %v74 = vld [vmem:[#allocation4 + $0xf8] sm:$0xff]
    %v75 = vld [vmem:[#allocation4 + $0x100] sm:$0xff]
    %v76 = vld [vmem:[#allocation4 + $0x108] sm:$0xff]
    %v77 = vld [vmem:[#allocation4 + $0x110] sm:$0xff]
    %v78 = vld [vmem:[#allocation4 + $0x118] sm:$0xff]
    %v79 = vld [vmem:[#allocation4 + $0x120] sm:$0xff]
    %v80 = vld [vmem:[#allocation4 + $0x128] sm:$0xff]
    %v81 = vld [vmem:[#allocation4 + $0x130] sm:$0xff]
    %v82 = vld [vmem:[#allocation4 + $0x138] sm:$0xff]
    %v83 = vld [vmem:[#allocation4 + $0x140] sm:$0xff]
    %v84 = vld [vmem:[#allocation4 + $0x148] sm:$0xff]
    %v85 = vld [vmem:[#allocation4 + $0x150] sm:$0xff]
    %v86 = vld [vmem:[#allocation4 + $0x158] sm:$0xff]
    %v87 = vld [vmem:[#allocation4 + $0x160] sm:$0xff]
    %v88 = vld [vmem:[#allocation4 + $0x168] sm:$0xff]
    %v89 = vld [vmem:[#allocation4 + $0x170] sm:$0xff]
    %v90 = vld [vmem:[#allocation4 + $0x178] sm:$0xff]
    %v91 = vld [vmem:[#allocation4 + $0x180] sm:$0xff]
    %v92 = vld [vmem:[#allocation4 + $0x188] sm:$0xff]
    %v93 = vld [vmem:[#allocation4 + $0x190] sm:$0xff]
    %v94 = vld [vmem:[#allocation4 + $0x198] sm:$0xff]
    %v95 = vld [vmem:[#allocation4 + $0x1a0] sm:$0xff]
    %v96 = vld [vmem:[#allocation4 + $0x1a8] sm:$0xff]
    %v97 = vld [vmem:[#allocation4 + $0x1b0] sm:$0xff]
    %v98 = vld [vmem:[#allocation4 + $0x1b8] sm:$0xff]
    %v99 = vld [vmem:[#allocation4 + $0x1c0] sm:$0xff]
    %v100 = vld [vmem:[#allocation4 + $0x1c8] sm:$0xff]
    %v101 = vld [vmem:[#allocation4 + $0x1d0] sm:$0xff]
    %v102 = vld [vmem:[#allocation4 + $0x1d8] sm:$0xff]
    %v103 = vld [vmem:[#allocation4 + $0x1e0] sm:$0xff]
    %v104 = vld [vmem:[#allocation4 + $0x1e8] sm:$0xff]
    %v105 = vld [vmem:[#allocation4 + $0x1f0] sm:$0xff]
    %v106 = vld [vmem:[#allocation4 + $0x1f8] sm:$0xff]
    %v107 = vld [vmem:[#allocation2] sm:$0xff]
    %v108 = vld [vmem:[#allocation3] sm:$0xff]
    %v109 = vld [vmem:[%s0] sm:$0xff]
    %v110 = vld [vmem:[%s0 + $0x8] sm:$0xff]
    %v111 = vld [vmem:[%s0 + $0x10] sm:$0xff]
    %v112 = vld [vmem:[%s0 + $0x18] sm:$0xff]
    %113 = vmatpush.msra.mxu0 %v103
    %114 = vmatpush.msra.mxu0 %v99
    %115 = vmatpush.msra.mxu0 %v95
    %116 = vmatpush.msra.mxu0 %v91
    %117 = vmatpush.msra.mxu0 %v87
    %118 = vmatpush.msra.mxu0 %v83
    %119 = vmatpush.msra.mxu0 %v79
    %120 = vmatpush.msra.mxu0 %v75
    %121 = vmatpush.msra.mxu0 %v71
    %122 = vmatpush.msra.mxu0 %v67
    %123 = vmatpush.msra.mxu0 %v63
    %124 = vmatpush.msra.mxu0 %v59
    %125 = vmatpush.msra.mxu0 %v55
    %126 = vmatpush.msra.mxu0 %v51
    %127 = vmatpush.msra.mxu0 %v47
    %128 = vmatpush.msra.mxu0 %v43
    %129 = vmatmul.f32.gmra.mxu0 %v107
    %v130 = vpop.f32.mrf.mxu0
    %v131 = vadd.f32 0.0, %v130
    %132 = vdwg.mxu0
    %133 = vmatpush.msra.mxu0 %v104
    %134 = vmatpush.msra.mxu0 %v100
    %135 = vmatpush.msra.mxu0 %v96
    %136 = vmatpush.msra.mxu0 %v92
    %137 = vmatpush.msra.mxu0 %v88
    %138 = vmatpush.msra.mxu0 %v84
    %139 = vmatpush.msra.mxu0 %v80
    %140 = vmatpush.msra.mxu0 %v76
    %141 = vmatpush.msra.mxu0 %v72
    %142 = vmatpush.msra.mxu0 %v68
    %143 = vmatpush.msra.mxu0 %v64
    %144 = vmatpush.msra.mxu0 %v60
    %145 = vmatpush.msra.mxu0 %v56
    %146 = vmatpush.msra.mxu0 %v52
    %147 = vmatpush.msra.mxu0 %v48
    %148 = vmatpush.msra.mxu0 %v44
    %149 = vmatmul.f32.gmra.mxu0 %v107
    %v150 = vpop.f32.mrf.mxu0
    %v151 = vadd.f32 0.0, %v150
    %152 = vdwg.mxu0
    %153 = vmatpush.msra.mxu0 %v105
    %154 = vmatpush.msra.mxu0 %v101
    %155 = vmatpush.msra.mxu0 %v97
    %156 = vmatpush.msra.mxu0 %v93
    %157 = vmatpush.msra.mxu0 %v89
    %158 = vmatpush.msra.mxu0 %v85
    %159 = vmatpush.msra.mxu0 %v81
    %160 = vmatpush.msra.mxu0 %v77
    %161 = vmatpush.msra.mxu0 %v73
    %162 = vmatpush.msra.mxu0 %v69
    %163 = vmatpush.msra.mxu0 %v65
    %164 = vmatpush.msra.mxu0 %v61
    %165 = vmatpush.msra.mxu0 %v57
    %166 = vmatpush.msra.mxu0 %v53
    %167 = vmatpush.msra.mxu0 %v49
    %168 = vmatpush.msra.mxu0 %v45
    %169 = vmatmul.f32.gmra.mxu0 %v107
    %v170 = vpop.f32.mrf.mxu0
    %v171 = vadd.f32 0.0, %v170
    %172 = vdwg.mxu0
    %173 = vmatpush.msra.mxu0 %v106
    %174 = vmatpush.msra.mxu0 %v102
    %175 = vmatpush.msra.mxu0 %v98
    %176 = vmatpush.msra.mxu0 %v94
    %177 = vmatpush.msra.mxu0 %v90
    %178 = vmatpush.msra.mxu0 %v86
    %179 = vmatpush.msra.mxu0 %v82
    %180 = vmatpush.msra.mxu0 %v78
    %181 = vmatpush.msra.mxu0 %v74
    %182 = vmatpush.msra.mxu0 %v70
    %183 = vmatpush.msra.mxu0 %v66
    %184 = vmatpush.msra.mxu0 %v62
    %185 = vmatpush.msra.mxu0 %v58
    %186 = vmatpush.msra.mxu0 %v54
    %187 = vmatpush.msra.mxu0 %v50
    %188 = vmatpush.msra.mxu0 %v46
    %189 = vmatmul.f32.gmra.mxu0 %v107
    %v190 = vpop.f32.mrf.mxu0
    %v191 = vadd.f32 0.0, %v190
    %192 = vdwg.mxu0
    %v193 = vadd.f32 %v109, %v131
    %v194 = vadd.f32 %v110, %v151
    %v195 = vadd.f32 %v111, %v171
    %v196 = vadd.f32 %v112, %v191
    %v197 = vxor.u32 %v193, 2147483648
    %v198 = vmul.f32 %v197, 1.442695
    %v199 = vpow.pop %v198
    %v200 = vadd.f32 %v199, 1.0
    %v201 = vrcp.pop %v200
    %v202 = vmul.f32 %v200, %v201
    %v203 = vsub.f32 1.0, %v202
    %v204 = vmul.f32 %v201, %v203
    %v205 = vadd.f32 %v201, %v204
    %vm206 = vweird.f32 %v200
    %vm207 = vweird.f32 %v201
    %vm208 = vmor %vm206, %vm207
    %v209 = vsel %vm208, %v201, %v205
    %v210 = vand.u32 2147483647, %v200
    %vm211 = vcmp.eq.f32.partialorder %v210, 8.507059e+37
    %v212 = vand.u32 %v200, 2147483648
    %v213 = vor.u32 1.1754944e-38, %v212
    %v214 = vsel %vm211, %v213, %v209
    %v215 = vmul.f32 1.0, %v214
    %v216 = vxor.u32 %v194, 2147483648
    %v217 = vmul.f32 %v216, 1.442695
    %v218 = vpow.pop %v217
    %v219 = vadd.f32 %v218, 1.0
    %v220 = vrcp.pop %v219
    %v221 = vmul.f32 %v219, %v220
    %v222 = vsub.f32 1.0, %v221
    %v223 = vmul.f32 %v220, %v222
    %v224 = vadd.f32 %v220, %v223
    %vm225 = vweird.f32 %v219
    %vm226 = vweird.f32 %v220
    %vm227 = vmor %vm225, %vm226
    %v228 = vsel %vm227, %v220, %v224
    %v229 = vand.u32 2147483647, %v219
    %vm230 = vcmp.eq.f32.partialorder %v229, 8.507059e+37
    %v231 = vand.u32 %v219, 2147483648
    %v232 = vor.u32 1.1754944e-38, %v231
    %v233 = vsel %vm230, %v232, %v228
    %v234 = vmul.f32 1.0, %v233
    %v235 = vtanh.pop %v195
    %v236 = vxor.u32 %v196, 2147483648
    %v237 = vmul.f32 %v236, 1.442695
    %v238 = vpow.pop %v237
    %v239 = vadd.f32 %v238, 1.0
    %v240 = vrcp.pop %v239
    %v241 = vmul.f32 %v239, %v240
    %v242 = vsub.f32 1.0, %v241
    %v243 = vmul.f32 %v240, %v242
    %v244 = vadd.f32 %v240, %v243
    %vm245 = vweird.f32 %v239
    %vm246 = vweird.f32 %v240
    %vm247 = vmor %vm245, %vm246
    %v248 = vsel %vm247, %v240, %v244
    %v249 = vand.u32 2147483647, %v239
    %vm250 = vcmp.eq.f32.partialorder %v249, 8.507059e+37
    %v251 = vand.u32 %v239, 2147483648
    %v252 = vor.u32 1.1754944e-38, %v251
    %v253 = vsel %vm250, %v252, %v248
    %v254 = vmul.f32 1.0, %v253
    %v255 = vmul.f32 %v234, %v108
    %v256 = vmul.f32 %v215, %v235
    %v257 = vadd.f32 %v255, %v256
    %v258 = vtanh.pop %v257
    %v259 = vmul.f32 %v254, %v258
    %260 = vst [vmem:[%s4] sm:$0xff] %v259
    %s261 = scalar_lea.vmem %s0, 32
    %v262 = vld [vmem:[%s261] sm:$0xff]
    %v263 = vld [vmem:[%s261 + $0x8] sm:$0xff]
    %v264 = vld [vmem:[%s261 + $0x10] sm:$0xff]
    %v265 = vld [vmem:[%s261 + $0x18] sm:$0xff]
    %266 = vmatpush.msra.mxu0 %v103
    %267 = vmatpush.msra.mxu0 %v99
    %268 = vmatpush.msra.mxu0 %v95
    %269 = vmatpush.msra.mxu0 %v91
    %270 = vmatpush.msra.mxu0 %v87
    %271 = vmatpush.msra.mxu0 %v83
    %272 = vmatpush.msra.mxu0 %v79
    %273 = vmatpush.msra.mxu0 %v75
    %274 = vmatpush.msra.mxu0 %v71
    %275 = vmatpush.msra.mxu0 %v67
    %276 = vmatpush.msra.mxu0 %v63
    %277 = vmatpush.msra.mxu0 %v59
    %278 = vmatpush.msra.mxu0 %v55
    %279 = vmatpush.msra.mxu0 %v51
    %280 = vmatpush.msra.mxu0 %v47
    %281 = vmatpush.msra.mxu0 %v43
    %282 = vmatmul.f32.gmra.mxu0 %v259
    %v283 = vpop.f32.mrf.mxu0
    %v284 = vadd.f32 0.0, %v283
    %285 = vdwg.mxu0
    %286 = vmatpush.msra.mxu0 %v104
    %287 = vmatpush.msra.mxu0 %v100
    %288 = vmatpush.msra.mxu0 %v96
    %289 = vmatpush.msra.mxu0 %v92
    %290 = vmatpush.msra.mxu0 %v88
    %291 = vmatpush.msra.mxu0 %v84
    %292 = vmatpush.msra.mxu0 %v80
    %293 = vmatpush.msra.mxu0 %v76
    %294 = vmatpush.msra.mxu0 %v72
    %295 = vmatpush.msra.mxu0 %v68
    %296 = vmatpush.msra.mxu0 %v64
    %297 = vmatpush.msra.mxu0 %v60
    %298 = vmatpush.msra.mxu0 %v56
    %299 = vmatpush.msra.mxu0 %v52
    %300 = vmatpush.msra.mxu0 %v48
    %301 = vmatpush.msra.mxu0 %v44
    %302 = vmatmul.f32.gmra.mxu0 %v259
    %v303 = vpop.f32.mrf.mxu0
    %v304 = vadd.f32 0.0, %v303
    %305 = vdwg.mxu0
    %306 = vmatpush.msra.mxu0 %v105
    %307 = vmatpush.msra.mxu0 %v101
    %308 = vmatpush.msra.mxu0 %v97
    %309 = vmatpush.msra.mxu0 %v93
    %310 = vmatpush.msra.mxu0 %v89
    %311 = vmatpush.msra.mxu0 %v85
    %312 = vmatpush.msra.mxu0 %v81
    %313 = vmatpush.msra.mxu0 %v77
    %314 = vmatpush.msra.mxu0 %v73
    %315 = vmatpush.msra.mxu0 %v69
    %316 = vmatpush.msra.mxu0 %v65
    %317 = vmatpush.msra.mxu0 %v61
    %318 = vmatpush.msra.mxu0 %v57
    %319 = vmatpush.msra.mxu0 %v53
    %320 = vmatpush.msra.mxu0 %v49
    %321 = vmatpush.msra.mxu0 %v45
    %322 = vmatmul.f32.gmra.mxu0 %v259
    %v323 = vpop.f32.mrf.mxu0
    %v324 = vadd.f32 0.0, %v323
    %325 = vdwg.mxu0
    %326 = vmatpush.msra.mxu0 %v106
    %327 = vmatpush.msra.mxu0 %v102
    %328 = vmatpush.msra.mxu0 %v98
    %329 = vmatpush.msra.mxu0 %v94
    %330 = vmatpush.msra.mxu0 %v90
    %331 = vmatpush.msra.mxu0 %v86
    %332 = vmatpush.msra.mxu0 %v82
    %333 = vmatpush.msra.mxu0 %v78
    %334 = vmatpush.msra.mxu0 %v74
    %335 = vmatpush.msra.mxu0 %v70
    %336 = vmatpush.msra.mxu0 %v66
    %337 = vmatpush.msra.mxu0 %v62
    %338 = vmatpush.msra.mxu0 %v58
    %339 = vmatpush.msra.mxu0 %v54
    %340 = vmatpush.msra.mxu0 %v50
    %341 = vmatpush.msra.mxu0 %v46
    %342 = vmatmul.f32.gmra.mxu0 %v259
    %v343 = vpop.f32.mrf.mxu0
    %v344 = vadd.f32 0.0, %v343
    %345 = vdwg.mxu0
    %v346 = vadd.f32 %v262, %v284
    %v347 = vadd.f32 %v263, %v304
    %v348 = vadd.f32 %v264, %v324
    %v349 = vadd.f32 %v265, %v344
    %v350 = vxor.u32 %v346, 2147483648
    %v351 = vmul.f32 %v350, 1.442695
    %v352 = vpow.pop %v351
    %v353 = vadd.f32 %v352, 1.0
    %v354 = vrcp.pop %v353
    %v355 = vmul.f32 %v353, %v354
    %v356 = vsub.f32 1.0, %v355
    %v357 = vmul.f32 %v354, %v356
    %v358 = vadd.f32 %v354, %v357
    %vm359 = vweird.f32 %v353
    %vm360 = vweird.f32 %v354
    %vm361 = vmor %vm359, %vm360
    %v362 = vsel %vm361, %v354, %v358
    %v363 = vand.u32 2147483647, %v353
    %vm364 = vcmp.eq.f32.partialorder %v363, 8.507059e+37
    %v365 = vand.u32 %v353, 2147483648
    %v366 = vor.u32 1.1754944e-38, %v365
    %v367 = vsel %vm364, %v366, %v362
    %v368 = vmul.f32 1.0, %v367
    %v369 = vxor.u32 %v347, 2147483648
    %v370 = vmul.f32 %v369, 1.442695
    %v371 = vpow.pop %v370
    %v372 = vadd.f32 %v371, 1.0
    %v373 = vrcp.pop %v372
    %v374 = vmul.f32 %v372, %v373
    %v375 = vsub.f32 1.0, %v374
    %v376 = vmul.f32 %v373, %v375
    %v377 = vadd.f32 %v373, %v376
    %vm378 = vweird.f32 %v372
    %vm379 = vweird.f32 %v373
    %vm380 = vmor %vm378, %vm379
    %v381 = vsel %vm380, %v373, %v377
    %v382 = vand.u32 2147483647, %v372
    %vm383 = vcmp.eq.f32.partialorder %v382, 8.507059e+37
    %v384 = vand.u32 %v372, 2147483648
    %v385 = vor.u32 1.1754944e-38, %v384
    %v386 = vsel %vm383, %v385, %v381
    %v387 = vmul.f32 1.0, %v386
    %v388 = vtanh.pop %v348
    %v389 = vxor.u32 %v349, 2147483648
    %v390 = vmul.f32 %v389, 1.442695
    %v391 = vpow.pop %v390
    %v392 = vadd.f32 %v391, 1.0
    %v393 = vrcp.pop %v392
    %v394 = vmul.f32 %v392, %v393
    %v395 = vsub.f32 1.0, %v394
    %v396 = vmul.f32 %v393, %v395
    %v397 = vadd.f32 %v393, %v396
    %vm398 = vweird.f32 %v392
    %vm399 = vweird.f32 %v393
    %vm400 = vmor %vm398, %vm399
    %v401 = vsel %vm400, %v393, %v397
    %v402 = vand.u32 2147483647, %v392
    %vm403 = vcmp.eq.f32.partialorder %v402, 8.507059e+37
    %v404 = vand.u32 %v392, 2147483648
    %v405 = vor.u32 1.1754944e-38, %v404
    %v406 = vsel %vm403, %v405, %v401
    %v407 = vmul.f32 1.0, %v406
    %v408 = vmul.f32 %v387, %v257
    %v409 = vmul.f32 %v368, %v388
    %v410 = vadd.f32 %v408, %v409
    %v411 = vtanh.pop %v410
    %v412 = vmul.f32 %v407, %v411
    %s413 = scalar_lea.vmem %s4, 8
    %414 = vst [vmem:[%s413] sm:$0xff] %v412
    %s415 = scalar_lea.vmem %s0, 64
    %v416 = vld [vmem:[%s415] sm:$0xff]
    %v417 = vld [vmem:[%s415 + $0x8] sm:$0xff]
    %v418 = vld [vmem:[%s415 + $0x10] sm:$0xff]
    %v419 = vld [vmem:[%s415 + $0x18] sm:$0xff]
    %420 = vmatpush.msra.mxu0 %v103
    %421 = vmatpush.msra.mxu0 %v99
    %422 = vmatpush.msra.mxu0 %v95
    %423 = vmatpush.msra.mxu0 %v91
    %424 = vmatpush.msra.mxu0 %v87
    %425 = vmatpush.msra.mxu0 %v83
    %426 = vmatpush.msra.mxu0 %v79
    %427 = vmatpush.msra.mxu0 %v75
    %428 = vmatpush.msra.mxu0 %v71
    %429 = vmatpush.msra.mxu0 %v67
    %430 = vmatpush.msra.mxu0 %v63
    %431 = vmatpush.msra.mxu0 %v59
    %432 = vmatpush.msra.mxu0 %v55
    %433 = vmatpush.msra.mxu0 %v51
    %434 = vmatpush.msra.mxu0 %v47
    %435 = vmatpush.msra.mxu0 %v43
    %436 = vmatmul.f32.gmra.mxu0 %v412
    %v437 = vpop.f32.mrf.mxu0
    %v438 = vadd.f32 0.0, %v437
    %439 = vdwg.mxu0
    %440 = vmatpush.msra.mxu0 %v104
    %441 = vmatpush.msra.mxu0 %v100
    %442 = vmatpush.msra.mxu0 %v96
    %443 = vmatpush.msra.mxu0 %v92
    %444 = vmatpush.msra.mxu0 %v88
    %445 = vmatpush.msra.mxu0 %v84
    %446 = vmatpush.msra.mxu0 %v80
    %447 = vmatpush.msra.mxu0 %v76
    %448 = vmatpush.msra.mxu0 %v72
    %449 = vmatpush.msra.mxu0 %v68
    %450 = vmatpush.msra.mxu0 %v64
    %451 = vmatpush.msra.mxu0 %v60
    %452 = vmatpush.msra.mxu0 %v56
    %453 = vmatpush.msra.mxu0 %v52
    %454 = vmatpush.msra.mxu0 %v48
    %455 = vmatpush.msra.mxu0 %v44
    %456 = vmatmul.f32.gmra.mxu0 %v412
    %v457 = vpop.f32.mrf.mxu0
    %v458 = vadd.f32 0.0, %v457
    %459 = vdwg.mxu0
    %460 = vmatpush.msra.mxu0 %v105
    %461 = vmatpush.msra.mxu0 %v101
    %462 = vmatpush.msra.mxu0 %v97
    %463 = vmatpush.msra.mxu0 %v93
    %464 = vmatpush.msra.mxu0 %v89
    %465 = vmatpush.msra.mxu0 %v85
    %466 = vmatpush.msra.mxu0 %v81
    %467 = vmatpush.msra.mxu0 %v77
    %468 = vmatpush.msra.mxu0 %v73
    %469 = vmatpush.msra.mxu0 %v69
    %470 = vmatpush.msra.mxu0 %v65
    %471 = vmatpush.msra.mxu0 %v61
    %472 = vmatpush.msra.mxu0 %v57
    %473 = vmatpush.msra.mxu0 %v53
    %474 = vmatpush.msra.mxu0 %v49
    %475 = vmatpush.msra.mxu0 %v45
    %476 = vmatmul.f32.gmra.mxu0 %v412
    %v477 = vpop.f32.mrf.mxu0
    %v478 = vadd.f32 0.0, %v477
    %479 = vdwg.mxu0
    %480 = vmatpush.msra.mxu0 %v106
    %481 = vmatpush.msra.mxu0 %v102
    %482 = vmatpush.msra.mxu0 %v98
    %483 = vmatpush.msra.mxu0 %v94
    %484 = vmatpush.msra.mxu0 %v90
    %485 = vmatpush.msra.mxu0 %v86
    %486 = vmatpush.msra.mxu0 %v82
    %487 = vmatpush.msra.mxu0 %v78
    %488 = vmatpush.msra.mxu0 %v74
    %489 = vmatpush.msra.mxu0 %v70
    %490 = vmatpush.msra.mxu0 %v66
    %491 = vmatpush.msra.mxu0 %v62
    %492 = vmatpush.msra.mxu0 %v58
    %493 = vmatpush.msra.mxu0 %v54
    %494 = vmatpush.msra.mxu0 %v50
    %495 = vmatpush.msra.mxu0 %v46
    %496 = vmatmul.f32.gmra.mxu0 %v412
    %v497 = vpop.f32.mrf.mxu0
    %v498 = vadd.f32 0.0, %v497
    %499 = vdwg.mxu0
    %v500 = vadd.f32 %v416, %v438
    %v501 = vadd.f32 %v417, %v458
    %v502 = vadd.f32 %v418, %v478
    %v503 = vadd.f32 %v419, %v498
    %v504 = vxor.u32 %v500, 2147483648
    %v505 = vmul.f32 %v504, 1.442695
    %v506 = vpow.pop %v505
    %v507 = vadd.f32 %v506, 1.0
    %v508 = vrcp.pop %v507
    %v509 = vmul.f32 %v507, %v508
    %v510 = vsub.f32 1.0, %v509
    %v511 = vmul.f32 %v508, %v510
    %v512 = vadd.f32 %v508, %v511
    %vm513 = vweird.f32 %v507
    %vm514 = vweird.f32 %v508
    %vm515 = vmor %vm513, %vm514
    %v516 = vsel %vm515, %v508, %v512
    %v517 = vand.u32 2147483647, %v507
    %vm518 = vcmp.eq.f32.partialorder %v517, 8.507059e+37
    %v519 = vand.u32 %v507, 2147483648
    %v520 = vor.u32 1.1754944e-38, %v519
    %v521 = vsel %vm518, %v520, %v516
    %v522 = vmul.f32 1.0, %v521
    %v523 = vxor.u32 %v501, 2147483648
    %v524 = vmul.f32 %v523, 1.442695
    %v525 = vpow.pop %v524
    %v526 = vadd.f32 %v525, 1.0
    %v527 = vrcp.pop %v526
    %v528 = vmul.f32 %v526, %v527
    %v529 = vsub.f32 1.0, %v528
    %v530 = vmul.f32 %v527, %v529
    %v531 = vadd.f32 %v527, %v530
    %vm532 = vweird.f32 %v526
    %vm533 = vweird.f32 %v527
    %vm534 = vmor %vm532, %vm533
    %v535 = vsel %vm534, %v527, %v531
    %v536 = vand.u32 2147483647, %v526
    %vm537 = vcmp.eq.f32.partialorder %v536, 8.507059e+37
    %v538 = vand.u32 %v526, 2147483648
    %v539 = vor.u32 1.1754944e-38, %v538
    %v540 = vsel %vm537, %v539, %v535
    %v541 = vmul.f32 1.0, %v540
    %v542 = vtanh.pop %v502
    %v543 = vxor.u32 %v503, 2147483648
    %v544 = vmul.f32 %v543, 1.442695
    %v545 = vpow.pop %v544
    %v546 = vadd.f32 %v545, 1.0
    %v547 = vrcp.pop %v546
    %v548 = vmul.f32 %v546, %v547
    %v549 = vsub.f32 1.0, %v548
    %v550 = vmul.f32 %v547, %v549
    %v551 = vadd.f32 %v547, %v550
    %vm552 = vweird.f32 %v546
    %vm553 = vweird.f32 %v547
    %vm554 = vmor %vm552, %vm553
    %v555 = vsel %vm554, %v547, %v551
    %v556 = vand.u32 2147483647, %v546
    %vm557 = vcmp.eq.f32.partialorder %v556, 8.507059e+37
    %v558 = vand.u32 %v546, 2147483648
    %v559 = vor.u32 1.1754944e-38, %v558
    %v560 = vsel %vm557, %v559, %v555
    %v561 = vmul.f32 1.0, %v560
    %v562 = vmul.f32 %v541, %v410
    %v563 = vmul.f32 %v522, %v542
    %v564 = vadd.f32 %v562, %v563
    %v565 = vtanh.pop %v564
    %v566 = vmul.f32 %v561, %v565
    %s567 = scalar_lea.vmem %s4, 16
    %568 = vst [vmem:[%s567] sm:$0xff] %v566
    %s569 = scalar_lea.vmem %s0, 96
    %v570 = vld [vmem:[%s569] sm:$0xff]
    %v571 = vld [vmem:[%s569 + $0x8] sm:$0xff]
    %v572 = vld [vmem:[%s569 + $0x10] sm:$0xff]
    %v573 = vld [vmem:[%s569 + $0x18] sm:$0xff]
    %574 = vmatpush.msra.mxu0 %v103
    %575 = vmatpush.msra.mxu0 %v99
    %576 = vmatpush.msra.mxu0 %v95
    %577 = vmatpush.msra.mxu0 %v91
    %578 = vmatpush.msra.mxu0 %v87
    %579 = vmatpush.msra.mxu0 %v83
    %580 = vmatpush.msra.mxu0 %v79
    %581 = vmatpush.msra.mxu0 %v75
    %582 = vmatpush.msra.mxu0 %v71
    %583 = vmatpush.msra.mxu0 %v67
    %584 = vmatpush.msra.mxu0 %v63
    %585 = vmatpush.msra.mxu0 %v59
    %586 = vmatpush.msra.mxu0 %v55
    %587 = vmatpush.msra.mxu0 %v51
    %588 = vmatpush.msra.mxu0 %v47
    %589 = vmatpush.msra.mxu0 %v43
    %590 = vmatmul.f32.gmra.mxu0 %v566
    %v591 = vpop.f32.mrf.mxu0
    %v592 = vadd.f32 0.0, %v591
    %593 = vdwg.mxu0
    %594 = vmatpush.msra.mxu0 %v104
    %595 = vmatpush.msra.mxu0 %v100
    %596 = vmatpush.msra.mxu0 %v96
    %597 = vmatpush.msra.mxu0 %v92
    %598 = vmatpush.msra.mxu0 %v88
    %599 = vmatpush.msra.mxu0 %v84
    %600 = vmatpush.msra.mxu0 %v80
    %601 = vmatpush.msra.mxu0 %v76
    %602 = vmatpush.msra.mxu0 %v72
    %603 = vmatpush.msra.mxu0 %v68
    %604 = vmatpush.msra.mxu0 %v64
    %605 = vmatpush.msra.mxu0 %v60
    %606 = vmatpush.msra.mxu0 %v56
    %607 = vmatpush.msra.mxu0 %v52
    %608 = vmatpush.msra.mxu0 %v48
    %609 = vmatpush.msra.mxu0 %v44
    %610 = vmatmul.f32.gmra.mxu0 %v566
    %v611 = vpop.f32.mrf.mxu0
    %v612 = vadd.f32 0.0, %v611
    %613 = vdwg.mxu0
    %614 = vmatpush.msra.mxu0 %v105
    %615 = vmatpush.msra.mxu0 %v101
    %616 = vmatpush.msra.mxu0 %v97
    %617 = vmatpush.msra.mxu0 %v93
    %618 = vmatpush.msra.mxu0 %v89
    %619 = vmatpush.msra.mxu0 %v85
    %620 = vmatpush.msra.mxu0 %v81
    %621 = vmatpush.msra.mxu0 %v77
    %622 = vmatpush.msra.mxu0 %v73
    %623 = vmatpush.msra.mxu0 %v69
    %624 = vmatpush.msra.mxu0 %v65
    %625 = vmatpush.msra.mxu0 %v61
    %626 = vmatpush.msra.mxu0 %v57
    %627 = vmatpush.msra.mxu0 %v53
    %628 = vmatpush.msra.mxu0 %v49
    %629 = vmatpush.msra.mxu0 %v45
    %630 = vmatmul.f32.gmra.mxu0 %v566
    %v631 = vpop.f32.mrf.mxu0
    %v632 = vadd.f32 0.0, %v631
    %633 = vdwg.mxu0
    %634 = vmatpush.msra.mxu0 %v106
    %635 = vmatpush.msra.mxu0 %v102
    %636 = vmatpush.msra.mxu0 %v98
    %637 = vmatpush.msra.mxu0 %v94
    %638 = vmatpush.msra.mxu0 %v90
    %639 = vmatpush.msra.mxu0 %v86
    %640 = vmatpush.msra.mxu0 %v82
    %641 = vmatpush.msra.mxu0 %v78
    %642 = vmatpush.msra.mxu0 %v74
    %643 = vmatpush.msra.mxu0 %v70
    %644 = vmatpush.msra.mxu0 %v66
    %645 = vmatpush.msra.mxu0 %v62
    %646 = vmatpush.msra.mxu0 %v58
    %647 = vmatpush.msra.mxu0 %v54
    %648 = vmatpush.msra.mxu0 %v50
    %649 = vmatpush.msra.mxu0 %v46
    %650 = vmatmul.f32.gmra.mxu0 %v566
    %v651 = vpop.f32.mrf.mxu0
    %v652 = vadd.f32 0.0, %v651
    %653 = vdwg.mxu0
    %v654 = vadd.f32 %v570, %v592
    %v655 = vadd.f32 %v571, %v612
    %v656 = vadd.f32 %v572, %v632
    %v657 = vadd.f32 %v573, %v652
    %v658 = vxor.u32 %v654, 2147483648
    %v659 = vmul.f32 %v658, 1.442695
    %v660 = vpow.pop %v659
    %v661 = vadd.f32 %v660, 1.0
    %v662 = vrcp.pop %v661
    %v663 = vmul.f32 %v661, %v662
    %v664 = vsub.f32 1.0, %v663
    %v665 = vmul.f32 %v662, %v664
    %v666 = vadd.f32 %v662, %v665
    %vm667 = vweird.f32 %v661
    %vm668 = vweird.f32 %v662
    %vm669 = vmor %vm667, %vm668
    %v670 = vsel %vm669, %v662, %v666
    %v671 = vand.u32 2147483647, %v661
    %vm672 = vcmp.eq.f32.partialorder %v671, 8.507059e+37
    %v673 = vand.u32 %v661, 2147483648
    %v674 = vor.u32 1.1754944e-38, %v673
    %v675 = vsel %vm672, %v674, %v670
    %v676 = vmul.f32 1.0, %v675
    %v677 = vxor.u32 %v655, 2147483648
    %v678 = vmul.f32 %v677, 1.442695
    %v679 = vpow.pop %v678
    %v680 = vadd.f32 %v679, 1.0
    %v681 = vrcp.pop %v680
    %v682 = vmul.f32 %v680, %v681
    %v683 = vsub.f32 1.0, %v682
    %v684 = vmul.f32 %v681, %v683
    %v685 = vadd.f32 %v681, %v684
    %vm686 = vweird.f32 %v680
    %vm687 = vweird.f32 %v681
    %vm688 = vmor %vm686, %vm687
    %v689 = vsel %vm688, %v681, %v685
    %v690 = vand.u32 2147483647, %v680
    %vm691 = vcmp.eq.f32.partialorder %v690, 8.507059e+37
    %v692 = vand.u32 %v680, 2147483648
    %v693 = vor.u32 1.1754944e-38, %v692
    %v694 = vsel %vm691, %v693, %v689
    %v695 = vmul.f32 1.0, %v694
    %v696 = vtanh.pop %v656
    %v697 = vxor.u32 %v657, 2147483648
    %v698 = vmul.f32 %v697, 1.442695
    %v699 = vpow.pop %v698
    %v700 = vadd.f32 %v699, 1.0
    %v701 = vrcp.pop %v700
    %v702 = vmul.f32 %v700, %v701
    %v703 = vsub.f32 1.0, %v702
    %v704 = vmul.f32 %v701, %v703
    %v705 = vadd.f32 %v701, %v704
    %vm706 = vweird.f32 %v700
    %vm707 = vweird.f32 %v701
    %vm708 = vmor %vm706, %vm707
    %v709 = vsel %vm708, %v701, %v705
    %v710 = vand.u32 2147483647, %v700
    %vm711 = vcmp.eq.f32.partialorder %v710, 8.507059e+37
    %v712 = vand.u32 %v700, 2147483648
    %v713 = vor.u32 1.1754944e-38, %v712
    %v714 = vsel %vm711, %v713, %v709
    %v715 = vmul.f32 1.0, %v714
    %v716 = vmul.f32 %v695, %v564
    %v717 = vmul.f32 %v676, %v696
    %v718 = vadd.f32 %v716, %v717
    %v719 = vtanh.pop %v718
    %v720 = vmul.f32 %v715, %v719
    %s721 = scalar_lea.vmem %s4, 24
    %722 = vst [vmem:[%s721] sm:$0xff] %v720
    %s723 = scalar_lea.vmem %s0, 128
    %v724 = vld [vmem:[%s723] sm:$0xff]
    %v725 = vld [vmem:[%s723 + $0x8] sm:$0xff]
    %v726 = vld [vmem:[%s723 + $0x10] sm:$0xff]
    %v727 = vld [vmem:[%s723 + $0x18] sm:$0xff]
    %728 = vmatpush.msra.mxu0 %v103
    %729 = vmatpush.msra.mxu0 %v99
    %730 = vmatpush.msra.mxu0 %v95
    %731 = vmatpush.msra.mxu0 %v91
    %732 = vmatpush.msra.mxu0 %v87
    %733 = vmatpush.msra.mxu0 %v83
    %734 = vmatpush.msra.mxu0 %v79
    %735 = vmatpush.msra.mxu0 %v75
    %736 = vmatpush.msra.mxu0 %v71
    %737 = vmatpush.msra.mxu0 %v67
    %738 = vmatpush.msra.mxu0 %v63
    %739 = vmatpush.msra.mxu0 %v59
    %740 = vmatpush.msra.mxu0 %v55
    %741 = vmatpush.msra.mxu0 %v51
    %742 = vmatpush.msra.mxu0 %v47
    %743 = vmatpush.msra.mxu0 %v43
    %744 = vmatmul.f32.gmra.mxu0 %v720
    %v745 = vpop.f32.mrf.mxu0
    %v746 = vadd.f32 0.0, %v745
    %747 = vdwg.mxu0
    %748 = vmatpush.msra.mxu0 %v104
    %749 = vmatpush.msra.mxu0 %v100
    %750 = vmatpush.msra.mxu0 %v96
    %751 = vmatpush.msra.mxu0 %v92
    %752 = vmatpush.msra.mxu0 %v88
    %753 = vmatpush.msra.mxu0 %v84
    %754 = vmatpush.msra.mxu0 %v80
    %755 = vmatpush.msra.mxu0 %v76
    %756 = vmatpush.msra.mxu0 %v72
    %757 = vmatpush.msra.mxu0 %v68
    %758 = vmatpush.msra.mxu0 %v64
    %759 = vmatpush.msra.mxu0 %v60
    %760 = vmatpush.msra.mxu0 %v56
    %761 = vmatpush.msra.mxu0 %v52
    %762 = vmatpush.msra.mxu0 %v48
    %763 = vmatpush.msra.mxu0 %v44
    %764 = vmatmul.f32.gmra.mxu0 %v720
    %v765 = vpop.f32.mrf.mxu0
    %v766 = vadd.f32 0.0, %v765
    %767 = vdwg.mxu0
    %768 = vmatpush.msra.mxu0 %v105
    %769 = vmatpush.msra.mxu0 %v101
    %770 = vmatpush.msra.mxu0 %v97
    %771 = vmatpush.msra.mxu0 %v93
    %772 = vmatpush.msra.mxu0 %v89
    %773 = vmatpush.msra.mxu0 %v85
    %774 = vmatpush.msra.mxu0 %v81
    %775 = vmatpush.msra.mxu0 %v77
    %776 = vmatpush.msra.mxu0 %v73
    %777 = vmatpush.msra.mxu0 %v69
    %778 = vmatpush.msra.mxu0 %v65
    %779 = vmatpush.msra.mxu0 %v61
    %780 = vmatpush.msra.mxu0 %v57
    %781 = vmatpush.msra.mxu0 %v53
    %782 = vmatpush.msra.mxu0 %v49
    %783 = vmatpush.msra.mxu0 %v45
    %784 = vmatmul.f32.gmra.mxu0 %v720
    %v785 = vpop.f32.mrf.mxu0
    %v786 = vadd.f32 0.0, %v785
    %787 = vdwg.mxu0
    %788 = vmatpush.msra.mxu0 %v106
    %789 = vmatpush.msra.mxu0 %v102
    %790 = vmatpush.msra.mxu0 %v98
    %791 = vmatpush.msra.mxu0 %v94
    %792 = vmatpush.msra.mxu0 %v90
    %793 = vmatpush.msra.mxu0 %v86
    %794 = vmatpush.msra.mxu0 %v82
    %795 = vmatpush.msra.mxu0 %v78
    %796 = vmatpush.msra.mxu0 %v74
    %797 = vmatpush.msra.mxu0 %v70
    %798 = vmatpush.msra.mxu0 %v66
    %799 = vmatpush.msra.mxu0 %v62
    %800 = vmatpush.msra.mxu0 %v58
    %801 = vmatpush.msra.mxu0 %v54
    %802 = vmatpush.msra.mxu0 %v50
    %803 = vmatpush.msra.mxu0 %v46
    %804 = vmatmul.f32.gmra.mxu0 %v720
    %v805 = vpop.f32.mrf.mxu0
    %v806 = vadd.f32 0.0, %v805
    %807 = vdwg.mxu0
    %v808 = vadd.f32 %v724, %v746
    %v809 = vadd.f32 %v725, %v766
    %v810 = vadd.f32 %v726, %v786
    %v811 = vadd.f32 %v727, %v806
    %v812 = vxor.u32 %v808, 2147483648
    %v813 = vmul.f32 %v812, 1.442695
    %v814 = vpow.pop %v813
    %v815 = vadd.f32 %v814, 1.0
    %v816 = vrcp.pop %v815
    %v817 = vmul.f32 %v815, %v816
    %v818 = vsub.f32 1.0, %v817
    %v819 = vmul.f32 %v816, %v818
    %v820 = vadd.f32 %v816, %v819
    %vm821 = vweird.f32 %v815
    %vm822 = vweird.f32 %v816
    %vm823 = vmor %vm821, %vm822
    %v824 = vsel %vm823, %v816, %v820
    %v825 = vand.u32 2147483647, %v815
    %vm826 = vcmp.eq.f32.partialorder %v825, 8.507059e+37
    %v827 = vand.u32 %v815, 2147483648
    %v828 = vor.u32 1.1754944e-38, %v827
    %v829 = vsel %vm826, %v828, %v824
    %v830 = vmul.f32 1.0, %v829
    %v831 = vxor.u32 %v809, 2147483648
    %v832 = vmul.f32 %v831, 1.442695
    %v833 = vpow.pop %v832
    %v834 = vadd.f32 %v833, 1.0
    %v835 = vrcp.pop %v834
    %v836 = vmul.f32 %v834, %v835
    %v837 = vsub.f32 1.0, %v836
    %v838 = vmul.f32 %v835, %v837
    %v839 = vadd.f32 %v835, %v838
    %vm840 = vweird.f32 %v834
    %vm841 = vweird.f32 %v835
    %vm842 = vmor %vm840, %vm841
    %v843 = vsel %vm842, %v835, %v839
    %v844 = vand.u32 2147483647, %v834
    %vm845 = vcmp.eq.f32.partialorder %v844, 8.507059e+37
    %v846 = vand.u32 %v834, 2147483648
    %v847 = vor.u32 1.1754944e-38, %v846
    %v848 = vsel %vm845, %v847, %v843
    %v849 = vmul.f32 1.0, %v848
    %v850 = vtanh.pop %v810
    %v851 = vxor.u32 %v811, 2147483648
    %v852 = vmul.f32 %v851, 1.442695
    %v853 = vpow.pop %v852
    %v854 = vadd.f32 %v853, 1.0
    %v855 = vrcp.pop %v854
    %v856 = vmul.f32 %v854, %v855
    %v857 = vsub.f32 1.0, %v856
    %v858 = vmul.f32 %v855, %v857
    %v859 = vadd.f32 %v855, %v858
    %vm860 = vweird.f32 %v854
    %vm861 = vweird.f32 %v855
    %vm862 = vmor %vm860, %vm861
    %v863 = vsel %vm862, %v855, %v859
    %v864 = vand.u32 2147483647, %v854
    %vm865 = vcmp.eq.f32.partialorder %v864, 8.507059e+37
    %v866 = vand.u32 %v854, 2147483648
    %v867 = vor.u32 1.1754944e-38, %v866
    %v868 = vsel %vm865, %v867, %v863
    %v869 = vmul.f32 1.0, %v868
    %v870 = vmul.f32 %v849, %v718
    %v871 = vmul.f32 %v830, %v850
    %v872 = vadd.f32 %v870, %v871
    %v873 = vtanh.pop %v872
    %v874 = vmul.f32 %v869, %v873
    %s875 = scalar_lea.vmem %s4, 32
    %876 = vst [vmem:[%s875] sm:$0xff] %v874
    %s877 = scalar_lea.vmem %s0, 160
    %v878 = vld [vmem:[%s877] sm:$0xff]
    %v879 = vld [vmem:[%s877 + $0x8] sm:$0xff]
    %v880 = vld [vmem:[%s877 + $0x10] sm:$0xff]
    %v881 = vld [vmem:[%s877 + $0x18] sm:$0xff]
    %882 = vmatpush.msra.mxu0 %v103
    %883 = vmatpush.msra.mxu0 %v99
    %884 = vmatpush.msra.mxu0 %v95
    %885 = vmatpush.msra.mxu0 %v91
    %886 = vmatpush.msra.mxu0 %v87
    %887 = vmatpush.msra.mxu0 %v83
    %888 = vmatpush.msra.mxu0 %v79
    %889 = vmatpush.msra.mxu0 %v75
    %890 = vmatpush.msra.mxu0 %v71
    %891 = vmatpush.msra.mxu0 %v67
    %892 = vmatpush.msra.mxu0 %v63
    %893 = vmatpush.msra.mxu0 %v59
    %894 = vmatpush.msra.mxu0 %v55
    %895 = vmatpush.msra.mxu0 %v51
    %896 = vmatpush.msra.mxu0 %v47
    %897 = vmatpush.msra.mxu0 %v43
    %898 = vmatmul.f32.gmra.mxu0 %v874
    %v899 = vpop.f32.mrf.mxu0
    %v900 = vadd.f32 0.0, %v899
    %901 = vdwg.mxu0
    %902 = vmatpush.msra.mxu0 %v104
    %903 = vmatpush.msra.mxu0 %v100
    %904 = vmatpush.msra.mxu0 %v96
    %905 = vmatpush.msra.mxu0 %v92
    %906 = vmatpush.msra.mxu0 %v88
    %907 = vmatpush.msra.mxu0 %v84
    %908 = vmatpush.msra.mxu0 %v80
    %909 = vmatpush.msra.mxu0 %v76
    %910 = vmatpush.msra.mxu0 %v72
    %911 = vmatpush.msra.mxu0 %v68
    %912 = vmatpush.msra.mxu0 %v64
    %913 = vmatpush.msra.mxu0 %v60
    %914 = vmatpush.msra.mxu0 %v56
    %915 = vmatpush.msra.mxu0 %v52
    %916 = vmatpush.msra.mxu0 %v48
    %917 = vmatpush.msra.mxu0 %v44
    %918 = vmatmul.f32.gmra.mxu0 %v874
    %v919 = vpop.f32.mrf.mxu0
    %v920 = vadd.f32 0.0, %v919
    %921 = vdwg.mxu0
    %922 = vmatpush.msra.mxu0 %v105
    %923 = vmatpush.msra.mxu0 %v101
    %924 = vmatpush.msra.mxu0 %v97
    %925 = vmatpush.msra.mxu0 %v93
    %926 = vmatpush.msra.mxu0 %v89
    %927 = vmatpush.msra.mxu0 %v85
    %928 = vmatpush.msra.mxu0 %v81
    %929 = vmatpush.msra.mxu0 %v77
    %930 = vmatpush.msra.mxu0 %v73
    %931 = vmatpush.msra.mxu0 %v69
    %932 = vmatpush.msra.mxu0 %v65
    %933 = vmatpush.msra.mxu0 %v61
    %934 = vmatpush.msra.mxu0 %v57
    %935 = vmatpush.msra.mxu0 %v53
    %936 = vmatpush.msra.mxu0 %v49
    %937 = vmatpush.msra.mxu0 %v45
    %938 = vmatmul.f32.gmra.mxu0 %v874
    %v939 = vpop.f32.mrf.mxu0
    %v940 = vadd.f32 0.0, %v939
    %941 = vdwg.mxu0
    %942 = vmatpush.msra.mxu0 %v106
    %943 = vmatpush.msra.mxu0 %v102
    %944 = vmatpush.msra.mxu0 %v98
    %945 = vmatpush.msra.mxu0 %v94
    %946 = vmatpush.msra.mxu0 %v90
    %947 = vmatpush.msra.mxu0 %v86
    %948 = vmatpush.msra.mxu0 %v82
    %949 = vmatpush.msra.mxu0 %v78
    %950 = vmatpush.msra.mxu0 %v74
    %951 = vmatpush.msra.mxu0 %v70
    %952 = vmatpush.msra.mxu0 %v66
    %953 = vmatpush.msra.mxu0 %v62
    %954 = vmatpush.msra.mxu0 %v58
    %955 = vmatpush.msra.mxu0 %v54
    %956 = vmatpush.msra.mxu0 %v50
    %957 = vmatpush.msra.mxu0 %v46
    %958 = vmatmul.f32.gmra.mxu0 %v874
    %v959 = vpop.f32.mrf.mxu0
    %v960 = vadd.f32 0.0, %v959
    %961 = vdwg.mxu0
    %v962 = vadd.f32 %v878, %v900
    %v963 = vadd.f32 %v879, %v920
    %v964 = vadd.f32 %v880, %v940
    %v965 = vadd.f32 %v881, %v960
    %v966 = vxor.u32 %v962, 2147483648
    %v967 = vmul.f32 %v966, 1.442695
    %v968 = vpow.pop %v967
    %v969 = vadd.f32 %v968, 1.0
    %v970 = vrcp.pop %v969
    %v971 = vmul.f32 %v969, %v970
    %v972 = vsub.f32 1.0, %v971
    %v973 = vmul.f32 %v970, %v972
    %v974 = vadd.f32 %v970, %v973
    %vm975 = vweird.f32 %v969
    %vm976 = vweird.f32 %v970
    %vm977 = vmor %vm975, %vm976
    %v978 = vsel %vm977, %v970, %v974
    %v979 = vand.u32 2147483647, %v969
    %vm980 = vcmp.eq.f32.partialorder %v979, 8.507059e+37
    %v981 = vand.u32 %v969, 2147483648
    %v982 = vor.u32 1.1754944e-38, %v981
    %v983 = vsel %vm980, %v982, %v978
    %v984 = vmul.f32 1.0, %v983
    %v985 = vxor.u32 %v963, 2147483648
    %v986 = vmul.f32 %v985, 1.442695
    %v987 = vpow.pop %v986
    %v988 = vadd.f32 %v987, 1.0
    %v989 = vrcp.pop %v988
    %v990 = vmul.f32 %v988, %v989
    %v991 = vsub.f32 1.0, %v990
    %v992 = vmul.f32 %v989, %v991
    %v993 = vadd.f32 %v989, %v992
    %vm994 = vweird.f32 %v988
    %vm995 = vweird.f32 %v989
    %vm996 = vmor %vm994, %vm995
    %v997 = vsel %vm996, %v989, %v993
    %v998 = vand.u32 2147483647, %v988
    %vm999 = vcmp.eq.f32.partialorder %v998, 8.507059e+37
    %v1000 = vand.u32 %v988, 2147483648
    %v1001 = vor.u32 1.1754944e-38, %v1000
    %v1002 = vsel %vm999, %v1001, %v997
    %v1003 = vmul.f32 1.0, %v1002
    %v1004 = vtanh.pop %v964
    %v1005 = vxor.u32 %v965, 2147483648
    %v1006 = vmul.f32 %v1005, 1.442695
    %v1007 = vpow.pop %v1006
    %v1008 = vadd.f32 %v1007, 1.0
    %v1009 = vrcp.pop %v1008
    %v1010 = vmul.f32 %v1008, %v1009
    %v1011 = vsub.f32 1.0, %v1010
    %v1012 = vmul.f32 %v1009, %v1011
    %v1013 = vadd.f32 %v1009, %v1012
    %vm1014 = vweird.f32 %v1008
    %vm1015 = vweird.f32 %v1009
    %vm1016 = vmor %vm1014, %vm1015
    %v1017 = vsel %vm1016, %v1009, %v1013
    %v1018 = vand.u32 2147483647, %v1008
    %vm1019 = vcmp.eq.f32.partialorder %v1018, 8.507059e+37
    %v1020 = vand.u32 %v1008, 2147483648
    %v1021 = vor.u32 1.1754944e-38, %v1020
    %v1022 = vsel %vm1019, %v1021, %v1017
    %v1023 = vmul.f32 1.0, %v1022
    %v1024 = vmul.f32 %v1003, %v872
    %v1025 = vmul.f32 %v984, %v1004
    %v1026 = vadd.f32 %v1024, %v1025
    %v1027 = vtanh.pop %v1026
    %v1028 = vmul.f32 %v1023, %v1027
    %s1029 = scalar_lea.vmem %s4, 40
    %1030 = vst [vmem:[%s1029] sm:$0xff] %v1028
    %s1031 = scalar_lea.vmem %s0, 192
    %v1032 = vld [vmem:[%s1031] sm:$0xff]
    %v1033 = vld [vmem:[%s1031 + $0x8] sm:$0xff]
    %v1034 = vld [vmem:[%s1031 + $0x10] sm:$0xff]
    %v1035 = vld [vmem:[%s1031 + $0x18] sm:$0xff]
    %1036 = vmatpush.msra.mxu0 %v103
    %1037 = vmatpush.msra.mxu0 %v99
    %1038 = vmatpush.msra.mxu0 %v95
    %1039 = vmatpush.msra.mxu0 %v91
    %1040 = vmatpush.msra.mxu0 %v87
    %1041 = vmatpush.msra.mxu0 %v83
    %1042 = vmatpush.msra.mxu0 %v79
    %1043 = vmatpush.msra.mxu0 %v75
    %1044 = vmatpush.msra.mxu0 %v71
    %1045 = vmatpush.msra.mxu0 %v67
    %1046 = vmatpush.msra.mxu0 %v63
    %1047 = vmatpush.msra.mxu0 %v59
    %1048 = vmatpush.msra.mxu0 %v55
    %1049 = vmatpush.msra.mxu0 %v51
    %1050 = vmatpush.msra.mxu0 %v47
    %1051 = vmatpush.msra.mxu0 %v43
    %1052 = vmatmul.f32.gmra.mxu0 %v1028
    %v1053 = vpop.f32.mrf.mxu0
    %v1054 = vadd.f32 0.0, %v1053
    %1055 = vdwg.mxu0
    %1056 = vmatpush.msra.mxu0 %v104
    %1057 = vmatpush.msra.mxu0 %v100
    %1058 = vmatpush.msra.mxu0 %v96
    %1059 = vmatpush.msra.mxu0 %v92
    %1060 = vmatpush.msra.mxu0 %v88
    %1061 = vmatpush.msra.mxu0 %v84
    %1062 = vmatpush.msra.mxu0 %v80
    %1063 = vmatpush.msra.mxu0 %v76
    %1064 = vmatpush.msra.mxu0 %v72
    %1065 = vmatpush.msra.mxu0 %v68
    %1066 = vmatpush.msra.mxu0 %v64
    %1067 = vmatpush.msra.mxu0 %v60
    %1068 = vmatpush.msra.mxu0 %v56
    %1069 = vmatpush.msra.mxu0 %v52
    %1070 = vmatpush.msra.mxu0 %v48
    %1071 = vmatpush.msra.mxu0 %v44
    %1072 = vmatmul.f32.gmra.mxu0 %v1028
    %v1073 = vpop.f32.mrf.mxu0
    %v1074 = vadd.f32 0.0, %v1073
    %1075 = vdwg.mxu0
    %1076 = vmatpush.msra.mxu0 %v105
    %1077 = vmatpush.msra.mxu0 %v101
    %1078 = vmatpush.msra.mxu0 %v97
    %1079 = vmatpush.msra.mxu0 %v93
    %1080 = vmatpush.msra.mxu0 %v89
    %1081 = vmatpush.msra.mxu0 %v85
    %1082 = vmatpush.msra.mxu0 %v81
    %1083 = vmatpush.msra.mxu0 %v77
    %1084 = vmatpush.msra.mxu0 %v73
    %1085 = vmatpush.msra.mxu0 %v69
    %1086 = vmatpush.msra.mxu0 %v65
    %1087 = vmatpush.msra.mxu0 %v61
    %1088 = vmatpush.msra.mxu0 %v57
    %1089 = vmatpush.msra.mxu0 %v53
    %1090 = vmatpush.msra.mxu0 %v49
    %1091 = vmatpush.msra.mxu0 %v45
    %1092 = vmatmul.f32.gmra.mxu0 %v1028
    %v1093 = vpop.f32.mrf.mxu0
    %v1094 = vadd.f32 0.0, %v1093
    %1095 = vdwg.mxu0
    %1096 = vmatpush.msra.mxu0 %v106
    %1097 = vmatpush.msra.mxu0 %v102
    %1098 = vmatpush.msra.mxu0 %v98
    %1099 = vmatpush.msra.mxu0 %v94
    %1100 = vmatpush.msra.mxu0 %v90
    %1101 = vmatpush.msra.mxu0 %v86
    %1102 = vmatpush.msra.mxu0 %v82
    %1103 = vmatpush.msra.mxu0 %v78
    %1104 = vmatpush.msra.mxu0 %v74
    %1105 = vmatpush.msra.mxu0 %v70
    %1106 = vmatpush.msra.mxu0 %v66
    %1107 = vmatpush.msra.mxu0 %v62
    %1108 = vmatpush.msra.mxu0 %v58
    %1109 = vmatpush.msra.mxu0 %v54
    %1110 = vmatpush.msra.mxu0 %v50
    %1111 = vmatpush.msra.mxu0 %v46
    %1112 = vmatmul.f32.gmra.mxu0 %v1028
    %v1113 = vpop.f32.mrf.mxu0
    %v1114 = vadd.f32 0.0, %v1113
    %1115 = vdwg.mxu0
    %v1116 = vadd.f32 %v1032, %v1054
    %v1117 = vadd.f32 %v1033, %v1074
    %v1118 = vadd.f32 %v1034, %v1094
    %v1119 = vadd.f32 %v1035, %v1114
    %v1120 = vxor.u32 %v1116, 2147483648
    %v1121 = vmul.f32 %v1120, 1.442695
    %v1122 = vpow.pop %v1121
    %v1123 = vadd.f32 %v1122, 1.0
    %v1124 = vrcp.pop %v1123
    %v1125 = vmul.f32 %v1123, %v1124
    %v1126 = vsub.f32 1.0, %v1125
    %v1127 = vmul.f32 %v1124, %v1126
    %v1128 = vadd.f32 %v1124, %v1127
    %vm1129 = vweird.f32 %v1123
    %vm1130 = vweird.f32 %v1124
    %vm1131 = vmor %vm1129, %vm1130
    %v1132 = vsel %vm1131, %v1124, %v1128
    %v1133 = vand.u32 2147483647, %v1123
    %vm1134 = vcmp.eq.f32.partialorder %v1133, 8.507059e+37
    %v1135 = vand.u32 %v1123, 2147483648
    %v1136 = vor.u32 1.1754944e-38, %v1135
    %v1137 = vsel %vm1134, %v1136, %v1132
    %v1138 = vmul.f32 1.0, %v1137
    %v1139 = vxor.u32 %v1117, 2147483648
    %v1140 = vmul.f32 %v1139, 1.442695
    %v1141 = vpow.pop %v1140
    %v1142 = vadd.f32 %v1141, 1.0
    %v1143 = vrcp.pop %v1142
    %v1144 = vmul.f32 %v1142, %v1143
    %v1145 = vsub.f32 1.0, %v1144
    %v1146 = vmul.f32 %v1143, %v1145
    %v1147 = vadd.f32 %v1143, %v1146
    %vm1148 = vweird.f32 %v1142
    %vm1149 = vweird.f32 %v1143
    %vm1150 = vmor %vm1148, %vm1149
    %v1151 = vsel %vm1150, %v1143, %v1147
    %v1152 = vand.u32 2147483647, %v1142
    %vm1153 = vcmp.eq.f32.partialorder %v1152, 8.507059e+37
    %v1154 = vand.u32 %v1142, 2147483648
    %v1155 = vor.u32 1.1754944e-38, %v1154
    %v1156 = vsel %vm1153, %v1155, %v1151
    %v1157 = vmul.f32 1.0, %v1156
    %v1158 = vtanh.pop %v1118
    %v1159 = vxor.u32 %v1119, 2147483648
    %v1160 = vmul.f32 %v1159, 1.442695
    %v1161 = vpow.pop %v1160
    %v1162 = vadd.f32 %v1161, 1.0
    %v1163 = vrcp.pop %v1162
    %v1164 = vmul.f32 %v1162, %v1163
    %v1165 = vsub.f32 1.0, %v1164
    %v1166 = vmul.f32 %v1163, %v1165
    %v1167 = vadd.f32 %v1163, %v1166
    %vm1168 = vweird.f32 %v1162
    %vm1169 = vweird.f32 %v1163
    %vm1170 = vmor %vm1168, %vm1169
    %v1171 = vsel %vm1170, %v1163, %v1167
    %v1172 = vand.u32 2147483647, %v1162
    %vm1173 = vcmp.eq.f32.partialorder %v1172, 8.507059e+37
    %v1174 = vand.u32 %v1162, 2147483648
    %v1175 = vor.u32 1.1754944e-38, %v1174
    %v1176 = vsel %vm1173, %v1175, %v1171
    %v1177 = vmul.f32 1.0, %v1176
    %v1178 = vmul.f32 %v1157, %v1026
    %v1179 = vmul.f32 %v1138, %v1158
    %v1180 = vadd.f32 %v1178, %v1179
    %v1181 = vtanh.pop %v1180
    %v1182 = vmul.f32 %v1177, %v1181
    %s1183 = scalar_lea.vmem %s4, 48
    %1184 = vst [vmem:[%s1183] sm:$0xff] %v1182
    %s1185 = scalar_lea.vmem %s0, 224
    %v1186 = vld [vmem:[%s1185] sm:$0xff]
    %v1187 = vld [vmem:[%s1185 + $0x8] sm:$0xff]
    %v1188 = vld [vmem:[%s1185 + $0x10] sm:$0xff]
    %v1189 = vld [vmem:[%s1185 + $0x18] sm:$0xff]
    %1190 = vmatpush.msra.mxu0 %v103
    %1191 = vmatpush.msra.mxu0 %v99
    %1192 = vmatpush.msra.mxu0 %v95
    %1193 = vmatpush.msra.mxu0 %v91
    %1194 = vmatpush.msra.mxu0 %v87
    %1195 = vmatpush.msra.mxu0 %v83
    %1196 = vmatpush.msra.mxu0 %v79
    %1197 = vmatpush.msra.mxu0 %v75
    %1198 = vmatpush.msra.mxu0 %v71
    %1199 = vmatpush.msra.mxu0 %v67
    %1200 = vmatpush.msra.mxu0 %v63
    %1201 = vmatpush.msra.mxu0 %v59
    %1202 = vmatpush.msra.mxu0 %v55
    %1203 = vmatpush.msra.mxu0 %v51
    %1204 = vmatpush.msra.mxu0 %v47
    %1205 = vmatpush.msra.mxu0 %v43
    %1206 = vmatmul.f32.gmra.mxu0 %v1182
    %v1207 = vpop.f32.mrf.mxu0
    %v1208 = vadd.f32 0.0, %v1207
    %1209 = vdwg.mxu0
    %1210 = vmatpush.msra.mxu0 %v104
    %1211 = vmatpush.msra.mxu0 %v100
    %1212 = vmatpush.msra.mxu0 %v96
    %1213 = vmatpush.msra.mxu0 %v92
    %1214 = vmatpush.msra.mxu0 %v88
    %1215 = vmatpush.msra.mxu0 %v84
    %1216 = vmatpush.msra.mxu0 %v80
    %1217 = vmatpush.msra.mxu0 %v76
    %1218 = vmatpush.msra.mxu0 %v72
    %1219 = vmatpush.msra.mxu0 %v68
    %1220 = vmatpush.msra.mxu0 %v64
    %1221 = vmatpush.msra.mxu0 %v60
    %1222 = vmatpush.msra.mxu0 %v56
    %1223 = vmatpush.msra.mxu0 %v52
    %1224 = vmatpush.msra.mxu0 %v48
    %1225 = vmatpush.msra.mxu0 %v44
    %1226 = vmatmul.f32.gmra.mxu0 %v1182
    %v1227 = vpop.f32.mrf.mxu0
    %v1228 = vadd.f32 0.0, %v1227
    %1229 = vdwg.mxu0
    %1230 = vmatpush.msra.mxu0 %v105
    %1231 = vmatpush.msra.mxu0 %v101
    %1232 = vmatpush.msra.mxu0 %v97
    %1233 = vmatpush.msra.mxu0 %v93
    %1234 = vmatpush.msra.mxu0 %v89
    %1235 = vmatpush.msra.mxu0 %v85
    %1236 = vmatpush.msra.mxu0 %v81
    %1237 = vmatpush.msra.mxu0 %v77
    %1238 = vmatpush.msra.mxu0 %v73
    %1239 = vmatpush.msra.mxu0 %v69
    %1240 = vmatpush.msra.mxu0 %v65
    %1241 = vmatpush.msra.mxu0 %v61
    %1242 = vmatpush.msra.mxu0 %v57
    %1243 = vmatpush.msra.mxu0 %v53
    %1244 = vmatpush.msra.mxu0 %v49
    %1245 = vmatpush.msra.mxu0 %v45
    %1246 = vmatmul.f32.gmra.mxu0 %v1182
    %v1247 = vpop.f32.mrf.mxu0
    %v1248 = vadd.f32 0.0, %v1247
    %1249 = vdwg.mxu0
    %1250 = vmatpush.msra.mxu0 %v106
    %1251 = vmatpush.msra.mxu0 %v102
    %1252 = vmatpush.msra.mxu0 %v98
    %1253 = vmatpush.msra.mxu0 %v94
    %1254 = vmatpush.msra.mxu0 %v90
    %1255 = vmatpush.msra.mxu0 %v86
    %1256 = vmatpush.msra.mxu0 %v82
    %1257 = vmatpush.msra.mxu0 %v78
    %1258 = vmatpush.msra.mxu0 %v74
    %1259 = vmatpush.msra.mxu0 %v70
    %1260 = vmatpush.msra.mxu0 %v66
    %1261 = vmatpush.msra.mxu0 %v62
    %1262 = vmatpush.msra.mxu0 %v58
    %1263 = vmatpush.msra.mxu0 %v54
    %1264 = vmatpush.msra.mxu0 %v50
    %1265 = vmatpush.msra.mxu0 %v46
    %1266 = vmatmul.f32.gmra.mxu0 %v1182
    %v1267 = vpop.f32.mrf.mxu0
    %v1268 = vadd.f32 0.0, %v1267
    %1269 = vdwg.mxu0
    %v1270 = vadd.f32 %v1186, %v1208
    %v1271 = vadd.f32 %v1187, %v1228
    %v1272 = vadd.f32 %v1188, %v1248
    %v1273 = vadd.f32 %v1189, %v1268
    %v1274 = vxor.u32 %v1270, 2147483648
    %v1275 = vmul.f32 %v1274, 1.442695
    %v1276 = vpow.pop %v1275
    %v1277 = vadd.f32 %v1276, 1.0
    %v1278 = vrcp.pop %v1277
    %v1279 = vmul.f32 %v1277, %v1278
    %v1280 = vsub.f32 1.0, %v1279
    %v1281 = vmul.f32 %v1278, %v1280
    %v1282 = vadd.f32 %v1278, %v1281
    %vm1283 = vweird.f32 %v1277
    %vm1284 = vweird.f32 %v1278
    %vm1285 = vmor %vm1283, %vm1284
    %v1286 = vsel %vm1285, %v1278, %v1282
    %v1287 = vand.u32 2147483647, %v1277
    %vm1288 = vcmp.eq.f32.partialorder %v1287, 8.507059e+37
    %v1289 = vand.u32 %v1277, 2147483648
    %v1290 = vor.u32 1.1754944e-38, %v1289
    %v1291 = vsel %vm1288, %v1290, %v1286
    %v1292 = vmul.f32 1.0, %v1291
    %v1293 = vxor.u32 %v1271, 2147483648
    %v1294 = vmul.f32 %v1293, 1.442695
    %v1295 = vpow.pop %v1294
    %v1296 = vadd.f32 %v1295, 1.0
    %v1297 = vrcp.pop %v1296
    %v1298 = vmul.f32 %v1296, %v1297
    %v1299 = vsub.f32 1.0, %v1298
    %v1300 = vmul.f32 %v1297, %v1299
    %v1301 = vadd.f32 %v1297, %v1300
    %vm1302 = vweird.f32 %v1296
    %vm1303 = vweird.f32 %v1297
    %vm1304 = vmor %vm1302, %vm1303
    %v1305 = vsel %vm1304, %v1297, %v1301
    %v1306 = vand.u32 2147483647, %v1296
    %vm1307 = vcmp.eq.f32.partialorder %v1306, 8.507059e+37
    %v1308 = vand.u32 %v1296, 2147483648
    %v1309 = vor.u32 1.1754944e-38, %v1308
    %v1310 = vsel %vm1307, %v1309, %v1305
    %v1311 = vmul.f32 1.0, %v1310
    %v1312 = vtanh.pop %v1272
    %v1313 = vxor.u32 %v1273, 2147483648
    %v1314 = vmul.f32 %v1313, 1.442695
    %v1315 = vpow.pop %v1314
    %v1316 = vadd.f32 %v1315, 1.0
    %v1317 = vrcp.pop %v1316
    %v1318 = vmul.f32 %v1316, %v1317
    %v1319 = vsub.f32 1.0, %v1318
    %v1320 = vmul.f32 %v1317, %v1319
    %v1321 = vadd.f32 %v1317, %v1320
    %vm1322 = vweird.f32 %v1316
    %vm1323 = vweird.f32 %v1317
    %vm1324 = vmor %vm1322, %vm1323
    %v1325 = vsel %vm1324, %v1317, %v1321
    %v1326 = vand.u32 2147483647, %v1316
    %vm1327 = vcmp.eq.f32.partialorder %v1326, 8.507059e+37
    %v1328 = vand.u32 %v1316, 2147483648
    %v1329 = vor.u32 1.1754944e-38, %v1328
    %v1330 = vsel %vm1327, %v1329, %v1325
    %v1331 = vmul.f32 1.0, %v1330
    %v1332 = vmul.f32 %v1311, %v1180
    %v1333 = vmul.f32 %v1292, %v1312
    %v1334 = vadd.f32 %v1332, %v1333
    %v1335 = vtanh.pop %v1334
    %v1336 = vmul.f32 %v1331, %v1335
    %s1337 = scalar_lea.vmem %s4, 56
    %1338 = vst [vmem:[%s1337] sm:$0xff] %v1336
    %s1339 = scalar_lea.vmem %s0, 256
    %v1340 = vld [vmem:[%s1339] sm:$0xff]
    %v1341 = vld [vmem:[%s1339 + $0x8] sm:$0xff]
    %v1342 = vld [vmem:[%s1339 + $0x10] sm:$0xff]
    %v1343 = vld [vmem:[%s1339 + $0x18] sm:$0xff]
    %1344 = vmatpush.msra.mxu0 %v103
    %1345 = vmatpush.msra.mxu0 %v99
    %1346 = vmatpush.msra.mxu0 %v95
    %1347 = vmatpush.msra.mxu0 %v91
    %1348 = vmatpush.msra.mxu0 %v87
    %1349 = vmatpush.msra.mxu0 %v83
    %1350 = vmatpush.msra.mxu0 %v79
    %1351 = vmatpush.msra.mxu0 %v75
    %1352 = vmatpush.msra.mxu0 %v71
    %1353 = vmatpush.msra.mxu0 %v67
    %1354 = vmatpush.msra.mxu0 %v63
    %1355 = vmatpush.msra.mxu0 %v59
    %1356 = vmatpush.msra.mxu0 %v55
    %1357 = vmatpush.msra.mxu0 %v51
    %1358 = vmatpush.msra.mxu0 %v47
    %1359 = vmatpush.msra.mxu0 %v43
    %1360 = vmatmul.f32.gmra.mxu0 %v1336
    %v1361 = vpop.f32.mrf.mxu0
    %v1362 = vadd.f32 0.0, %v1361
    %1363 = vdwg.mxu0
    %1364 = vmatpush.msra.mxu0 %v104
    %1365 = vmatpush.msra.mxu0 %v100
    %1366 = vmatpush.msra.mxu0 %v96
    %1367 = vmatpush.msra.mxu0 %v92
    %1368 = vmatpush.msra.mxu0 %v88
    %1369 = vmatpush.msra.mxu0 %v84
    %1370 = vmatpush.msra.mxu0 %v80
    %1371 = vmatpush.msra.mxu0 %v76
    %1372 = vmatpush.msra.mxu0 %v72
    %1373 = vmatpush.msra.mxu0 %v68
    %1374 = vmatpush.msra.mxu0 %v64
    %1375 = vmatpush.msra.mxu0 %v60
    %1376 = vmatpush.msra.mxu0 %v56
    %1377 = vmatpush.msra.mxu0 %v52
    %1378 = vmatpush.msra.mxu0 %v48
    %1379 = vmatpush.msra.mxu0 %v44
    %1380 = vmatmul.f32.gmra.mxu0 %v1336
    %v1381 = vpop.f32.mrf.mxu0
    %v1382 = vadd.f32 0.0, %v1381
    %1383 = vdwg.mxu0
    %1384 = vmatpush.msra.mxu0 %v105
    %1385 = vmatpush.msra.mxu0 %v101
    %1386 = vmatpush.msra.mxu0 %v97
    %1387 = vmatpush.msra.mxu0 %v93
    %1388 = vmatpush.msra.mxu0 %v89
    %1389 = vmatpush.msra.mxu0 %v85
    %1390 = vmatpush.msra.mxu0 %v81
    %1391 = vmatpush.msra.mxu0 %v77
    %1392 = vmatpush.msra.mxu0 %v73
    %1393 = vmatpush.msra.mxu0 %v69
    %1394 = vmatpush.msra.mxu0 %v65
    %1395 = vmatpush.msra.mxu0 %v61
    %1396 = vmatpush.msra.mxu0 %v57
    %1397 = vmatpush.msra.mxu0 %v53
    %1398 = vmatpush.msra.mxu0 %v49
    %1399 = vmatpush.msra.mxu0 %v45
    %1400 = vmatmul.f32.gmra.mxu0 %v1336
    %v1401 = vpop.f32.mrf.mxu0
    %v1402 = vadd.f32 0.0, %v1401
    %1403 = vdwg.mxu0
    %1404 = vmatpush.msra.mxu0 %v106
    %1405 = vmatpush.msra.mxu0 %v102
    %1406 = vmatpush.msra.mxu0 %v98
    %1407 = vmatpush.msra.mxu0 %v94
    %1408 = vmatpush.msra.mxu0 %v90
    %1409 = vmatpush.msra.mxu0 %v86
    %1410 = vmatpush.msra.mxu0 %v82
    %1411 = vmatpush.msra.mxu0 %v78
    %1412 = vmatpush.msra.mxu0 %v74
    %1413 = vmatpush.msra.mxu0 %v70
    %1414 = vmatpush.msra.mxu0 %v66
    %1415 = vmatpush.msra.mxu0 %v62
    %1416 = vmatpush.msra.mxu0 %v58
    %1417 = vmatpush.msra.mxu0 %v54
    %1418 = vmatpush.msra.mxu0 %v50
    %1419 = vmatpush.msra.mxu0 %v46
    %1420 = vmatmul.f32.gmra.mxu0 %v1336
    %v1421 = vpop.f32.mrf.mxu0
    %v1422 = vadd.f32 0.0, %v1421
    %1423 = vdwg.mxu0
    %v1424 = vadd.f32 %v1340, %v1362
    %v1425 = vadd.f32 %v1341, %v1382
    %v1426 = vadd.f32 %v1342, %v1402
    %v1427 = vadd.f32 %v1343, %v1422
    %v1428 = vxor.u32 %v1424, 2147483648
    %v1429 = vmul.f32 %v1428, 1.442695
    %v1430 = vpow.pop %v1429
    %v1431 = vadd.f32 %v1430, 1.0
    %v1432 = vrcp.pop %v1431
    %v1433 = vmul.f32 %v1431, %v1432
    %v1434 = vsub.f32 1.0, %v1433
    %v1435 = vmul.f32 %v1432, %v1434
    %v1436 = vadd.f32 %v1432, %v1435
    %vm1437 = vweird.f32 %v1431
    %vm1438 = vweird.f32 %v1432
    %vm1439 = vmor %vm1437, %vm1438
    %v1440 = vsel %vm1439, %v1432, %v1436
    %v1441 = vand.u32 2147483647, %v1431
    %vm1442 = vcmp.eq.f32.partialorder %v1441, 8.507059e+37
    %v1443 = vand.u32 %v1431, 2147483648
    %v1444 = vor.u32 1.1754944e-38, %v1443
    %v1445 = vsel %vm1442, %v1444, %v1440
    %v1446 = vmul.f32 1.0, %v1445
    %v1447 = vxor.u32 %v1425, 2147483648
    %v1448 = vmul.f32 %v1447, 1.442695
    %v1449 = vpow.pop %v1448
    %v1450 = vadd.f32 %v1449, 1.0
    %v1451 = vrcp.pop %v1450
    %v1452 = vmul.f32 %v1450, %v1451
    %v1453 = vsub.f32 1.0, %v1452
    %v1454 = vmul.f32 %v1451, %v1453
    %v1455 = vadd.f32 %v1451, %v1454
    %vm1456 = vweird.f32 %v1450
    %vm1457 = vweird.f32 %v1451
    %vm1458 = vmor %vm1456, %vm1457
    %v1459 = vsel %vm1458, %v1451, %v1455
    %v1460 = vand.u32 2147483647, %v1450
    %vm1461 = vcmp.eq.f32.partialorder %v1460, 8.507059e+37
    %v1462 = vand.u32 %v1450, 2147483648
    %v1463 = vor.u32 1.1754944e-38, %v1462
    %v1464 = vsel %vm1461, %v1463, %v1459
    %v1465 = vmul.f32 1.0, %v1464
    %v1466 = vtanh.pop %v1426
    %v1467 = vxor.u32 %v1427, 2147483648
    %v1468 = vmul.f32 %v1467, 1.442695
    %v1469 = vpow.pop %v1468
    %v1470 = vadd.f32 %v1469, 1.0
    %v1471 = vrcp.pop %v1470
    %v1472 = vmul.f32 %v1470, %v1471
    %v1473 = vsub.f32 1.0, %v1472
    %v1474 = vmul.f32 %v1471, %v1473
    %v1475 = vadd.f32 %v1471, %v1474
    %vm1476 = vweird.f32 %v1470
    %vm1477 = vweird.f32 %v1471
    %vm1478 = vmor %vm1476, %vm1477
    %v1479 = vsel %vm1478, %v1471, %v1475
    %v1480 = vand.u32 2147483647, %v1470
    %vm1481 = vcmp.eq.f32.partialorder %v1480, 8.507059e+37
    %v1482 = vand.u32 %v1470, 2147483648
    %v1483 = vor.u32 1.1754944e-38, %v1482
    %v1484 = vsel %vm1481, %v1483, %v1479
    %v1485 = vmul.f32 1.0, %v1484
    %v1486 = vmul.f32 %v1465, %v1334
    %v1487 = vmul.f32 %v1446, %v1466
    %v1488 = vadd.f32 %v1486, %v1487
    %v1489 = vtanh.pop %v1488
    %v1490 = vmul.f32 %v1485, %v1489
    %s1491 = scalar_lea.vmem %s4, 64
    %1492 = vst [vmem:[%s1491] sm:$0xff] %v1490
    %s1493 = scalar_lea.vmem %s0, 288
    %v1494 = vld [vmem:[%s1493] sm:$0xff]
    %v1495 = vld [vmem:[%s1493 + $0x8] sm:$0xff]
    %v1496 = vld [vmem:[%s1493 + $0x10] sm:$0xff]
    %v1497 = vld [vmem:[%s1493 + $0x18] sm:$0xff]
    %1498 = vmatpush.msra.mxu0 %v103
    %1499 = vmatpush.msra.mxu0 %v99
    %1500 = vmatpush.msra.mxu0 %v95
    %1501 = vmatpush.msra.mxu0 %v91
    %1502 = vmatpush.msra.mxu0 %v87
    %1503 = vmatpush.msra.mxu0 %v83
    %1504 = vmatpush.msra.mxu0 %v79
    %1505 = vmatpush.msra.mxu0 %v75
    %1506 = vmatpush.msra.mxu0 %v71
    %1507 = vmatpush.msra.mxu0 %v67
    %1508 = vmatpush.msra.mxu0 %v63
    %1509 = vmatpush.msra.mxu0 %v59
    %1510 = vmatpush.msra.mxu0 %v55
    %1511 = vmatpush.msra.mxu0 %v51
    %1512 = vmatpush.msra.mxu0 %v47
    %1513 = vmatpush.msra.mxu0 %v43
    %1514 = vmatmul.f32.gmra.mxu0 %v1490
    %v1515 = vpop.f32.mrf.mxu0
    %v1516 = vadd.f32 0.0, %v1515
    %1517 = vdwg.mxu0
    %1518 = vmatpush.msra.mxu0 %v104
    %1519 = vmatpush.msra.mxu0 %v100
    %1520 = vmatpush.msra.mxu0 %v96
    %1521 = vmatpush.msra.mxu0 %v92
    %1522 = vmatpush.msra.mxu0 %v88
    %1523 = vmatpush.msra.mxu0 %v84
    %1524 = vmatpush.msra.mxu0 %v80
    %1525 = vmatpush.msra.mxu0 %v76
    %1526 = vmatpush.msra.mxu0 %v72
    %1527 = vmatpush.msra.mxu0 %v68
    %1528 = vmatpush.msra.mxu0 %v64
    %1529 = vmatpush.msra.mxu0 %v60
    %1530 = vmatpush.msra.mxu0 %v56
    %1531 = vmatpush.msra.mxu0 %v52
    %1532 = vmatpush.msra.mxu0 %v48
    %1533 = vmatpush.msra.mxu0 %v44
    %1534 = vmatmul.f32.gmra.mxu0 %v1490
    %v1535 = vpop.f32.mrf.mxu0
    %v1536 = vadd.f32 0.0, %v1535
    %1537 = vdwg.mxu0
    %1538 = vmatpush.msra.mxu0 %v105
    %1539 = vmatpush.msra.mxu0 %v101
    %1540 = vmatpush.msra.mxu0 %v97
    %1541 = vmatpush.msra.mxu0 %v93
    %1542 = vmatpush.msra.mxu0 %v89
    %1543 = vmatpush.msra.mxu0 %v85
    %1544 = vmatpush.msra.mxu0 %v81
    %1545 = vmatpush.msra.mxu0 %v77
    %1546 = vmatpush.msra.mxu0 %v73
    %1547 = vmatpush.msra.mxu0 %v69
    %1548 = vmatpush.msra.mxu0 %v65
    %1549 = vmatpush.msra.mxu0 %v61
    %1550 = vmatpush.msra.mxu0 %v57
    %1551 = vmatpush.msra.mxu0 %v53
    %1552 = vmatpush.msra.mxu0 %v49
    %1553 = vmatpush.msra.mxu0 %v45
    %1554 = vmatmul.f32.gmra.mxu0 %v1490
    %v1555 = vpop.f32.mrf.mxu0
    %v1556 = vadd.f32 0.0, %v1555
    %1557 = vdwg.mxu0
    %1558 = vmatpush.msra.mxu0 %v106
    %1559 = vmatpush.msra.mxu0 %v102
    %1560 = vmatpush.msra.mxu0 %v98
    %1561 = vmatpush.msra.mxu0 %v94
    %1562 = vmatpush.msra.mxu0 %v90
    %1563 = vmatpush.msra.mxu0 %v86
    %1564 = vmatpush.msra.mxu0 %v82
    %1565 = vmatpush.msra.mxu0 %v78
    %1566 = vmatpush.msra.mxu0 %v74
    %1567 = vmatpush.msra.mxu0 %v70
    %1568 = vmatpush.msra.mxu0 %v66
    %1569 = vmatpush.msra.mxu0 %v62
    %1570 = vmatpush.msra.mxu0 %v58
    %1571 = vmatpush.msra.mxu0 %v54
    %1572 = vmatpush.msra.mxu0 %v50
    %1573 = vmatpush.msra.mxu0 %v46
    %1574 = vmatmul.f32.gmra.mxu0 %v1490
    %v1575 = vpop.f32.mrf.mxu0
    %v1576 = vadd.f32 0.0, %v1575
    %1577 = vdwg.mxu0
    %v1578 = vadd.f32 %v1494, %v1516
    %v1579 = vadd.f32 %v1495, %v1536
    %v1580 = vadd.f32 %v1496, %v1556
    %v1581 = vadd.f32 %v1497, %v1576
    %v1582 = vxor.u32 %v1578, 2147483648
    %v1583 = vmul.f32 %v1582, 1.442695
    %v1584 = vpow.pop %v1583
    %v1585 = vadd.f32 %v1584, 1.0
    %v1586 = vrcp.pop %v1585
    %v1587 = vmul.f32 %v1585, %v1586
    %v1588 = vsub.f32 1.0, %v1587
    %v1589 = vmul.f32 %v1586, %v1588
    %v1590 = vadd.f32 %v1586, %v1589
    %vm1591 = vweird.f32 %v1585
    %vm1592 = vweird.f32 %v1586
    %vm1593 = vmor %vm1591, %vm1592
    %v1594 = vsel %vm1593, %v1586, %v1590
    %v1595 = vand.u32 2147483647, %v1585
    %vm1596 = vcmp.eq.f32.partialorder %v1595, 8.507059e+37
    %v1597 = vand.u32 %v1585, 2147483648
    %v1598 = vor.u32 1.1754944e-38, %v1597
    %v1599 = vsel %vm1596, %v1598, %v1594
    %v1600 = vmul.f32 1.0, %v1599
    %v1601 = vxor.u32 %v1579, 2147483648
    %v1602 = vmul.f32 %v1601, 1.442695
    %v1603 = vpow.pop %v1602
    %v1604 = vadd.f32 %v1603, 1.0
    %v1605 = vrcp.pop %v1604
    %v1606 = vmul.f32 %v1604, %v1605
    %v1607 = vsub.f32 1.0, %v1606
    %v1608 = vmul.f32 %v1605, %v1607
    %v1609 = vadd.f32 %v1605, %v1608
    %vm1610 = vweird.f32 %v1604
    %vm1611 = vweird.f32 %v1605
    %vm1612 = vmor %vm1610, %vm1611
    %v1613 = vsel %vm1612, %v1605, %v1609
    %v1614 = vand.u32 2147483647, %v1604
    %vm1615 = vcmp.eq.f32.partialorder %v1614, 8.507059e+37
    %v1616 = vand.u32 %v1604, 2147483648
    %v1617 = vor.u32 1.1754944e-38, %v1616
    %v1618 = vsel %vm1615, %v1617, %v1613
    %v1619 = vmul.f32 1.0, %v1618
    %v1620 = vtanh.pop %v1580
    %v1621 = vxor.u32 %v1581, 2147483648
    %v1622 = vmul.f32 %v1621, 1.442695
    %v1623 = vpow.pop %v1622
    %v1624 = vadd.f32 %v1623, 1.0
    %v1625 = vrcp.pop %v1624
    %v1626 = vmul.f32 %v1624, %v1625
    %v1627 = vsub.f32 1.0, %v1626
    %v1628 = vmul.f32 %v1625, %v1627
    %v1629 = vadd.f32 %v1625, %v1628
    %vm1630 = vweird.f32 %v1624
    %vm1631 = vweird.f32 %v1625
    %vm1632 = vmor %vm1630, %vm1631
    %v1633 = vsel %vm1632, %v1625, %v1629
    %v1634 = vand.u32 2147483647, %v1624
    %vm1635 = vcmp.eq.f32.partialorder %v1634, 8.507059e+37
    %v1636 = vand.u32 %v1624, 2147483648
    %v1637 = vor.u32 1.1754944e-38, %v1636
    %v1638 = vsel %vm1635, %v1637, %v1633
    %v1639 = vmul.f32 1.0, %v1638
    %v1640 = vmul.f32 %v1619, %v1488
    %v1641 = vmul.f32 %v1600, %v1620
    %v1642 = vadd.f32 %v1640, %v1641
    %v1643 = vtanh.pop %v1642
    %v1644 = vmul.f32 %v1639, %v1643
    %s1645 = scalar_lea.vmem %s4, 72
    %1646 = vst [vmem:[%s1645] sm:$0xff] %v1644
    %s1647 = scalar_lea.vmem %s0, 320
    %v1648 = vld [vmem:[%s1647] sm:$0xff]
    %v1649 = vld [vmem:[%s1647 + $0x8] sm:$0xff]
    %v1650 = vld [vmem:[%s1647 + $0x10] sm:$0xff]
    %v1651 = vld [vmem:[%s1647 + $0x18] sm:$0xff]
    %1652 = vmatpush.msra.mxu0 %v103
    %1653 = vmatpush.msra.mxu0 %v99
    %1654 = vmatpush.msra.mxu0 %v95
    %1655 = vmatpush.msra.mxu0 %v91
    %1656 = vmatpush.msra.mxu0 %v87
    %1657 = vmatpush.msra.mxu0 %v83
    %1658 = vmatpush.msra.mxu0 %v79
    %1659 = vmatpush.msra.mxu0 %v75
    %1660 = vmatpush.msra.mxu0 %v71
    %1661 = vmatpush.msra.mxu0 %v67
    %1662 = vmatpush.msra.mxu0 %v63
    %1663 = vmatpush.msra.mxu0 %v59
    %1664 = vmatpush.msra.mxu0 %v55
    %1665 = vmatpush.msra.mxu0 %v51
    %1666 = vmatpush.msra.mxu0 %v47
    %1667 = vmatpush.msra.mxu0 %v43
    %1668 = vmatmul.f32.gmra.mxu0 %v1644
    %v1669 = vpop.f32.mrf.mxu0
    %v1670 = vadd.f32 0.0, %v1669
    %1671 = vdwg.mxu0
    %1672 = vmatpush.msra.mxu0 %v104
    %1673 = vmatpush.msra.mxu0 %v100
    %1674 = vmatpush.msra.mxu0 %v96
    %1675 = vmatpush.msra.mxu0 %v92
    %1676 = vmatpush.msra.mxu0 %v88
    %1677 = vmatpush.msra.mxu0 %v84
    %1678 = vmatpush.msra.mxu0 %v80
    %1679 = vmatpush.msra.mxu0 %v76
    %1680 = vmatpush.msra.mxu0 %v72
    %1681 = vmatpush.msra.mxu0 %v68
    %1682 = vmatpush.msra.mxu0 %v64
    %1683 = vmatpush.msra.mxu0 %v60
    %1684 = vmatpush.msra.mxu0 %v56
    %1685 = vmatpush.msra.mxu0 %v52
    %1686 = vmatpush.msra.mxu0 %v48
    %1687 = vmatpush.msra.mxu0 %v44
    %1688 = vmatmul.f32.gmra.mxu0 %v1644
    %v1689 = vpop.f32.mrf.mxu0
    %v1690 = vadd.f32 0.0, %v1689
    %1691 = vdwg.mxu0
    %1692 = vmatpush.msra.mxu0 %v105
    %1693 = vmatpush.msra.mxu0 %v101
    %1694 = vmatpush.msra.mxu0 %v97
    %1695 = vmatpush.msra.mxu0 %v93
    %1696 = vmatpush.msra.mxu0 %v89
    %1697 = vmatpush.msra.mxu0 %v85
    %1698 = vmatpush.msra.mxu0 %v81
    %1699 = vmatpush.msra.mxu0 %v77
    %1700 = vmatpush.msra.mxu0 %v73
    %1701 = vmatpush.msra.mxu0 %v69
    %1702 = vmatpush.msra.mxu0 %v65
    %1703 = vmatpush.msra.mxu0 %v61
    %1704 = vmatpush.msra.mxu0 %v57
    %1705 = vmatpush.msra.mxu0 %v53
    %1706 = vmatpush.msra.mxu0 %v49
    %1707 = vmatpush.msra.mxu0 %v45
    %1708 = vmatmul.f32.gmra.mxu0 %v1644
    %v1709 = vpop.f32.mrf.mxu0
    %v1710 = vadd.f32 0.0, %v1709
    %1711 = vdwg.mxu0
    %1712 = vmatpush.msra.mxu0 %v106
    %1713 = vmatpush.msra.mxu0 %v102
    %1714 = vmatpush.msra.mxu0 %v98
    %1715 = vmatpush.msra.mxu0 %v94
    %1716 = vmatpush.msra.mxu0 %v90
    %1717 = vmatpush.msra.mxu0 %v86
    %1718 = vmatpush.msra.mxu0 %v82
    %1719 = vmatpush.msra.mxu0 %v78
    %1720 = vmatpush.msra.mxu0 %v74
    %1721 = vmatpush.msra.mxu0 %v70
    %1722 = vmatpush.msra.mxu0 %v66
    %1723 = vmatpush.msra.mxu0 %v62
    %1724 = vmatpush.msra.mxu0 %v58
    %1725 = vmatpush.msra.mxu0 %v54
    %1726 = vmatpush.msra.mxu0 %v50
    %1727 = vmatpush.msra.mxu0 %v46
    %1728 = vmatmul.f32.gmra.mxu0 %v1644
    %v1729 = vpop.f32.mrf.mxu0
    %v1730 = vadd.f32 0.0, %v1729
    %1731 = vdwg.mxu0
    %v1732 = vadd.f32 %v1648, %v1670
    %v1733 = vadd.f32 %v1649, %v1690
    %v1734 = vadd.f32 %v1650, %v1710
    %v1735 = vadd.f32 %v1651, %v1730
    %v1736 = vxor.u32 %v1732, 2147483648
    %v1737 = vmul.f32 %v1736, 1.442695
    %v1738 = vpow.pop %v1737
    %v1739 = vadd.f32 %v1738, 1.0
    %v1740 = vrcp.pop %v1739
    %v1741 = vmul.f32 %v1739, %v1740
    %v1742 = vsub.f32 1.0, %v1741
    %v1743 = vmul.f32 %v1740, %v1742
    %v1744 = vadd.f32 %v1740, %v1743
    %vm1745 = vweird.f32 %v1739
    %vm1746 = vweird.f32 %v1740
    %vm1747 = vmor %vm1745, %vm1746
    %v1748 = vsel %vm1747, %v1740, %v1744
    %v1749 = vand.u32 2147483647, %v1739
    %vm1750 = vcmp.eq.f32.partialorder %v1749, 8.507059e+37
    %v1751 = vand.u32 %v1739, 2147483648
    %v1752 = vor.u32 1.1754944e-38, %v1751
    %v1753 = vsel %vm1750, %v1752, %v1748
    %v1754 = vmul.f32 1.0, %v1753
    %v1755 = vxor.u32 %v1733, 2147483648
    %v1756 = vmul.f32 %v1755, 1.442695
    %v1757 = vpow.pop %v1756
    %v1758 = vadd.f32 %v1757, 1.0
    %v1759 = vrcp.pop %v1758
    %v1760 = vmul.f32 %v1758, %v1759
    %v1761 = vsub.f32 1.0, %v1760
    %v1762 = vmul.f32 %v1759, %v1761
    %v1763 = vadd.f32 %v1759, %v1762
    %vm1764 = vweird.f32 %v1758
    %vm1765 = vweird.f32 %v1759
    %vm1766 = vmor %vm1764, %vm1765
    %v1767 = vsel %vm1766, %v1759, %v1763
    %v1768 = vand.u32 2147483647, %v1758
    %vm1769 = vcmp.eq.f32.partialorder %v1768, 8.507059e+37
    %v1770 = vand.u32 %v1758, 2147483648
    %v1771 = vor.u32 1.1754944e-38, %v1770
    %v1772 = vsel %vm1769, %v1771, %v1767
    %v1773 = vmul.f32 1.0, %v1772
    %v1774 = vtanh.pop %v1734
    %v1775 = vxor.u32 %v1735, 2147483648
    %v1776 = vmul.f32 %v1775, 1.442695
    %v1777 = vpow.pop %v1776
    %v1778 = vadd.f32 %v1777, 1.0
    %v1779 = vrcp.pop %v1778
    %v1780 = vmul.f32 %v1778, %v1779
    %v1781 = vsub.f32 1.0, %v1780
    %v1782 = vmul.f32 %v1779, %v1781
    %v1783 = vadd.f32 %v1779, %v1782
    %vm1784 = vweird.f32 %v1778
    %vm1785 = vweird.f32 %v1779
    %vm1786 = vmor %vm1784, %vm1785
    %v1787 = vsel %vm1786, %v1779, %v1783
    %v1788 = vand.u32 2147483647, %v1778
    %vm1789 = vcmp.eq.f32.partialorder %v1788, 8.507059e+37
    %v1790 = vand.u32 %v1778, 2147483648
    %v1791 = vor.u32 1.1754944e-38, %v1790
    %v1792 = vsel %vm1789, %v1791, %v1787
    %v1793 = vmul.f32 1.0, %v1792
    %v1794 = vmul.f32 %v1773, %v1642
    %v1795 = vmul.f32 %v1754, %v1774
    %v1796 = vadd.f32 %v1794, %v1795
    %v1797 = vtanh.pop %v1796
    %v1798 = vmul.f32 %v1793, %v1797
    %s1799 = scalar_lea.vmem %s4, 80
    %1800 = vst [vmem:[%s1799] sm:$0xff] %v1798
    %s1801 = scalar_lea.vmem %s0, 352
    %v1802 = vld [vmem:[%s1801] sm:$0xff]
    %v1803 = vld [vmem:[%s1801 + $0x8] sm:$0xff]
    %v1804 = vld [vmem:[%s1801 + $0x10] sm:$0xff]
    %v1805 = vld [vmem:[%s1801 + $0x18] sm:$0xff]
    %1806 = vmatpush.msra.mxu0 %v103
    %1807 = vmatpush.msra.mxu0 %v99
    %1808 = vmatpush.msra.mxu0 %v95
    %1809 = vmatpush.msra.mxu0 %v91
    %1810 = vmatpush.msra.mxu0 %v87
    %1811 = vmatpush.msra.mxu0 %v83
    %1812 = vmatpush.msra.mxu0 %v79
    %1813 = vmatpush.msra.mxu0 %v75
    %1814 = vmatpush.msra.mxu0 %v71
    %1815 = vmatpush.msra.mxu0 %v67
    %1816 = vmatpush.msra.mxu0 %v63
    %1817 = vmatpush.msra.mxu0 %v59
    %1818 = vmatpush.msra.mxu0 %v55
    %1819 = vmatpush.msra.mxu0 %v51
    %1820 = vmatpush.msra.mxu0 %v47
    %1821 = vmatpush.msra.mxu0 %v43
    %1822 = vmatmul.f32.gmra.mxu0 %v1798
    %v1823 = vpop.f32.mrf.mxu0
    %v1824 = vadd.f32 0.0, %v1823
    %1825 = vdwg.mxu0
    %1826 = vmatpush.msra.mxu0 %v104
    %1827 = vmatpush.msra.mxu0 %v100
    %1828 = vmatpush.msra.mxu0 %v96
    %1829 = vmatpush.msra.mxu0 %v92
    %1830 = vmatpush.msra.mxu0 %v88
    %1831 = vmatpush.msra.mxu0 %v84
    %1832 = vmatpush.msra.mxu0 %v80
    %1833 = vmatpush.msra.mxu0 %v76
    %1834 = vmatpush.msra.mxu0 %v72
    %1835 = vmatpush.msra.mxu0 %v68
    %1836 = vmatpush.msra.mxu0 %v64
    %1837 = vmatpush.msra.mxu0 %v60
    %1838 = vmatpush.msra.mxu0 %v56
    %1839 = vmatpush.msra.mxu0 %v52
    %1840 = vmatpush.msra.mxu0 %v48
    %1841 = vmatpush.msra.mxu0 %v44
    %1842 = vmatmul.f32.gmra.mxu0 %v1798
    %v1843 = vpop.f32.mrf.mxu0
    %v1844 = vadd.f32 0.0, %v1843
    %1845 = vdwg.mxu0
    %1846 = vmatpush.msra.mxu0 %v105
    %1847 = vmatpush.msra.mxu0 %v101
    %1848 = vmatpush.msra.mxu0 %v97
    %1849 = vmatpush.msra.mxu0 %v93
    %1850 = vmatpush.msra.mxu0 %v89
    %1851 = vmatpush.msra.mxu0 %v85
    %1852 = vmatpush.msra.mxu0 %v81
    %1853 = vmatpush.msra.mxu0 %v77
    %1854 = vmatpush.msra.mxu0 %v73
    %1855 = vmatpush.msra.mxu0 %v69
    %1856 = vmatpush.msra.mxu0 %v65
    %1857 = vmatpush.msra.mxu0 %v61
    %1858 = vmatpush.msra.mxu0 %v57
    %1859 = vmatpush.msra.mxu0 %v53
    %1860 = vmatpush.msra.mxu0 %v49
    %1861 = vmatpush.msra.mxu0 %v45
    %1862 = vmatmul.f32.gmra.mxu0 %v1798
    %v1863 = vpop.f32.mrf.mxu0
    %v1864 = vadd.f32 0.0, %v1863
    %1865 = vdwg.mxu0
    %1866 = vmatpush.msra.mxu0 %v106
    %1867 = vmatpush.msra.mxu0 %v102
    %1868 = vmatpush.msra.mxu0 %v98
    %1869 = vmatpush.msra.mxu0 %v94
    %1870 = vmatpush.msra.mxu0 %v90
    %1871 = vmatpush.msra.mxu0 %v86
    %1872 = vmatpush.msra.mxu0 %v82
    %1873 = vmatpush.msra.mxu0 %v78
    %1874 = vmatpush.msra.mxu0 %v74
    %1875 = vmatpush.msra.mxu0 %v70
    %1876 = vmatpush.msra.mxu0 %v66
    %1877 = vmatpush.msra.mxu0 %v62
    %1878 = vmatpush.msra.mxu0 %v58
    %1879 = vmatpush.msra.mxu0 %v54
    %1880 = vmatpush.msra.mxu0 %v50
    %1881 = vmatpush.msra.mxu0 %v46
    %1882 = vmatmul.f32.gmra.mxu0 %v1798
    %v1883 = vpop.f32.mrf.mxu0
    %v1884 = vadd.f32 0.0, %v1883
    %1885 = vdwg.mxu0
    %v1886 = vadd.f32 %v1802, %v1824
    %v1887 = vadd.f32 %v1803, %v1844
    %v1888 = vadd.f32 %v1804, %v1864
    %v1889 = vadd.f32 %v1805, %v1884
    %v1890 = vxor.u32 %v1886, 2147483648
    %v1891 = vmul.f32 %v1890, 1.442695
    %v1892 = vpow.pop %v1891
    %v1893 = vadd.f32 %v1892, 1.0
    %v1894 = vrcp.pop %v1893
    %v1895 = vmul.f32 %v1893, %v1894
    %v1896 = vsub.f32 1.0, %v1895
    %v1897 = vmul.f32 %v1894, %v1896
    %v1898 = vadd.f32 %v1894, %v1897
    %vm1899 = vweird.f32 %v1893
    %vm1900 = vweird.f32 %v1894
    %vm1901 = vmor %vm1899, %vm1900
    %v1902 = vsel %vm1901, %v1894, %v1898
    %v1903 = vand.u32 2147483647, %v1893
    %vm1904 = vcmp.eq.f32.partialorder %v1903, 8.507059e+37
    %v1905 = vand.u32 %v1893, 2147483648
    %v1906 = vor.u32 1.1754944e-38, %v1905
    %v1907 = vsel %vm1904, %v1906, %v1902
    %v1908 = vmul.f32 1.0, %v1907
    %v1909 = vxor.u32 %v1887, 2147483648
    %v1910 = vmul.f32 %v1909, 1.442695
    %v1911 = vpow.pop %v1910
    %v1912 = vadd.f32 %v1911, 1.0
    %v1913 = vrcp.pop %v1912
    %v1914 = vmul.f32 %v1912, %v1913
    %v1915 = vsub.f32 1.0, %v1914
    %v1916 = vmul.f32 %v1913, %v1915
    %v1917 = vadd.f32 %v1913, %v1916
    %vm1918 = vweird.f32 %v1912
    %vm1919 = vweird.f32 %v1913
    %vm1920 = vmor %vm1918, %vm1919
    %v1921 = vsel %vm1920, %v1913, %v1917
    %v1922 = vand.u32 2147483647, %v1912
    %vm1923 = vcmp.eq.f32.partialorder %v1922, 8.507059e+37
    %v1924 = vand.u32 %v1912, 2147483648
    %v1925 = vor.u32 1.1754944e-38, %v1924
    %v1926 = vsel %vm1923, %v1925, %v1921
    %v1927 = vmul.f32 1.0, %v1926
    %v1928 = vtanh.pop %v1888
    %v1929 = vxor.u32 %v1889, 2147483648
    %v1930 = vmul.f32 %v1929, 1.442695
    %v1931 = vpow.pop %v1930
    %v1932 = vadd.f32 %v1931, 1.0
    %v1933 = vrcp.pop %v1932
    %v1934 = vmul.f32 %v1932, %v1933
    %v1935 = vsub.f32 1.0, %v1934
    %v1936 = vmul.f32 %v1933, %v1935
    %v1937 = vadd.f32 %v1933, %v1936
    %vm1938 = vweird.f32 %v1932
    %vm1939 = vweird.f32 %v1933
    %vm1940 = vmor %vm1938, %vm1939
    %v1941 = vsel %vm1940, %v1933, %v1937
    %v1942 = vand.u32 2147483647, %v1932
    %vm1943 = vcmp.eq.f32.partialorder %v1942, 8.507059e+37
    %v1944 = vand.u32 %v1932, 2147483648
    %v1945 = vor.u32 1.1754944e-38, %v1944
    %v1946 = vsel %vm1943, %v1945, %v1941
    %v1947 = vmul.f32 1.0, %v1946
    %v1948 = vmul.f32 %v1927, %v1796
    %v1949 = vmul.f32 %v1908, %v1928
    %v1950 = vadd.f32 %v1948, %v1949
    %v1951 = vtanh.pop %v1950
    %v1952 = vmul.f32 %v1947, %v1951
    %s1953 = scalar_lea.vmem %s4, 88
    %1954 = vst [vmem:[%s1953] sm:$0xff] %v1952
    %s1955 = scalar_lea.vmem %s0, 384
    %v1956 = vld [vmem:[%s1955] sm:$0xff]
    %v1957 = vld [vmem:[%s1955 + $0x8] sm:$0xff]
    %v1958 = vld [vmem:[%s1955 + $0x10] sm:$0xff]
    %v1959 = vld [vmem:[%s1955 + $0x18] sm:$0xff]
    %1960 = vmatpush.msra.mxu0 %v103
    %1961 = vmatpush.msra.mxu0 %v99
    %1962 = vmatpush.msra.mxu0 %v95
    %1963 = vmatpush.msra.mxu0 %v91
    %1964 = vmatpush.msra.mxu0 %v87
    %1965 = vmatpush.msra.mxu0 %v83
    %1966 = vmatpush.msra.mxu0 %v79
    %1967 = vmatpush.msra.mxu0 %v75
    %1968 = vmatpush.msra.mxu0 %v71
    %1969 = vmatpush.msra.mxu0 %v67
    %1970 = vmatpush.msra.mxu0 %v63
    %1971 = vmatpush.msra.mxu0 %v59
    %1972 = vmatpush.msra.mxu0 %v55
    %1973 = vmatpush.msra.mxu0 %v51
    %1974 = vmatpush.msra.mxu0 %v47
    %1975 = vmatpush.msra.mxu0 %v43
    %1976 = vmatmul.f32.gmra.mxu0 %v1952
    %v1977 = vpop.f32.mrf.mxu0
    %v1978 = vadd.f32 0.0, %v1977
    %1979 = vdwg.mxu0
    %1980 = vmatpush.msra.mxu0 %v104
    %1981 = vmatpush.msra.mxu0 %v100
    %1982 = vmatpush.msra.mxu0 %v96
    %1983 = vmatpush.msra.mxu0 %v92
    %1984 = vmatpush.msra.mxu0 %v88
    %1985 = vmatpush.msra.mxu0 %v84
    %1986 = vmatpush.msra.mxu0 %v80
    %1987 = vmatpush.msra.mxu0 %v76
    %1988 = vmatpush.msra.mxu0 %v72
    %1989 = vmatpush.msra.mxu0 %v68
    %1990 = vmatpush.msra.mxu0 %v64
    %1991 = vmatpush.msra.mxu0 %v60
    %1992 = vmatpush.msra.mxu0 %v56
    %1993 = vmatpush.msra.mxu0 %v52
    %1994 = vmatpush.msra.mxu0 %v48
    %1995 = vmatpush.msra.mxu0 %v44
    %1996 = vmatmul.f32.gmra.mxu0 %v1952
    %v1997 = vpop.f32.mrf.mxu0
    %v1998 = vadd.f32 0.0, %v1997
    %1999 = vdwg.mxu0
    %2000 = vmatpush.msra.mxu0 %v105
    %2001 = vmatpush.msra.mxu0 %v101
    %2002 = vmatpush.msra.mxu0 %v97
    %2003 = vmatpush.msra.mxu0 %v93
    %2004 = vmatpush.msra.mxu0 %v89
    %2005 = vmatpush.msra.mxu0 %v85
    %2006 = vmatpush.msra.mxu0 %v81
    %2007 = vmatpush.msra.mxu0 %v77
    %2008 = vmatpush.msra.mxu0 %v73
    %2009 = vmatpush.msra.mxu0 %v69
    %2010 = vmatpush.msra.mxu0 %v65
    %2011 = vmatpush.msra.mxu0 %v61
    %2012 = vmatpush.msra.mxu0 %v57
    %2013 = vmatpush.msra.mxu0 %v53
    %2014 = vmatpush.msra.mxu0 %v49
    %2015 = vmatpush.msra.mxu0 %v45
    %2016 = vmatmul.f32.gmra.mxu0 %v1952
    %v2017 = vpop.f32.mrf.mxu0
    %v2018 = vadd.f32 0.0, %v2017
    %2019 = vdwg.mxu0
    %2020 = vmatpush.msra.mxu0 %v106
    %2021 = vmatpush.msra.mxu0 %v102
    %2022 = vmatpush.msra.mxu0 %v98
    %2023 = vmatpush.msra.mxu0 %v94
    %2024 = vmatpush.msra.mxu0 %v90
    %2025 = vmatpush.msra.mxu0 %v86
    %2026 = vmatpush.msra.mxu0 %v82
    %2027 = vmatpush.msra.mxu0 %v78
    %2028 = vmatpush.msra.mxu0 %v74
    %2029 = vmatpush.msra.mxu0 %v70
    %2030 = vmatpush.msra.mxu0 %v66
    %2031 = vmatpush.msra.mxu0 %v62
    %2032 = vmatpush.msra.mxu0 %v58
    %2033 = vmatpush.msra.mxu0 %v54
    %2034 = vmatpush.msra.mxu0 %v50
    %2035 = vmatpush.msra.mxu0 %v46
    %2036 = vmatmul.f32.gmra.mxu0 %v1952
    %v2037 = vpop.f32.mrf.mxu0
    %v2038 = vadd.f32 0.0, %v2037
    %2039 = vdwg.mxu0
    %v2040 = vadd.f32 %v1956, %v1978
    %v2041 = vadd.f32 %v1957, %v1998
    %v2042 = vadd.f32 %v1958, %v2018
    %v2043 = vadd.f32 %v1959, %v2038
    %v2044 = vxor.u32 %v2040, 2147483648
    %v2045 = vmul.f32 %v2044, 1.442695
    %v2046 = vpow.pop %v2045
    %v2047 = vadd.f32 %v2046, 1.0
    %v2048 = vrcp.pop %v2047
    %v2049 = vmul.f32 %v2047, %v2048
    %v2050 = vsub.f32 1.0, %v2049
    %v2051 = vmul.f32 %v2048, %v2050
    %v2052 = vadd.f32 %v2048, %v2051
    %vm2053 = vweird.f32 %v2047
    %vm2054 = vweird.f32 %v2048
    %vm2055 = vmor %vm2053, %vm2054
    %v2056 = vsel %vm2055, %v2048, %v2052
    %v2057 = vand.u32 2147483647, %v2047
    %vm2058 = vcmp.eq.f32.partialorder %v2057, 8.507059e+37
    %v2059 = vand.u32 %v2047, 2147483648
    %v2060 = vor.u32 1.1754944e-38, %v2059
    %v2061 = vsel %vm2058, %v2060, %v2056
    %v2062 = vmul.f32 1.0, %v2061
    %v2063 = vxor.u32 %v2041, 2147483648
    %v2064 = vmul.f32 %v2063, 1.442695
    %v2065 = vpow.pop %v2064
    %v2066 = vadd.f32 %v2065, 1.0
    %v2067 = vrcp.pop %v2066
    %v2068 = vmul.f32 %v2066, %v2067
    %v2069 = vsub.f32 1.0, %v2068
    %v2070 = vmul.f32 %v2067, %v2069
    %v2071 = vadd.f32 %v2067, %v2070
    %vm2072 = vweird.f32 %v2066
    %vm2073 = vweird.f32 %v2067
    %vm2074 = vmor %vm2072, %vm2073
    %v2075 = vsel %vm2074, %v2067, %v2071
    %v2076 = vand.u32 2147483647, %v2066
    %vm2077 = vcmp.eq.f32.partialorder %v2076, 8.507059e+37
    %v2078 = vand.u32 %v2066, 2147483648
    %v2079 = vor.u32 1.1754944e-38, %v2078
    %v2080 = vsel %vm2077, %v2079, %v2075
    %v2081 = vmul.f32 1.0, %v2080
    %v2082 = vtanh.pop %v2042
    %v2083 = vxor.u32 %v2043, 2147483648
    %v2084 = vmul.f32 %v2083, 1.442695
    %v2085 = vpow.pop %v2084
    %v2086 = vadd.f32 %v2085, 1.0
    %v2087 = vrcp.pop %v2086
    %v2088 = vmul.f32 %v2086, %v2087
    %v2089 = vsub.f32 1.0, %v2088
    %v2090 = vmul.f32 %v2087, %v2089
    %v2091 = vadd.f32 %v2087, %v2090
    %vm2092 = vweird.f32 %v2086
    %vm2093 = vweird.f32 %v2087
    %vm2094 = vmor %vm2092, %vm2093
    %v2095 = vsel %vm2094, %v2087, %v2091
    %v2096 = vand.u32 2147483647, %v2086
    %vm2097 = vcmp.eq.f32.partialorder %v2096, 8.507059e+37
    %v2098 = vand.u32 %v2086, 2147483648
    %v2099 = vor.u32 1.1754944e-38, %v2098
    %v2100 = vsel %vm2097, %v2099, %v2095
    %v2101 = vmul.f32 1.0, %v2100
    %v2102 = vmul.f32 %v2081, %v1950
    %v2103 = vmul.f32 %v2062, %v2082
    %v2104 = vadd.f32 %v2102, %v2103
    %v2105 = vtanh.pop %v2104
    %v2106 = vmul.f32 %v2101, %v2105
    %s2107 = scalar_lea.vmem %s4, 96
    %2108 = vst [vmem:[%s2107] sm:$0xff] %v2106
    %s2109 = scalar_lea.vmem %s0, 416
    %v2110 = vld [vmem:[%s2109] sm:$0xff]
    %v2111 = vld [vmem:[%s2109 + $0x8] sm:$0xff]
    %v2112 = vld [vmem:[%s2109 + $0x10] sm:$0xff]
    %v2113 = vld [vmem:[%s2109 + $0x18] sm:$0xff]
    %2114 = vmatpush.msra.mxu0 %v103
    %2115 = vmatpush.msra.mxu0 %v99
    %2116 = vmatpush.msra.mxu0 %v95
    %2117 = vmatpush.msra.mxu0 %v91
    %2118 = vmatpush.msra.mxu0 %v87
    %2119 = vmatpush.msra.mxu0 %v83
    %2120 = vmatpush.msra.mxu0 %v79
    %2121 = vmatpush.msra.mxu0 %v75
    %2122 = vmatpush.msra.mxu0 %v71
    %2123 = vmatpush.msra.mxu0 %v67
    %2124 = vmatpush.msra.mxu0 %v63
    %2125 = vmatpush.msra.mxu0 %v59
    %2126 = vmatpush.msra.mxu0 %v55
    %2127 = vmatpush.msra.mxu0 %v51
    %2128 = vmatpush.msra.mxu0 %v47
    %2129 = vmatpush.msra.mxu0 %v43
    %2130 = vmatmul.f32.gmra.mxu0 %v2106
    %v2131 = vpop.f32.mrf.mxu0
    %v2132 = vadd.f32 0.0, %v2131
    %2133 = vdwg.mxu0
    %2134 = vmatpush.msra.mxu0 %v104
    %2135 = vmatpush.msra.mxu0 %v100
    %2136 = vmatpush.msra.mxu0 %v96
    %2137 = vmatpush.msra.mxu0 %v92
    %2138 = vmatpush.msra.mxu0 %v88
    %2139 = vmatpush.msra.mxu0 %v84
    %2140 = vmatpush.msra.mxu0 %v80
    %2141 = vmatpush.msra.mxu0 %v76
    %2142 = vmatpush.msra.mxu0 %v72
    %2143 = vmatpush.msra.mxu0 %v68
    %2144 = vmatpush.msra.mxu0 %v64
    %2145 = vmatpush.msra.mxu0 %v60
    %2146 = vmatpush.msra.mxu0 %v56
    %2147 = vmatpush.msra.mxu0 %v52
    %2148 = vmatpush.msra.mxu0 %v48
    %2149 = vmatpush.msra.mxu0 %v44
    %2150 = vmatmul.f32.gmra.mxu0 %v2106
    %v2151 = vpop.f32.mrf.mxu0
    %v2152 = vadd.f32 0.0, %v2151
    %2153 = vdwg.mxu0
    %2154 = vmatpush.msra.mxu0 %v105
    %2155 = vmatpush.msra.mxu0 %v101
    %2156 = vmatpush.msra.mxu0 %v97
    %2157 = vmatpush.msra.mxu0 %v93
    %2158 = vmatpush.msra.mxu0 %v89
    %2159 = vmatpush.msra.mxu0 %v85
    %2160 = vmatpush.msra.mxu0 %v81
    %2161 = vmatpush.msra.mxu0 %v77
    %2162 = vmatpush.msra.mxu0 %v73
    %2163 = vmatpush.msra.mxu0 %v69
    %2164 = vmatpush.msra.mxu0 %v65
    %2165 = vmatpush.msra.mxu0 %v61
    %2166 = vmatpush.msra.mxu0 %v57
    %2167 = vmatpush.msra.mxu0 %v53
    %2168 = vmatpush.msra.mxu0 %v49
    %2169 = vmatpush.msra.mxu0 %v45
    %2170 = vmatmul.f32.gmra.mxu0 %v2106
    %v2171 = vpop.f32.mrf.mxu0
    %v2172 = vadd.f32 0.0, %v2171
    %2173 = vdwg.mxu0
    %2174 = vmatpush.msra.mxu0 %v106
    %2175 = vmatpush.msra.mxu0 %v102
    %2176 = vmatpush.msra.mxu0 %v98
    %2177 = vmatpush.msra.mxu0 %v94
    %2178 = vmatpush.msra.mxu0 %v90
    %2179 = vmatpush.msra.mxu0 %v86
    %2180 = vmatpush.msra.mxu0 %v82
    %2181 = vmatpush.msra.mxu0 %v78
    %2182 = vmatpush.msra.mxu0 %v74
    %2183 = vmatpush.msra.mxu0 %v70
    %2184 = vmatpush.msra.mxu0 %v66
    %2185 = vmatpush.msra.mxu0 %v62
    %2186 = vmatpush.msra.mxu0 %v58
    %2187 = vmatpush.msra.mxu0 %v54
    %2188 = vmatpush.msra.mxu0 %v50
    %2189 = vmatpush.msra.mxu0 %v46
    %2190 = vmatmul.f32.gmra.mxu0 %v2106
    %v2191 = vpop.f32.mrf.mxu0
    %v2192 = vadd.f32 0.0, %v2191
    %2193 = vdwg.mxu0
    %v2194 = vadd.f32 %v2110, %v2132
    %v2195 = vadd.f32 %v2111, %v2152
    %v2196 = vadd.f32 %v2112, %v2172
    %v2197 = vadd.f32 %v2113, %v2192
    %v2198 = vxor.u32 %v2194, 2147483648
    %v2199 = vmul.f32 %v2198, 1.442695
    %v2200 = vpow.pop %v2199
    %v2201 = vadd.f32 %v2200, 1.0
    %v2202 = vrcp.pop %v2201
    %v2203 = vmul.f32 %v2201, %v2202
    %v2204 = vsub.f32 1.0, %v2203
    %v2205 = vmul.f32 %v2202, %v2204
    %v2206 = vadd.f32 %v2202, %v2205
    %vm2207 = vweird.f32 %v2201
    %vm2208 = vweird.f32 %v2202
    %vm2209 = vmor %vm2207, %vm2208
    %v2210 = vsel %vm2209, %v2202, %v2206
    %v2211 = vand.u32 2147483647, %v2201
    %vm2212 = vcmp.eq.f32.partialorder %v2211, 8.507059e+37
    %v2213 = vand.u32 %v2201, 2147483648
    %v2214 = vor.u32 1.1754944e-38, %v2213
    %v2215 = vsel %vm2212, %v2214, %v2210
    %v2216 = vmul.f32 1.0, %v2215
    %v2217 = vxor.u32 %v2195, 2147483648
    %v2218 = vmul.f32 %v2217, 1.442695
    %v2219 = vpow.pop %v2218
    %v2220 = vadd.f32 %v2219, 1.0
    %v2221 = vrcp.pop %v2220
    %v2222 = vmul.f32 %v2220, %v2221
    %v2223 = vsub.f32 1.0, %v2222
    %v2224 = vmul.f32 %v2221, %v2223
    %v2225 = vadd.f32 %v2221, %v2224
    %vm2226 = vweird.f32 %v2220
    %vm2227 = vweird.f32 %v2221
    %vm2228 = vmor %vm2226, %vm2227
    %v2229 = vsel %vm2228, %v2221, %v2225
    %v2230 = vand.u32 2147483647, %v2220
    %vm2231 = vcmp.eq.f32.partialorder %v2230, 8.507059e+37
    %v2232 = vand.u32 %v2220, 2147483648
    %v2233 = vor.u32 1.1754944e-38, %v2232
    %v2234 = vsel %vm2231, %v2233, %v2229
    %v2235 = vmul.f32 1.0, %v2234
    %v2236 = vtanh.pop %v2196
    %v2237 = vxor.u32 %v2197, 2147483648
    %v2238 = vmul.f32 %v2237, 1.442695
    %v2239 = vpow.pop %v2238
    %v2240 = vadd.f32 %v2239, 1.0
    %v2241 = vrcp.pop %v2240
    %v2242 = vmul.f32 %v2240, %v2241
    %v2243 = vsub.f32 1.0, %v2242
    %v2244 = vmul.f32 %v2241, %v2243
    %v2245 = vadd.f32 %v2241, %v2244
    %vm2246 = vweird.f32 %v2240
    %vm2247 = vweird.f32 %v2241
    %vm2248 = vmor %vm2246, %vm2247
    %v2249 = vsel %vm2248, %v2241, %v2245
    %v2250 = vand.u32 2147483647, %v2240
    %vm2251 = vcmp.eq.f32.partialorder %v2250, 8.507059e+37
    %v2252 = vand.u32 %v2240, 2147483648
    %v2253 = vor.u32 1.1754944e-38, %v2252
    %v2254 = vsel %vm2251, %v2253, %v2249
    %v2255 = vmul.f32 1.0, %v2254
    %v2256 = vmul.f32 %v2235, %v2104
    %v2257 = vmul.f32 %v2216, %v2236
    %v2258 = vadd.f32 %v2256, %v2257
    %v2259 = vtanh.pop %v2258
    %v2260 = vmul.f32 %v2255, %v2259
    %s2261 = scalar_lea.vmem %s4, 104
    %2262 = vst [vmem:[%s2261] sm:$0xff] %v2260
    %s2263 = scalar_lea.vmem %s0, 448
    %v2264 = vld [vmem:[%s2263] sm:$0xff]
    %v2265 = vld [vmem:[%s2263 + $0x8] sm:$0xff]
    %v2266 = vld [vmem:[%s2263 + $0x10] sm:$0xff]
    %v2267 = vld [vmem:[%s2263 + $0x18] sm:$0xff]
    %2268 = vmatpush.msra.mxu0 %v103
    %2269 = vmatpush.msra.mxu0 %v99
    %2270 = vmatpush.msra.mxu0 %v95
    %2271 = vmatpush.msra.mxu0 %v91
    %2272 = vmatpush.msra.mxu0 %v87
    %2273 = vmatpush.msra.mxu0 %v83
    %2274 = vmatpush.msra.mxu0 %v79
    %2275 = vmatpush.msra.mxu0 %v75
    %2276 = vmatpush.msra.mxu0 %v71
    %2277 = vmatpush.msra.mxu0 %v67
    %2278 = vmatpush.msra.mxu0 %v63
    %2279 = vmatpush.msra.mxu0 %v59
    %2280 = vmatpush.msra.mxu0 %v55
    %2281 = vmatpush.msra.mxu0 %v51
    %2282 = vmatpush.msra.mxu0 %v47
    %2283 = vmatpush.msra.mxu0 %v43
    %2284 = vmatmul.f32.gmra.mxu0 %v2260
    %v2285 = vpop.f32.mrf.mxu0
    %v2286 = vadd.f32 0.0, %v2285
    %2287 = vdwg.mxu0
    %2288 = vmatpush.msra.mxu0 %v104
    %2289 = vmatpush.msra.mxu0 %v100
    %2290 = vmatpush.msra.mxu0 %v96
    %2291 = vmatpush.msra.mxu0 %v92
    %2292 = vmatpush.msra.mxu0 %v88
    %2293 = vmatpush.msra.mxu0 %v84
    %2294 = vmatpush.msra.mxu0 %v80
    %2295 = vmatpush.msra.mxu0 %v76
    %2296 = vmatpush.msra.mxu0 %v72
    %2297 = vmatpush.msra.mxu0 %v68
    %2298 = vmatpush.msra.mxu0 %v64
    %2299 = vmatpush.msra.mxu0 %v60
    %2300 = vmatpush.msra.mxu0 %v56
    %2301 = vmatpush.msra.mxu0 %v52
    %2302 = vmatpush.msra.mxu0 %v48
    %2303 = vmatpush.msra.mxu0 %v44
    %2304 = vmatmul.f32.gmra.mxu0 %v2260
    %v2305 = vpop.f32.mrf.mxu0
    %v2306 = vadd.f32 0.0, %v2305
    %2307 = vdwg.mxu0
    %2308 = vmatpush.msra.mxu0 %v105
    %2309 = vmatpush.msra.mxu0 %v101
    %2310 = vmatpush.msra.mxu0 %v97
    %2311 = vmatpush.msra.mxu0 %v93
    %2312 = vmatpush.msra.mxu0 %v89
    %2313 = vmatpush.msra.mxu0 %v85
    %2314 = vmatpush.msra.mxu0 %v81
    %2315 = vmatpush.msra.mxu0 %v77
    %2316 = vmatpush.msra.mxu0 %v73
    %2317 = vmatpush.msra.mxu0 %v69
    %2318 = vmatpush.msra.mxu0 %v65
    %2319 = vmatpush.msra.mxu0 %v61
    %2320 = vmatpush.msra.mxu0 %v57
    %2321 = vmatpush.msra.mxu0 %v53
    %2322 = vmatpush.msra.mxu0 %v49
    %2323 = vmatpush.msra.mxu0 %v45
    %2324 = vmatmul.f32.gmra.mxu0 %v2260
    %v2325 = vpop.f32.mrf.mxu0
    %v2326 = vadd.f32 0.0, %v2325
    %2327 = vdwg.mxu0
    %2328 = vmatpush.msra.mxu0 %v106
    %2329 = vmatpush.msra.mxu0 %v102
    %2330 = vmatpush.msra.mxu0 %v98
    %2331 = vmatpush.msra.mxu0 %v94
    %2332 = vmatpush.msra.mxu0 %v90
    %2333 = vmatpush.msra.mxu0 %v86
    %2334 = vmatpush.msra.mxu0 %v82
    %2335 = vmatpush.msra.mxu0 %v78
    %2336 = vmatpush.msra.mxu0 %v74
    %2337 = vmatpush.msra.mxu0 %v70
    %2338 = vmatpush.msra.mxu0 %v66
    %2339 = vmatpush.msra.mxu0 %v62
    %2340 = vmatpush.msra.mxu0 %v58
    %2341 = vmatpush.msra.mxu0 %v54
    %2342 = vmatpush.msra.mxu0 %v50
    %2343 = vmatpush.msra.mxu0 %v46
    %2344 = vmatmul.f32.gmra.mxu0 %v2260
    %v2345 = vpop.f32.mrf.mxu0
    %v2346 = vadd.f32 0.0, %v2345
    %2347 = vdwg.mxu0
    %v2348 = vadd.f32 %v2264, %v2286
    %v2349 = vadd.f32 %v2265, %v2306
    %v2350 = vadd.f32 %v2266, %v2326
    %v2351 = vadd.f32 %v2267, %v2346
    %v2352 = vxor.u32 %v2348, 2147483648
    %v2353 = vmul.f32 %v2352, 1.442695
    %v2354 = vpow.pop %v2353
    %v2355 = vadd.f32 %v2354, 1.0
    %v2356 = vrcp.pop %v2355
    %v2357 = vmul.f32 %v2355, %v2356
    %v2358 = vsub.f32 1.0, %v2357
    %v2359 = vmul.f32 %v2356, %v2358
    %v2360 = vadd.f32 %v2356, %v2359
    %vm2361 = vweird.f32 %v2355
    %vm2362 = vweird.f32 %v2356
    %vm2363 = vmor %vm2361, %vm2362
    %v2364 = vsel %vm2363, %v2356, %v2360
    %v2365 = vand.u32 2147483647, %v2355
    %vm2366 = vcmp.eq.f32.partialorder %v2365, 8.507059e+37
    %v2367 = vand.u32 %v2355, 2147483648
    %v2368 = vor.u32 1.1754944e-38, %v2367
    %v2369 = vsel %vm2366, %v2368, %v2364
    %v2370 = vmul.f32 1.0, %v2369
    %v2371 = vxor.u32 %v2349, 2147483648
    %v2372 = vmul.f32 %v2371, 1.442695
    %v2373 = vpow.pop %v2372
    %v2374 = vadd.f32 %v2373, 1.0
    %v2375 = vrcp.pop %v2374
    %v2376 = vmul.f32 %v2374, %v2375
    %v2377 = vsub.f32 1.0, %v2376
    %v2378 = vmul.f32 %v2375, %v2377
    %v2379 = vadd.f32 %v2375, %v2378
    %vm2380 = vweird.f32 %v2374
    %vm2381 = vweird.f32 %v2375
    %vm2382 = vmor %vm2380, %vm2381
    %v2383 = vsel %vm2382, %v2375, %v2379
    %v2384 = vand.u32 2147483647, %v2374
    %vm2385 = vcmp.eq.f32.partialorder %v2384, 8.507059e+37
    %v2386 = vand.u32 %v2374, 2147483648
    %v2387 = vor.u32 1.1754944e-38, %v2386
    %v2388 = vsel %vm2385, %v2387, %v2383
    %v2389 = vmul.f32 1.0, %v2388
    %v2390 = vtanh.pop %v2350
    %v2391 = vxor.u32 %v2351, 2147483648
    %v2392 = vmul.f32 %v2391, 1.442695
    %v2393 = vpow.pop %v2392
    %v2394 = vadd.f32 %v2393, 1.0
    %v2395 = vrcp.pop %v2394
    %v2396 = vmul.f32 %v2394, %v2395
    %v2397 = vsub.f32 1.0, %v2396
    %v2398 = vmul.f32 %v2395, %v2397
    %v2399 = vadd.f32 %v2395, %v2398
    %vm2400 = vweird.f32 %v2394
    %vm2401 = vweird.f32 %v2395
    %vm2402 = vmor %vm2400, %vm2401
    %v2403 = vsel %vm2402, %v2395, %v2399
    %v2404 = vand.u32 2147483647, %v2394
    %vm2405 = vcmp.eq.f32.partialorder %v2404, 8.507059e+37
    %v2406 = vand.u32 %v2394, 2147483648
    %v2407 = vor.u32 1.1754944e-38, %v2406
    %v2408 = vsel %vm2405, %v2407, %v2403
    %v2409 = vmul.f32 1.0, %v2408
    %v2410 = vmul.f32 %v2389, %v2258
    %v2411 = vmul.f32 %v2370, %v2390
    %v2412 = vadd.f32 %v2410, %v2411
    %v2413 = vtanh.pop %v2412
    %v2414 = vmul.f32 %v2409, %v2413
    %s2415 = scalar_lea.vmem %s4, 112
    %2416 = vst [vmem:[%s2415] sm:$0xff] %v2414
    %s2417 = scalar_lea.vmem %s0, 480
    %v2418 = vld [vmem:[%s2417] sm:$0xff]
    %v2419 = vld [vmem:[%s2417 + $0x8] sm:$0xff]
    %v2420 = vld [vmem:[%s2417 + $0x10] sm:$0xff]
    %v2421 = vld [vmem:[%s2417 + $0x18] sm:$0xff]
    %2422 = vmatpush.msra.mxu0 %v103
    %2423 = vmatpush.msra.mxu0 %v99
    %2424 = vmatpush.msra.mxu0 %v95
    %2425 = vmatpush.msra.mxu0 %v91
    %2426 = vmatpush.msra.mxu0 %v87
    %2427 = vmatpush.msra.mxu0 %v83
    %2428 = vmatpush.msra.mxu0 %v79
    %2429 = vmatpush.msra.mxu0 %v75
    %2430 = vmatpush.msra.mxu0 %v71
    %2431 = vmatpush.msra.mxu0 %v67
    %2432 = vmatpush.msra.mxu0 %v63
    %2433 = vmatpush.msra.mxu0 %v59
    %2434 = vmatpush.msra.mxu0 %v55
    %2435 = vmatpush.msra.mxu0 %v51
    %2436 = vmatpush.msra.mxu0 %v47
    %2437 = vmatpush.msra.mxu0 %v43
    %2438 = vmatmul.f32.gmra.mxu0 %v2414
    %v2439 = vpop.f32.mrf.mxu0
    %v2440 = vadd.f32 0.0, %v2439
    %2441 = vdwg.mxu0
    %2442 = vmatpush.msra.mxu0 %v104
    %2443 = vmatpush.msra.mxu0 %v100
    %2444 = vmatpush.msra.mxu0 %v96
    %2445 = vmatpush.msra.mxu0 %v92
    %2446 = vmatpush.msra.mxu0 %v88
    %2447 = vmatpush.msra.mxu0 %v84
    %2448 = vmatpush.msra.mxu0 %v80
    %2449 = vmatpush.msra.mxu0 %v76
    %2450 = vmatpush.msra.mxu0 %v72
    %2451 = vmatpush.msra.mxu0 %v68
    %2452 = vmatpush.msra.mxu0 %v64
    %2453 = vmatpush.msra.mxu0 %v60
    %2454 = vmatpush.msra.mxu0 %v56
    %2455 = vmatpush.msra.mxu0 %v52
    %2456 = vmatpush.msra.mxu0 %v48
    %2457 = vmatpush.msra.mxu0 %v44
    %2458 = vmatmul.f32.gmra.mxu0 %v2414
    %v2459 = vpop.f32.mrf.mxu0
    %v2460 = vadd.f32 0.0, %v2459
    %2461 = vdwg.mxu0
    %2462 = vmatpush.msra.mxu0 %v105
    %2463 = vmatpush.msra.mxu0 %v101
    %2464 = vmatpush.msra.mxu0 %v97
    %2465 = vmatpush.msra.mxu0 %v93
    %2466 = vmatpush.msra.mxu0 %v89
    %2467 = vmatpush.msra.mxu0 %v85
    %2468 = vmatpush.msra.mxu0 %v81
    %2469 = vmatpush.msra.mxu0 %v77
    %2470 = vmatpush.msra.mxu0 %v73
    %2471 = vmatpush.msra.mxu0 %v69
    %2472 = vmatpush.msra.mxu0 %v65
    %2473 = vmatpush.msra.mxu0 %v61
    %2474 = vmatpush.msra.mxu0 %v57
    %2475 = vmatpush.msra.mxu0 %v53
    %2476 = vmatpush.msra.mxu0 %v49
    %2477 = vmatpush.msra.mxu0 %v45
    %2478 = vmatmul.f32.gmra.mxu0 %v2414
    %v2479 = vpop.f32.mrf.mxu0
    %v2480 = vadd.f32 0.0, %v2479
    %2481 = vdwg.mxu0
    %2482 = vmatpush.msra.mxu0 %v106
    %2483 = vmatpush.msra.mxu0 %v102
    %2484 = vmatpush.msra.mxu0 %v98
    %2485 = vmatpush.msra.mxu0 %v94
    %2486 = vmatpush.msra.mxu0 %v90
    %2487 = vmatpush.msra.mxu0 %v86
    %2488 = vmatpush.msra.mxu0 %v82
    %2489 = vmatpush.msra.mxu0 %v78
    %2490 = vmatpush.msra.mxu0 %v74
    %2491 = vmatpush.msra.mxu0 %v70
    %2492 = vmatpush.msra.mxu0 %v66
    %2493 = vmatpush.msra.mxu0 %v62
    %2494 = vmatpush.msra.mxu0 %v58
    %2495 = vmatpush.msra.mxu0 %v54
    %2496 = vmatpush.msra.mxu0 %v50
    %2497 = vmatpush.msra.mxu0 %v46
    %2498 = vmatmul.f32.gmra.mxu0 %v2414
    %v2499 = vpop.f32.mrf.mxu0
    %v2500 = vadd.f32 0.0, %v2499
    %2501 = vdwg.mxu0
    %v2502 = vadd.f32 %v2418, %v2440
    %v2503 = vadd.f32 %v2419, %v2460
    %v2504 = vadd.f32 %v2420, %v2480
    %v2505 = vadd.f32 %v2421, %v2500
    %v2506 = vxor.u32 %v2502, 2147483648
    %v2507 = vmul.f32 %v2506, 1.442695
    %v2508 = vpow.pop %v2507
    %v2509 = vadd.f32 %v2508, 1.0
    %v2510 = vrcp.pop %v2509
    %v2511 = vmul.f32 %v2509, %v2510
    %v2512 = vsub.f32 1.0, %v2511
    %v2513 = vmul.f32 %v2510, %v2512
    %v2514 = vadd.f32 %v2510, %v2513
    %vm2515 = vweird.f32 %v2509
    %vm2516 = vweird.f32 %v2510
    %vm2517 = vmor %vm2515, %vm2516
    %v2518 = vsel %vm2517, %v2510, %v2514
    %v2519 = vand.u32 2147483647, %v2509
    %vm2520 = vcmp.eq.f32.partialorder %v2519, 8.507059e+37
    %v2521 = vand.u32 %v2509, 2147483648
    %v2522 = vor.u32 1.1754944e-38, %v2521
    %v2523 = vsel %vm2520, %v2522, %v2518
    %v2524 = vmul.f32 1.0, %v2523
    %v2525 = vxor.u32 %v2503, 2147483648
    %v2526 = vmul.f32 %v2525, 1.442695
    %v2527 = vpow.pop %v2526
    %v2528 = vadd.f32 %v2527, 1.0
    %v2529 = vrcp.pop %v2528
    %v2530 = vmul.f32 %v2528, %v2529
    %v2531 = vsub.f32 1.0, %v2530
    %v2532 = vmul.f32 %v2529, %v2531
    %v2533 = vadd.f32 %v2529, %v2532
    %vm2534 = vweird.f32 %v2528
    %vm2535 = vweird.f32 %v2529
    %vm2536 = vmor %vm2534, %vm2535
    %v2537 = vsel %vm2536, %v2529, %v2533
    %v2538 = vand.u32 2147483647, %v2528
    %vm2539 = vcmp.eq.f32.partialorder %v2538, 8.507059e+37
    %v2540 = vand.u32 %v2528, 2147483648
    %v2541 = vor.u32 1.1754944e-38, %v2540
    %v2542 = vsel %vm2539, %v2541, %v2537
    %v2543 = vmul.f32 1.0, %v2542
    %v2544 = vtanh.pop %v2504
    %v2545 = vxor.u32 %v2505, 2147483648
    %v2546 = vmul.f32 %v2545, 1.442695
    %v2547 = vpow.pop %v2546
    %v2548 = vadd.f32 %v2547, 1.0
    %v2549 = vrcp.pop %v2548
    %v2550 = vmul.f32 %v2548, %v2549
    %v2551 = vsub.f32 1.0, %v2550
    %v2552 = vmul.f32 %v2549, %v2551
    %v2553 = vadd.f32 %v2549, %v2552
    %vm2554 = vweird.f32 %v2548
    %vm2555 = vweird.f32 %v2549
    %vm2556 = vmor %vm2554, %vm2555
    %v2557 = vsel %vm2556, %v2549, %v2553
    %v2558 = vand.u32 2147483647, %v2548
    %vm2559 = vcmp.eq.f32.partialorder %v2558, 8.507059e+37
    %v2560 = vand.u32 %v2548, 2147483648
    %v2561 = vor.u32 1.1754944e-38, %v2560
    %v2562 = vsel %vm2559, %v2561, %v2557
    %v2563 = vmul.f32 1.0, %v2562
    %v2564 = vmul.f32 %v2543, %v2412
    %v2565 = vmul.f32 %v2524, %v2544
    %v2566 = vadd.f32 %v2564, %v2565
    %v2567 = vtanh.pop %v2566
    %v2568 = vmul.f32 %v2563, %v2567
    %s2569 = scalar_lea.vmem %s4, 120
    %2570 = vst [vmem:[%s2569] sm:$0xff] %v2568
    %2571 = vst [vmem:[#allocation2] sm:$0xff] %v2568
    %2572 = vst [vmem:[#allocation3] sm:$0xff] %v2566
    // Predicated region
    $region26: #{seq2seq_forward.9} parent=1 // pred_check
      %p2573 = pneg %p35
    $region27: #{seq2seq_forward.9} parent=1 // pred_check_branch
      %2575 = sbr.rel (%p2573) target = $region29
    $region28: #{seq2seq_forward.9} parent=1 // pred_region
      %2576 = vst [vmem:[%s5] sm:$0xff] %v2566
    $region29: #{seq2seq_forward.9} parent=1 // pred_fallthru
      _
    // Predicated region
    $region30: #{seq2seq_forward.9} parent=1 // pred_check
      _
    $region31: #{seq2seq_forward.9} parent=1 // pred_check_branch
      %2578 = sbr.rel (0) target = $region33
    $region32: #{seq2seq_forward.9} parent=1 // pred_region
      _
    $region33: #{seq2seq_forward.9} parent=1 // pred_fallthru
      _
    // Predicated region
    $region34: #{seq2seq_forward.9} parent=1 // pred_check
      _
    $region35: #{seq2seq_forward.9} parent=1 // pred_check_branch
      %2580 = sbr.rel (0) target = $region37
    $region36: #{seq2seq_forward.9} parent=1 // pred_region
      _
    $region37: #{seq2seq_forward.9} parent=1 // pred_fallthru
      _
    // Predicated region
    $region38: #{seq2seq_forward.9} parent=1 // pred_check
      _
    $region39: #{seq2seq_forward.9} parent=1 // pred_check_branch
      %2582 = sbr.rel (0) target = $region41
    $region40: #{seq2seq_forward.9} parent=1 // pred_region
      _
    $region41: #{seq2seq_forward.9} parent=1 // pred_fallthru
      _
    // Predicated region
    $region42: #{seq2seq_forward.9} parent=1 // pred_check
      _
    $region43: #{seq2seq_forward.9} parent=1 // pred_check_branch
      %2584 = sbr.rel (0) target = $region45
    $region44: #{seq2seq_forward.9} parent=1 // pred_region
      _
    $region45: #{seq2seq_forward.9} parent=1 // pred_fallthru
      _
    %2585 = vsyncpa [#allocation5], 1

// kernel: seq2seq_forward.13
$region0: #{seq2seq_forward.13}
  #allocation0 [shape = 'u32[]', space=smem, size = 0x4, offset = 0x4, fixed_abs, tag = 'smem constant byte address 0x4 - core index']
  #allocation1 [shape = 'u32[72,128]{1,0:T(1,128)}', space=vmem, size = 0x9000, scoped, tag = 'internal scratch']
  %s0 = inlined_call_operand.vmem [shape: f32[24,128], index: 0, kind: input, shape index: {}]
  %s1 = inlined_call_operand.vmem [shape: f32[128,128], index: 1, kind: input, shape index: {}]
  %s2 = inlined_call_operand.vmem [shape: f32[1,128], index: 2, kind: input, shape index: {}]
  %s3 = inlined_call_operand.vmem [shape: f32[24,128], index: 3, kind: output, shape index: {}]
  %s4 = sld [smem:[#allocation0]]
  $region22: #{seq2seq_forward.13} parent=0
    _
  %s6 = ssub.s32 1, %s4
  %s7 = scalar_select 0, %s6, %s4
  // Predicated region
  $region2: #{seq2seq_forward.13} parent=0 // pred_check
    _
  $region3: #{seq2seq_forward.13} parent=0 // pred_check_branch
    %9 = sbr.rel (0) target = $region5
  $region4: #{seq2seq_forward.13} parent=0 // pred_region
    _
  $region5: #{seq2seq_forward.13} parent=0 // pred_fallthru
    _
  // Predicated region
  $region6: #{seq2seq_forward.13} parent=0 // pred_check
    _
  $region7: #{seq2seq_forward.13} parent=0 // pred_check_branch
    %11 = sbr.rel (0) target = $region9
  $region8: #{seq2seq_forward.13} parent=0 // pred_region
    _
  $region9: #{seq2seq_forward.13} parent=0 // pred_fallthru
    _
  // Predicated region
  $region10: #{seq2seq_forward.13} parent=0 // pred_check
    _
  $region11: #{seq2seq_forward.13} parent=0 // pred_check_branch
    %13 = sbr.rel (0) target = $region13
  $region12: #{seq2seq_forward.13} parent=0 // pred_region
    _
  $region13: #{seq2seq_forward.13} parent=0 // pred_fallthru
    _
  %v14 = vld [vmem:[%s0] sm:$0xff]
  %v15 = vld [vmem:[%s0 + $0x8] sm:$0xff]
  %v16 = vld [vmem:[%s0 + $0x10] sm:$0xff]
  %v17 = vld [vmem:[%s1] sm:$0xff]
  %v18 = vld [vmem:[%s1 + $0x8] sm:$0xff]
  %v19 = vld [vmem:[%s1 + $0x10] sm:$0xff]
  %v20 = vld [vmem:[%s1 + $0x18] sm:$0xff]
  %v21 = vld [vmem:[%s1 + $0x20] sm:$0xff]
  %v22 = vld [vmem:[%s1 + $0x28] sm:$0xff]
  %v23 = vld [vmem:[%s1 + $0x30] sm:$0xff]
  %v24 = vld [vmem:[%s1 + $0x38] sm:$0xff]
  %v25 = vld [vmem:[%s1 + $0x40] sm:$0xff]
  %v26 = vld [vmem:[%s1 + $0x48] sm:$0xff]
  %v27 = vld [vmem:[%s1 + $0x50] sm:$0xff]
  %v28 = vld [vmem:[%s1 + $0x58] sm:$0xff]
  %v29 = vld [vmem:[%s1 + $0x60] sm:$0xff]
  %v30 = vld [vmem:[%s1 + $0x68] sm:$0xff]
  %v31 = vld [vmem:[%s1 + $0x70] sm:$0xff]
  %v32 = vld [vmem:[%s1 + $0x78] sm:$0xff]
  %v33 = vld [vmem:[%s2] sm:$0x1]
  %v35 = vperm.slane %v33, 0
  %37 = vmatpush.msra.mxu0 %v32
  %38 = vmatpush.msra.mxu0 %v31
  %39 = vmatpush.msra.mxu0 %v30
  %40 = vmatpush.msra.mxu0 %v29
  %41 = vmatpush.msra.mxu0 %v28
  %42 = vmatpush.msra.mxu0 %v27
  %43 = vmatpush.msra.mxu0 %v26
  %44 = vmatpush.msra.mxu0 %v25
  %45 = vmatpush.msra.mxu0 %v24
  %46 = vmatpush.msra.mxu0 %v23
  %47 = vmatpush.msra.mxu0 %v22
  %48 = vmatpush.msra.mxu0 %v21
  %49 = vmatpush.msra.mxu0 %v20
  %50 = vmatpush.msra.mxu0 %v19
  %51 = vmatpush.msra.mxu0 %v18
  %52 = vmatpush.msra.mxu0 %v17
  %53 = vmatmul.f32.gmra.mxu0 %v14
  %v54 = vpop.f32.mrf.mxu0
  %v55 = vadd.f32 %v35, %v54
  %56 = vmatmul.f32.gmra.mxu0 %v15
  %v57 = vpop.f32.mrf.mxu0
  %v58 = vadd.f32 %v35, %v57
  %59 = vmatmul.f32.gmra.mxu0 %v16
  %v60 = vpop.f32.mrf.mxu0
  %v61 = vadd.f32 %v35, %v60
  %62 = vdwg.mxu0
  %63 = vst [vmem:[%s3] sm:$0xff] %v55
  %64 = vst [vmem:[%s3 + $0x8] sm:$0xff] %v58
  %65 = vst [vmem:[%s3 + $0x10] sm:$0xff] %v61
  // Predicated region
  $region14: #{seq2seq_forward.13} parent=0 // pred_check
    _
  $region15: #{seq2seq_forward.13} parent=0 // pred_check_branch
    %67 = sbr.rel (0) target = $region17
  $region16: #{seq2seq_forward.13} parent=0 // pred_region
    _
  $region17: #{seq2seq_forward.13} parent=0 // pred_fallthru
    _
  // Predicated region
  $region18: #{seq2seq_forward.13} parent=0 // pred_check
    _
  $region19: #{seq2seq_forward.13} parent=0 // pred_check_branch
    %69 = sbr.rel (0) target = $region21
  $region20: #{seq2seq_forward.13} parent=0 // pred_region
    _
  $region21: #{seq2seq_forward.13} parent=0 // pred_fallthru
    _

// kernel: seq2seq_forward.14
$region0: #{seq2seq_forward.14}
  #allocation0 [shape = 'u32[]', space=smem, size = 0x4, offset = 0x4, fixed_abs, tag = 'smem constant byte address 0x4 - core index']
  #allocation1 [shape = 'u32[72,128]{1,0:T(1,128)}', space=vmem, size = 0x9000, scoped, tag = 'internal scratch']
  %s0 = inlined_call_operand.vmem [shape: f32[128,128], index: 0, kind: input, shape index: {}]
  %s1 = inlined_call_operand.vmem [shape: f32[128,128], index: 1, kind: input, shape index: {}]
  %s2 = inlined_call_operand.vmem [shape: f32[1,128], index: 2, kind: input, shape index: {}]
  %s3 = inlined_call_operand.vmem [shape: f32[128,128], index: 3, kind: input, shape index: {}]
  %s4 = inlined_call_operand.vmem [shape: f32[128,128], index: 4, kind: output, shape index: {}]
  %s5 = sld [smem:[#allocation0]]
  $region26: #{seq2seq_forward.14} parent=0
    _
  %s7 = ssub.s32 1, %s5
  %s8 = scalar_select 0, %s7, %s5
  // Predicated region
  $region2: #{seq2seq_forward.14} parent=0 // pred_check
    _
  $region3: #{seq2seq_forward.14} parent=0 // pred_check_branch
    %10 = sbr.rel (0) target = $region5
  $region4: #{seq2seq_forward.14} parent=0 // pred_region
    _
  $region5: #{seq2seq_forward.14} parent=0 // pred_fallthru
    _
  // Predicated region
  $region6: #{seq2seq_forward.14} parent=0 // pred_check
    _
  $region7: #{seq2seq_forward.14} parent=0 // pred_check_branch
    %12 = sbr.rel (0) target = $region9
  $region8: #{seq2seq_forward.14} parent=0 // pred_region
    _
  $region9: #{seq2seq_forward.14} parent=0 // pred_fallthru
    _
  // Predicated region
  $region10: #{seq2seq_forward.14} parent=0 // pred_check
    _
  $region11: #{seq2seq_forward.14} parent=0 // pred_check_branch
    %14 = sbr.rel (0) target = $region13
  $region12: #{seq2seq_forward.14} parent=0 // pred_region
    _
  $region13: #{seq2seq_forward.14} parent=0 // pred_fallthru
    _
  // Predicated region
  $region14: #{seq2seq_forward.14} parent=0 // pred_check
    _
  $region15: #{seq2seq_forward.14} parent=0 // pred_check_branch
    %16 = sbr.rel (0) target = $region17
  $region16: #{seq2seq_forward.14} parent=0 // pred_region
    _
  $region17: #{seq2seq_forward.14} parent=0 // pred_fallthru
    _
  %v17 = vld [vmem:[%s0] sm:$0xff]
  %v18 = vld [vmem:[%s0 + $0x8] sm:$0xff]
  %v19 = vld [vmem:[%s0 + $0x10] sm:$0xff]
  %v20 = vld [vmem:[%s0 + $0x18] sm:$0xff]
  %v21 = vld [vmem:[%s0 + $0x20] sm:$0xff]
  %v22 = vld [vmem:[%s0 + $0x28] sm:$0xff]
  %v23 = vld [vmem:[%s0 + $0x30] sm:$0xff]
  %v24 = vld [vmem:[%s0 + $0x38] sm:$0xff]
  %v25 = vld [vmem:[%s0 + $0x40] sm:$0xff]
  %v26 = vld [vmem:[%s0 + $0x48] sm:$0xff]
  %v27 = vld [vmem:[%s0 + $0x50] sm:$0xff]
  %v28 = vld [vmem:[%s0 + $0x58] sm:$0xff]
  %v29 = vld [vmem:[%s0 + $0x60] sm:$0xff]
  %v30 = vld [vmem:[%s0 + $0x68] sm:$0xff]
  %v31 = vld [vmem:[%s0 + $0x70] sm:$0xff]
  %v32 = vld [vmem:[%s0 + $0x78] sm:$0xff]
  %v33 = vld [vmem:[%s1] sm:$0xff]
  %v34 = vld [vmem:[%s1 + $0x8] sm:$0xff]
  %v35 = vld [vmem:[%s1 + $0x10] sm:$0xff]
  %v36 = vld [vmem:[%s1 + $0x18] sm:$0xff]
  %v37 = vld [vmem:[%s1 + $0x20] sm:$0xff]
  %v38 = vld [vmem:[%s1 + $0x28] sm:$0xff]
  %v39 = vld [vmem:[%s1 + $0x30] sm:$0xff]
  %v40 = vld [vmem:[%s1 + $0x38] sm:$0xff]
  %v41 = vld [vmem:[%s1 + $0x40] sm:$0xff]
  %v42 = vld [vmem:[%s1 + $0x48] sm:$0xff]
  %v43 = vld [vmem:[%s1 + $0x50] sm:$0xff]
  %v44 = vld [vmem:[%s1 + $0x58] sm:$0xff]
  %v45 = vld [vmem:[%s1 + $0x60] sm:$0xff]
  %v46 = vld [vmem:[%s1 + $0x68] sm:$0xff]
  %v47 = vld [vmem:[%s1 + $0x70] sm:$0xff]
  %v48 = vld [vmem:[%s1 + $0x78] sm:$0xff]
  %v49 = vld [vmem:[%s2] sm:$0x1]
  %v51 = vperm.slane %v49, 0
  %53 = vmatpush.msra.mxu0 %v48
  %54 = vmatpush.msra.mxu0 %v47
  %55 = vmatpush.msra.mxu0 %v46
  %56 = vmatpush.msra.mxu0 %v45
  %57 = vmatpush.msra.mxu0 %v44
  %58 = vmatpush.msra.mxu0 %v43
  %59 = vmatpush.msra.mxu0 %v42
  %60 = vmatpush.msra.mxu0 %v41
  %61 = vmatpush.msra.mxu0 %v40
  %62 = vmatpush.msra.mxu0 %v39
  %63 = vmatpush.msra.mxu0 %v38
  %64 = vmatpush.msra.mxu0 %v37
  %65 = vmatpush.msra.mxu0 %v36
  %66 = vmatpush.msra.mxu0 %v35
  %67 = vmatpush.msra.mxu0 %v34
  %68 = vmatpush.msra.mxu0 %v33
  %69 = vmatmul.f32.gmra.mxu0 %v17
  %v70 = vpop.f32.mrf.mxu0
  %v71 = vadd.f32 %v51, %v70
  %72 = vmatmul.f32.gmra.mxu0 %v18
  %v73 = vpop.f32.mrf.mxu0
  %v74 = vadd.f32 %v51, %v73
  %75 = vmatmul.f32.gmra.mxu0 %v19
  %v76 = vpop.f32.mrf.mxu0
  %v77 = vadd.f32 %v51, %v76
  %78 = vmatmul.f32.gmra.mxu0 %v20
  %v79 = vpop.f32.mrf.mxu0
  %v80 = vadd.f32 %v51, %v79
  %81 = vmatmul.f32.gmra.mxu0 %v21
  %v82 = vpop.f32.mrf.mxu0
  %v83 = vadd.f32 %v51, %v82
  %84 = vmatmul.f32.gmra.mxu0 %v22
  %v85 = vpop.f32.mrf.mxu0
  %v86 = vadd.f32 %v51, %v85
  %87 = vmatmul.f32.gmra.mxu0 %v23
  %v88 = vpop.f32.mrf.mxu0
  %v89 = vadd.f32 %v51, %v88
  %90 = vmatmul.f32.gmra.mxu0 %v24
  %v91 = vpop.f32.mrf.mxu0
  %v92 = vadd.f32 %v51, %v91
  %93 = vmatmul.f32.gmra.mxu0 %v25
  %v94 = vpop.f32.mrf.mxu0
  %v95 = vadd.f32 %v51, %v94
  %96 = vmatmul.f32.gmra.mxu0 %v26
  %v97 = vpop.f32.mrf.mxu0
  %v98 = vadd.f32 %v51, %v97
  %99 = vmatmul.f32.gmra.mxu0 %v27
  %v100 = vpop.f32.mrf.mxu0
  %v101 = vadd.f32 %v51, %v100
  %102 = vmatmul.f32.gmra.mxu0 %v28
  %v103 = vpop.f32.mrf.mxu0
  %v104 = vadd.f32 %v51, %v103
  %105 = vmatmul.f32.gmra.mxu0 %v29
  %v106 = vpop.f32.mrf.mxu0
  %v107 = vadd.f32 %v51, %v106
  %108 = vmatmul.f32.gmra.mxu0 %v30
  %v109 = vpop.f32.mrf.mxu0
  %v110 = vadd.f32 %v51, %v109
  %111 = vmatmul.f32.gmra.mxu0 %v31
  %v112 = vpop.f32.mrf.mxu0
  %v113 = vadd.f32 %v51, %v112
  %114 = vmatmul.f32.gmra.mxu0 %v32
  %v115 = vpop.f32.mrf.mxu0
  %v116 = vadd.f32 %v51, %v115
  %117 = vdwg.mxu0
  %v118 = vtanh.pop %v71
  %v119 = vtanh.pop %v74
  %v120 = vtanh.pop %v77
  %v121 = vtanh.pop %v80
  %v122 = vtanh.pop %v83
  %v123 = vtanh.pop %v86
  %v124 = vtanh.pop %v89
  %v125 = vtanh.pop %v92
  %v126 = vtanh.pop %v95
  %v127 = vtanh.pop %v98
  %v128 = vtanh.pop %v101
  %v129 = vtanh.pop %v104
  %v130 = vtanh.pop %v107
  %v131 = vtanh.pop %v110
  %v132 = vtanh.pop %v113
  %v133 = vtanh.pop %v116
  %v134 = vld [vmem:[%s3] sm:$0xff]
  %v135 = vld [vmem:[%s3 + $0x8] sm:$0xff]
  %v136 = vld [vmem:[%s3 + $0x10] sm:$0xff]
  %v137 = vld [vmem:[%s3 + $0x18] sm:$0xff]
  %v138 = vld [vmem:[%s3 + $0x20] sm:$0xff]
  %v139 = vld [vmem:[%s3 + $0x28] sm:$0xff]
  %v140 = vld [vmem:[%s3 + $0x30] sm:$0xff]
  %v141 = vld [vmem:[%s3 + $0x38] sm:$0xff]
  %v142 = vld [vmem:[%s3 + $0x40] sm:$0xff]
  %v143 = vld [vmem:[%s3 + $0x48] sm:$0xff]
  %v144 = vld [vmem:[%s3 + $0x50] sm:$0xff]
  %v145 = vld [vmem:[%s3 + $0x58] sm:$0xff]
  %v146 = vld [vmem:[%s3 + $0x60] sm:$0xff]
  %v147 = vld [vmem:[%s3 + $0x68] sm:$0xff]
  %v148 = vld [vmem:[%s3 + $0x70] sm:$0xff]
  %v149 = vld [vmem:[%s3 + $0x78] sm:$0xff]
  %150 = vmatpush.msra.mxu0 %v149
  %151 = vmatpush.msra.mxu0 %v148
  %152 = vmatpush.msra.mxu0 %v147
  %153 = vmatpush.msra.mxu0 %v146
  %154 = vmatpush.msra.mxu0 %v145
  %155 = vmatpush.msra.mxu0 %v144
  %156 = vmatpush.msra.mxu0 %v143
  %157 = vmatpush.msra.mxu0 %v142
  %158 = vmatpush.msra.mxu0 %v141
  %159 = vmatpush.msra.mxu0 %v140
  %160 = vmatpush.msra.mxu0 %v139
  %161 = vmatpush.msra.mxu0 %v138
  %162 = vmatpush.msra.mxu0 %v137
  %163 = vmatpush.msra.mxu0 %v136
  %164 = vmatpush.msra.mxu0 %v135
  %165 = vmatpush.msra.mxu0 %v134
  %166 = vmatmul.f32.gmra.mxu0 %v118
  %v167 = vpop.f32.mrf.mxu0
  %v168 = vadd.f32 0.0, %v167
  %169 = vmatmul.f32.gmra.mxu0 %v119
  %v170 = vpop.f32.mrf.mxu0
  %v171 = vadd.f32 0.0, %v170
  %172 = vmatmul.f32.gmra.mxu0 %v120
  %v173 = vpop.f32.mrf.mxu0
  %v174 = vadd.f32 0.0, %v173
  %175 = vmatmul.f32.gmra.mxu0 %v121
  %v176 = vpop.f32.mrf.mxu0
  %v177 = vadd.f32 0.0, %v176
  %178 = vmatmul.f32.gmra.mxu0 %v122
  %v179 = vpop.f32.mrf.mxu0
  %v180 = vadd.f32 0.0, %v179
  %181 = vmatmul.f32.gmra.mxu0 %v123
  %v182 = vpop.f32.mrf.mxu0
  %v183 = vadd.f32 0.0, %v182
  %184 = vmatmul.f32.gmra.mxu0 %v124
  %v185 = vpop.f32.mrf.mxu0
  %v186 = vadd.f32 0.0, %v185
  %187 = vmatmul.f32.gmra.mxu0 %v125
  %v188 = vpop.f32.mrf.mxu0
  %v189 = vadd.f32 0.0, %v188
  %190 = vmatmul.f32.gmra.mxu0 %v126
  %v191 = vpop.f32.mrf.mxu0
  %v192 = vadd.f32 0.0, %v191
  %193 = vmatmul.f32.gmra.mxu0 %v127
  %v194 = vpop.f32.mrf.mxu0
  %v195 = vadd.f32 0.0, %v194
  %196 = vmatmul.f32.gmra.mxu0 %v128
  %v197 = vpop.f32.mrf.mxu0
  %v198 = vadd.f32 0.0, %v197
  %199 = vmatmul.f32.gmra.mxu0 %v129
  %v200 = vpop.f32.mrf.mxu0
  %v201 = vadd.f32 0.0, %v200
  %202 = vmatmul.f32.gmra.mxu0 %v130
  %v203 = vpop.f32.mrf.mxu0
  %v204 = vadd.f32 0.0, %v203
  %205 = vmatmul.f32.gmra.mxu0 %v131
  %v206 = vpop.f32.mrf.mxu0
  %v207 = vadd.f32 0.0, %v206
  %208 = vmatmul.f32.gmra.mxu0 %v132
  %v209 = vpop.f32.mrf.mxu0
  %v210 = vadd.f32 0.0, %v209
  %211 = vmatmul.f32.gmra.mxu0 %v133
  %v212 = vpop.f32.mrf.mxu0
  %v213 = vadd.f32 0.0, %v212
  %214 = vdwg.mxu0
  %215 = vst [vmem:[%s4] sm:$0xff] %v168
  %216 = vst [vmem:[%s4 + $0x8] sm:$0xff] %v171
  %217 = vst [vmem:[%s4 + $0x10] sm:$0xff] %v174
  %218 = vst [vmem:[%s4 + $0x18] sm:$0xff] %v177
  %219 = vst [vmem:[%s4 + $0x20] sm:$0xff] %v180
  %220 = vst [vmem:[%s4 + $0x28] sm:$0xff] %v183
  %221 = vst [vmem:[%s4 + $0x30] sm:$0xff] %v186
  %222 = vst [vmem:[%s4 + $0x38] sm:$0xff] %v189
  %223 = vst [vmem:[%s4 + $0x40] sm:$0xff] %v192
  %224 = vst [vmem:[%s4 + $0x48] sm:$0xff] %v195
  %225 = vst [vmem:[%s4 + $0x50] sm:$0xff] %v198
  %226 = vst [vmem:[%s4 + $0x58] sm:$0xff] %v201
  %227 = vst [vmem:[%s4 + $0x60] sm:$0xff] %v204
  %228 = vst [vmem:[%s4 + $0x68] sm:$0xff] %v207
  %229 = vst [vmem:[%s4 + $0x70] sm:$0xff] %v210
  %230 = vst [vmem:[%s4 + $0x78] sm:$0xff] %v213
  // Predicated region
  $region18: #{seq2seq_forward.14} parent=0 // pred_check
    _
  $region19: #{seq2seq_forward.14} parent=0 // pred_check_branch
    %232 = sbr.rel (0) target = $region21
  $region20: #{seq2seq_forward.14} parent=0 // pred_region
    _
  $region21: #{seq2seq_forward.14} parent=0 // pred_fallthru
    _
  // Predicated region
  $region22: #{seq2seq_forward.14} parent=0 // pred_check
    _
  $region23: #{seq2seq_forward.14} parent=0 // pred_check_branch
    %234 = sbr.rel (0) target = $region25
  $region24: #{seq2seq_forward.14} parent=0 // pred_region
    _
  $region25: #{seq2seq_forward.14} parent=0 // pred_fallthru
    _

// kernel: seq2seq_forward.12
$region0: #{seq2seq_forward.12}
  #allocation0 [shape = 'u32[]', space=smem, size = 0x4, offset = 0x4, fixed_abs, tag = 'smem constant byte address 0x4 - core index']
  #allocation1 [shape = 'u32[72,128]{1,0:T(1,128)}', space=vmem, size = 0x9000, scoped, tag = 'internal scratch']
  %s0 = inlined_call_operand.vmem [shape: f32[8,4,128], index: 0, kind: input, shape index: {}]
  %s1 = inlined_call_operand.vmem [shape: f32[8,16,128], index: 1, kind: input, shape index: {}]
  %s2 = inlined_call_operand.vmem [shape: f32[128,128], index: 2, kind: input, shape index: {}]
  %s3 = inlined_call_operand.vmem [shape: f32[128,128], index: 3, kind: input, shape index: {}]
  %s4 = inlined_call_operand.vmem [shape: f32[8,4,128], index: 4, kind: output, shape index: {0}]
  %s5 = inlined_call_operand.vmem [shape: f32[8,4,16], index: 5, kind: output, shape index: {1}]
  %6 = xla_tuple %s4, %s5
  %s7 = sld [smem:[#allocation0]]
  $region34: #{seq2seq_forward.12} parent=0
    _
  %s9 = ssub.s32 1, %s7
  %s10 = scalar_select 0, %s9, %s7
  // Predicated region
  $region2: #{seq2seq_forward.12} parent=0 // pred_check
    _
  $region3: #{seq2seq_forward.12} parent=0 // pred_check_branch
    %12 = sbr.rel (0) target = $region5
  $region4: #{seq2seq_forward.12} parent=0 // pred_region
    _
  $region5: #{seq2seq_forward.12} parent=0 // pred_fallthru
    _
  // Predicated region
  $region6: #{seq2seq_forward.12} parent=0 // pred_check
    _
  $region7: #{seq2seq_forward.12} parent=0 // pred_check_branch
    %14 = sbr.rel (0) target = $region9
  $region8: #{seq2seq_forward.12} parent=0 // pred_region
    _
  $region9: #{seq2seq_forward.12} parent=0 // pred_fallthru
    _
  // Predicated region
  $region10: #{seq2seq_forward.12} parent=0 // pred_check
    _
  $region11: #{seq2seq_forward.12} parent=0 // pred_check_branch
    %16 = sbr.rel (0) target = $region13
  $region12: #{seq2seq_forward.12} parent=0 // pred_region
    _
  $region13: #{seq2seq_forward.12} parent=0 // pred_fallthru
    _
  // Predicated region
  $region14: #{seq2seq_forward.12} parent=0 // pred_check
    _
  $region15: #{seq2seq_forward.12} parent=0 // pred_check_branch
    %18 = sbr.rel (0) target = $region17
  $region16: #{seq2seq_forward.12} parent=0 // pred_region
    _
  $region17: #{seq2seq_forward.12} parent=0 // pred_fallthru
    _
  %v19 = vld [vmem:[%s0] sm:$0xf]
  %v20 = vld [vmem:[%s0 + $0x4] sm:$0xf]
  %v21 = vld [vmem:[%s0 + $0x8] sm:$0xf]
  %v22 = vld [vmem:[%s0 + $0xc] sm:$0xf]
  %v23 = vld [vmem:[%s0 + $0x10] sm:$0xf]
  %v24 = vld [vmem:[%s0 + $0x14] sm:$0xf]
  %v25 = vld [vmem:[%s0 + $0x18] sm:$0xf]
  %v26 = vld [vmem:[%s0 + $0x1c] sm:$0xf]
  %v27 = vld [vmem:[%s1] sm:$0xff]
  %v28 = vld [vmem:[%s1 + $0x8] sm:$0xff]
  %v29 = vld [vmem:[%s1 + $0x10] sm:$0xff]
  %v30 = vld [vmem:[%s1 + $0x18] sm:$0xff]
  %v31 = vld [vmem:[%s1 + $0x20] sm:$0xff]
  %v32 = vld [vmem:[%s1 + $0x28] sm:$0xff]
  %v33 = vld [vmem:[%s1 + $0x30] sm:$0xff]
  %v34 = vld [vmem:[%s1 + $0x38] sm:$0xff]
  %v35 = vld [vmem:[%s1 + $0x40] sm:$0xff]
  %v36 = vld [vmem:[%s1 + $0x48] sm:$0xff]
  %v37 = vld [vmem:[%s1 + $0x50] sm:$0xff]
  %v38 = vld [vmem:[%s1 + $0x58] sm:$0xff]
  %v39 = vld [vmem:[%s1 + $0x60] sm:$0xff]
  %v40 = vld [vmem:[%s1 + $0x68] sm:$0xff]
  %v41 = vld [vmem:[%s1 + $0x70] sm:$0xff]
  %v42 = vld [vmem:[%s1 + $0x78] sm:$0xff]
  %43 = vmatpush.xpose.msra.mxu0 0.0
  %44 = vmatpush.xpose.msra.mxu0 0.0
  %45 = vmatpush.xpose.msra.mxu0 0.0
  %46 = vmatpush.xpose.msra.mxu0 0.0
  %47 = vmatpush.xpose.msra.mxu0 0.0
  %48 = vmatpush.xpose.msra.mxu0 0.0
  %49 = vmatpush.xpose.msra.mxu0 0.0
  %50 = vmatpush.xpose.msra.mxu0 0.0
  %51 = vmatpush.xpose.msra.mxu0 0.0
  %52 = vmatpush.xpose.msra.mxu0 0.0
  %53 = vmatpush.xpose.msra.mxu0 0.0
  %54 = vmatpush.xpose.msra.mxu0 0.0
  %55 = vmatpush.xpose.msra.mxu0 0.0
  %56 = vmatpush.xpose.msra.mxu0 0.0
  %57 = vmatpush.xpose.msra.mxu0 %v28
  %58 = vmatpush.xpose.msra.mxu0 %v27
  %59 = vmatmul.f32.gmra.mxu0 %v19
  %v60 = vpop.f32.mrf.mxu0
  %v61 = vadd.f32 0.0, %v60
  %62 = vdwg.mxu0
  %63 = vmatpush.xpose.msra.mxu0 0.0
  %64 = vmatpush.xpose.msra.mxu0 0.0
  %65 = vmatpush.xpose.msra.mxu0 0.0
  %66 = vmatpush.xpose.msra.mxu0 0.0
  %67 = vmatpush.xpose.msra.mxu0 0.0
  %68 = vmatpush.xpose.msra.mxu0 0.0
  %69 = vmatpush.xpose.msra.mxu0 0.0
  %70 = vmatpush.xpose.msra.mxu0 0.0
  %71 = vmatpush.xpose.msra.mxu0 0.0
  %72 = vmatpush.xpose.msra.mxu0 0.0
  %73 = vmatpush.xpose.msra.mxu0 0.0
  %74 = vmatpush.xpose.msra.mxu0 0.0
  %75 = vmatpush.xpose.msra.mxu0 0.0
  %76 = vmatpush.xpose.msra.mxu0 0.0
  %77 = vmatpush.xpose.msra.mxu0 %v30
  %78 = vmatpush.xpose.msra.mxu0 %v29
  %79 = vmatmul.f32.gmra.mxu0 %v20
  %v80 = vpop.f32.mrf.mxu0
  %v81 = vadd.f32 0.0, %v80
  %82 = vdwg.mxu0
  %83 = vmatpush.xpose.msra.mxu0 0.0
  %84 = vmatpush.xpose.msra.mxu0 0.0
  %85 = vmatpush.xpose.msra.mxu0 0.0
  %86 = vmatpush.xpose.msra.mxu0 0.0
  %87 = vmatpush.xpose.msra.mxu0 0.0
  %88 = vmatpush.xpose.msra.mxu0 0.0
  %89 = vmatpush.xpose.msra.mxu0 0.0
  %90 = vmatpush.xpose.msra.mxu0 0.0
  %91 = vmatpush.xpose.msra.mxu0 0.0
  %92 = vmatpush.xpose.msra.mxu0 0.0
  %93 = vmatpush.xpose.msra.mxu0 0.0
  %94 = vmatpush.xpose.msra.mxu0 0.0
  %95 = vmatpush.xpose.msra.mxu0 0.0
  %96 = vmatpush.xpose.msra.mxu0 0.0
  %97 = vmatpush.xpose.msra.mxu0 %v32
  %98 = vmatpush.xpose.msra.mxu0 %v31
  %99 = vmatmul.f32.gmra.mxu0 %v21
  %v100 = vpop.f32.mrf.mxu0
  %v101 = vadd.f32 0.0, %v100
  %102 = vdwg.mxu0
  %103 = vmatpush.xpose.msra.mxu0 0.0
  %104 = vmatpush.xpose.msra.mxu0 0.0
  %105 = vmatpush.xpose.msra.mxu0 0.0
  %106 = vmatpush.xpose.msra.mxu0 0.0
  %107 = vmatpush.xpose.msra.mxu0 0.0
  %108 = vmatpush.xpose.msra.mxu0 0.0
  %109 = vmatpush.xpose.msra.mxu0 0.0
  %110 = vmatpush.xpose.msra.mxu0 0.0
  %111 = vmatpush.xpose.msra.mxu0 0.0
  %112 = vmatpush.xpose.msra.mxu0 0.0
  %113 = vmatpush.xpose.msra.mxu0 0.0
  %114 = vmatpush.xpose.msra.mxu0 0.0
  %115 = vmatpush.xpose.msra.mxu0 0.0
  %116 = vmatpush.xpose.msra.mxu0 0.0
  %117 = vmatpush.xpose.msra.mxu0 %v34
  %118 = vmatpush.xpose.msra.mxu0 %v33
  %119 = vmatmul.f32.gmra.mxu0 %v22
  %v120 = vpop.f32.mrf.mxu0
  %v121 = vadd.f32 0.0, %v120
  %122 = vdwg.mxu0
  %123 = vmatpush.xpose.msra.mxu0 0.0
  %124 = vmatpush.xpose.msra.mxu0 0.0
  %125 = vmatpush.xpose.msra.mxu0 0.0
  %126 = vmatpush.xpose.msra.mxu0 0.0
  %127 = vmatpush.xpose.msra.mxu0 0.0
  %128 = vmatpush.xpose.msra.mxu0 0.0
  %129 = vmatpush.xpose.msra.mxu0 0.0
  %130 = vmatpush.xpose.msra.mxu0 0.0
  %131 = vmatpush.xpose.msra.mxu0 0.0
  %132 = vmatpush.xpose.msra.mxu0 0.0
  %133 = vmatpush.xpose.msra.mxu0 0.0
  %134 = vmatpush.xpose.msra.mxu0 0.0
  %135 = vmatpush.xpose.msra.mxu0 0.0
  %136 = vmatpush.xpose.msra.mxu0 0.0
  %137 = vmatpush.xpose.msra.mxu0 %v36
  %138 = vmatpush.xpose.msra.mxu0 %v35
  %139 = vmatmul.f32.gmra.mxu0 %v23
  %v140 = vpop.f32.mrf.mxu0
  %v141 = vadd.f32 0.0, %v140
  %142 = vdwg.mxu0
  %143 = vmatpush.xpose.msra.mxu0 0.0
  %144 = vmatpush.xpose.msra.mxu0 0.0
  %145 = vmatpush.xpose.msra.mxu0 0.0
  %146 = vmatpush.xpose.msra.mxu0 0.0
  %147 = vmatpush.xpose.msra.mxu0 0.0
  %148 = vmatpush.xpose.msra.mxu0 0.0
  %149 = vmatpush.xpose.msra.mxu0 0.0
  %150 = vmatpush.xpose.msra.mxu0 0.0
  %151 = vmatpush.xpose.msra.mxu0 0.0
  %152 = vmatpush.xpose.msra.mxu0 0.0
  %153 = vmatpush.xpose.msra.mxu0 0.0
  %154 = vmatpush.xpose.msra.mxu0 0.0
  %155 = vmatpush.xpose.msra.mxu0 0.0
  %156 = vmatpush.xpose.msra.mxu0 0.0
  %157 = vmatpush.xpose.msra.mxu0 %v38
  %158 = vmatpush.xpose.msra.mxu0 %v37
  %159 = vmatmul.f32.gmra.mxu0 %v24
  %v160 = vpop.f32.mrf.mxu0
  %v161 = vadd.f32 0.0, %v160
  %162 = vdwg.mxu0
  %163 = vmatpush.xpose.msra.mxu0 0.0
  %164 = vmatpush.xpose.msra.mxu0 0.0
  %165 = vmatpush.xpose.msra.mxu0 0.0
  %166 = vmatpush.xpose.msra.mxu0 0.0
  %167 = vmatpush.xpose.msra.mxu0 0.0
  %168 = vmatpush.xpose.msra.mxu0 0.0
  %169 = vmatpush.xpose.msra.mxu0 0.0
  %170 = vmatpush.xpose.msra.mxu0 0.0
  %171 = vmatpush.xpose.msra.mxu0 0.0
  %172 = vmatpush.xpose.msra.mxu0 0.0
  %173 = vmatpush.xpose.msra.mxu0 0.0
  %174 = vmatpush.xpose.msra.mxu0 0.0
  %175 = vmatpush.xpose.msra.mxu0 0.0
  %176 = vmatpush.xpose.msra.mxu0 0.0
  %177 = vmatpush.xpose.msra.mxu0 %v40
  %178 = vmatpush.xpose.msra.mxu0 %v39
  %179 = vmatmul.f32.gmra.mxu0 %v25
  %v180 = vpop.f32.mrf.mxu0
  %v181 = vadd.f32 0.0, %v180
  %182 = vdwg.mxu0
  %183 = vmatpush.xpose.msra.mxu0 0.0
  %184 = vmatpush.xpose.msra.mxu0 0.0
  %185 = vmatpush.xpose.msra.mxu0 0.0
  %186 = vmatpush.xpose.msra.mxu0 0.0
  %187 = vmatpush.xpose.msra.mxu0 0.0
  %188 = vmatpush.xpose.msra.mxu0 0.0
  %189 = vmatpush.xpose.msra.mxu0 0.0
  %190 = vmatpush.xpose.msra.mxu0 0.0
  %191 = vmatpush.xpose.msra.mxu0 0.0
  %192 = vmatpush.xpose.msra.mxu0 0.0
  %193 = vmatpush.xpose.msra.mxu0 0.0
  %194 = vmatpush.xpose.msra.mxu0 0.0
  %195 = vmatpush.xpose.msra.mxu0 0.0
  %196 = vmatpush.xpose.msra.mxu0 0.0
  %197 = vmatpush.xpose.msra.mxu0 %v42
  %198 = vmatpush.xpose.msra.mxu0 %v41
  %199 = vmatmul.f32.gmra.mxu0 %v26
  %v200 = vpop.f32.mrf.mxu0
  %v201 = vadd.f32 0.0, %v200
  %202 = vdwg.mxu0
  %vm203 = vcmask 125952
  %v204 = vsel %vm203, %v61, -inf
  %205 = vmax.xlane.f32.xlu0 %v204
  %v206 = vpop.xlane.xlu0 %205
  %v207 = vsel %vm203, %v81, -inf
  %208 = vmax.xlane.f32.xlu0 %v207
  %v209 = vpop.xlane.xlu0 %208
  %v210 = vsel %vm203, %v101, -inf
  %211 = vmax.xlane.f32.xlu0 %v210
  %v212 = vpop.xlane.xlu0 %211
  %v213 = vsel %vm203, %v121, -inf
  %214 = vmax.xlane.f32.xlu0 %v213
  %v215 = vpop.xlane.xlu0 %214
  %v216 = vsel %vm203, %v141, -inf
  %217 = vmax.xlane.f32.xlu0 %v216
  %v218 = vpop.xlane.xlu0 %217
  %v219 = vsel %vm203, %v161, -inf
  %220 = vmax.xlane.f32.xlu0 %v219
  %v221 = vpop.xlane.xlu0 %220
  %v222 = vsel %vm203, %v181, -inf
  %223 = vmax.xlane.f32.xlu0 %v222
  %v224 = vpop.xlane.xlu0 %223
  %v225 = vsel %vm203, %v201, -inf
  %226 = vmax.xlane.f32.xlu0 %v225
  %v227 = vpop.xlane.xlu0 %226
  %v228 = vsub.f32 %v61, %v206
  %v229 = vsub.f32 %v81, %v209
  %v230 = vsub.f32 %v101, %v212
  %v231 = vsub.f32 %v121, %v215
  %v232 = vsub.f32 %v141, %v218
  %v233 = vsub.f32 %v161, %v221
  %v234 = vsub.f32 %v181, %v224
  %v235 = vsub.f32 %v201, %v227
  %v236 = vmul.f32 %v228, 1.442695
  %v237 = vpow.pop %v236
  %v238 = vmul.f32 %v229, 1.442695
  %v239 = vpow.pop %v238
  %v240 = vmul.f32 %v230, 1.442695
  %v241 = vpow.pop %v240
  %v242 = vmul.f32 %v231, 1.442695
  %v243 = vpow.pop %v242
  %v244 = vmul.f32 %v232, 1.442695
  %v245 = vpow.pop %v244
  %v246 = vmul.f32 %v233, 1.442695
  %v247 = vpow.pop %v246
  %v248 = vmul.f32 %v234, 1.442695
  %v249 = vpow.pop %v248
  %v250 = vmul.f32 %v235, 1.442695
  %v251 = vpow.pop %v250
  %v252 = vsel %vm203, %v237, 0.0
  %253 = vadd.xlane.f32.xlu0 %v252
  %v254 = vpop.xlane.xlu0 %253
  %v255 = vsel %vm203, %v239, 0.0
  %256 = vadd.xlane.f32.xlu0 %v255
  %v257 = vpop.xlane.xlu0 %256
  %v258 = vsel %vm203, %v241, 0.0
  %259 = vadd.xlane.f32.xlu0 %v258
  %v260 = vpop.xlane.xlu0 %259
  %v261 = vsel %vm203, %v243, 0.0
  %262 = vadd.xlane.f32.xlu0 %v261
  %v263 = vpop.xlane.xlu0 %262
  %v264 = vsel %vm203, %v245, 0.0
  %265 = vadd.xlane.f32.xlu0 %v264
  %v266 = vpop.xlane.xlu0 %265
  %v267 = vsel %vm203, %v247, 0.0
  %268 = vadd.xlane.f32.xlu0 %v267
  %v269 = vpop.xlane.xlu0 %268
  %v270 = vsel %vm203, %v249, 0.0
  %271 = vadd.xlane.f32.xlu0 %v270
  %v272 = vpop.xlane.xlu0 %271
  %v273 = vsel %vm203, %v251, 0.0
  %274 = vadd.xlane.f32.xlu0 %v273
  %v275 = vpop.xlane.xlu0 %274
  %v276 = vrcp.pop %v254
  %v277 = vmul.f32 %v254, %v276
  %v278 = vsub.f32 1.0, %v277
  %v279 = vmul.f32 %v276, %v278
  %v280 = vadd.f32 %v276, %v279
  %vm281 = vweird.f32 %v254
  %vm282 = vweird.f32 %v276
  %vm283 = vmor %vm281, %vm282
  %v284 = vsel %vm283, %v276, %v280
  %v285 = vand.u32 2147483647, %v254
  %vm286 = vcmp.eq.f32.partialorder %v285, 8.507059e+37
  %v287 = vand.u32 %v254, 2147483648
  %v288 = vor.u32 1.1754944e-38, %v287
  %v289 = vsel %vm286, %v288, %v284
  %v290 = vmul.f32 %v237, %v289
  %v291 = vrcp.pop %v257
  %v292 = vmul.f32 %v257, %v291
  %v293 = vsub.f32 1.0, %v292
  %v294 = vmul.f32 %v291, %v293
  %v295 = vadd.f32 %v291, %v294
  %vm296 = vweird.f32 %v257
  %vm297 = vweird.f32 %v291
  %vm298 = vmor %vm296, %vm297
  %v299 = vsel %vm298, %v291, %v295
  %v300 = vand.u32 2147483647, %v257
  %vm301 = vcmp.eq.f32.partialorder %v300, 8.507059e+37
  %v302 = vand.u32 %v257, 2147483648
  %v303 = vor.u32 1.1754944e-38, %v302
  %v304 = vsel %vm301, %v303, %v299
  %v305 = vmul.f32 %v239, %v304
  %v306 = vrcp.pop %v260
  %v307 = vmul.f32 %v260, %v306
  %v308 = vsub.f32 1.0, %v307
  %v309 = vmul.f32 %v306, %v308
  %v310 = vadd.f32 %v306, %v309
  %vm311 = vweird.f32 %v260
  %vm312 = vweird.f32 %v306
  %vm313 = vmor %vm311, %vm312
  %v314 = vsel %vm313, %v306, %v310
  %v315 = vand.u32 2147483647, %v260
  %vm316 = vcmp.eq.f32.partialorder %v315, 8.507059e+37
  %v317 = vand.u32 %v260, 2147483648
  %v318 = vor.u32 1.1754944e-38, %v317
  %v319 = vsel %vm316, %v318, %v314
  %v320 = vmul.f32 %v241, %v319
  %v321 = vrcp.pop %v263
  %v322 = vmul.f32 %v263, %v321
  %v323 = vsub.f32 1.0, %v322
  %v324 = vmul.f32 %v321, %v323
  %v325 = vadd.f32 %v321, %v324
  %vm326 = vweird.f32 %v263
  %vm327 = vweird.f32 %v321
  %vm328 = vmor %vm326, %vm327
  %v329 = vsel %vm328, %v321, %v325
  %v330 = vand.u32 2147483647, %v263
  %vm331 = vcmp.eq.f32.partialorder %v330, 8.507059e+37
  %v332 = vand.u32 %v263, 2147483648
  %v333 = vor.u32 1.1754944e-38, %v332
  %v334 = vsel %vm331, %v333, %v329
  %v335 = vmul.f32 %v243, %v334
  %v336 = vrcp.pop %v266
  %v337 = vmul.f32 %v266, %v336
  %v338 = vsub.f32 1.0, %v337
  %v339 = vmul.f32 %v336, %v338
  %v340 = vadd.f32 %v336, %v339
  %vm341 = vweird.f32 %v266
  %vm342 = vweird.f32 %v336
  %vm343 = vmor %vm341, %vm342
  %v344 = vsel %vm343, %v336, %v340
  %v345 = vand.u32 2147483647, %v266
  %vm346 = vcmp.eq.f32.partialorder %v345, 8.507059e+37
  %v347 = vand.u32 %v266, 2147483648
  %v348 = vor.u32 1.1754944e-38, %v347
  %v349 = vsel %vm346, %v348, %v344
  %v350 = vmul.f32 %v245, %v349
  %v351 = vrcp.pop %v269
  %v352 = vmul.f32 %v269, %v351
  %v353 = vsub.f32 1.0, %v352
  %v354 = vmul.f32 %v351, %v353
  %v355 = vadd.f32 %v351, %v354
  %vm356 = vweird.f32 %v269
  %vm357 = vweird.f32 %v351
  %vm358 = vmor %vm356, %vm357
  %v359 = vsel %vm358, %v351, %v355
  %v360 = vand.u32 2147483647, %v269
  %vm361 = vcmp.eq.f32.partialorder %v360, 8.507059e+37
  %v362 = vand.u32 %v269, 2147483648
  %v363 = vor.u32 1.1754944e-38, %v362
  %v364 = vsel %vm361, %v363, %v359
  %v365 = vmul.f32 %v247, %v364
  %v366 = vrcp.pop %v272
  %v367 = vmul.f32 %v272, %v366
  %v368 = vsub.f32 1.0, %v367
  %v369 = vmul.f32 %v366, %v368
  %v370 = vadd.f32 %v366, %v369
  %vm371 = vweird.f32 %v272
  %vm372 = vweird.f32 %v366
  %vm373 = vmor %vm371, %vm372
  %v374 = vsel %vm373, %v366, %v370
  %v375 = vand.u32 2147483647, %v272
  %vm376 = vcmp.eq.f32.partialorder %v375, 8.507059e+37
  %v377 = vand.u32 %v272, 2147483648
  %v378 = vor.u32 1.1754944e-38, %v377
  %v379 = vsel %vm376, %v378, %v374
  %v380 = vmul.f32 %v249, %v379
  %v381 = vrcp.pop %v275
  %v382 = vmul.f32 %v275, %v381
  %v383 = vsub.f32 1.0, %v382
  %v384 = vmul.f32 %v381, %v383
  %v385 = vadd.f32 %v381, %v384
  %vm386 = vweird.f32 %v275
  %vm387 = vweird.f32 %v381
  %vm388 = vmor %vm386, %vm387
  %v389 = vsel %vm388, %v381, %v385
  %v390 = vand.u32 2147483647, %v275
  %vm391 = vcmp.eq.f32.partialorder %v390, 8.507059e+37
  %v392 = vand.u32 %v275, 2147483648
  %v393 = vor.u32 1.1754944e-38, %v392
  %v394 = vsel %vm391, %v393, %v389
  %v395 = vmul.f32 %v251, %v394
  %vm396 = vcmask 130048
  %v398 = vsel %vm396, %v290, 0
  %400 = vmatpush.msra.mxu0 0.0
  %401 = vmatpush.msra.mxu0 0.0
  %402 = vmatpush.msra.mxu0 0.0
  %403 = vmatpush.msra.mxu0 0.0
  %404 = vmatpush.msra.mxu0 0.0
  %405 = vmatpush.msra.mxu0 0.0
  %406 = vmatpush.msra.mxu0 0.0
  %407 = vmatpush.msra.mxu0 0.0
  %408 = vmatpush.msra.mxu0 0.0
  %409 = vmatpush.msra.mxu0 0.0
  %410 = vmatpush.msra.mxu0 0.0
  %411 = vmatpush.msra.mxu0 0.0
  %412 = vmatpush.msra.mxu0 0.0
  %413 = vmatpush.msra.mxu0 0.0
  %414 = vmatpush.msra.mxu0 %v28
  %415 = vmatpush.msra.mxu0 %v27
  %416 = vmatmul.f32.gmra.mxu0 %v398
  %v417 = vpop.f32.mrf.mxu0
  %v418 = vadd.f32 0.0, %v417
  %419 = vdwg.mxu0
  %v421 = vsel %vm396, %v305, 0
  %423 = vmatpush.msra.mxu0 0.0
  %424 = vmatpush.msra.mxu0 0.0
  %425 = vmatpush.msra.mxu0 0.0
  %426 = vmatpush.msra.mxu0 0.0
  %427 = vmatpush.msra.mxu0 0.0
  %428 = vmatpush.msra.mxu0 0.0
  %429 = vmatpush.msra.mxu0 0.0
  %430 = vmatpush.msra.mxu0 0.0
  %431 = vmatpush.msra.mxu0 0.0
  %432 = vmatpush.msra.mxu0 0.0
  %433 = vmatpush.msra.mxu0 0.0
  %434 = vmatpush.msra.mxu0 0.0
  %435 = vmatpush.msra.mxu0 0.0
  %436 = vmatpush.msra.mxu0 0.0
  %437 = vmatpush.msra.mxu0 %v30
  %438 = vmatpush.msra.mxu0 %v29
  %439 = vmatmul.f32.gmra.mxu0 %v421
  %v440 = vpop.f32.mrf.mxu0
  %v441 = vadd.f32 0.0, %v440
  %442 = vdwg.mxu0
  %v444 = vsel %vm396, %v320, 0
  %446 = vmatpush.msra.mxu0 0.0
  %447 = vmatpush.msra.mxu0 0.0
  %448 = vmatpush.msra.mxu0 0.0
  %449 = vmatpush.msra.mxu0 0.0
  %450 = vmatpush.msra.mxu0 0.0
  %451 = vmatpush.msra.mxu0 0.0
  %452 = vmatpush.msra.mxu0 0.0
  %453 = vmatpush.msra.mxu0 0.0
  %454 = vmatpush.msra.mxu0 0.0
  %455 = vmatpush.msra.mxu0 0.0
  %456 = vmatpush.msra.mxu0 0.0
  %457 = vmatpush.msra.mxu0 0.0
  %458 = vmatpush.msra.mxu0 0.0
  %459 = vmatpush.msra.mxu0 0.0
  %460 = vmatpush.msra.mxu0 %v32
  %461 = vmatpush.msra.mxu0 %v31
  %462 = vmatmul.f32.gmra.mxu0 %v444
  %v463 = vpop.f32.mrf.mxu0
  %v464 = vadd.f32 0.0, %v463
  %465 = vdwg.mxu0
  %v467 = vsel %vm396, %v335, 0
  %469 = vmatpush.msra.mxu0 0.0
  %470 = vmatpush.msra.mxu0 0.0
  %471 = vmatpush.msra.mxu0 0.0
  %472 = vmatpush.msra.mxu0 0.0
  %473 = vmatpush.msra.mxu0 0.0
  %474 = vmatpush.msra.mxu0 0.0
  %475 = vmatpush.msra.mxu0 0.0
  %476 = vmatpush.msra.mxu0 0.0
  %477 = vmatpush.msra.mxu0 0.0
  %478 = vmatpush.msra.mxu0 0.0
  %479 = vmatpush.msra.mxu0 0.0
  %480 = vmatpush.msra.mxu0 0.0
  %481 = vmatpush.msra.mxu0 0.0
  %482 = vmatpush.msra.mxu0 0.0
  %483 = vmatpush.msra.mxu0 %v34
  %484 = vmatpush.msra.mxu0 %v33
  %485 = vmatmul.f32.gmra.mxu0 %v467
  %v486 = vpop.f32.mrf.mxu0
  %v487 = vadd.f32 0.0, %v486
  %488 = vdwg.mxu0
  %v490 = vsel %vm396, %v350, 0
  %492 = vmatpush.msra.mxu0 0.0
  %493 = vmatpush.msra.mxu0 0.0
  %494 = vmatpush.msra.mxu0 0.0
  %495 = vmatpush.msra.mxu0 0.0
  %496 = vmatpush.msra.mxu0 0.0
  %497 = vmatpush.msra.mxu0 0.0
  %498 = vmatpush.msra.mxu0 0.0
  %499 = vmatpush.msra.mxu0 0.0
  %500 = vmatpush.msra.mxu0 0.0
  %501 = vmatpush.msra.mxu0 0.0
  %502 = vmatpush.msra.mxu0 0.0
  %503 = vmatpush.msra.mxu0 0.0
  %504 = vmatpush.msra.mxu0 0.0
  %505 = vmatpush.msra.mxu0 0.0
  %506 = vmatpush.msra.mxu0 %v36
  %507 = vmatpush.msra.mxu0 %v35
  %508 = vmatmul.f32.gmra.mxu0 %v490
  %v509 = vpop.f32.mrf.mxu0
  %v510 = vadd.f32 0.0, %v509
  %511 = vdwg.mxu0
  %v513 = vsel %vm396, %v365, 0
  %515 = vmatpush.msra.mxu0 0.0
  %516 = vmatpush.msra.mxu0 0.0
  %517 = vmatpush.msra.mxu0 0.0
  %518 = vmatpush.msra.mxu0 0.0
  %519 = vmatpush.msra.mxu0 0.0
  %520 = vmatpush.msra.mxu0 0.0
  %521 = vmatpush.msra.mxu0 0.0
  %522 = vmatpush.msra.mxu0 0.0
  %523 = vmatpush.msra.mxu0 0.0
  %524 = vmatpush.msra.mxu0 0.0
  %525 = vmatpush.msra.mxu0 0.0
  %526 = vmatpush.msra.mxu0 0.0
  %527 = vmatpush.msra.mxu0 0.0
  %528 = vmatpush.msra.mxu0 0.0
  %529 = vmatpush.msra.mxu0 %v38
  %530 = vmatpush.msra.mxu0 %v37
  %531 = vmatmul.f32.gmra.mxu0 %v513
  %v532 = vpop.f32.mrf.mxu0
  %v533 = vadd.f32 0.0, %v532
  %534 = vdwg.mxu0
  %v536 = vsel %vm396, %v380, 0
  %538 = vmatpush.msra.mxu0 0.0
  %539 = vmatpush.msra.mxu0 0.0
  %540 = vmatpush.msra.mxu0 0.0
  %541 = vmatpush.msra.mxu0 0.0
  %542 = vmatpush.msra.mxu0 0.0
  %543 = vmatpush.msra.mxu0 0.0
  %544 = vmatpush.msra.mxu0 0.0
  %545 = vmatpush.msra.mxu0 0.0
  %546 = vmatpush.msra.mxu0 0.0
  %547 = vmatpush.msra.mxu0 0.0
  %548 = vmatpush.msra.mxu0 0.0
  %549 = vmatpush.msra.mxu0 0.0
  %550 = vmatpush.msra.mxu0 0.0
  %551 = vmatpush.msra.mxu0 0.0
  %552 = vmatpush.msra.mxu0 %v40
  %553 = vmatpush.msra.mxu0 %v39
  %554 = vmatmul.f32.gmra.mxu0 %v536
  %v555 = vpop.f32.mrf.mxu0
  %v556 = vadd.f32 0.0, %v555
  %557 = vdwg.mxu0
  %v559 = vsel %vm396, %v395, 0
  %561 = vmatpush.msra.mxu0 0.0
  %562 = vmatpush.msra.mxu0 0.0
  %563 = vmatpush.msra.mxu0 0.0
  %564 = vmatpush.msra.mxu0 0.0
  %565 = vmatpush.msra.mxu0 0.0
  %566 = vmatpush.msra.mxu0 0.0
  %567 = vmatpush.msra.mxu0 0.0
  %568 = vmatpush.msra.mxu0 0.0
  %569 = vmatpush.msra.mxu0 0.0
  %570 = vmatpush.msra.mxu0 0.0
  %571 = vmatpush.msra.mxu0 0.0
  %572 = vmatpush.msra.mxu0 0.0
  %573 = vmatpush.msra.mxu0 0.0
  %574 = vmatpush.msra.mxu0 0.0
  %575 = vmatpush.msra.mxu0 %v42
  %576 = vmatpush.msra.mxu0 %v41
  %577 = vmatmul.f32.gmra.mxu0 %v559
  %v578 = vpop.f32.mrf.mxu0
  %v579 = vadd.f32 0.0, %v578
  %580 = vdwg.mxu0
  %v581 = vld [vmem:[%s2] sm:$0xff]
  %v582 = vld [vmem:[%s2 + $0x8] sm:$0xff]
  %v583 = vld [vmem:[%s2 + $0x10] sm:$0xff]
  %v584 = vld [vmem:[%s2 + $0x18] sm:$0xff]
  %v585 = vld [vmem:[%s2 + $0x20] sm:$0xff]
  %v586 = vld [vmem:[%s2 + $0x28] sm:$0xff]
  %v587 = vld [vmem:[%s2 + $0x30] sm:$0xff]
  %v588 = vld [vmem:[%s2 + $0x38] sm:$0xff]
  %v589 = vld [vmem:[%s2 + $0x40] sm:$0xff]
  %v590 = vld [vmem:[%s2 + $0x48] sm:$0xff]
  %v591 = vld [vmem:[%s2 + $0x50] sm:$0xff]
  %v592 = vld [vmem:[%s2 + $0x58] sm:$0xff]
  %v593 = vld [vmem:[%s2 + $0x60] sm:$0xff]
  %v594 = vld [vmem:[%s2 + $0x68] sm:$0xff]
  %v595 = vld [vmem:[%s2 + $0x70] sm:$0xff]
  %v596 = vld [vmem:[%s2 + $0x78] sm:$0xff]
  %v597 = vld [vmem:[%s3] sm:$0xff]
  %v598 = vld [vmem:[%s3 + $0x8] sm:$0xff]
  %v599 = vld [vmem:[%s3 + $0x10] sm:$0xff]
  %v600 = vld [vmem:[%s3 + $0x18] sm:$0xff]
  %v601 = vld [vmem:[%s3 + $0x20] sm:$0xff]
  %v602 = vld [vmem:[%s3 + $0x28] sm:$0xff]
  %v603 = vld [vmem:[%s3 + $0x30] sm:$0xff]
  %v604 = vld [vmem:[%s3 + $0x38] sm:$0xff]
  %v605 = vld [vmem:[%s3 + $0x40] sm:$0xff]
  %v606 = vld [vmem:[%s3 + $0x48] sm:$0xff]
  %v607 = vld [vmem:[%s3 + $0x50] sm:$0xff]
  %v608 = vld [vmem:[%s3 + $0x58] sm:$0xff]
  %v609 = vld [vmem:[%s3 + $0x60] sm:$0xff]
  %v610 = vld [vmem:[%s3 + $0x68] sm:$0xff]
  %v611 = vld [vmem:[%s3 + $0x70] sm:$0xff]
  %v612 = vld [vmem:[%s3 + $0x78] sm:$0xff]
  %621 = vst [vmem:[#allocation1] ss:$2 sm:$0xff] %v19
  %s622 = scalar_lea.vmem [#allocation1], 1
  %623 = vst [vmem:[%s622] ss:$2 sm:$0xff] %v20
  %s624 = scalar_lea.vmem [#allocation1], 16
  %625 = vst [vmem:[%s624] ss:$2 sm:$0xff] %v21
  %s626 = scalar_lea.vmem [#allocation1], 17
  %627 = vst [vmem:[%s626] ss:$2 sm:$0xff] %v22
  %s628 = scalar_lea.vmem [#allocation1], 32
  %629 = vst [vmem:[%s628] ss:$2 sm:$0xff] %v23
  %s630 = scalar_lea.vmem [#allocation1], 33
  %631 = vst [vmem:[%s630] ss:$2 sm:$0xff] %v24
  %s632 = scalar_lea.vmem [#allocation1], 48
  %633 = vst [vmem:[%s632] ss:$2 sm:$0xff] %v25
  %s634 = scalar_lea.vmem [#allocation1], 49
  %635 = vst [vmem:[%s634] ss:$2 sm:$0xff] %v26
  %v636 = vld.sshfl [vmem:[#allocation1] sm:$0xff pattern:$0x75316420]
  %v637 = vld.sshfl [vmem:[#allocation1 + $0x10] sm:$0xff pattern:$0x75316420]
  %v638 = vld.sshfl [vmem:[#allocation1 + $0x20] sm:$0xff pattern:$0x75316420]
  %v639 = vld.sshfl [vmem:[#allocation1 + $0x30] sm:$0xff pattern:$0x75316420]
  %644 = vmatpush.msra.mxu0 %v612
  %645 = vmatpush.msra.mxu0 %v611
  %646 = vmatpush.msra.mxu0 %v610
  %647 = vmatpush.msra.mxu0 %v609
  %648 = vmatpush.msra.mxu0 %v608
  %649 = vmatpush.msra.mxu0 %v607
  %650 = vmatpush.msra.mxu0 %v606
  %651 = vmatpush.msra.mxu0 %v605
  %652 = vmatpush.msra.mxu0 %v604
  %653 = vmatpush.msra.mxu0 %v603
  %654 = vmatpush.msra.mxu0 %v602
  %655 = vmatpush.msra.mxu0 %v601
  %656 = vmatpush.msra.mxu0 %v600
  %657 = vmatpush.msra.mxu0 %v599
  %658 = vmatpush.msra.mxu0 %v598
  %659 = vmatpush.msra.mxu0 %v597
  %660 = vmatmul.f32.gmra.mxu0 %v636
  %v661 = vpop.f32.mrf.mxu0
  %v662 = vadd.f32 0.0, %v661
  %663 = vmatmul.f32.gmra.mxu0 %v637
  %v664 = vpop.f32.mrf.mxu0
  %v665 = vadd.f32 0.0, %v664
  %666 = vmatmul.f32.gmra.mxu0 %v638
  %v667 = vpop.f32.mrf.mxu0
  %v668 = vadd.f32 0.0, %v667
  %669 = vmatmul.f32.gmra.mxu0 %v639
  %v670 = vpop.f32.mrf.mxu0
  %v671 = vadd.f32 0.0, %v670
  %672 = vdwg.mxu0
  %681 = vst [vmem:[#allocation1] ss:$2 sm:$0xff] %v418
  %s682 = scalar_lea.vmem [#allocation1], 1
  %683 = vst [vmem:[%s682] ss:$2 sm:$0xff] %v441
  %s684 = scalar_lea.vmem [#allocation1], 16
  %685 = vst [vmem:[%s684] ss:$2 sm:$0xff] %v464
  %s686 = scalar_lea.vmem [#allocation1], 17
  %687 = vst [vmem:[%s686] ss:$2 sm:$0xff] %v487
  %s688 = scalar_lea.vmem [#allocation1], 32
  %689 = vst [vmem:[%s688] ss:$2 sm:$0xff] %v510
  %s690 = scalar_lea.vmem [#allocation1], 33
  %691 = vst [vmem:[%s690] ss:$2 sm:$0xff] %v533
  %s692 = scalar_lea.vmem [#allocation1], 48
  %693 = vst [vmem:[%s692] ss:$2 sm:$0xff] %v556
  %s694 = scalar_lea.vmem [#allocation1], 49
  %695 = vst [vmem:[%s694] ss:$2 sm:$0xff] %v579
  %v696 = vld.sshfl [vmem:[#allocation1] sm:$0xff pattern:$0x75316420]
  %v697 = vld.sshfl [vmem:[#allocation1 + $0x10] sm:$0xff pattern:$0x75316420]
  %v698 = vld.sshfl [vmem:[#allocation1 + $0x20] sm:$0xff pattern:$0x75316420]
  %v699 = vld.sshfl [vmem:[#allocation1 + $0x30] sm:$0xff pattern:$0x75316420]
  %704 = vmatpush.msra.mxu0 %v596
  %705 = vmatpush.msra.mxu0 %v595
  %706 = vmatpush.msra.mxu0 %v594
  %707 = vmatpush.msra.mxu0 %v593
  %708 = vmatpush.msra.mxu0 %v592
  %709 = vmatpush.msra.mxu0 %v591
  %710 = vmatpush.msra.mxu0 %v590
  %711 = vmatpush.msra.mxu0 %v589
  %712 = vmatpush.msra.mxu0 %v588
  %713 = vmatpush.msra.mxu0 %v587
  %714 = vmatpush.msra.mxu0 %v586
  %715 = vmatpush.msra.mxu0 %v585
  %716 = vmatpush.msra.mxu0 %v584
  %717 = vmatpush.msra.mxu0 %v583
  %718 = vmatpush.msra.mxu0 %v582
  %719 = vmatpush.msra.mxu0 %v581
  %720 = vmatmul.f32.gmra.mxu0 %v696
  %v721 = vpop.f32.mrf.mxu0
  %v722 = vadd.f32 %v662, %v721
  %723 = vmatmul.f32.gmra.mxu0 %v697
  %v724 = vpop.f32.mrf.mxu0
  %v725 = vadd.f32 %v665, %v724
  %726 = vmatmul.f32.gmra.mxu0 %v698
  %v727 = vpop.f32.mrf.mxu0
  %v728 = vadd.f32 %v668, %v727
  %729 = vmatmul.f32.gmra.mxu0 %v699
  %v730 = vpop.f32.mrf.mxu0
  %v731 = vadd.f32 %v671, %v730
  %732 = vdwg.mxu0
  %v737 = vrot.slane %v722, 4
  %v738 = vrot.slane %v725, 4
  %v739 = vrot.slane %v728, 4
  %v740 = vrot.slane %v731, 4
  %v745 = vtanh.pop %v722
  %v746 = vtanh.pop %v737
  %v747 = vtanh.pop %v725
  %v748 = vtanh.pop %v738
  %v749 = vtanh.pop %v728
  %v750 = vtanh.pop %v739
  %v751 = vtanh.pop %v731
  %v752 = vtanh.pop %v740
  %753 = vst [vmem:[%s4] sm:$0xf] %v745
  %754 = vst [vmem:[%s4 + $0x4] sm:$0xf] %v746
  %755 = vst [vmem:[%s4 + $0x8] sm:$0xf] %v747
  %756 = vst [vmem:[%s4 + $0xc] sm:$0xf] %v748
  %757 = vst [vmem:[%s4 + $0x10] sm:$0xf] %v749
  %758 = vst [vmem:[%s4 + $0x14] sm:$0xf] %v750
  %759 = vst [vmem:[%s4 + $0x18] sm:$0xf] %v751
  %760 = vst [vmem:[%s4 + $0x1c] sm:$0xf] %v752
  %761 = vst.msk [vmem:[%s5] sm:$0xf] %vm203, %v290
  %762 = vst.msk [vmem:[%s5 + $0x4] sm:$0xf] %vm203, %v305
  %763 = vst.msk [vmem:[%s5 + $0x8] sm:$0xf] %vm203, %v320
  %764 = vst.msk [vmem:[%s5 + $0xc] sm:$0xf] %vm203, %v335
  %765 = vst.msk [vmem:[%s5 + $0x10] sm:$0xf] %vm203, %v350
  %766 = vst.msk [vmem:[%s5 + $0x14] sm:$0xf] %vm203, %v365
  %767 = vst.msk [vmem:[%s5 + $0x18] sm:$0xf] %vm203, %v380
  %768 = vst.msk [vmem:[%s5 + $0x1c] sm:$0xf] %vm203, %v395
  // Predicated region
  $region18: #{seq2seq_forward.12} parent=0 // pred_check
    _
  $region19: #{seq2seq_forward.12} parent=0 // pred_check_branch
    %770 = sbr.rel (0) target = $region21
  $region20: #{seq2seq_forward.12} parent=0 // pred_region
    _
  $region21: #{seq2seq_forward.12} parent=0 // pred_fallthru
    _
  // Predicated region
  $region22: #{seq2seq_forward.12} parent=0 // pred_check
    _
  $region23: #{seq2seq_forward.12} parent=0 // pred_check_branch
    %772 = sbr.rel (0) target = $region25
  $region24: #{seq2seq_forward.12} parent=0 // pred_region
    _
  $region25: #{seq2seq_forward.12} parent=0 // pred_fallthru
    _
  // Predicated region
  $region26: #{seq2seq_forward.12} parent=0 // pred_check
    _
  $region27: #{seq2seq_forward.12} parent=0 // pred_check_branch
    %774 = sbr.rel (0) target = $region29
  $region28: #{seq2seq_forward.12} parent=0 // pred_region
    _
  $region29: #{seq2seq_forward.12} parent=0 // pred_fallthru
    _
  // Predicated region
  $region30: #{seq2seq_forward.12} parent=0 // pred_check
    _
  $region31: #{seq2seq_forward.12} parent=0 // pred_check_branch
    %776 = sbr.rel (0) target = $region33
  $region32: #{seq2seq_forward.12} parent=0 // pred_region
    _
  $region33: #{seq2seq_forward.12} parent=0 // pred_fallthru
    _

// kernel: seq2seq_forward.15
$region0: #{seq2seq_forward.15}
  #allocation0 [shape = 'u32[]', space=smem, size = 0x4, offset = 0x4, fixed_abs, tag = 'smem constant byte address 0x4 - core index']
  #allocation1 [shape = 'u32[72,128]{1,0:T(1,128)}', space=vmem, size = 0x9000, scoped, tag = 'internal scratch']
  #allocation4 [shape = 's32[]', space=sflag, size = 0x4, offset = 0, fixed_abs, tag = 'sflag constant byte address 0x0 - dummy sync flag']
  %s0 = inlined_call_operand.vmem [shape: f32[3,8,128], index: 0, kind: input, shape index: {}]
  %s1 = inlined_call_operand.vmem [shape: f32[8,16,128], index: 1, kind: input, shape index: {}]
  %s2 = inlined_call_operand.hbm [shape: f32[8,3,16,128], index: 2, kind: output, shape index: {}]
  %s3 = sld [smem:[#allocation0]]
  $region41: #{seq2seq_forward.15} parent=0
    _
  %s5 = ssub.s32 1, %s3
  %s6 = scalar_select 0, %s5, %s3
  $region1: #{seq2seq_forward.15} parent=0
    #allocation2 [shape = 'u8[131072]{0}', space=vmem, size = 0x20000, scoped, tag = 'output window, operand 0']
    #allocation3 [shape = 's32[2]{0}', space=sflag, size = 0x8, scoped, tag = 'scoped memory for seq2seq_forward.15']
    %7 = vsyncpa [#allocation3], 0
    %s8 = scalar_lea.sflag [#allocation3], 1
    %9 = vsyncpa %s8, 0
    loop: start=0, step=1, limit=5
    $region2: #{seq2seq_forward.15} parent=1 // loop_pre_header
      _
    $region3: #{seq2seq_forward.15} parent=1 // loop_header
      %s11 = sphi 0, %s15
      %p12 = scmp.ge.s32.totalorder %s11, 5
      %s21 = sphi 0, %s23
      %s24 = sphi 0, %s21
      %s25 = sphi 0, %s24
      %s41 = sphi 0, %s25
      %s45 = sphi 0, %s45
      %s47 = sphi 0, %s45
      %s48 = sphi 0, %s47
      %s62 = sphi 0, %s48
      %s68 = sphi 0, %s70
      %s71 = sphi 0, %s68
      %s72 = sphi 0, %s71
      %s88 = sphi 0, %s72
    $region4: #{seq2seq_forward.15} parent=1 // loop_header_branch
      %14 = sbr.rel (%p12) target = $region8
    $region5: #{seq2seq_forward.15} parent=1 // loop_body
      %s16 = ssub.s32 %s11, 1
      %s17 = ssub.s32 %s11, 2
      %s18 = sadd.s32 %s11, 1
      %s19 = ssub.s32 %s11, %s18
      %p20 = scmp.eq.s32.totalorder %s19, 0
      %s22 = sadd.s32 %s21, 1
      %s23 = scalar_select %p20, %s21, %s22
      %p26 = pneg %p20
      %p27 = scmp.eq.s32.totalorder %s11, 2
      %p28 = por %p26, %p27
      %p29 = scmp.ne.s32.totalorder %s21, %s24
      %p30 = scmp.eq.s32.totalorder %s11, 0
      %p31 = por %p29, %p30
      %p32 = scmp.ne.s32.totalorder %s21, %s24
      %p33 = scmp.eq.s32.totalorder %s16, 2
      %p34 = por %p32, %p33
      %p35 = scmp.ne.s32.totalorder %s24, %s25
      %p36 = scmp.eq.s32.totalorder %s16, 0
      %p37 = por %p35, %p36
      %p38 = scmp.ne.s32.totalorder %s24, %s25
      %p39 = scmp.eq.s32.totalorder %s17, 2
      %p40 = por %p38, %p39
      %p42 = scmp.ne.s32.totalorder %s25, %s41
      %p43 = scmp.eq.s32.totalorder %s17, 0
      %p44 = por %p42, %p43
      %s46 = sadd.s32 %s45, 1
      %p49 = scmp.eq.s32.totalorder %s11, 2
      %p50 = scmp.ne.s32.totalorder %s45, %s47
      %p51 = scmp.eq.s32.totalorder %s11, 0
      %p52 = por %p50, %p51
      %p53 = scmp.ne.s32.totalorder %s45, %s47
      %p54 = scmp.eq.s32.totalorder %s16, 2
      %p55 = por %p53, %p54
      %p56 = scmp.ne.s32.totalorder %s47, %s48
      %p57 = scmp.eq.s32.totalorder %s16, 0
      %p58 = por %p56, %p57
      %p59 = scmp.ne.s32.totalorder %s47, %s48
      %p60 = scmp.eq.s32.totalorder %s17, 2
      %p61 = por %p59, %p60
      %p63 = scmp.ne.s32.totalorder %s48, %s62
      %p64 = scmp.eq.s32.totalorder %s17, 0
      %p65 = por %p63, %p64
      %s66 = ssub.s32 %s11, %s18
      %p67 = scmp.eq.s32.totalorder %s66, 0
      %s69 = sadd.s32 %s68, 1
      %s70 = scalar_select %p67, %s68, %s69
      %p73 = pneg %p67
      %p74 = scmp.eq.s32.totalorder %s11, 2
      %p75 = por %p73, %p74
      %p76 = scmp.ne.s32.totalorder %s68, %s71
      %p77 = scmp.eq.s32.totalorder %s11, 0
      %p78 = por %p76, %p77
      %p79 = scmp.ne.s32.totalorder %s68, %s71
      %p80 = scmp.eq.s32.totalorder %s16, 2
      %p81 = por %p79, %p80
      %p82 = scmp.ne.s32.totalorder %s71, %s72
      %p83 = scmp.eq.s32.totalorder %s16, 0
      %p84 = por %p82, %p83
      %p85 = scmp.ne.s32.totalorder %s71, %s72
      %p86 = scmp.eq.s32.totalorder %s17, 2
      %p87 = por %p85, %p86
      %p89 = scmp.ne.s32.totalorder %s72, %s88
      %p90 = scmp.eq.s32.totalorder %s17, 0
      %p91 = por %p89, %p90
      %p92 = scmp.le.s32.totalorder 1, %s11
      %p93 = scmp.lt.s32.totalorder %s11, 4
      %p94 = pnand %p92, %p93
      %p95 = pneg %p94
      // Predicated region
      $region9: #{seq2seq_forward.15} parent=5 // pred_check
        _
      $region10: #{seq2seq_forward.15} parent=5 // pred_check_branch
        %97 = sbr.rel (%p94) target = $region12
      $region11: #{seq2seq_forward.15} parent=5 // pred_region
        %s98 = ssub.s32 %s11, 1
        // Predicated region
        $region13: #{seq2seq_forward.15} parent=11 // pred_check
          %p99 = pneg %p58
        $region14: #{seq2seq_forward.15} parent=11 // pred_check_branch
          %101 = sbr.rel (%p99) target = $region16
        $region15: #{seq2seq_forward.15} parent=11 // pred_region
          _
        $region16: #{seq2seq_forward.15} parent=11 // pred_fallthru
          _
      $region12: #{seq2seq_forward.15} parent=5 // pred_fallthru
        _
      %p102 = scmp.lt.s32.totalorder %s11, 3
      // Predicated region
      $region17: #{seq2seq_forward.15} parent=5 // pred_check
        %p103 = pneg %p102
      $region18: #{seq2seq_forward.15} parent=5 // pred_check_branch
        %105 = sbr.rel (%p103) target = $region20
      $region19: #{seq2seq_forward.15} parent=5 // pred_region
        // Predicated region
        $region21: #{seq2seq_forward.15} parent=19 // pred_check
          %p106 = pneg %p31
        $region22: #{seq2seq_forward.15} parent=19 // pred_check_branch
          %108 = sbr.rel (%p106) target = $region24
        $region23: #{seq2seq_forward.15} parent=19 // pred_region
          %p109 = scmp.lt.s32.totalorder %s11, 2
          %s110 = scalar_select %p109, %s11, 2
          %s111 = smul.addr %s110, 8
          %s112 = scalar_lea.vmem %s0, %s111
        $region24: #{seq2seq_forward.15} parent=19 // pred_fallthru
          _
      $region20: #{seq2seq_forward.15} parent=5 // pred_fallthru
        _
      %p113 = scmp.le.s32.totalorder 1, %s11
      %p114 = scmp.lt.s32.totalorder %s11, 4
      %p115 = pnand %p113, %p114
      %p116 = pneg %p115
      // Predicated region
      $region25: #{seq2seq_forward.15} parent=5 // pred_check
        _
      $region26: #{seq2seq_forward.15} parent=5 // pred_check_branch
        %118 = sbr.rel (%p115) target = $region28
      $region27: #{seq2seq_forward.15} parent=5 // pred_region
        %s119 = ssub.s32 %s11, 1
        %p120 = scmp.lt.s32.totalorder %s16, 2
        %s121 = scalar_select %p120, %s16, 2
        %s122 = smul.addr %s121, 8
        %s123 = scalar_lea.vmem %s0, %s122
        %p124 = pneg %p37
        %p125 = pneg %p34
        %p126 = pneg %p58
        %p127 = pneg %p55
        %p128 = pneg %p84
        %p129 = pneg %p81
        %s130 = sand.u32 %s71, 1
        %s131 = scalar_lea.sflag [#allocation3], %s130
        %s132 = sand.u32 %s71, 1
        %s133 = smul.addr %s132, 128
        %s134 = scalar_lea.vmem [#allocation2], %s133
        %p135 = scmp.lt.s32.totalorder %s16, 2
        %s136 = scalar_select %p135, %s16, 2
        %s137 = smul.addr %s136, 8
        %s138 = scalar_lea.vmem %s0, %s137
        %v139 = vld [vmem:[%s1] sm:$0xff]
        %v140 = vld [vmem:[%s1 + $0x8] sm:$0xff]
        %v141 = vld [vmem:[%s1 + $0x10] sm:$0xff]
        %v142 = vld [vmem:[%s1 + $0x18] sm:$0xff]
        %v143 = vld [vmem:[%s1 + $0x20] sm:$0xff]
        %v144 = vld [vmem:[%s1 + $0x28] sm:$0xff]
        %v145 = vld [vmem:[%s1 + $0x30] sm:$0xff]
        %v146 = vld [vmem:[%s1 + $0x38] sm:$0xff]
        %v147 = vld [vmem:[%s1 + $0x40] sm:$0xff]
        %v148 = vld [vmem:[%s1 + $0x48] sm:$0xff]
        %v149 = vld [vmem:[%s1 + $0x50] sm:$0xff]
        %v150 = vld [vmem:[%s1 + $0x58] sm:$0xff]
        %v151 = vld [vmem:[%s1 + $0x60] sm:$0xff]
        %v152 = vld [vmem:[%s1 + $0x68] sm:$0xff]
        %v153 = vld [vmem:[%s1 + $0x70] sm:$0xff]
        %v154 = vld [vmem:[%s1 + $0x78] sm:$0xff]
        %v155 = vld [vmem:[%s138] sm:$0xff]
        %v157 = vrot.slane %v155, 1
        %v158 = vrot.slane %v155, 2
        %v159 = vrot.slane %v155, 3
        %v160 = vrot.slane %v155, 4
        %v161 = vrot.slane %v155, 5
        %v162 = vrot.slane %v155, 6
        %v163 = vrot.slane %v155, 7
        %v164 = vperm.slane %v155, 0
        %v165 = vperm.slane %v157, 0
        %v166 = vperm.slane %v158, 0
        %v167 = vperm.slane %v159, 0
        %v168 = vperm.slane %v160, 0
        %v169 = vperm.slane %v161, 0
        %v170 = vperm.slane %v162, 0
        %v171 = vperm.slane %v163, 0
        %v180 = vadd.f32 %v139, %v164
        %v181 = vadd.f32 %v140, %v164
        %v182 = vadd.f32 %v141, %v165
        %v183 = vadd.f32 %v142, %v165
        %v184 = vadd.f32 %v143, %v166
        %v185 = vadd.f32 %v144, %v166
        %v186 = vadd.f32 %v145, %v167
        %v187 = vadd.f32 %v146, %v167
        %v188 = vadd.f32 %v147, %v168
        %v189 = vadd.f32 %v148, %v168
        %v190 = vadd.f32 %v149, %v169
        %v191 = vadd.f32 %v150, %v169
        %v192 = vadd.f32 %v151, %v170
        %v193 = vadd.f32 %v152, %v170
        %v194 = vadd.f32 %v153, %v171
        %v195 = vadd.f32 %v154, %v171
        %v196 = vxor.u32 %v180, 2147483648
        %v197 = vxor.u32 %v181, 2147483648
        %v198 = vxor.u32 %v182, 2147483648
        %v199 = vxor.u32 %v183, 2147483648
        %v200 = vxor.u32 %v184, 2147483648
        %v201 = vxor.u32 %v185, 2147483648
        %v202 = vxor.u32 %v186, 2147483648
        %v203 = vxor.u32 %v187, 2147483648
        %v204 = vxor.u32 %v188, 2147483648
        %v205 = vxor.u32 %v189, 2147483648
        %v206 = vxor.u32 %v190, 2147483648
        %v207 = vxor.u32 %v191, 2147483648
        %v208 = vxor.u32 %v192, 2147483648
        %v209 = vxor.u32 %v193, 2147483648
        %v210 = vxor.u32 %v194, 2147483648
        %v211 = vxor.u32 %v195, 2147483648
        %v212 = vmul.f32 %v196, 1.442695
        %v213 = vpow.pop %v212
        %v214 = vmul.f32 %v197, 1.442695
        %v215 = vpow.pop %v214
        %v216 = vmul.f32 %v198, 1.442695
        %v217 = vpow.pop %v216
        %v218 = vmul.f32 %v199, 1.442695
        %v219 = vpow.pop %v218
        %v220 = vmul.f32 %v200, 1.442695
        %v221 = vpow.pop %v220
        %v222 = vmul.f32 %v201, 1.442695
        %v223 = vpow.pop %v222
        %v224 = vmul.f32 %v202, 1.442695
        %v225 = vpow.pop %v224
        %v226 = vmul.f32 %v203, 1.442695
        %v227 = vpow.pop %v226
        %v228 = vmul.f32 %v204, 1.442695
        %v229 = vpow.pop %v228
        %v230 = vmul.f32 %v205, 1.442695
        %v231 = vpow.pop %v230
        %v232 = vmul.f32 %v206, 1.442695
        %v233 = vpow.pop %v232
        %v234 = vmul.f32 %v207, 1.442695
        %v235 = vpow.pop %v234
        %v236 = vmul.f32 %v208, 1.442695
        %v237 = vpow.pop %v236
        %v238 = vmul.f32 %v209, 1.442695
        %v239 = vpow.pop %v238
        %v240 = vmul.f32 %v210, 1.442695
        %v241 = vpow.pop %v240
        %v242 = vmul.f32 %v211, 1.442695
        %v243 = vpow.pop %v242
        %v244 = vadd.f32 %v213, 1.0
        %v245 = vadd.f32 %v215, 1.0
        %v246 = vadd.f32 %v217, 1.0
        %v247 = vadd.f32 %v219, 1.0
        %v248 = vadd.f32 %v221, 1.0
        %v249 = vadd.f32 %v223, 1.0
        %v250 = vadd.f32 %v225, 1.0
        %v251 = vadd.f32 %v227, 1.0
        %v252 = vadd.f32 %v229, 1.0
        %v253 = vadd.f32 %v231, 1.0
        %v254 = vadd.f32 %v233, 1.0
        %v255 = vadd.f32 %v235, 1.0
        %v256 = vadd.f32 %v237, 1.0
        %v257 = vadd.f32 %v239, 1.0
        %v258 = vadd.f32 %v241, 1.0
        %v259 = vadd.f32 %v243, 1.0
        %v260 = vrcp.pop %v244
        %v261 = vmul.f32 %v244, %v260
        %v262 = vsub.f32 1.0, %v261
        %v263 = vmul.f32 %v260, %v262
        %v264 = vadd.f32 %v260, %v263
        %vm265 = vweird.f32 %v244
        %vm266 = vweird.f32 %v260
        %vm267 = vmor %vm265, %vm266
        %v268 = vsel %vm267, %v260, %v264
        %v269 = vand.u32 2147483647, %v244
        %vm270 = vcmp.eq.f32.partialorder %v269, 8.507059e+37
        %v271 = vand.u32 %v244, 2147483648
        %v272 = vor.u32 1.1754944e-38, %v271
        %v273 = vsel %vm270, %v272, %v268
        %v274 = vmul.f32 1.0, %v273
        %v275 = vrcp.pop %v245
        %v276 = vmul.f32 %v245, %v275
        %v277 = vsub.f32 1.0, %v276
        %v278 = vmul.f32 %v275, %v277
        %v279 = vadd.f32 %v275, %v278
        %vm280 = vweird.f32 %v245
        %vm281 = vweird.f32 %v275
        %vm282 = vmor %vm280, %vm281
        %v283 = vsel %vm282, %v275, %v279
        %v284 = vand.u32 2147483647, %v245
        %vm285 = vcmp.eq.f32.partialorder %v284, 8.507059e+37
        %v286 = vand.u32 %v245, 2147483648
        %v287 = vor.u32 1.1754944e-38, %v286
        %v288 = vsel %vm285, %v287, %v283
        %v289 = vmul.f32 1.0, %v288
        %v290 = vrcp.pop %v246
        %v291 = vmul.f32 %v246, %v290
        %v292 = vsub.f32 1.0, %v291
        %v293 = vmul.f32 %v290, %v292
        %v294 = vadd.f32 %v290, %v293
        %vm295 = vweird.f32 %v246
        %vm296 = vweird.f32 %v290
        %vm297 = vmor %vm295, %vm296
        %v298 = vsel %vm297, %v290, %v294
        %v299 = vand.u32 2147483647, %v246
        %vm300 = vcmp.eq.f32.partialorder %v299, 8.507059e+37
        %v301 = vand.u32 %v246, 2147483648
        %v302 = vor.u32 1.1754944e-38, %v301
        %v303 = vsel %vm300, %v302, %v298
        %v304 = vmul.f32 1.0, %v303
        %v305 = vrcp.pop %v247
        %v306 = vmul.f32 %v247, %v305
        %v307 = vsub.f32 1.0, %v306
        %v308 = vmul.f32 %v305, %v307
        %v309 = vadd.f32 %v305, %v308
        %vm310 = vweird.f32 %v247
        %vm311 = vweird.f32 %v305
        %vm312 = vmor %vm310, %vm311
        %v313 = vsel %vm312, %v305, %v309
        %v314 = vand.u32 2147483647, %v247
        %vm315 = vcmp.eq.f32.partialorder %v314, 8.507059e+37
        %v316 = vand.u32 %v247, 2147483648
        %v317 = vor.u32 1.1754944e-38, %v316
        %v318 = vsel %vm315, %v317, %v313
        %v319 = vmul.f32 1.0, %v318
        %v320 = vrcp.pop %v248
        %v321 = vmul.f32 %v248, %v320
        %v322 = vsub.f32 1.0, %v321
        %v323 = vmul.f32 %v320, %v322
        %v324 = vadd.f32 %v320, %v323
        %vm325 = vweird.f32 %v248
        %vm326 = vweird.f32 %v320
        %vm327 = vmor %vm325, %vm326
        %v328 = vsel %vm327, %v320, %v324
        %v329 = vand.u32 2147483647, %v248
        %vm330 = vcmp.eq.f32.partialorder %v329, 8.507059e+37
        %v331 = vand.u32 %v248, 2147483648
        %v332 = vor.u32 1.1754944e-38, %v331
        %v333 = vsel %vm330, %v332, %v328
        %v334 = vmul.f32 1.0, %v333
        %v335 = vrcp.pop %v249
        %v336 = vmul.f32 %v249, %v335
        %v337 = vsub.f32 1.0, %v336
        %v338 = vmul.f32 %v335, %v337
        %v339 = vadd.f32 %v335, %v338
        %vm340 = vweird.f32 %v249
        %vm341 = vweird.f32 %v335
        %vm342 = vmor %vm340, %vm341
        %v343 = vsel %vm342, %v335, %v339
        %v344 = vand.u32 2147483647, %v249
        %vm345 = vcmp.eq.f32.partialorder %v344, 8.507059e+37
        %v346 = vand.u32 %v249, 2147483648
        %v347 = vor.u32 1.1754944e-38, %v346
        %v348 = vsel %vm345, %v347, %v343
        %v349 = vmul.f32 1.0, %v348
        %v350 = vrcp.pop %v250
        %v351 = vmul.f32 %v250, %v350
        %v352 = vsub.f32 1.0, %v351
        %v353 = vmul.f32 %v350, %v352
        %v354 = vadd.f32 %v350, %v353
        %vm355 = vweird.f32 %v250
        %vm356 = vweird.f32 %v350
        %vm357 = vmor %vm355, %vm356
        %v358 = vsel %vm357, %v350, %v354
        %v359 = vand.u32 2147483647, %v250
        %vm360 = vcmp.eq.f32.partialorder %v359, 8.507059e+37
        %v361 = vand.u32 %v250, 2147483648
        %v362 = vor.u32 1.1754944e-38, %v361
        %v363 = vsel %vm360, %v362, %v358
        %v364 = vmul.f32 1.0, %v363
        %v365 = vrcp.pop %v251
        %v366 = vmul.f32 %v251, %v365
        %v367 = vsub.f32 1.0, %v366
        %v368 = vmul.f32 %v365, %v367
        %v369 = vadd.f32 %v365, %v368
        %vm370 = vweird.f32 %v251
        %vm371 = vweird.f32 %v365
        %vm372 = vmor %vm370, %vm371
        %v373 = vsel %vm372, %v365, %v369
        %v374 = vand.u32 2147483647, %v251
        %vm375 = vcmp.eq.f32.partialorder %v374, 8.507059e+37
        %v376 = vand.u32 %v251, 2147483648
        %v377 = vor.u32 1.1754944e-38, %v376
        %v378 = vsel %vm375, %v377, %v373
        %v379 = vmul.f32 1.0, %v378
        %v380 = vrcp.pop %v252
        %v381 = vmul.f32 %v252, %v380
        %v382 = vsub.f32 1.0, %v381
        %v383 = vmul.f32 %v380, %v382
        %v384 = vadd.f32 %v380, %v383
        %vm385 = vweird.f32 %v252
        %vm386 = vweird.f32 %v380
        %vm387 = vmor %vm385, %vm386
        %v388 = vsel %vm387, %v380, %v384
        %v389 = vand.u32 2147483647, %v252
        %vm390 = vcmp.eq.f32.partialorder %v389, 8.507059e+37
        %v391 = vand.u32 %v252, 2147483648
        %v392 = vor.u32 1.1754944e-38, %v391
        %v393 = vsel %vm390, %v392, %v388
        %v394 = vmul.f32 1.0, %v393
        %v395 = vrcp.pop %v253
        %v396 = vmul.f32 %v253, %v395
        %v397 = vsub.f32 1.0, %v396
        %v398 = vmul.f32 %v395, %v397
        %v399 = vadd.f32 %v395, %v398
        %vm400 = vweird.f32 %v253
        %vm401 = vweird.f32 %v395
        %vm402 = vmor %vm400, %vm401
        %v403 = vsel %vm402, %v395, %v399
        %v404 = vand.u32 2147483647, %v253
        %vm405 = vcmp.eq.f32.partialorder %v404, 8.507059e+37
        %v406 = vand.u32 %v253, 2147483648
        %v407 = vor.u32 1.1754944e-38, %v406
        %v408 = vsel %vm405, %v407, %v403
        %v409 = vmul.f32 1.0, %v408
        %v410 = vrcp.pop %v254
        %v411 = vmul.f32 %v254, %v410
        %v412 = vsub.f32 1.0, %v411
        %v413 = vmul.f32 %v410, %v412
        %v414 = vadd.f32 %v410, %v413
        %vm415 = vweird.f32 %v254
        %vm416 = vweird.f32 %v410
        %vm417 = vmor %vm415, %vm416
        %v418 = vsel %vm417, %v410, %v414
        %v419 = vand.u32 2147483647, %v254
        %vm420 = vcmp.eq.f32.partialorder %v419, 8.507059e+37
        %v421 = vand.u32 %v254, 2147483648
        %v422 = vor.u32 1.1754944e-38, %v421
        %v423 = vsel %vm420, %v422, %v418
        %v424 = vmul.f32 1.0, %v423
        %v425 = vrcp.pop %v255
        %v426 = vmul.f32 %v255, %v425
        %v427 = vsub.f32 1.0, %v426
        %v428 = vmul.f32 %v425, %v427
        %v429 = vadd.f32 %v425, %v428
        %vm430 = vweird.f32 %v255
        %vm431 = vweird.f32 %v425
        %vm432 = vmor %vm430, %vm431
        %v433 = vsel %vm432, %v425, %v429
        %v434 = vand.u32 2147483647, %v255
        %vm435 = vcmp.eq.f32.partialorder %v434, 8.507059e+37
        %v436 = vand.u32 %v255, 2147483648
        %v437 = vor.u32 1.1754944e-38, %v436
        %v438 = vsel %vm435, %v437, %v433
        %v439 = vmul.f32 1.0, %v438
        %v440 = vrcp.pop %v256
        %v441 = vmul.f32 %v256, %v440
        %v442 = vsub.f32 1.0, %v441
        %v443 = vmul.f32 %v440, %v442
        %v444 = vadd.f32 %v440, %v443
        %vm445 = vweird.f32 %v256
        %vm446 = vweird.f32 %v440
        %vm447 = vmor %vm445, %vm446
        %v448 = vsel %vm447, %v440, %v444
        %v449 = vand.u32 2147483647, %v256
        %vm450 = vcmp.eq.f32.partialorder %v449, 8.507059e+37
        %v451 = vand.u32 %v256, 2147483648
        %v452 = vor.u32 1.1754944e-38, %v451
        %v453 = vsel %vm450, %v452, %v448
        %v454 = vmul.f32 1.0, %v453
        %v455 = vrcp.pop %v257
        %v456 = vmul.f32 %v257, %v455
        %v457 = vsub.f32 1.0, %v456
        %v458 = vmul.f32 %v455, %v457
        %v459 = vadd.f32 %v455, %v458
        %vm460 = vweird.f32 %v257
        %vm461 = vweird.f32 %v455
        %vm462 = vmor %vm460, %vm461
        %v463 = vsel %vm462, %v455, %v459
        %v464 = vand.u32 2147483647, %v257
        %vm465 = vcmp.eq.f32.partialorder %v464, 8.507059e+37
        %v466 = vand.u32 %v257, 2147483648
        %v467 = vor.u32 1.1754944e-38, %v466
        %v468 = vsel %vm465, %v467, %v463
        %v469 = vmul.f32 1.0, %v468
        %v470 = vrcp.pop %v258
        %v471 = vmul.f32 %v258, %v470
        %v472 = vsub.f32 1.0, %v471
        %v473 = vmul.f32 %v470, %v472
        %v474 = vadd.f32 %v470, %v473
        %vm475 = vweird.f32 %v258
        %vm476 = vweird.f32 %v470
        %vm477 = vmor %vm475, %vm476
        %v478 = vsel %vm477, %v470, %v474
        %v479 = vand.u32 2147483647, %v258
        %vm480 = vcmp.eq.f32.partialorder %v479, 8.507059e+37
        %v481 = vand.u32 %v258, 2147483648
        %v482 = vor.u32 1.1754944e-38, %v481
        %v483 = vsel %vm480, %v482, %v478
        %v484 = vmul.f32 1.0, %v483
        %v485 = vrcp.pop %v259
        %v486 = vmul.f32 %v259, %v485
        %v487 = vsub.f32 1.0, %v486
        %v488 = vmul.f32 %v485, %v487
        %v489 = vadd.f32 %v485, %v488
        %vm490 = vweird.f32 %v259
        %vm491 = vweird.f32 %v485
        %vm492 = vmor %vm490, %vm491
        %v493 = vsel %vm492, %v485, %v489
        %v494 = vand.u32 2147483647, %v259
        %vm495 = vcmp.eq.f32.partialorder %v494, 8.507059e+37
        %v496 = vand.u32 %v259, 2147483648
        %v497 = vor.u32 1.1754944e-38, %v496
        %v498 = vsel %vm495, %v497, %v493
        %v499 = vmul.f32 1.0, %v498
        %500 = vst [vmem:[%s134] sm:$0xff] %v274
        %501 = vst [vmem:[%s134 + $0x8] sm:$0xff] %v289
        %502 = vst [vmem:[%s134 + $0x10] sm:$0xff] %v304
        %503 = vst [vmem:[%s134 + $0x18] sm:$0xff] %v319
        %504 = vst [vmem:[%s134 + $0x20] sm:$0xff] %v334
        %505 = vst [vmem:[%s134 + $0x28] sm:$0xff] %v349
        %506 = vst [vmem:[%s134 + $0x30] sm:$0xff] %v364
        %507 = vst [vmem:[%s134 + $0x38] sm:$0xff] %v379
        %508 = vst [vmem:[%s134 + $0x40] sm:$0xff] %v394
        %509 = vst [vmem:[%s134 + $0x48] sm:$0xff] %v409
        %510 = vst [vmem:[%s134 + $0x50] sm:$0xff] %v424
        %511 = vst [vmem:[%s134 + $0x58] sm:$0xff] %v439
        %512 = vst [vmem:[%s134 + $0x60] sm:$0xff] %v454
        %513 = vst [vmem:[%s134 + $0x68] sm:$0xff] %v469
        %514 = vst [vmem:[%s134 + $0x70] sm:$0xff] %v484
        %515 = vst [vmem:[%s134 + $0x78] sm:$0xff] %v499
        %s516 = sand.u32 %s71, 1
        %s517 = scalar_lea.sflag [#allocation3], %s516
        %s518 = sand.u32 %s71, 1
        %s519 = smul.addr %s518, 128
        %s520 = scalar_lea.vmem [#allocation2], %s519
        // Predicated region
        $region29: #{seq2seq_forward.15} parent=27 // pred_check
          %p521 = pneg %p81
        $region30: #{seq2seq_forward.15} parent=27 // pred_check_branch
          %523 = sbr.rel (%p521) target = $region32
        $region31: #{seq2seq_forward.15} parent=27 // pred_region
          #allocation5 [shape = 'u32[6]{0}', space=smem, size = 0x18, scoped, tag = 'DMA stride descriptor']
          %525 = vsyncadd %s517, 0
          %s526 = smul.addr %s16, 2
          %s527 = smul.addr %s526, 8
          %s528 = scalar_lea.hbm %s2, %s527
          %s530 = sshll.u32 1, 14
          %s531 = sxor.u32 4294967295, %s530
          %s534 = sshll.u32 7, 18
          %s535 = sxor.u32 4294967295, %s534
          %s536 = sand.u32 0, %s535
          %s538 = sor.u32 %s536, 0
          %s539 = sshll.u32 %s520, 4
          %s540 = int_to_ptr.vmem [resolvable:$true] %s539
          %s541 = sshll.u32 %s528, 4
          %s542 = int_to_ptr.hbm [resolvable:$true] %s541
          %548 = sst [smem:[#allocation5]] 256
          %s549 = scalar_lea.smem [#allocation5], 1
          %550 = sst [smem:[%s549]] 768
          %s551 = scalar_lea.smem [#allocation5], 2
          %552 = sst [smem:[%s551]] 2
          %s553 = scalar_lea.smem [#allocation5], 3
          %554 = sst [smem:[%s553]] 128
          %s555 = scalar_lea.smem [#allocation5], 4
          %556 = sst [smem:[%s555]] 128
          %s557 = scalar_lea.smem [#allocation5], 5
          %558 = sst [smem:[%s557]] 8
          %560 = dma.general %s540, 2048, %s542, %s517, [#allocation4], [#allocation5], %s538, 0
        $region32: #{seq2seq_forward.15} parent=27 // pred_fallthru
          _
      $region28: #{seq2seq_forward.15} parent=5 // pred_fallthru
        _
      %p561 = scmp.le.s32.totalorder 2, %s11
      // Predicated region
      $region33: #{seq2seq_forward.15} parent=5 // pred_check
        %p562 = pneg %p561
      $region34: #{seq2seq_forward.15} parent=5 // pred_check_branch
        %564 = sbr.rel (%p562) target = $region36
      $region35: #{seq2seq_forward.15} parent=5 // pred_region
        %s565 = ssub.s32 %s11, 2
        // Predicated region
        $region37: #{seq2seq_forward.15} parent=35 // pred_check
          %p566 = pneg %p87
        $region38: #{seq2seq_forward.15} parent=35 // pred_check_branch
          %568 = sbr.rel (%p566) target = $region40
        $region39: #{seq2seq_forward.15} parent=35 // pred_region
          %s569 = sand.u32 %s72, 1
          %s570 = scalar_lea.sflag [#allocation3], %s569
          %s571 = sand.u32 %s72, 1
          %s572 = smul.addr %s571, 128
          %s573 = scalar_lea.vmem [#allocation2], %s572
          %575 = dma.done %s570, 2048
        $region40: #{seq2seq_forward.15} parent=35 // pred_fallthru
          _
      $region36: #{seq2seq_forward.15} parent=5 // pred_fallthru
        _
    $region6: #{seq2seq_forward.15} parent=1 // loop_footer
      %s15 = sadd.s32 1, %s11
    $region7: #{seq2seq_forward.15} parent=1 // loop_footer_branch
      %10 = sbr.rel target = $region3
    $region8: #{seq2seq_forward.15} parent=1 // loop_exit
      _
    %576 = vsyncpa [#allocation3], 1
    %s577 = scalar_lea.sflag [#allocation3], 1
    %578 = vsyncpa %s577, 1

</llo_original>
